<compile_context>
chip_gen: v7x
topology: tpu7x:2x2x1
jax: 0.10.0
libtpu: 0.0.40
codegen_flags: <defaults>
</compile_context>

<pallas_src>
import functools
import math

import jax
import jax.numpy as jnp
from jax import lax
from jax.experimental import pallas as pl
from jax.experimental.pallas import tpu as pltpu

DIM_EMB = 32                  # dim_embedding
DIM_OUT = 64                  # dim_output (reconstructed length)
C0 = 128                      # channels after 'B L (C T) -> (B L) C T'
T0 = (DIM_OUT * 8) // C0      # initial time length (= 4)
GN_GROUPS = 16
GN_EPS = 1e-5
VEC_W = 128                   # lane width of the packed small-vector table

# Row indices of the packed small-vector table (each row: one (<=128,) vector, zero padded).
_LIN_B0 = 0                                  # rows 0..3: Linear bias in (t, c) order
_R1_G1_G, _R1_G1_B, _R1_C1_B = 4, 5, 6
_R1_G2_G, _R1_G2_B, _R1_C2_B = 7, 8, 9
_U1_B = 10
_R2_CU_B = 11
_R2_G1_G, _R2_G1_B, _R2_C1_B = 12, 13, 14
_R2_G2_G, _R2_G2_B, _R2_C2_B = 15, 16, 17
_U2_B = 18
_F_W0, _F_W1, _F_W2, _F_B = 19, 20, 21, 22
_N_VEC_ROWS = 24                             # padded to a multiple of 8 sublanes


# ===================================== kernel ===============================================

def shape_decoder_kernel(x_ref, lin_w, r1c1_w, r1c2_w, u1_w, r2c1cu_w, r2c2_w, u2_w, vec,
                         sel, segt4, segt16, gn128_in, gn128_out, gn64_in, gn64_out,
                         edge4, edge16, edge64, out_ref, *, tb, exact_gelu):
    f32, bf16 = jnp.float32, jnp.bfloat16
    t1, t2, t3 = T0, 4 * T0, 16 * T0                       # per-token time lengths 4/16/64
    m1, m2, m3 = tb * t1, tb * t2, tb * t3                 # stacked row counts

    def gelu(z):
        if exact_gelu:
            # PyTorch nn.GELU() default = exact erf formulation.
            return 0.5 * z * (1.0 + lax.erf(z * (1.0 / math.sqrt(2.0))))
        # Reviewed tanh approximation (EUP path); enable when the accuracy budget allows.
        return jax.nn.gelu(z, approximate=True)

    def v(row, width=VEC_W):
        return vec[row:row + 1, 0:width]                   # (1, width) slice of the table

    def conv3(x, w_ref, bias, edge, cout):
        """Conv1d(k=3, stride=1, 'same'), output-stacked: one (M,Cin)@(Cin,3*Cout) bf16 dot,
        then roll + token-boundary-mask + sum of the three Cout-wide output slabs."""
        m = x.shape[0]
        a = jnp.dot(x.astype(bf16), w_ref[...], preferred_element_type=f32)   # (M, 3*Cout)
        prev = pltpu.roll(a[:, 0:cout], 1, axis=0) * edge[:, 0:1]             # tap on x[i-1]
        nxt = pltpu.roll(a[:, 2 * cout:3 * cout], m - 1, axis=0) * edge[:, 1:2]  # tap x[i+1]
        return prev + a[:, cout:2 * cout] + nxt + bias

    def gnorm(x, segt_ref, t, gin_ref, gout_ref, gamma, beta, inv_n, c):
        """GroupNorm(16): fused per-token statistics (f32) + per-channel affine."""
        m = x.shape[0]
        ntok = m // t
        pq = jnp.concatenate([x, x * x], axis=1)                              # (M, 2C)
        s = jnp.dot(pq, gin_ref[...], preferred_element_type=f32)             # (M, 2G)
        tok = jnp.dot(segt_ref[...], s, preferred_element_type=f32) * inv_n   # (tb, 2G)
        mean_g = tok[:, 0:GN_GROUPS]
        var_g = jnp.maximum(tok[:, GN_GROUPS:2 * GN_GROUPS] - mean_g * mean_g, 0.0)
        stats = jnp.concatenate([mean_g, lax.rsqrt(var_g + GN_EPS)], axis=1)  # (tb, 2G)
        sc = jnp.dot(stats, gout_ref[...], preferred_element_type=f32)        # (tb, 2C)
        mean_r = jnp.broadcast_to(sc[:, None, 0:c], (ntok, t, c)).reshape(m, c)
        inv_r = jnp.broadcast_to(sc[:, None, c:2 * c], (ntok, t, c)).reshape(m, c)
        return (x - mean_r) * inv_r * gamma + beta

    def up4(x):
        """nn.functional.interpolate(scale_factor=4, mode='nearest') along stacked time."""
        m, c = x.shape
        return jnp.broadcast_to(x[:, None, :], (m, 4, c)).reshape(m * 4, c)

    # ---------- Linear(dim_embedding, 512) + Rearrange -> stacked (tb*4, 128) --------------
    xin = x_ref[...].astype(bf16)                                        # (tb, E)
    lin = jnp.dot(xin, lin_w[...], preferred_element_type=f32)           # (tb, 512), col=t*128+c
    l4 = jnp.concatenate(
        [lin[:, t * C0:(t + 1) * C0] + v(_LIN_B0 + t) for t in range(T0)], axis=0)  # (4tb,128)
    h = jnp.dot(sel[...], l4, preferred_element_type=f32)                # (m1, 128), row=b*4+t

    # ---------- ResidualBlock(128, 128) + GELU ----------------------------------------------
    e4 = edge4[...]
    inv_n1 = 1.0 / (t1 * (C0 // GN_GROUPS))
    b = gnorm(h, segt4, t1, gn128_in, gn128_out, v(_R1_G1_G), v(_R1_G1_B), inv_n1, 128)
    b = conv3(gelu(b), r1c1_w, v(_R1_C1_B), e4, 128)
    b = gnorm(b, segt4, t1, gn128_in, gn128_out, v(_R1_G2_G), v(_R1_G2_B), inv_n1, 128)
    b = conv3(gelu(b), r1c2_w, v(_R1_C2_B), e4, 128)
    h = gelu(h + b)

    # ---------- UpSampleBlock(128, scale_factor=4) ------------------------------------------
    e16 = edge16[...]
    h = conv3(up4(h), u1_w, v(_U1_B), e16, 128)                          # (m2, 128)

    # ---------- ResidualBlock(128, 64) [1x1 channel_up fused] + GELU ------------------------
    b = gnorm(h, segt16, t2, gn128_in, gn128_out, v(_R2_G1_G), v(_R2_G1_B),
              1.0 / (t2 * (128 // GN_GROUPS)), 128)
    z = jnp.concatenate([gelu(b).astype(bf16), h.astype(bf16)], axis=1)  # (m2, 256)
    r = jnp.dot(z, r2c1cu_w[...], preferred_element_type=f32)            # (m2, 256)
    b = (pltpu.roll(r[:, 0:64], 1, axis=0) * e16[:, 0:1] + r[:, 64:128]
         + pltpu.roll(r[:, 128:192], m2 - 1, axis=0) * e16[:, 1:2] + v(_R2_C1_B, 64))
    up = r[:, 192:256] + v(_R2_CU_B, 64)                                 # channel_up(h)
    b = gnorm(b, segt16, t2, gn64_in, gn64_out, v(_R2_G2_G, 64), v(_R2_G2_B, 64),
              1.0 / (t2 * (64 // GN_GROUPS)), 64)
    b = conv3(gelu(b), r2c2_w, v(_R2_C2_B, 64), e16, 64)
    h = gelu(up + b)                                                     # (m2, 64)

    # ---------- UpSampleBlock(64, scale_factor=4) + GELU ------------------------------------
    e64 = edge64[...]
    h = gelu(conv3(up4(h), u2_w, v(_U2_B, 64), e64, 64))                 # (m3, 64)

    # ---------- Conv1d(64, 1, 3, 'same') on VPU/XLU (an N=1 matmul would waste the MXU) -----
    xm = pltpu.roll(h, 1, axis=0) * e64[:, 0:1]
    xp = pltpu.roll(h, m3 - 1, axis=0) * e64[:, 1:2]
    contrib = xm * v(_F_W0, 64) + h * v(_F_W1, 64) + xp * v(_F_W2, 64)   # (m3, 64)

    # ---------- transpose to lane-dense (tb, 64) via aligned reshapes + reductions -----------
    eye = (lax.broadcasted_iota(jnp.int32, (DIM_OUT, DIM_OUT), 0)
           == lax.broadcasted_iota(jnp.int32, (DIM_OUT, DIM_OUT), 1)).astype(f32)
    ysub = jnp.sum(contrib.reshape(tb, DIM_OUT, DIM_OUT), axis=2, keepdims=True)  # (tb,64,1)
    y = jnp.sum(ysub * eye[None, :, :], axis=1) + vec[_F_B:_F_B + 1, 0:1]         # (tb, 64)

    # ---------- per-token mean / unbiased std (torch.std correction=1), normalize -----------
    mean = jnp.sum(y, axis=1, keepdims=True) * (1.0 / DIM_OUT)           # (tb, 1)
    d = y - mean
    std = jnp.sqrt(jnp.sum(d * d, axis=1, keepdims=True) * (1.0 / (DIM_OUT - 1)))
    yn = d / (std + 1e-8)
    pad = jnp.zeros((tb, VEC_W - DIM_OUT - 2), f32)
    # Single lane-dense output block: [y | mean | std | 0...]
    out_ref[...] = jnp.concatenate([yn, mean, std, pad], axis=1)         # (tb, 128)


# ======================== parameter construction / packing ==================================

def init_params(key):
    """Random parameters in PyTorch layout (Conv1d weight: (Cout, Cin, K); Linear: (out, in))."""
    keys = iter(jax.random.split(key, 32))

    def rnd(shape, scale=0.05):
        return scale * jax.random.normal(next(keys), shape, dtype=jnp.float32)

    p = {}
    p["lin_w"] = rnd((DIM_OUT * 8, DIM_EMB))
    p["lin_b"] = rnd((DIM_OUT * 8,))

    def add_conv(name, cout, cin, k=3):
        p[name + "_w"] = rnd((cout, cin, k))
        p[name + "_b"] = rnd((cout,))

    def add_gn(name, c):
        p[name + "_g"] = 1.0 + rnd((c,))      # perturbed so the affine path is exercised
        p[name + "_b"] = rnd((c,))

    add_gn("r1_gn1", 128); add_conv("r1_c1", 128, 128)
    add_gn("r1_gn2", 128); add_conv("r1_c2", 128, 128)
    add_conv("u1", 128, 128)
    add_conv("r2_cu", 64, 128, k=1)
    add_gn("r2_gn1", 128); add_conv("r2_c1", 64, 128)
    add_gn("r2_gn2", 64);  add_conv("r2_c2", 64, 64)
    add_conv("u2", 64, 64)
    add_conv("f", 1, 64)
    return p


def pack_params(p):
    """PyTorch-layout params -> kernel layout (output-stacked bf16 convs, packed vectors)."""
    f32, bf16 = jnp.float32, jnp.bfloat16

    def conv_wide(w):   # (Cout, Cin, 3) -> (Cin, 3*Cout), slabs ordered [prev | center | next]
        return jnp.concatenate([w[:, :, k].T for k in range(3)], axis=1).astype(bf16)

    # Linear: reorder output columns from (c*T0 + t) to (t*C0 + c) so the '(C T)' split of the
    # Linear output lands directly in the stacked (time, channel) layout.
    lin_w = jnp.transpose(p["lin_w"].reshape(C0, T0, DIM_EMB),
                          (2, 1, 0)).reshape(DIM_EMB, T0 * C0).astype(bf16)
    lin_b = p["lin_b"].reshape(C0, T0).T                               # (T0, C0), row t

    # ResidualBlock(128,64): first conv + 1x1 channel_up fused into one block-diagonal matmul.
    c1 = jnp.concatenate([p["r2_c1_w"][:, :, k].T for k in range(3)], axis=1)   # (128, 192)
    cu = p["r2_cu_w"][:, :, 0].T                                                 # (128, 64)
    r2c1cu_w = jnp.concatenate(
        [jnp.concatenate([c1, jnp.zeros((128, 64), f32)], axis=1),
         jnp.concatenate([jnp.zeros((128, 192), f32), cu], axis=1)],
        axis=0).astype(bf16)                                                     # (256, 256)

    def row(vals):
        vals = jnp.asarray(vals, f32).reshape(-1)
        return jnp.zeros((VEC_W,), f32).at[:vals.shape[0]].set(vals)

    rows = [jnp.zeros((VEC_W,), f32)] * _N_VEC_ROWS
    for t in range(T0):
        rows[_LIN_B0 + t] = row(lin_b[t])
    rows[_R1_G1_G] = row(p["r1_gn1_g"]); rows[_R1_G1_B] = row(p["r1_gn1_b"])
    rows[_R1_C1_B] = row(p["r1_c1_b"])
    rows[_R1_G2_G] = row(p["r1_gn2_g"]); rows[_R1_G2_B] = row(p["r1_gn2_b"])
    rows[_R1_C2_B] = row(p["r1_c2_b"])
    rows[_U1_B] = row(p["u1_b"])
    rows[_R2_CU_B] = row(p["r2_cu_b"])
    rows[_R2_G1_G] = row(p["r2_gn1_g"]); rows[_R2_G1_B] = row(p["r2_gn1_b"])
    rows[_R2_C1_B] = row(p["r2_c1_b"])
    rows[_R2_G2_G] = row(p["r2_gn2_g"]); rows[_R2_G2_B] = row(p["r2_gn2_b"])
    rows[_R2_C2_B] = row(p["r2_c2_b"])
    rows[_U2_B] = row(p["u2_b"])
    rows[_F_W0] = row(p["f_w"][0, :, 0]); rows[_F_W1] = row(p["f_w"][0, :, 1])
    rows[_F_W2] = row(p["f_w"][0, :, 2]); rows[_F_B] = row(p["f_b"])
    vec = jnp.stack(rows, axis=0)                                      # (24, 128), f32

    return (lin_w, conv_wide(p["r1_c1_w"]), conv_wide(p["r1_c2_w"]), conv_wide(p["u1_w"]),
            r2c1cu_w, conv_wide(p["r2_c2_w"]), conv_wide(p["u2_w"]), vec)


# ----------------- host-precomputed static selectors / masks (depend only on tb) ------------

def _segment_t(ntok, t):
    m = ntok * t
    return (jnp.arange(m, dtype=jnp.int32)[None, :] // t
            == jnp.arange(ntok, dtype=jnp.int32)[:, None]).astype(jnp.float32)   # (ntok, m)


def _edge(t, m):
    ph = jnp.arange(m, dtype=jnp.int32) % t
    return jnp.stack([(ph != 0), (ph != t - 1)], axis=1).astype(jnp.float32)      # (m, 2)


def _group_blockdiag(c):
    g = GN_GROUPS
    mk = (jnp.arange(c, dtype=jnp.int32)[:, None] // (c // g)
          == jnp.arange(g, dtype=jnp.int32)[None, :]).astype(jnp.float32)          # (c, g)
    zcg = jnp.zeros((c, g), jnp.float32)
    zgc = jnp.zeros((g, c), jnp.float32)
    gin = jnp.concatenate([jnp.concatenate([mk, zcg], axis=1),
                           jnp.concatenate([zcg, mk], axis=1)], axis=0)            # (2c, 2g)
    gout = jnp.concatenate([jnp.concatenate([mk.T, zgc], axis=1),
                            jnp.concatenate([zgc, mk.T], axis=1)], axis=0)         # (2g, 2c)
    return gin, gout


def _lin_scatter_sel(tb):
    """sel[b*4 + t, t*tb + b] = 1 : scatters the 4 vertically-stacked Linear lane-slices
    into token-major / time-on-sublanes order with one matmul."""
    m1 = tb * T0
    r = jnp.arange(m1, dtype=jnp.int32)
    cols = (r % T0) * tb + (r // T0)
    return (jnp.arange(m1, dtype=jnp.int32)[None, :] == cols[:, None]).astype(jnp.float32)


def _build_constants(tb):
    t1, t2, t3 = T0, 4 * T0, 16 * T0
    m1, m2, m3 = tb * t1, tb * t2, tb * t3
    gn128_in, gn128_out = _group_blockdiag(128)
    gn64_in, gn64_out = _group_blockdiag(64)
    return (_lin_scatter_sel(tb), _segment_t(tb, t1), _segment_t(tb, t2),
            gn128_in, gn128_out, gn64_in, gn64_out,
            _edge(t1, m1), _edge(t2, m2), _edge(t3, m3))


# ================================= wrapper ==================================================

def shape_decoder(x, params, *, token_block=128, exact_gelu=True):
    """x: (B, L, dim_embedding) -> ((B, L, dim_output), (B, L, 1), (B, L, 1))."""
    B, L, E = x.shape
    assert E == DIM_EMB
    BL = B * L

    tb = max(8, (min(int(token_block), BL) // 8) * 8)      # sublane-aligned token block
    # v7x has 2 TensorCores; keep the ("parallel",) grid at >= 2 blocks when possible.
    if pl.cdiv(BL, tb) < 2 and BL >= 16:
        tb = max(8, (((BL + 1) // 2) // 8) * 8)
    n_blocks = pl.cdiv(BL, tb)
    BLp = n_blocks * tb

    x2 = x.reshape(BL, E).astype(jnp.float32)
    if BLp != BL:
        x2 = jnp.pad(x2, ((0, BLp - BL), (0, 0)))          # padded tokens are dropped at the end

    weights = pack_params(params)
    consts = _build_constants(tb)
    ops = tuple(weights) + tuple(consts)

    in_specs = [pl.BlockSpec((tb, E), lambda i: (i, 0))]
    in_specs += [pl.BlockSpec(a.shape, lambda i: (0, 0)) for a in ops]
    out_specs = pl.BlockSpec((tb, VEC_W), lambda i: (i, 0))
    out_shape = jax.ShapeDtypeStruct((BLp, VEC_W), jnp.float32)

    kernel = functools.partial(shape_decoder_kernel, tb=tb, exact_gelu=exact_gelu)
    out = pl.pallas_call(
        kernel,
        out_shape=out_shape,
        grid_spec=pltpu.PrefetchScalarGridSpec(
            num_scalar_prefetch=0,
            grid=(n_blocks,),
            in_specs=in_specs,
            out_specs=out_specs,
        ),
        compiler_params=pltpu.CompilerParams(
            dimension_semantics=("parallel",),
            # ~25 MiB live at tb=128; 48 MiB leaves headroom and stays under v7x's 64 MiB.
            vmem_limit_bytes=48 * 1024 * 1024,
        ),
    )(x2, *ops)

    y = out[:BL, 0:DIM_OUT].reshape(B, L, DIM_OUT)
    mean = out[:BL, DIM_OUT:DIM_OUT + 1].reshape(B, L, 1)
    std = out[:BL, DIM_OUT + 1:DIM_OUT + 2].reshape(B, L, 1)
    return y, mean, std


# ============================ pure-JAX reference (for checking) =============================

def shape_decoder_reference(x, p):
    B, L, _ = x.shape
    n = B * L
    hi = lax.Precision.HIGHEST
    gelu = lambda z: 0.5 * z * (1.0 + lax.erf(z * (1.0 / math.sqrt(2.0))))

    def conv1d(h, w, b):                           # h: (N, Cin, T), w: (Cout, Cin, K)
        out = lax.conv_general_dilated(h, w, window_strides=(1,), padding="SAME",
                                       dimension_numbers=("NCH", "OIH", "NCH"), precision=hi)
        return out + b[None, :, None]

    def gnorm(h, g, beta):
        nn_, c, t = h.shape
        hg = h.reshape(nn_, GN_GROUPS, c // GN_GROUPS, t)
        m = hg.mean(axis=(2, 3), keepdims=True)
        v = hg.var(axis=(2, 3), keepdims=True)
        hn = ((hg - m) / jnp.sqrt(v + GN_EPS)).reshape(nn_, c, t)
        return hn * g[None, :, None] + beta[None, :, None]

    def resblock(h, pre, cin, cout):
        b = conv1d(gelu(gnorm(h, p[pre + "_gn1_g"], p[pre + "_gn1_b"])),
                   p[pre + "_c1_w"], p[pre + "_c1_b"])
        b = conv1d(gelu(gnorm(b, p[pre + "_gn2_g"], p[pre + "_gn2_b"])),
                   p[pre + "_c2_w"], p[pre + "_c2_b"])
        skip = h if cin == cout else conv1d(h, p[pre + "_cu_w"], p[pre + "_cu_b"])
        return skip + b

    def upsample(h, w, b):
        return conv1d(jnp.repeat(h, 4, axis=-1), w, b)

    h = jnp.dot(x.reshape(n, DIM_EMB).astype(jnp.float32), p["lin_w"].T, precision=hi) + p["lin_b"]
    h = h.reshape(n, C0, T0)
    h = gelu(resblock(h, "r1", 128, 128))
    h = upsample(h, p["u1_w"], p["u1_b"])
    h = gelu(resblock(h, "r2", 128, 64))
    h = gelu(upsample(h, p["u2_w"], p["u2_b"]))
    y = conv1d(h, p["f_w"], p["f_b"])[:, 0, :].reshape(B, L, DIM_OUT)
    mean = y.mean(axis=-1, keepdims=True)
    std = jnp.sqrt(jnp.sum((y - mean) ** 2, axis=-1, keepdims=True) / (DIM_OUT - 1))
    return (y - mean) / (std + 1e-8), mean, std


if __name__ == "__main__":
    key = jax.random.PRNGKey(0)
    k_param, k_x = jax.random.split(key)
    params = init_params(k_param)
    x = jax.random.normal(k_x, (2, 8, DIM_EMB), dtype=jnp.float32)    # (B, L, dim_embedding)

    y, mean, std = shape_decoder(x, params)
    jax.block_until_ready((y, mean, std))

    assert bool(jnp.all(jnp.isfinite(y)))
    assert bool(jnp.all(jnp.isfinite(mean))) and bool(jnp.all(jnp.isfinite(std)))

    # Correctness vs the pure-JAX reference of the PyTorch module.  The normalized output is
    # amplified by 1/std, so compare the de-amplified (pre-normalization) reconstruction plus
    # the statistics directly — this bounds the true network error under bf16 MXU operands.
    y_ref, mean_ref, std_ref = shape_decoder_reference(x, params)
    sig = y * (std + 1e-8) + mean
    sig_ref = y_ref * (std_ref + 1e-8) + mean_ref
    err_sig = float(jnp.max(jnp.abs(sig - sig_ref)))
    err_stats = max(float(jnp.max(jnp.abs(mean - mean_ref))),
                    float(jnp.max(jnp.abs(std - std_ref))))
    assert err_sig < 8e-2, f"pre-normalization mismatch: max abs err = {err_sig}"
    assert err_stats < 3e-2, f"mean/std mismatch: max abs err = {err_stats}"

    print("KERNEL_OK")
</pallas_src>

<mosaic_0001>
module attributes {stable_mosaic.version = 11 : i64} {
  func.func @shape_decoder_kernel(%arg0: i32, %arg1: memref<8x32xf32, #tpu.memory_space<vmem>>, %arg2: memref<32x512xbf16, #tpu.memory_space<vmem>>, %arg3: memref<128x384xbf16, #tpu.memory_space<vmem>>, %arg4: memref<128x384xbf16, #tpu.memory_space<vmem>>, %arg5: memref<128x384xbf16, #tpu.memory_space<vmem>>, %arg6: memref<256x256xbf16, #tpu.memory_space<vmem>>, %arg7: memref<64x192xbf16, #tpu.memory_space<vmem>>, %arg8: memref<64x192xbf16, #tpu.memory_space<vmem>>, %arg9: memref<24x128xf32, #tpu.memory_space<vmem>>, %arg10: memref<32x32xf32, #tpu.memory_space<vmem>>, %arg11: memref<8x32xf32, #tpu.memory_space<vmem>>, %arg12: memref<8x128xf32, #tpu.memory_space<vmem>>, %arg13: memref<256x32xf32, #tpu.memory_space<vmem>>, %arg14: memref<32x256xf32, #tpu.memory_space<vmem>>, %arg15: memref<128x32xf32, #tpu.memory_space<vmem>>, %arg16: memref<32x128xf32, #tpu.memory_space<vmem>>, %arg17: memref<32x2xf32, #tpu.memory_space<vmem>>, %arg18: memref<128x2xf32, #tpu.memory_space<vmem>>, %arg19: memref<512x2xf32, #tpu.memory_space<vmem>>, %arg20: memref<8x128xf32, #tpu.memory_space<vmem>>) attributes {dimension_semantics = [#tpu.dimension_semantics<parallel>], iteration_bounds = array<i64: 2>, scalar_prefetch = 0 : i64, scratch_operands = 0 : i64, tpu.core_type = #tpu.core_type<tc>, window_params = [{transform_indices = @transform_0, window_bounds = array<i64: 8, 32>}, {pipeline_mode = #tpu.pipeline_mode<synchronous>, transform_indices = @transform_1, window_bounds = array<i64: 32, 512>}, {pipeline_mode = #tpu.pipeline_mode<synchronous>, transform_indices = @transform_2, window_bounds = array<i64: 128, 384>}, {pipeline_mode = #tpu.pipeline_mode<synchronous>, transform_indices = @transform_3, window_bounds = array<i64: 128, 384>}, {pipeline_mode = #tpu.pipeline_mode<synchronous>, transform_indices = @transform_4, window_bounds = array<i64: 128, 384>}, {pipeline_mode = #tpu.pipeline_mode<synchronous>, transform_indices = @transform_5, window_bounds = array<i64: 256, 256>}, {pipeline_mode = #tpu.pipeline_mode<synchronous>, transform_indices = @transform_6, window_bounds = array<i64: 64, 192>}, {pipeline_mode = #tpu.pipeline_mode<synchronous>, transform_indices = @transform_7, window_bounds = array<i64: 64, 192>}, {pipeline_mode = #tpu.pipeline_mode<synchronous>, transform_indices = @transform_8, window_bounds = array<i64: 24, 128>}, {pipeline_mode = #tpu.pipeline_mode<synchronous>, transform_indices = @transform_9, window_bounds = array<i64: 32, 32>}, {pipeline_mode = #tpu.pipeline_mode<synchronous>, transform_indices = @transform_10, window_bounds = array<i64: 8, 32>}, {pipeline_mode = #tpu.pipeline_mode<synchronous>, transform_indices = @transform_11, window_bounds = array<i64: 8, 128>}, {pipeline_mode = #tpu.pipeline_mode<synchronous>, transform_indices = @transform_12, window_bounds = array<i64: 256, 32>}, {pipeline_mode = #tpu.pipeline_mode<synchronous>, transform_indices = @transform_13, window_bounds = array<i64: 32, 256>}, {pipeline_mode = #tpu.pipeline_mode<synchronous>, transform_indices = @transform_14, window_bounds = array<i64: 128, 32>}, {pipeline_mode = #tpu.pipeline_mode<synchronous>, transform_indices = @transform_15, window_bounds = array<i64: 32, 128>}, {pipeline_mode = #tpu.pipeline_mode<synchronous>, transform_indices = @transform_16, window_bounds = array<i64: 32, 2>}, {pipeline_mode = #tpu.pipeline_mode<synchronous>, transform_indices = @transform_17, window_bounds = array<i64: 128, 2>}, {pipeline_mode = #tpu.pipeline_mode<synchronous>, transform_indices = @transform_18, window_bounds = array<i64: 512, 2>}, {transform_indices = @transform_19, window_bounds = array<i64: 8, 128>}]} {
    %c0 = arith.constant 0 : index
    %c0_0 = arith.constant 0 : index
    %0 = vector.load %arg1[%c0, %c0_0] : memref<8x32xf32, #tpu.memory_space<vmem>>, vector<8x32xf32>
    %1 = arith.truncf %0 : vector<8x32xf32> to vector<8x32xbf16>
    %c0_1 = arith.constant 0 : index
    %c0_2 = arith.constant 0 : index
    %2 = vector.load %arg2[%c0_1, %c0_2] : memref<32x512xbf16, #tpu.memory_space<vmem>>, vector<32x512xbf16>
    %cst = arith.constant dense<0.000000e+00> : vector<8x512xf32>
    %3 = tpu.matmul %1, %2, %cst {dimension_numbers = #tpu.dot_dimension_numbers<[1], [0], [0], [1], [0, 0, 1, 1], [], []>} : vector<8x32xbf16>, vector<32x512xbf16>, vector<8x512xf32> -> vector<8x512xf32>
    %4 = vector.extract_strided_slice %3 {offsets = [0, 0], sizes = [8, 128], strides = [1, 1]} : vector<8x512xf32> to vector<8x128xf32>
    %c0_3 = arith.constant 0 : index
    %c0_4 = arith.constant 0 : index
    %5 = vector.load %arg9[%c0_3, %c0_4] : memref<24x128xf32, #tpu.memory_space<vmem>>, vector<1x128xf32>
    %6 = vector.broadcast %5 : vector<1x128xf32> to vector<8x128xf32>
    %7 = arith.addf %4, %6 : vector<8x128xf32>
    %8 = vector.extract_strided_slice %3 {offsets = [0, 128], sizes = [8, 128], strides = [1, 1]} : vector<8x512xf32> to vector<8x128xf32>
    %c1 = arith.constant 1 : index
    %c0_5 = arith.constant 0 : index
    %9 = vector.load %arg9[%c1, %c0_5] : memref<24x128xf32, #tpu.memory_space<vmem>>, vector<1x128xf32>
    %10 = vector.broadcast %9 : vector<1x128xf32> to vector<8x128xf32>
    %11 = arith.addf %8, %10 : vector<8x128xf32>
    %12 = vector.extract_strided_slice %3 {offsets = [0, 256], sizes = [8, 128], strides = [1, 1]} : vector<8x512xf32> to vector<8x128xf32>
    %c2 = arith.constant 2 : index
    %c0_6 = arith.constant 0 : index
    %13 = vector.load %arg9[%c2, %c0_6] : memref<24x128xf32, #tpu.memory_space<vmem>>, vector<1x128xf32>
    %14 = vector.broadcast %13 : vector<1x128xf32> to vector<8x128xf32>
    %15 = arith.addf %12, %14 : vector<8x128xf32>
    %16 = vector.extract_strided_slice %3 {offsets = [0, 384], sizes = [8, 128], strides = [1, 1]} : vector<8x512xf32> to vector<8x128xf32>
    %c3 = arith.constant 3 : index
    %c0_7 = arith.constant 0 : index
    %17 = vector.load %arg9[%c3, %c0_7] : memref<24x128xf32, #tpu.memory_space<vmem>>, vector<1x128xf32>
    %18 = vector.broadcast %17 : vector<1x128xf32> to vector<8x128xf32>
    %19 = arith.addf %16, %18 : vector<8x128xf32>
    %20 = tpu.concatenate %7, %11, %15, %19 in 0 : vector<8x128xf32>, vector<8x128xf32>, vector<8x128xf32>, vector<8x128xf32> -> vector<32x128xf32>
    %c0_8 = arith.constant 0 : index
    %c0_9 = arith.constant 0 : index
    %21 = vector.load %arg10[%c0_8, %c0_9] : memref<32x32xf32, #tpu.memory_space<vmem>>, vector<32x32xf32>
    %cst_10 = arith.constant dense<0.000000e+00> : vector<32x128xf32>
    %22 = tpu.matmul %21, %20, %cst_10 {dimension_numbers = #tpu.dot_dimension_numbers<[1], [0], [0], [1], [0, 0, 1, 1], [], []>} : vector<32x32xf32>, vector<32x128xf32>, vector<32x128xf32> -> vector<32x128xf32>
    %c0_11 = arith.constant 0 : index
    %c0_12 = arith.constant 0 : index
    %23 = vector.load %arg17[%c0_11, %c0_12] : memref<32x2xf32, #tpu.memory_space<vmem>>, vector<32x2xf32>
    %c4 = arith.constant 4 : index
    %c0_13 = arith.constant 0 : index
    %24 = vector.load %arg9[%c4, %c0_13] : memref<24x128xf32, #tpu.memory_space<vmem>>, vector<1x128xf32>
    %c5 = arith.constant 5 : index
    %c0_14 = arith.constant 0 : index
    %25 = vector.load %arg9[%c5, %c0_14] : memref<24x128xf32, #tpu.memory_space<vmem>>, vector<1x128xf32>
    %26 = arith.mulf %22, %22 : vector<32x128xf32>
    %27 = tpu.concatenate %22, %26 in 1 : vector<32x128xf32>, vector<32x128xf32> -> vector<32x256xf32>
    %c0_15 = arith.constant 0 : index
    %c0_16 = arith.constant 0 : index
    %28 = vector.load %arg13[%c0_15, %c0_16] : memref<256x32xf32, #tpu.memory_space<vmem>>, vector<256x32xf32>
    %cst_17 = arith.constant dense<0.000000e+00> : vector<32x32xf32>
    %29 = tpu.matmul %27, %28, %cst_17 {dimension_numbers = #tpu.dot_dimension_numbers<[1], [0], [0], [1], [0, 0, 1, 1], [], []>} : vector<32x256xf32>, vector<256x32xf32>, vector<32x32xf32> -> vector<32x32xf32>
    %c0_18 = arith.constant 0 : index
    %c0_19 = arith.constant 0 : index
    %30 = vector.load %arg11[%c0_18, %c0_19] : memref<8x32xf32, #tpu.memory_space<vmem>>, vector<8x32xf32>
    %cst_20 = arith.constant dense<0.000000e+00> : vector<8x32xf32>
    %31 = tpu.matmul %30, %29, %cst_20 {dimension_numbers = #tpu.dot_dimension_numbers<[1], [0], [0], [1], [0, 0, 1, 1], [], []>} : vector<8x32xf32>, vector<32x32xf32>, vector<8x32xf32> -> vector<8x32xf32>
    %cst_21 = arith.constant 3.125000e-02 : f32
    %32 = vector.broadcast %cst_21 : f32 to vector<8x32xf32>
    %33 = arith.mulf %31, %32 : vector<8x32xf32>
    %34 = vector.extract_strided_slice %33 {offsets = [0, 0], sizes = [8, 16], strides = [1, 1]} : vector<8x32xf32> to vector<8x16xf32>
    %35 = vector.extract_strided_slice %33 {offsets = [0, 16], sizes = [8, 16], strides = [1, 1]} : vector<8x32xf32> to vector<8x16xf32>
    %36 = arith.mulf %34, %34 : vector<8x16xf32>
    %37 = arith.subf %35, %36 : vector<8x16xf32>
    %cst_22 = arith.constant 0.000000e+00 : f32
    %38 = vector.broadcast %cst_22 : f32 to vector<8x16xf32>
    %39 = arith.maximumf %37, %38 : vector<8x16xf32>
    %cst_23 = arith.constant 9.99999974E-6 : f32
    %40 = vector.broadcast %cst_23 : f32 to vector<8x16xf32>
    %41 = arith.addf %39, %40 : vector<8x16xf32>
    %42 = math.rsqrt %41 : vector<8x16xf32>
    %43 = tpu.concatenate %34, %42 in 1 : vector<8x16xf32>, vector<8x16xf32> -> vector<8x32xf32>
    %c0_24 = arith.constant 0 : index
    %c0_25 = arith.constant 0 : index
    %44 = vector.load %arg14[%c0_24, %c0_25] : memref<32x256xf32, #tpu.memory_space<vmem>>, vector<32x256xf32>
    %cst_26 = arith.constant dense<0.000000e+00> : vector<8x256xf32>
    %45 = tpu.matmul %43, %44, %cst_26 {dimension_numbers = #tpu.dot_dimension_numbers<[1], [0], [0], [1], [0, 0, 1, 1], [], []>} : vector<8x32xf32>, vector<32x256xf32>, vector<8x256xf32> -> vector<8x256xf32>
    %46 = vector.extract_strided_slice %45 {offsets = [0, 0], sizes = [8, 128], strides = [1, 1]} : vector<8x256xf32> to vector<8x128xf32>
    %47 = vector.shape_cast %46 : vector<8x128xf32> to vector<8x1x128xf32>
    %48 = vector.shape_cast %47 : vector<8x1x128xf32> to vector<8x1x128xf32>
    %49 = vector.broadcast %48 : vector<8x1x128xf32> to vector<8x4x128xf32>
    %50 = vector.shape_cast %49 : vector<8x4x128xf32> to vector<32x128xf32>
    %51 = vector.extract_strided_slice %45 {offsets = [0, 128], sizes = [8, 128], strides = [1, 1]} : vector<8x256xf32> to vector<8x128xf32>
    %52 = vector.shape_cast %51 : vector<8x128xf32> to vector<8x1x128xf32>
    %53 = vector.shape_cast %52 : vector<8x1x128xf32> to vector<8x1x128xf32>
    %54 = vector.broadcast %53 : vector<8x1x128xf32> to vector<8x4x128xf32>
    %55 = vector.shape_cast %54 : vector<8x4x128xf32> to vector<32x128xf32>
    %56 = arith.subf %22, %50 : vector<32x128xf32>
    %57 = arith.mulf %56, %55 : vector<32x128xf32>
    %58 = vector.broadcast %24 : vector<1x128xf32> to vector<32x128xf32>
    %59 = arith.mulf %57, %58 : vector<32x128xf32>
    %60 = vector.broadcast %25 : vector<1x128xf32> to vector<32x128xf32>
    %61 = arith.addf %59, %60 : vector<32x128xf32>
    %cst_27 = arith.constant 5.000000e-01 : f32
    %62 = vector.broadcast %cst_27 : f32 to vector<32x128xf32>
    %63 = arith.mulf %62, %61 : vector<32x128xf32>
    %cst_28 = arith.constant 0.707106769 : f32
    %64 = vector.broadcast %cst_28 : f32 to vector<32x128xf32>
    %65 = arith.mulf %61, %64 : vector<32x128xf32>
    %66 = math.erf %65 : vector<32x128xf32>
    %cst_29 = arith.constant 1.000000e+00 : f32
    %67 = vector.broadcast %cst_29 : f32 to vector<32x128xf32>
    %68 = arith.addf %67, %66 : vector<32x128xf32>
    %69 = arith.mulf %63, %68 : vector<32x128xf32>
    %c6 = arith.constant 6 : index
    %c0_30 = arith.constant 0 : index
    %70 = vector.load %arg9[%c6, %c0_30] : memref<24x128xf32, #tpu.memory_space<vmem>>, vector<1x128xf32>
    %71 = arith.truncf %69 : vector<32x128xf32> to vector<32x128xbf16>
    %c0_31 = arith.constant 0 : index
    %c0_32 = arith.constant 0 : index
    %72 = vector.load %arg3[%c0_31, %c0_32] : memref<128x384xbf16, #tpu.memory_space<vmem>>, vector<128x384xbf16>
    %cst_33 = arith.constant dense<0.000000e+00> : vector<32x384xf32>
    %73 = tpu.matmul %71, %72, %cst_33 {dimension_numbers = #tpu.dot_dimension_numbers<[1], [0], [0], [1], [0, 0, 1, 1], [], []>} : vector<32x128xbf16>, vector<128x384xbf16>, vector<32x384xf32> -> vector<32x384xf32>
    %74 = vector.extract_strided_slice %73 {offsets = [0, 0], sizes = [32, 128], strides = [1, 1]} : vector<32x384xf32> to vector<32x128xf32>
    %c1_i32 = arith.constant 1 : i32
    %75 = tpu.dynamic_rotate %74 by %c1_i32 dim 0 : vector<32x128xf32>, i32 -> vector<32x128xf32>
    %76 = vector.extract_strided_slice %23 {offsets = [0, 0], sizes = [32, 1], strides = [1, 1]} : vector<32x2xf32> to vector<32x1xf32>
    %77 = vector.broadcast %76 : vector<32x1xf32> to vector<32x128xf32>
    %78 = arith.mulf %75, %77 : vector<32x128xf32>
    %79 = vector.extract_strided_slice %73 {offsets = [0, 256], sizes = [32, 128], strides = [1, 1]} : vector<32x384xf32> to vector<32x128xf32>
    %c31_i32 = arith.constant 31 : i32
    %80 = tpu.dynamic_rotate %79 by %c31_i32 dim 0 : vector<32x128xf32>, i32 -> vector<32x128xf32>
    %81 = vector.extract_strided_slice %23 {offsets = [0, 1], sizes = [32, 1], strides = [1, 1]} : vector<32x2xf32> to vector<32x1xf32>
    %82 = vector.broadcast %81 : vector<32x1xf32> to vector<32x128xf32>
    %83 = arith.mulf %80, %82 : vector<32x128xf32>
    %84 = vector.extract_strided_slice %73 {offsets = [0, 128], sizes = [32, 128], strides = [1, 1]} : vector<32x384xf32> to vector<32x128xf32>
    %85 = arith.addf %78, %84 : vector<32x128xf32>
    %86 = arith.addf %85, %83 : vector<32x128xf32>
    %87 = vector.broadcast %70 : vector<1x128xf32> to vector<32x128xf32>
    %88 = arith.addf %86, %87 : vector<32x128xf32>
    %c7 = arith.constant 7 : index
    %c0_34 = arith.constant 0 : index
    %89 = vector.load %arg9[%c7, %c0_34] : memref<24x128xf32, #tpu.memory_space<vmem>>, vector<1x128xf32>
    %c8 = arith.constant 8 : index
    %c0_35 = arith.constant 0 : index
    %90 = vector.load %arg9[%c8, %c0_35] : memref<24x128xf32, #tpu.memory_space<vmem>>, vector<1x128xf32>
    %91 = arith.mulf %88, %88 : vector<32x128xf32>
    %92 = tpu.concatenate %88, %91 in 1 : vector<32x128xf32>, vector<32x128xf32> -> vector<32x256xf32>
    %c0_36 = arith.constant 0 : index
    %c0_37 = arith.constant 0 : index
    %93 = vector.load %arg13[%c0_36, %c0_37] : memref<256x32xf32, #tpu.memory_space<vmem>>, vector<256x32xf32>
    %cst_38 = arith.constant dense<0.000000e+00> : vector<32x32xf32>
    %94 = tpu.matmul %92, %93, %cst_38 {dimension_numbers = #tpu.dot_dimension_numbers<[1], [0], [0], [1], [0, 0, 1, 1], [], []>} : vector<32x256xf32>, vector<256x32xf32>, vector<32x32xf32> -> vector<32x32xf32>
    %c0_39 = arith.constant 0 : index
    %c0_40 = arith.constant 0 : index
    %95 = vector.load %arg11[%c0_39, %c0_40] : memref<8x32xf32, #tpu.memory_space<vmem>>, vector<8x32xf32>
    %cst_41 = arith.constant dense<0.000000e+00> : vector<8x32xf32>
    %96 = tpu.matmul %95, %94, %cst_41 {dimension_numbers = #tpu.dot_dimension_numbers<[1], [0], [0], [1], [0, 0, 1, 1], [], []>} : vector<8x32xf32>, vector<32x32xf32>, vector<8x32xf32> -> vector<8x32xf32>
    %cst_42 = arith.constant 3.125000e-02 : f32
    %97 = vector.broadcast %cst_42 : f32 to vector<8x32xf32>
    %98 = arith.mulf %96, %97 : vector<8x32xf32>
    %99 = vector.extract_strided_slice %98 {offsets = [0, 0], sizes = [8, 16], strides = [1, 1]} : vector<8x32xf32> to vector<8x16xf32>
    %100 = vector.extract_strided_slice %98 {offsets = [0, 16], sizes = [8, 16], strides = [1, 1]} : vector<8x32xf32> to vector<8x16xf32>
    %101 = arith.mulf %99, %99 : vector<8x16xf32>
    %102 = arith.subf %100, %101 : vector<8x16xf32>
    %cst_43 = arith.constant 0.000000e+00 : f32
    %103 = vector.broadcast %cst_43 : f32 to vector<8x16xf32>
    %104 = arith.maximumf %102, %103 : vector<8x16xf32>
    %cst_44 = arith.constant 9.99999974E-6 : f32
    %105 = vector.broadcast %cst_44 : f32 to vector<8x16xf32>
    %106 = arith.addf %104, %105 : vector<8x16xf32>
    %107 = math.rsqrt %106 : vector<8x16xf32>
    %108 = tpu.concatenate %99, %107 in 1 : vector<8x16xf32>, vector<8x16xf32> -> vector<8x32xf32>
    %c0_45 = arith.constant 0 : index
    %c0_46 = arith.constant 0 : index
    %109 = vector.load %arg14[%c0_45, %c0_46] : memref<32x256xf32, #tpu.memory_space<vmem>>, vector<32x256xf32>
    %cst_47 = arith.constant dense<0.000000e+00> : vector<8x256xf32>
    %110 = tpu.matmul %108, %109, %cst_47 {dimension_numbers = #tpu.dot_dimension_numbers<[1], [0], [0], [1], [0, 0, 1, 1], [], []>} : vector<8x32xf32>, vector<32x256xf32>, vector<8x256xf32> -> vector<8x256xf32>
    %111 = vector.extract_strided_slice %110 {offsets = [0, 0], sizes = [8, 128], strides = [1, 1]} : vector<8x256xf32> to vector<8x128xf32>
    %112 = vector.shape_cast %111 : vector<8x128xf32> to vector<8x1x128xf32>
    %113 = vector.shape_cast %112 : vector<8x1x128xf32> to vector<8x1x128xf32>
    %114 = vector.broadcast %113 : vector<8x1x128xf32> to vector<8x4x128xf32>
    %115 = vector.shape_cast %114 : vector<8x4x128xf32> to vector<32x128xf32>
    %116 = vector.extract_strided_slice %110 {offsets = [0, 128], sizes = [8, 128], strides = [1, 1]} : vector<8x256xf32> to vector<8x128xf32>
    %117 = vector.shape_cast %116 : vector<8x128xf32> to vector<8x1x128xf32>
    %118 = vector.shape_cast %117 : vector<8x1x128xf32> to vector<8x1x128xf32>
    %119 = vector.broadcast %118 : vector<8x1x128xf32> to vector<8x4x128xf32>
    %120 = vector.shape_cast %119 : vector<8x4x128xf32> to vector<32x128xf32>
    %121 = arith.subf %88, %115 : vector<32x128xf32>
    %122 = arith.mulf %121, %120 : vector<32x128xf32>
    %123 = vector.broadcast %89 : vector<1x128xf32> to vector<32x128xf32>
    %124 = arith.mulf %122, %123 : vector<32x128xf32>
    %125 = vector.broadcast %90 : vector<1x128xf32> to vector<32x128xf32>
    %126 = arith.addf %124, %125 : vector<32x128xf32>
    %cst_48 = arith.constant 5.000000e-01 : f32
    %127 = vector.broadcast %cst_48 : f32 to vector<32x128xf32>
    %128 = arith.mulf %127, %126 : vector<32x128xf32>
    %cst_49 = arith.constant 0.707106769 : f32
    %129 = vector.broadcast %cst_49 : f32 to vector<32x128xf32>
    %130 = arith.mulf %126, %129 : vector<32x128xf32>
    %131 = math.erf %130 : vector<32x128xf32>
    %cst_50 = arith.constant 1.000000e+00 : f32
    %132 = vector.broadcast %cst_50 : f32 to vector<32x128xf32>
    %133 = arith.addf %132, %131 : vector<32x128xf32>
    %134 = arith.mulf %128, %133 : vector<32x128xf32>
    %c9 = arith.constant 9 : index
    %c0_51 = arith.constant 0 : index
    %135 = vector.load %arg9[%c9, %c0_51] : memref<24x128xf32, #tpu.memory_space<vmem>>, vector<1x128xf32>
    %136 = arith.truncf %134 : vector<32x128xf32> to vector<32x128xbf16>
    %c0_52 = arith.constant 0 : index
    %c0_53 = arith.constant 0 : index
    %137 = vector.load %arg4[%c0_52, %c0_53] : memref<128x384xbf16, #tpu.memory_space<vmem>>, vector<128x384xbf16>
    %cst_54 = arith.constant dense<0.000000e+00> : vector<32x384xf32>
    %138 = tpu.matmul %136, %137, %cst_54 {dimension_numbers = #tpu.dot_dimension_numbers<[1], [0], [0], [1], [0, 0, 1, 1], [], []>} : vector<32x128xbf16>, vector<128x384xbf16>, vector<32x384xf32> -> vector<32x384xf32>
    %139 = vector.extract_strided_slice %138 {offsets = [0, 0], sizes = [32, 128], strides = [1, 1]} : vector<32x384xf32> to vector<32x128xf32>
    %c1_i32_55 = arith.constant 1 : i32
    %140 = tpu.dynamic_rotate %139 by %c1_i32_55 dim 0 : vector<32x128xf32>, i32 -> vector<32x128xf32>
    %141 = vector.extract_strided_slice %23 {offsets = [0, 0], sizes = [32, 1], strides = [1, 1]} : vector<32x2xf32> to vector<32x1xf32>
    %142 = vector.broadcast %141 : vector<32x1xf32> to vector<32x128xf32>
    %143 = arith.mulf %140, %142 : vector<32x128xf32>
    %144 = vector.extract_strided_slice %138 {offsets = [0, 256], sizes = [32, 128], strides = [1, 1]} : vector<32x384xf32> to vector<32x128xf32>
    %c31_i32_56 = arith.constant 31 : i32
    %145 = tpu.dynamic_rotate %144 by %c31_i32_56 dim 0 : vector<32x128xf32>, i32 -> vector<32x128xf32>
    %146 = vector.extract_strided_slice %23 {offsets = [0, 1], sizes = [32, 1], strides = [1, 1]} : vector<32x2xf32> to vector<32x1xf32>
    %147 = vector.broadcast %146 : vector<32x1xf32> to vector<32x128xf32>
    %148 = arith.mulf %145, %147 : vector<32x128xf32>
    %149 = vector.extract_strided_slice %138 {offsets = [0, 128], sizes = [32, 128], strides = [1, 1]} : vector<32x384xf32> to vector<32x128xf32>
    %150 = arith.addf %143, %149 : vector<32x128xf32>
    %151 = arith.addf %150, %148 : vector<32x128xf32>
    %152 = vector.broadcast %135 : vector<1x128xf32> to vector<32x128xf32>
    %153 = arith.addf %151, %152 : vector<32x128xf32>
    %154 = arith.addf %22, %153 : vector<32x128xf32>
    %cst_57 = arith.constant 5.000000e-01 : f32
    %155 = vector.broadcast %cst_57 : f32 to vector<32x128xf32>
    %156 = arith.mulf %155, %154 : vector<32x128xf32>
    %cst_58 = arith.constant 0.707106769 : f32
    %157 = vector.broadcast %cst_58 : f32 to vector<32x128xf32>
    %158 = arith.mulf %154, %157 : vector<32x128xf32>
    %159 = math.erf %158 : vector<32x128xf32>
    %cst_59 = arith.constant 1.000000e+00 : f32
    %160 = vector.broadcast %cst_59 : f32 to vector<32x128xf32>
    %161 = arith.addf %160, %159 : vector<32x128xf32>
    %162 = arith.mulf %156, %161 : vector<32x128xf32>
    %c0_60 = arith.constant 0 : index
    %c0_61 = arith.constant 0 : index
    %163 = vector.load %arg18[%c0_60, %c0_61] : memref<128x2xf32, #tpu.memory_space<vmem>>, vector<128x2xf32>
    %164 = vector.shape_cast %162 : vector<32x128xf32> to vector<32x1x128xf32>
    %165 = vector.shape_cast %164 : vector<32x1x128xf32> to vector<32x1x128xf32>
    %166 = vector.broadcast %165 : vector<32x1x128xf32> to vector<32x4x128xf32>
    %167 = vector.shape_cast %166 : vector<32x4x128xf32> to vector<128x128xf32>
    %c10 = arith.constant 10 : index
    %c0_62 = arith.constant 0 : index
    %168 = vector.load %arg9[%c10, %c0_62] : memref<24x128xf32, #tpu.memory_space<vmem>>, vector<1x128xf32>
    %169 = arith.truncf %167 : vector<128x128xf32> to vector<128x128xbf16>
    %c0_63 = arith.constant 0 : index
    %c0_64 = arith.constant 0 : index
    %170 = vector.load %arg5[%c0_63, %c0_64] : memref<128x384xbf16, #tpu.memory_space<vmem>>, vector<128x384xbf16>
    %cst_65 = arith.constant dense<0.000000e+00> : vector<128x384xf32>
    %171 = tpu.matmul %169, %170, %cst_65 {dimension_numbers = #tpu.dot_dimension_numbers<[1], [0], [0], [1], [0, 0, 1, 1], [], []>} : vector<128x128xbf16>, vector<128x384xbf16>, vector<128x384xf32> -> vector<128x384xf32>
    %172 = vector.extract_strided_slice %171 {offsets = [0, 0], sizes = [128, 128], strides = [1, 1]} : vector<128x384xf32> to vector<128x128xf32>
    %c1_i32_66 = arith.constant 1 : i32
    %173 = tpu.dynamic_rotate %172 by %c1_i32_66 dim 0 : vector<128x128xf32>, i32 -> vector<128x128xf32>
    %174 = vector.extract_strided_slice %163 {offsets = [0, 0], sizes = [128, 1], strides = [1, 1]} : vector<128x2xf32> to vector<128x1xf32>
    %175 = vector.broadcast %174 : vector<128x1xf32> to vector<128x128xf32>
    %176 = arith.mulf %173, %175 : vector<128x128xf32>
    %177 = vector.extract_strided_slice %171 {offsets = [0, 256], sizes = [128, 128], strides = [1, 1]} : vector<128x384xf32> to vector<128x128xf32>
    %c127_i32 = arith.constant 127 : i32
    %178 = tpu.dynamic_rotate %177 by %c127_i32 dim 0 : vector<128x128xf32>, i32 -> vector<128x128xf32>
    %179 = vector.extract_strided_slice %163 {offsets = [0, 1], sizes = [128, 1], strides = [1, 1]} : vector<128x2xf32> to vector<128x1xf32>
    %180 = vector.broadcast %179 : vector<128x1xf32> to vector<128x128xf32>
    %181 = arith.mulf %178, %180 : vector<128x128xf32>
    %182 = vector.extract_strided_slice %171 {offsets = [0, 128], sizes = [128, 128], strides = [1, 1]} : vector<128x384xf32> to vector<128x128xf32>
    %183 = arith.addf %176, %182 : vector<128x128xf32>
    %184 = arith.addf %183, %181 : vector<128x128xf32>
    %185 = vector.broadcast %168 : vector<1x128xf32> to vector<128x128xf32>
    %186 = arith.addf %184, %185 : vector<128x128xf32>
    %c12 = arith.constant 12 : index
    %c0_67 = arith.constant 0 : index
    %187 = vector.load %arg9[%c12, %c0_67] : memref<24x128xf32, #tpu.memory_space<vmem>>, vector<1x128xf32>
    %c13 = arith.constant 13 : index
    %c0_68 = arith.constant 0 : index
    %188 = vector.load %arg9[%c13, %c0_68] : memref<24x128xf32, #tpu.memory_space<vmem>>, vector<1x128xf32>
    %189 = arith.mulf %186, %186 : vector<128x128xf32>
    %190 = tpu.concatenate %186, %189 in 1 : vector<128x128xf32>, vector<128x128xf32> -> vector<128x256xf32>
    %c0_69 = arith.constant 0 : index
    %c0_70 = arith.constant 0 : index
    %191 = vector.load %arg13[%c0_69, %c0_70] : memref<256x32xf32, #tpu.memory_space<vmem>>, vector<256x32xf32>
    %cst_71 = arith.constant dense<0.000000e+00> : vector<128x32xf32>
    %192 = tpu.matmul %190, %191, %cst_71 {dimension_numbers = #tpu.dot_dimension_numbers<[1], [0], [0], [1], [0, 0, 1, 1], [], []>} : vector<128x256xf32>, vector<256x32xf32>, vector<128x32xf32> -> vector<128x32xf32>
    %c0_72 = arith.constant 0 : index
    %c0_73 = arith.constant 0 : index
    %193 = vector.load %arg12[%c0_72, %c0_73] : memref<8x128xf32, #tpu.memory_space<vmem>>, vector<8x128xf32>
    %cst_74 = arith.constant dense<0.000000e+00> : vector<8x32xf32>
    %194 = tpu.matmul %193, %192, %cst_74 {dimension_numbers = #tpu.dot_dimension_numbers<[1], [0], [0], [1], [0, 0, 1, 1], [], []>} : vector<8x128xf32>, vector<128x32xf32>, vector<8x32xf32> -> vector<8x32xf32>
    %cst_75 = arith.constant 7.812500e-03 : f32
    %195 = vector.broadcast %cst_75 : f32 to vector<8x32xf32>
    %196 = arith.mulf %194, %195 : vector<8x32xf32>
    %197 = vector.extract_strided_slice %196 {offsets = [0, 0], sizes = [8, 16], strides = [1, 1]} : vector<8x32xf32> to vector<8x16xf32>
    %198 = vector.extract_strided_slice %196 {offsets = [0, 16], sizes = [8, 16], strides = [1, 1]} : vector<8x32xf32> to vector<8x16xf32>
    %199 = arith.mulf %197, %197 : vector<8x16xf32>
    %200 = arith.subf %198, %199 : vector<8x16xf32>
    %cst_76 = arith.constant 0.000000e+00 : f32
    %201 = vector.broadcast %cst_76 : f32 to vector<8x16xf32>
    %202 = arith.maximumf %200, %201 : vector<8x16xf32>
    %cst_77 = arith.constant 9.99999974E-6 : f32
    %203 = vector.broadcast %cst_77 : f32 to vector<8x16xf32>
    %204 = arith.addf %202, %203 : vector<8x16xf32>
    %205 = math.rsqrt %204 : vector<8x16xf32>
    %206 = tpu.concatenate %197, %205 in 1 : vector<8x16xf32>, vector<8x16xf32> -> vector<8x32xf32>
    %c0_78 = arith.constant 0 : index
    %c0_79 = arith.constant 0 : index
    %207 = vector.load %arg14[%c0_78, %c0_79] : memref<32x256xf32, #tpu.memory_space<vmem>>, vector<32x256xf32>
    %cst_80 = arith.constant dense<0.000000e+00> : vector<8x256xf32>
    %208 = tpu.matmul %206, %207, %cst_80 {dimension_numbers = #tpu.dot_dimension_numbers<[1], [0], [0], [1], [0, 0, 1, 1], [], []>} : vector<8x32xf32>, vector<32x256xf32>, vector<8x256xf32> -> vector<8x256xf32>
    %209 = vector.extract_strided_slice %208 {offsets = [0, 0], sizes = [8, 128], strides = [1, 1]} : vector<8x256xf32> to vector<8x128xf32>
    %210 = vector.shape_cast %209 : vector<8x128xf32> to vector<8x1x128xf32>
    %211 = vector.shape_cast %210 : vector<8x1x128xf32> to vector<8x1x128xf32>
    %212 = vector.broadcast %211 : vector<8x1x128xf32> to vector<8x16x128xf32>
    %213 = vector.shape_cast %212 : vector<8x16x128xf32> to vector<128x128xf32>
    %214 = vector.extract_strided_slice %208 {offsets = [0, 128], sizes = [8, 128], strides = [1, 1]} : vector<8x256xf32> to vector<8x128xf32>
    %215 = vector.shape_cast %214 : vector<8x128xf32> to vector<8x1x128xf32>
    %216 = vector.shape_cast %215 : vector<8x1x128xf32> to vector<8x1x128xf32>
    %217 = vector.broadcast %216 : vector<8x1x128xf32> to vector<8x16x128xf32>
    %218 = vector.shape_cast %217 : vector<8x16x128xf32> to vector<128x128xf32>
    %219 = arith.subf %186, %213 : vector<128x128xf32>
    %220 = arith.mulf %219, %218 : vector<128x128xf32>
    %221 = vector.broadcast %187 : vector<1x128xf32> to vector<128x128xf32>
    %222 = arith.mulf %220, %221 : vector<128x128xf32>
    %223 = vector.broadcast %188 : vector<1x128xf32> to vector<128x128xf32>
    %224 = arith.addf %222, %223 : vector<128x128xf32>
    %cst_81 = arith.constant 5.000000e-01 : f32
    %225 = vector.broadcast %cst_81 : f32 to vector<128x128xf32>
    %226 = arith.mulf %225, %224 : vector<128x128xf32>
    %cst_82 = arith.constant 0.707106769 : f32
    %227 = vector.broadcast %cst_82 : f32 to vector<128x128xf32>
    %228 = arith.mulf %224, %227 : vector<128x128xf32>
    %229 = math.erf %228 : vector<128x128xf32>
    %cst_83 = arith.constant 1.000000e+00 : f32
    %230 = vector.broadcast %cst_83 : f32 to vector<128x128xf32>
    %231 = arith.addf %230, %229 : vector<128x128xf32>
    %232 = arith.mulf %226, %231 : vector<128x128xf32>
    %233 = arith.truncf %232 : vector<128x128xf32> to vector<128x128xbf16>
    %234 = arith.truncf %186 : vector<128x128xf32> to vector<128x128xbf16>
    %235 = tpu.concatenate %233, %234 in 1 : vector<128x128xbf16>, vector<128x128xbf16> -> vector<128x256xbf16>
    %c0_84 = arith.constant 0 : index
    %c0_85 = arith.constant 0 : index
    %236 = vector.load %arg6[%c0_84, %c0_85] : memref<256x256xbf16, #tpu.memory_space<vmem>>, vector<256x256xbf16>
    %cst_86 = arith.constant dense<0.000000e+00> : vector<128x256xf32>
    %237 = tpu.matmul %235, %236, %cst_86 {dimension_numbers = #tpu.dot_dimension_numbers<[1], [0], [0], [1], [0, 0, 1, 1], [], []>} : vector<128x256xbf16>, vector<256x256xbf16>, vector<128x256xf32> -> vector<128x256xf32>
    %238 = vector.extract_strided_slice %237 {offsets = [0, 0], sizes = [128, 64], strides = [1, 1]} : vector<128x256xf32> to vector<128x64xf32>
    %c1_i32_87 = arith.constant 1 : i32
    %239 = tpu.dynamic_rotate %238 by %c1_i32_87 dim 0 : vector<128x64xf32>, i32 -> vector<128x64xf32>
    %240 = vector.extract_strided_slice %163 {offsets = [0, 0], sizes = [128, 1], strides = [1, 1]} : vector<128x2xf32> to vector<128x1xf32>
    %241 = vector.broadcast %240 : vector<128x1xf32> to vector<128x64xf32>
    %242 = arith.mulf %239, %241 : vector<128x64xf32>
    %243 = vector.extract_strided_slice %237 {offsets = [0, 64], sizes = [128, 64], strides = [1, 1]} : vector<128x256xf32> to vector<128x64xf32>
    %244 = arith.addf %242, %243 : vector<128x64xf32>
    %245 = vector.extract_strided_slice %237 {offsets = [0, 128], sizes = [128, 64], strides = [1, 1]} : vector<128x256xf32> to vector<128x64xf32>
    %c127_i32_88 = arith.constant 127 : i32
    %246 = tpu.dynamic_rotate %245 by %c127_i32_88 dim 0 : vector<128x64xf32>, i32 -> vector<128x64xf32>
    %247 = vector.extract_strided_slice %163 {offsets = [0, 1], sizes = [128, 1], strides = [1, 1]} : vector<128x2xf32> to vector<128x1xf32>
    %248 = vector.broadcast %247 : vector<128x1xf32> to vector<128x64xf32>
    %249 = arith.mulf %246, %248 : vector<128x64xf32>
    %250 = arith.addf %244, %249 : vector<128x64xf32>
    %c14 = arith.constant 14 : index
    %c0_89 = arith.constant 0 : index
    %251 = vector.load %arg9[%c14, %c0_89] : memref<24x128xf32, #tpu.memory_space<vmem>>, vector<1x64xf32>
    %252 = vector.broadcast %251 : vector<1x64xf32> to vector<128x64xf32>
    %253 = arith.addf %250, %252 : vector<128x64xf32>
    %254 = vector.extract_strided_slice %237 {offsets = [0, 192], sizes = [128, 64], strides = [1, 1]} : vector<128x256xf32> to vector<128x64xf32>
    %c11 = arith.constant 11 : index
    %c0_90 = arith.constant 0 : index
    %255 = vector.load %arg9[%c11, %c0_90] : memref<24x128xf32, #tpu.memory_space<vmem>>, vector<1x64xf32>
    %256 = vector.broadcast %255 : vector<1x64xf32> to vector<128x64xf32>
    %257 = arith.addf %254, %256 : vector<128x64xf32>
    %c15 = arith.constant 15 : index
    %c0_91 = arith.constant 0 : index
    %258 = vector.load %arg9[%c15, %c0_91] : memref<24x128xf32, #tpu.memory_space<vmem>>, vector<1x64xf32>
    %c16 = arith.constant 16 : index
    %c0_92 = arith.constant 0 : index
    %259 = vector.load %arg9[%c16, %c0_92] : memref<24x128xf32, #tpu.memory_space<vmem>>, vector<1x64xf32>
    %260 = arith.mulf %253, %253 : vector<128x64xf32>
    %261 = tpu.concatenate %253, %260 in 1 : vector<128x64xf32>, vector<128x64xf32> -> vector<128x128xf32>
    %c0_93 = arith.constant 0 : index
    %c0_94 = arith.constant 0 : index
    %262 = vector.load %arg15[%c0_93, %c0_94] : memref<128x32xf32, #tpu.memory_space<vmem>>, vector<128x32xf32>
    %cst_95 = arith.constant dense<0.000000e+00> : vector<128x32xf32>
    %263 = tpu.matmul %261, %262, %cst_95 {dimension_numbers = #tpu.dot_dimension_numbers<[1], [0], [0], [1], [0, 0, 1, 1], [], []>} : vector<128x128xf32>, vector<128x32xf32>, vector<128x32xf32> -> vector<128x32xf32>
    %c0_96 = arith.constant 0 : index
    %c0_97 = arith.constant 0 : index
    %264 = vector.load %arg12[%c0_96, %c0_97] : memref<8x128xf32, #tpu.memory_space<vmem>>, vector<8x128xf32>
    %cst_98 = arith.constant dense<0.000000e+00> : vector<8x32xf32>
    %265 = tpu.matmul %264, %263, %cst_98 {dimension_numbers = #tpu.dot_dimension_numbers<[1], [0], [0], [1], [0, 0, 1, 1], [], []>} : vector<8x128xf32>, vector<128x32xf32>, vector<8x32xf32> -> vector<8x32xf32>
    %cst_99 = arith.constant 1.562500e-02 : f32
    %266 = vector.broadcast %cst_99 : f32 to vector<8x32xf32>
    %267 = arith.mulf %265, %266 : vector<8x32xf32>
    %268 = vector.extract_strided_slice %267 {offsets = [0, 0], sizes = [8, 16], strides = [1, 1]} : vector<8x32xf32> to vector<8x16xf32>
    %269 = vector.extract_strided_slice %267 {offsets = [0, 16], sizes = [8, 16], strides = [1, 1]} : vector<8x32xf32> to vector<8x16xf32>
    %270 = arith.mulf %268, %268 : vector<8x16xf32>
    %271 = arith.subf %269, %270 : vector<8x16xf32>
    %cst_100 = arith.constant 0.000000e+00 : f32
    %272 = vector.broadcast %cst_100 : f32 to vector<8x16xf32>
    %273 = arith.maximumf %271, %272 : vector<8x16xf32>
    %cst_101 = arith.constant 9.99999974E-6 : f32
    %274 = vector.broadcast %cst_101 : f32 to vector<8x16xf32>
    %275 = arith.addf %273, %274 : vector<8x16xf32>
    %276 = math.rsqrt %275 : vector<8x16xf32>
    %277 = tpu.concatenate %268, %276 in 1 : vector<8x16xf32>, vector<8x16xf32> -> vector<8x32xf32>
    %c0_102 = arith.constant 0 : index
    %c0_103 = arith.constant 0 : index
    %278 = vector.load %arg16[%c0_102, %c0_103] : memref<32x128xf32, #tpu.memory_space<vmem>>, vector<32x128xf32>
    %cst_104 = arith.constant dense<0.000000e+00> : vector<8x128xf32>
    %279 = tpu.matmul %277, %278, %cst_104 {dimension_numbers = #tpu.dot_dimension_numbers<[1], [0], [0], [1], [0, 0, 1, 1], [], []>} : vector<8x32xf32>, vector<32x128xf32>, vector<8x128xf32> -> vector<8x128xf32>
    %280 = vector.extract_strided_slice %279 {offsets = [0, 0], sizes = [8, 64], strides = [1, 1]} : vector<8x128xf32> to vector<8x64xf32>
    %281 = vector.shape_cast %280 : vector<8x64xf32> to vector<8x1x64xf32>
    %282 = vector.shape_cast %281 : vector<8x1x64xf32> to vector<8x1x64xf32>
    %283 = vector.broadcast %282 : vector<8x1x64xf32> to vector<8x16x64xf32>
    %284 = vector.shape_cast %283 : vector<8x16x64xf32> to vector<128x64xf32>
    %285 = vector.extract_strided_slice %279 {offsets = [0, 64], sizes = [8, 64], strides = [1, 1]} : vector<8x128xf32> to vector<8x64xf32>
    %286 = vector.shape_cast %285 : vector<8x64xf32> to vector<8x1x64xf32>
    %287 = vector.shape_cast %286 : vector<8x1x64xf32> to vector<8x1x64xf32>
    %288 = vector.broadcast %287 : vector<8x1x64xf32> to vector<8x16x64xf32>
    %289 = vector.shape_cast %288 : vector<8x16x64xf32> to vector<128x64xf32>
    %290 = arith.subf %253, %284 : vector<128x64xf32>
    %291 = arith.mulf %290, %289 : vector<128x64xf32>
    %292 = vector.broadcast %258 : vector<1x64xf32> to vector<128x64xf32>
    %293 = arith.mulf %291, %292 : vector<128x64xf32>
    %294 = vector.broadcast %259 : vector<1x64xf32> to vector<128x64xf32>
    %295 = arith.addf %293, %294 : vector<128x64xf32>
    %cst_105 = arith.constant 5.000000e-01 : f32
    %296 = vector.broadcast %cst_105 : f32 to vector<128x64xf32>
    %297 = arith.mulf %296, %295 : vector<128x64xf32>
    %cst_106 = arith.constant 0.707106769 : f32
    %298 = vector.broadcast %cst_106 : f32 to vector<128x64xf32>
    %299 = arith.mulf %295, %298 : vector<128x64xf32>
    %300 = math.erf %299 : vector<128x64xf32>
    %cst_107 = arith.constant 1.000000e+00 : f32
    %301 = vector.broadcast %cst_107 : f32 to vector<128x64xf32>
    %302 = arith.addf %301, %300 : vector<128x64xf32>
    %303 = arith.mulf %297, %302 : vector<128x64xf32>
    %c17 = arith.constant 17 : index
    %c0_108 = arith.constant 0 : index
    %304 = vector.load %arg9[%c17, %c0_108] : memref<24x128xf32, #tpu.memory_space<vmem>>, vector<1x64xf32>
    %305 = arith.truncf %303 : vector<128x64xf32> to vector<128x64xbf16>
    %c0_109 = arith.constant 0 : index
    %c0_110 = arith.constant 0 : index
    %306 = vector.load %arg7[%c0_109, %c0_110] : memref<64x192xbf16, #tpu.memory_space<vmem>>, vector<64x192xbf16>
    %cst_111 = arith.constant dense<0.000000e+00> : vector<128x192xf32>
    %307 = tpu.matmul %305, %306, %cst_111 {dimension_numbers = #tpu.dot_dimension_numbers<[1], [0], [0], [1], [0, 0, 1, 1], [], []>} : vector<128x64xbf16>, vector<64x192xbf16>, vector<128x192xf32> -> vector<128x192xf32>
    %308 = vector.extract_strided_slice %307 {offsets = [0, 0], sizes = [128, 64], strides = [1, 1]} : vector<128x192xf32> to vector<128x64xf32>
    %c1_i32_112 = arith.constant 1 : i32
    %309 = tpu.dynamic_rotate %308 by %c1_i32_112 dim 0 : vector<128x64xf32>, i32 -> vector<128x64xf32>
    %310 = vector.extract_strided_slice %163 {offsets = [0, 0], sizes = [128, 1], strides = [1, 1]} : vector<128x2xf32> to vector<128x1xf32>
    %311 = vector.broadcast %310 : vector<128x1xf32> to vector<128x64xf32>
    %312 = arith.mulf %309, %311 : vector<128x64xf32>
    %313 = vector.extract_strided_slice %307 {offsets = [0, 128], sizes = [128, 64], strides = [1, 1]} : vector<128x192xf32> to vector<128x64xf32>
    %c127_i32_113 = arith.constant 127 : i32
    %314 = tpu.dynamic_rotate %313 by %c127_i32_113 dim 0 : vector<128x64xf32>, i32 -> vector<128x64xf32>
    %315 = vector.extract_strided_slice %163 {offsets = [0, 1], sizes = [128, 1], strides = [1, 1]} : vector<128x2xf32> to vector<128x1xf32>
    %316 = vector.broadcast %315 : vector<128x1xf32> to vector<128x64xf32>
    %317 = arith.mulf %314, %316 : vector<128x64xf32>
    %318 = vector.extract_strided_slice %307 {offsets = [0, 64], sizes = [128, 64], strides = [1, 1]} : vector<128x192xf32> to vector<128x64xf32>
    %319 = arith.addf %312, %318 : vector<128x64xf32>
    %320 = arith.addf %319, %317 : vector<128x64xf32>
    %321 = vector.broadcast %304 : vector<1x64xf32> to vector<128x64xf32>
    %322 = arith.addf %320, %321 : vector<128x64xf32>
    %323 = arith.addf %257, %322 : vector<128x64xf32>
    %cst_114 = arith.constant 5.000000e-01 : f32
    %324 = vector.broadcast %cst_114 : f32 to vector<128x64xf32>
    %325 = arith.mulf %324, %323 : vector<128x64xf32>
    %cst_115 = arith.constant 0.707106769 : f32
    %326 = vector.broadcast %cst_115 : f32 to vector<128x64xf32>
    %327 = arith.mulf %323, %326 : vector<128x64xf32>
    %328 = math.erf %327 : vector<128x64xf32>
    %cst_116 = arith.constant 1.000000e+00 : f32
    %329 = vector.broadcast %cst_116 : f32 to vector<128x64xf32>
    %330 = arith.addf %329, %328 : vector<128x64xf32>
    %331 = arith.mulf %325, %330 : vector<128x64xf32>
    %c0_117 = arith.constant 0 : index
    %c0_118 = arith.constant 0 : index
    %332 = vector.load %arg19[%c0_117, %c0_118] : memref<512x2xf32, #tpu.memory_space<vmem>>, vector<512x2xf32>
    %333 = vector.shape_cast %331 : vector<128x64xf32> to vector<128x1x64xf32>
    %334 = vector.shape_cast %333 : vector<128x1x64xf32> to vector<128x1x64xf32>
    %335 = vector.broadcast %334 : vector<128x1x64xf32> to vector<128x4x64xf32>
    %336 = vector.shape_cast %335 : vector<128x4x64xf32> to vector<512x64xf32>
    %c18 = arith.constant 18 : index
    %c0_119 = arith.constant 0 : index
    %337 = vector.load %arg9[%c18, %c0_119] : memref<24x128xf32, #tpu.memory_space<vmem>>, vector<1x64xf32>
    %338 = arith.truncf %336 : vector<512x64xf32> to vector<512x64xbf16>
    %c0_120 = arith.constant 0 : index
    %c0_121 = arith.constant 0 : index
    %339 = vector.load %arg8[%c0_120, %c0_121] : memref<64x192xbf16, #tpu.memory_space<vmem>>, vector<64x192xbf16>
    %cst_122 = arith.constant dense<0.000000e+00> : vector<512x192xf32>
    %340 = tpu.matmul %338, %339, %cst_122 {dimension_numbers = #tpu.dot_dimension_numbers<[1], [0], [0], [1], [0, 0, 1, 1], [], []>} : vector<512x64xbf16>, vector<64x192xbf16>, vector<512x192xf32> -> vector<512x192xf32>
    %341 = vector.extract_strided_slice %340 {offsets = [0, 0], sizes = [512, 64], strides = [1, 1]} : vector<512x192xf32> to vector<512x64xf32>
    %c1_i32_123 = arith.constant 1 : i32
    %342 = tpu.dynamic_rotate %341 by %c1_i32_123 dim 0 : vector<512x64xf32>, i32 -> vector<512x64xf32>
    %343 = vector.extract_strided_slice %332 {offsets = [0, 0], sizes = [512, 1], strides = [1, 1]} : vector<512x2xf32> to vector<512x1xf32>
    %344 = vector.broadcast %343 : vector<512x1xf32> to vector<512x64xf32>
    %345 = arith.mulf %342, %344 : vector<512x64xf32>
    %346 = vector.extract_strided_slice %340 {offsets = [0, 128], sizes = [512, 64], strides = [1, 1]} : vector<512x192xf32> to vector<512x64xf32>
    %c511_i32 = arith.constant 511 : i32
    %347 = tpu.dynamic_rotate %346 by %c511_i32 dim 0 : vector<512x64xf32>, i32 -> vector<512x64xf32>
    %348 = vector.extract_strided_slice %332 {offsets = [0, 1], sizes = [512, 1], strides = [1, 1]} : vector<512x2xf32> to vector<512x1xf32>
    %349 = vector.broadcast %348 : vector<512x1xf32> to vector<512x64xf32>
    %350 = arith.mulf %347, %349 : vector<512x64xf32>
    %351 = vector.extract_strided_slice %340 {offsets = [0, 64], sizes = [512, 64], strides = [1, 1]} : vector<512x192xf32> to vector<512x64xf32>
    %352 = arith.addf %345, %351 : vector<512x64xf32>
    %353 = arith.addf %352, %350 : vector<512x64xf32>
    %354 = vector.broadcast %337 : vector<1x64xf32> to vector<512x64xf32>
    %355 = arith.addf %353, %354 : vector<512x64xf32>
    %cst_124 = arith.constant 5.000000e-01 : f32
    %356 = vector.broadcast %cst_124 : f32 to vector<512x64xf32>
    %357 = arith.mulf %356, %355 : vector<512x64xf32>
    %cst_125 = arith.constant 0.707106769 : f32
    %358 = vector.broadcast %cst_125 : f32 to vector<512x64xf32>
    %359 = arith.mulf %355, %358 : vector<512x64xf32>
    %360 = math.erf %359 : vector<512x64xf32>
    %cst_126 = arith.constant 1.000000e+00 : f32
    %361 = vector.broadcast %cst_126 : f32 to vector<512x64xf32>
    %362 = arith.addf %361, %360 : vector<512x64xf32>
    %363 = arith.mulf %357, %362 : vector<512x64xf32>
    %c1_i32_127 = arith.constant 1 : i32
    %364 = tpu.dynamic_rotate %363 by %c1_i32_127 dim 0 : vector<512x64xf32>, i32 -> vector<512x64xf32>
    %365 = vector.extract_strided_slice %332 {offsets = [0, 0], sizes = [512, 1], strides = [1, 1]} : vector<512x2xf32> to vector<512x1xf32>
    %366 = vector.broadcast %365 : vector<512x1xf32> to vector<512x64xf32>
    %367 = arith.mulf %364, %366 : vector<512x64xf32>
    %c511_i32_128 = arith.constant 511 : i32
    %368 = tpu.dynamic_rotate %363 by %c511_i32_128 dim 0 : vector<512x64xf32>, i32 -> vector<512x64xf32>
    %369 = vector.extract_strided_slice %332 {offsets = [0, 1], sizes = [512, 1], strides = [1, 1]} : vector<512x2xf32> to vector<512x1xf32>
    %370 = vector.broadcast %369 : vector<512x1xf32> to vector<512x64xf32>
    %371 = arith.mulf %368, %370 : vector<512x64xf32>
    %c19 = arith.constant 19 : index
    %c0_129 = arith.constant 0 : index
    %372 = vector.load %arg9[%c19, %c0_129] : memref<24x128xf32, #tpu.memory_space<vmem>>, vector<1x64xf32>
    %373 = vector.broadcast %372 : vector<1x64xf32> to vector<512x64xf32>
    %374 = arith.mulf %367, %373 : vector<512x64xf32>
    %c20 = arith.constant 20 : index
    %c0_130 = arith.constant 0 : index
    %375 = vector.load %arg9[%c20, %c0_130] : memref<24x128xf32, #tpu.memory_space<vmem>>, vector<1x64xf32>
    %376 = vector.broadcast %375 : vector<1x64xf32> to vector<512x64xf32>
    %377 = arith.mulf %363, %376 : vector<512x64xf32>
    %378 = arith.addf %374, %377 : vector<512x64xf32>
    %c21 = arith.constant 21 : index
    %c0_131 = arith.constant 0 : index
    %379 = vector.load %arg9[%c21, %c0_131] : memref<24x128xf32, #tpu.memory_space<vmem>>, vector<1x64xf32>
    %380 = vector.broadcast %379 : vector<1x64xf32> to vector<512x64xf32>
    %381 = arith.mulf %371, %380 : vector<512x64xf32>
    %382 = arith.addf %378, %381 : vector<512x64xf32>
    %383 = tpu.iota {dimensions = array<i32: 0>} : vector<64x64xi32>
    %384 = tpu.iota {dimensions = array<i32: 1>} : vector<64x64xi32>
    %385 = arith.cmpi eq, %383, %384 : vector<64x64xi32>
    %386 = arith.extui %385 : vector<64x64xi1> to vector<64x64xi32>
    %387 = arith.sitofp %386 : vector<64x64xi32> to vector<64x64xf32>
    %388 = vector.shape_cast %382 : vector<512x64xf32> to vector<8x64x64xf32>
    %cst_132 = arith.constant dense<0.000000e+00> : vector<8x64xf32>
    %389 = vector.multi_reduction <add>, %388, %cst_132 [2] : vector<8x64x64xf32> to vector<8x64xf32>
    %390 = vector.shape_cast %389 : vector<8x64xf32> to vector<8x64x1xf32>
    %391 = vector.shape_cast %387 : vector<64x64xf32> to vector<1x64x64xf32>
    %392 = vector.broadcast %390 : vector<8x64x1xf32> to vector<8x64x64xf32>
    %393 = vector.broadcast %391 : vector<1x64x64xf32> to vector<8x64x64xf32>
    %394 = arith.mulf %392, %393 : vector<8x64x64xf32>
    %cst_133 = arith.constant dense<0.000000e+00> : vector<8x64xf32>
    %395 = vector.multi_reduction <add>, %394, %cst_133 [1] : vector<8x64x64xf32> to vector<8x64xf32>
    %c22 = arith.constant 22 : index
    %c0_134 = arith.constant 0 : index
    %396 = vector.load %arg9[%c22, %c0_134] : memref<24x128xf32, #tpu.memory_space<vmem>>, vector<1x1xf32>
    %397 = vector.broadcast %396 : vector<1x1xf32> to vector<8x64xf32>
    %398 = arith.addf %395, %397 : vector<8x64xf32>
    %cst_135 = arith.constant dense<0.000000e+00> : vector<8xf32>
    %399 = vector.multi_reduction <add>, %398, %cst_135 [1] : vector<8x64xf32> to vector<8xf32>
    %400 = vector.shape_cast %399 : vector<8xf32> to vector<8x1xf32>
    %cst_136 = arith.constant 1.562500e-02 : f32
    %401 = vector.broadcast %cst_136 : f32 to vector<8x1xf32>
    %402 = arith.mulf %400, %401 : vector<8x1xf32>
    %403 = vector.broadcast %402 : vector<8x1xf32> to vector<8x64xf32>
    %404 = arith.subf %398, %403 : vector<8x64xf32>
    %405 = arith.mulf %404, %404 : vector<8x64xf32>
    %cst_137 = arith.constant dense<0.000000e+00> : vector<8xf32>
    %406 = vector.multi_reduction <add>, %405, %cst_137 [1] : vector<8x64xf32> to vector<8xf32>
    %407 = vector.shape_cast %406 : vector<8xf32> to vector<8x1xf32>
    %cst_138 = arith.constant 0.0158730168 : f32
    %408 = vector.broadcast %cst_138 : f32 to vector<8x1xf32>
    %409 = arith.mulf %407, %408 : vector<8x1xf32>
    %410 = math.sqrt %409 : vector<8x1xf32>
    %cst_139 = arith.constant 9.99999993E-9 : f32
    %411 = vector.broadcast %cst_139 : f32 to vector<8x1xf32>
    %412 = arith.addf %410, %411 : vector<8x1xf32>
    %413 = vector.broadcast %412 : vector<8x1xf32> to vector<8x64xf32>
    %414 = arith.divf %404, %413 : vector<8x64xf32>
    %cst_140 = arith.constant 0.000000e+00 : f32
    %415 = vector.broadcast %cst_140 : f32 to vector<8x62xf32>
    %416 = tpu.concatenate %414, %402, %410, %415 in 1 : vector<8x64xf32>, vector<8x1xf32>, vector<8x1xf32>, vector<8x62xf32> -> vector<8x128xf32>
    %c0_141 = arith.constant 0 : index
    %c0_142 = arith.constant 0 : index
    %417 = vector.load %arg20[%c0_141, %c0_142] : memref<8x128xf32, #tpu.memory_space<vmem>>, vector<8x128xf32>
    tpu.vector_store %arg20[%c0_141, %c0_142], %416 {strides = array<i32>} : memref<8x128xf32, #tpu.memory_space<vmem>>, vector<8x128xf32>,
    return
  }
  func.func @transform_0(%arg0: i32) -> (i32, i32) {
    %c0_i32 = arith.constant 0 : i32
    %c0_i32_0 = arith.constant 0 : i32
    return %arg0, %c0_i32 : i32, i32
  }
  func.func @transform_1(%arg0: i32) -> (i32, i32) {
    %c0_i32 = arith.constant 0 : i32
    %c0_i32_0 = arith.constant 0 : i32
    %c0_i32_1 = arith.constant 0 : i32
    return %c0_i32, %c0_i32_0 : i32, i32
  }
  func.func @transform_2(%arg0: i32) -> (i32, i32) {
    %c0_i32 = arith.constant 0 : i32
    %c0_i32_0 = arith.constant 0 : i32
    %c0_i32_1 = arith.constant 0 : i32
    return %c0_i32, %c0_i32_0 : i32, i32
  }
  func.func @transform_3(%arg0: i32) -> (i32, i32) {
    %c0_i32 = arith.constant 0 : i32
    %c0_i32_0 = arith.constant 0 : i32
    %c0_i32_1 = arith.constant 0 : i32
    return %c0_i32, %c0_i32_0 : i32, i32
  }
  func.func @transform_4(%arg0: i32) -> (i32, i32) {
    %c0_i32 = arith.constant 0 : i32
    %c0_i32_0 = arith.constant 0 : i32
    %c0_i32_1 = arith.constant 0 : i32
    return %c0_i32, %c0_i32_0 : i32, i32
  }
  func.func @transform_5(%arg0: i32) -> (i32, i32) {
    %c0_i32 = arith.constant 0 : i32
    %c0_i32_0 = arith.constant 0 : i32
    %c0_i32_1 = arith.constant 0 : i32
    return %c0_i32, %c0_i32_0 : i32, i32
  }
  func.func @transform_6(%arg0: i32) -> (i32, i32) {
    %c0_i32 = arith.constant 0 : i32
    %c0_i32_0 = arith.constant 0 : i32
    %c0_i32_1 = arith.constant 0 : i32
    return %c0_i32, %c0_i32_0 : i32, i32
  }
  func.func @transform_7(%arg0: i32) -> (i32, i32) {
    %c0_i32 = arith.constant 0 : i32
    %c0_i32_0 = arith.constant 0 : i32
    %c0_i32_1 = arith.constant 0 : i32
    return %c0_i32, %c0_i32_0 : i32, i32
  }
  func.func @transform_8(%arg0: i32) -> (i32, i32) {
    %c0_i32 = arith.constant 0 : i32
    %c0_i32_0 = arith.constant 0 : i32
    %c0_i32_1 = arith.constant 0 : i32
    return %c0_i32, %c0_i32_0 : i32, i32
  }
  func.func @transform_9(%arg0: i32) -> (i32, i32) {
    %c0_i32 = arith.constant 0 : i32
    %c0_i32_0 = arith.constant 0 : i32
    %c0_i32_1 = arith.constant 0 : i32
    return %c0_i32, %c0_i32_0 : i32, i32
  }
  func.func @transform_10(%arg0: i32) -> (i32, i32) {
    %c0_i32 = arith.constant 0 : i32
    %c0_i32_0 = arith.constant 0 : i32
    %c0_i32_1 = arith.constant 0 : i32
    return %c0_i32, %c0_i32_0 : i32, i32
  }
  func.func @transform_11(%arg0: i32) -> (i32, i32) {
    %c0_i32 = arith.constant 0 : i32
    %c0_i32_0 = arith.constant 0 : i32
    %c0_i32_1 = arith.constant 0 : i32
    return %c0_i32, %c0_i32_0 : i32, i32
  }
  func.func @transform_12(%arg0: i32) -> (i32, i32) {
    %c0_i32 = arith.constant 0 : i32
    %c0_i32_0 = arith.constant 0 : i32
    %c0_i32_1 = arith.constant 0 : i32
    return %c0_i32, %c0_i32_0 : i32, i32
  }
  func.func @transform_13(%arg0: i32) -> (i32, i32) {
    %c0_i32 = arith.constant 0 : i32
    %c0_i32_0 = arith.constant 0 : i32
    %c0_i32_1 = arith.constant 0 : i32
    return %c0_i32, %c0_i32_0 : i32, i32
  }
  func.func @transform_14(%arg0: i32) -> (i32, i32) {
    %c0_i32 = arith.constant 0 : i32
    %c0_i32_0 = arith.constant 0 : i32
    %c0_i32_1 = arith.constant 0 : i32
    return %c0_i32, %c0_i32_0 : i32, i32
  }
  func.func @transform_15(%arg0: i32) -> (i32, i32) {
    %c0_i32 = arith.constant 0 : i32
    %c0_i32_0 = arith.constant 0 : i32
    %c0_i32_1 = arith.constant 0 : i32
    return %c0_i32, %c0_i32_0 : i32, i32
  }
  func.func @transform_16(%arg0: i32) -> (i32, i32) {
    %c0_i32 = arith.constant 0 : i32
    %c0_i32_0 = arith.constant 0 : i32
    %c0_i32_1 = arith.constant 0 : i32
    return %c0_i32, %c0_i32_0 : i32, i32
  }
  func.func @transform_17(%arg0: i32) -> (i32, i32) {
    %c0_i32 = arith.constant 0 : i32
    %c0_i32_0 = arith.constant 0 : i32
    %c0_i32_1 = arith.constant 0 : i32
    return %c0_i32, %c0_i32_0 : i32, i32
  }
  func.func @transform_18(%arg0: i32) -> (i32, i32) {
    %c0_i32 = arith.constant 0 : i32
    %c0_i32_0 = arith.constant 0 : i32
    %c0_i32_1 = arith.constant 0 : i32
    return %c0_i32, %c0_i32_0 : i32, i32
  }
  func.func @transform_19(%arg0: i32) -> (i32, i32) {
    %c0_i32 = arith.constant 0 : i32
    %c0_i32_0 = arith.constant 0 : i32
    return %arg0, %c0_i32 : i32, i32
  }
}

</mosaic_0001>

<llo_original>
// kernel: tpu_custom_call.1
$region0: #{tpu_custom_call.1}
  #allocation0 [shape = 'u32[]', space=smem, size = 0x4, offset = 0x4, fixed_abs, tag = 'smem constant byte address 0x4 - core index']
  #allocation1 [shape = 'u32[144,128]{1,0:T(1,128)}', space=vmem, size = 0x12000, scoped, tag = 'internal scratch']
  %s0 = inlined_call_operand.hbm [shape: f32[16,32], index: 0, kind: input, shape index: {}]
  %s1 = inlined_call_operand.vmem [shape: bf16[32,512], index: 1, kind: input, shape index: {}]
  %s2 = inlined_call_operand.vmem [shape: bf16[128,384], index: 2, kind: input, shape index: {}]
  %s3 = inlined_call_operand.vmem [shape: bf16[128,384], index: 3, kind: input, shape index: {}]
  %s4 = inlined_call_operand.vmem [shape: bf16[128,384], index: 4, kind: input, shape index: {}]
  %s5 = inlined_call_operand.vmem [shape: bf16[256,256], index: 5, kind: input, shape index: {}]
  %s6 = inlined_call_operand.vmem [shape: bf16[64,192], index: 6, kind: input, shape index: {}]
  %s7 = inlined_call_operand.vmem [shape: bf16[64,192], index: 7, kind: input, shape index: {}]
  %s8 = inlined_call_operand.hbm [shape: f32[24,128], index: 8, kind: input, shape index: {}]
  %s9 = inlined_call_operand.vmem [shape: f32[32,32], index: 9, kind: input, shape index: {}]
  %s10 = inlined_call_operand.hbm [shape: f32[8,32], index: 10, kind: input, shape index: {}]
  %s11 = inlined_call_operand.hbm [shape: f32[8,128], index: 11, kind: input, shape index: {}]
  %s12 = inlined_call_operand.vmem [shape: f32[256,32], index: 12, kind: input, shape index: {}]
  %s13 = inlined_call_operand.vmem [shape: f32[32,256], index: 13, kind: input, shape index: {}]
  %s14 = inlined_call_operand.vmem [shape: f32[128,32], index: 14, kind: input, shape index: {}]
  %s15 = inlined_call_operand.hbm [shape: f32[32,128], index: 15, kind: input, shape index: {}]
  %s16 = inlined_call_operand.vmem [shape: f32[32,2], index: 16, kind: input, shape index: {}]
  %s17 = inlined_call_operand.vmem [shape: f32[128,2], index: 17, kind: input, shape index: {}]
  %s18 = inlined_call_operand.vmem [shape: f32[512,2], index: 18, kind: input, shape index: {}]
  %s19 = inlined_call_operand.hbm [shape: f32[16,128], index: 19, kind: output, shape index: {}]
  %s20 = sld [smem:[#allocation0]]
  $region129: #{tpu_custom_call.1} parent=0
    _
  %s22 = ssub.s32 1, %s20
  %s23 = scalar_select 0, %s22, %s20
  $region1: #{tpu_custom_call.1} parent=0
    #allocation2 [shape = 'u8[8192]{0}', space=vmem, size = 0x2000, scoped, tag = 'input window, operand 0']
    #allocation3 [shape = 's32[2]{0}', space=sflag, size = 0x8, scoped, tag = 'scoped memory for tpu_custom_call.1']
    #allocation4 [shape = 's32[2]{0}', space=sflag, size = 0x8, scoped, tag = 'scoped memory for tpu_custom_call.1']
    #allocation5 [shape = 'u8[12288]{0}', space=vmem, size = 0x3000, scoped, tag = 'input window, operand 8, single buffered']
    #allocation6 [shape = 's32[1]{0}', space=sflag, size = 0x4, scoped, tag = 'scoped memory for tpu_custom_call.1']
    #allocation7 [shape = 'u8[4096]{0}', space=vmem, size = 0x1000, scoped, tag = 'input window, operand 10, single buffered']
    #allocation8 [shape = 'u8[4096]{0}', space=vmem, size = 0x1000, scoped, tag = 'input window, operand 11, single buffered']
    #allocation9 [shape = 's32[1]{0}', space=sflag, size = 0x4, scoped, tag = 'scoped memory for tpu_custom_call.1']
    #allocation10 [shape = 'u8[16384]{0}', space=vmem, size = 0x4000, scoped, tag = 'input window, operand 15, single buffered']
    #allocation11 [shape = 'u8[8192]{0}', space=vmem, size = 0x2000, scoped, tag = 'output window, operand 0']
    %24 = vsyncpa [#allocation3], 0
    %s25 = scalar_lea.sflag [#allocation3], 1
    %26 = vsyncpa %s25, 0
    %27 = vsyncpa [#allocation6], 0
    %28 = vsyncpa [#allocation9], 0
    %29 = vsyncpa [#allocation4], 0
    %s30 = scalar_lea.sflag [#allocation4], 1
    %31 = vsyncpa %s30, 0
    loop: start=0, step=1, limit=4
    $region2: #{tpu_custom_call.1} parent=1 // loop_pre_header
      _
    $region3: #{tpu_custom_call.1} parent=1 // loop_header
      %s33 = sphi 0, %s37
      %p34 = scmp.ge.s32.totalorder %s33, 4
      %s43 = sphi 0, %s45
      %s46 = sphi 0, %s43
      %s47 = sphi 0, %s46
      %s63 = sphi 0, %s47
      %s67 = sphi 0, %s67
      %s69 = sphi 0, %s67
      %s70 = sphi 0, %s69
      %s84 = sphi 0, %s70
      %s88 = sphi 0, %s88
      %s90 = sphi 0, %s88
      %s91 = sphi 0, %s90
      %s105 = sphi 0, %s91
      %s109 = sphi 0, %s109
      %s111 = sphi 0, %s109
      %s112 = sphi 0, %s111
      %s126 = sphi 0, %s112
      %s130 = sphi 0, %s130
      %s132 = sphi 0, %s130
      %s133 = sphi 0, %s132
      %s147 = sphi 0, %s133
      %s151 = sphi 0, %s151
      %s153 = sphi 0, %s151
      %s154 = sphi 0, %s153
      %s168 = sphi 0, %s154
      %s172 = sphi 0, %s172
      %s174 = sphi 0, %s172
      %s175 = sphi 0, %s174
      %s189 = sphi 0, %s175
      %s193 = sphi 0, %s193
      %s195 = sphi 0, %s193
      %s196 = sphi 0, %s195
      %s210 = sphi 0, %s196
      %s214 = sphi 0, %s214
      %s216 = sphi 0, %s214
      %s217 = sphi 0, %s216
      %s231 = sphi 0, %s217
      %s235 = sphi 0, %s235
      %s237 = sphi 0, %s235
      %s238 = sphi 0, %s237
      %s252 = sphi 0, %s238
      %s256 = sphi 0, %s256
      %s258 = sphi 0, %s256
      %s259 = sphi 0, %s258
      %s273 = sphi 0, %s259
      %s277 = sphi 0, %s277
      %s279 = sphi 0, %s277
      %s280 = sphi 0, %s279
      %s294 = sphi 0, %s280
      %s298 = sphi 0, %s298
      %s300 = sphi 0, %s298
      %s301 = sphi 0, %s300
      %s315 = sphi 0, %s301
      %s319 = sphi 0, %s319
      %s321 = sphi 0, %s319
      %s322 = sphi 0, %s321
      %s336 = sphi 0, %s322
      %s340 = sphi 0, %s340
      %s342 = sphi 0, %s340
      %s343 = sphi 0, %s342
      %s357 = sphi 0, %s343
      %s361 = sphi 0, %s361
      %s363 = sphi 0, %s361
      %s364 = sphi 0, %s363
      %s378 = sphi 0, %s364
      %s382 = sphi 0, %s382
      %s384 = sphi 0, %s382
      %s385 = sphi 0, %s384
      %s399 = sphi 0, %s385
      %s403 = sphi 0, %s403
      %s405 = sphi 0, %s403
      %s406 = sphi 0, %s405
      %s420 = sphi 0, %s406
      %s424 = sphi 0, %s424
      %s426 = sphi 0, %s424
      %s427 = sphi 0, %s426
      %s441 = sphi 0, %s427
      %s447 = sphi 0, %s449
      %s450 = sphi 0, %s447
      %s451 = sphi 0, %s450
      %s467 = sphi 0, %s451
    $region4: #{tpu_custom_call.1} parent=1 // loop_header_branch
      %36 = sbr.rel (%p34) target = $region8
    $region5: #{tpu_custom_call.1} parent=1 // loop_body
      %s38 = ssub.s32 %s33, 1
      %s39 = ssub.s32 %s33, 2
      %s40 = sadd.s32 %s33, 1
      %s41 = ssub.s32 %s33, %s40
      %p42 = scmp.eq.s32.totalorder %s41, 0
      %s44 = sadd.s32 %s43, 1
      %s45 = scalar_select %p42, %s43, %s44
      %p48 = pneg %p42
      %p49 = scmp.eq.s32.totalorder %s33, 1
      %p50 = por %p48, %p49
      %p51 = scmp.ne.s32.totalorder %s43, %s46
      %p52 = scmp.eq.s32.totalorder %s33, 0
      %p53 = por %p51, %p52
      %p54 = scmp.ne.s32.totalorder %s43, %s46
      %p55 = scmp.eq.s32.totalorder %s38, 1
      %p56 = por %p54, %p55
      %p57 = scmp.ne.s32.totalorder %s46, %s47
      %p58 = scmp.eq.s32.totalorder %s38, 0
      %p59 = por %p57, %p58
      %p60 = scmp.ne.s32.totalorder %s46, %s47
      %p61 = scmp.eq.s32.totalorder %s39, 1
      %p62 = por %p60, %p61
      %p64 = scmp.ne.s32.totalorder %s47, %s63
      %p65 = scmp.eq.s32.totalorder %s39, 0
      %p66 = por %p64, %p65
      %s68 = sadd.s32 %s67, 1
      %p71 = scmp.eq.s32.totalorder %s33, 1
      %p72 = scmp.ne.s32.totalorder %s67, %s69
      %p73 = scmp.eq.s32.totalorder %s33, 0
      %p74 = por %p72, %p73
      %p75 = scmp.ne.s32.totalorder %s67, %s69
      %p76 = scmp.eq.s32.totalorder %s38, 1
      %p77 = por %p75, %p76
      %p78 = scmp.ne.s32.totalorder %s69, %s70
      %p79 = scmp.eq.s32.totalorder %s38, 0
      %p80 = por %p78, %p79
      %p81 = scmp.ne.s32.totalorder %s69, %s70
      %p82 = scmp.eq.s32.totalorder %s39, 1
      %p83 = por %p81, %p82
      %p85 = scmp.ne.s32.totalorder %s70, %s84
      %p86 = scmp.eq.s32.totalorder %s39, 0
      %p87 = por %p85, %p86
      %s89 = sadd.s32 %s88, 1
      %p92 = scmp.eq.s32.totalorder %s33, 1
      %p93 = scmp.ne.s32.totalorder %s88, %s90
      %p94 = scmp.eq.s32.totalorder %s33, 0
      %p95 = por %p93, %p94
      %p96 = scmp.ne.s32.totalorder %s88, %s90
      %p97 = scmp.eq.s32.totalorder %s38, 1
      %p98 = por %p96, %p97
      %p99 = scmp.ne.s32.totalorder %s90, %s91
      %p100 = scmp.eq.s32.totalorder %s38, 0
      %p101 = por %p99, %p100
      %p102 = scmp.ne.s32.totalorder %s90, %s91
      %p103 = scmp.eq.s32.totalorder %s39, 1
      %p104 = por %p102, %p103
      %p106 = scmp.ne.s32.totalorder %s91, %s105
      %p107 = scmp.eq.s32.totalorder %s39, 0
      %p108 = por %p106, %p107
      %s110 = sadd.s32 %s109, 1
      %p113 = scmp.eq.s32.totalorder %s33, 1
      %p114 = scmp.ne.s32.totalorder %s109, %s111
      %p115 = scmp.eq.s32.totalorder %s33, 0
      %p116 = por %p114, %p115
      %p117 = scmp.ne.s32.totalorder %s109, %s111
      %p118 = scmp.eq.s32.totalorder %s38, 1
      %p119 = por %p117, %p118
      %p120 = scmp.ne.s32.totalorder %s111, %s112
      %p121 = scmp.eq.s32.totalorder %s38, 0
      %p122 = por %p120, %p121
      %p123 = scmp.ne.s32.totalorder %s111, %s112
      %p124 = scmp.eq.s32.totalorder %s39, 1
      %p125 = por %p123, %p124
      %p127 = scmp.ne.s32.totalorder %s112, %s126
      %p128 = scmp.eq.s32.totalorder %s39, 0
      %p129 = por %p127, %p128
      %s131 = sadd.s32 %s130, 1
      %p134 = scmp.eq.s32.totalorder %s33, 1
      %p135 = scmp.ne.s32.totalorder %s130, %s132
      %p136 = scmp.eq.s32.totalorder %s33, 0
      %p137 = por %p135, %p136
      %p138 = scmp.ne.s32.totalorder %s130, %s132
      %p139 = scmp.eq.s32.totalorder %s38, 1
      %p140 = por %p138, %p139
      %p141 = scmp.ne.s32.totalorder %s132, %s133
      %p142 = scmp.eq.s32.totalorder %s38, 0
      %p143 = por %p141, %p142
      %p144 = scmp.ne.s32.totalorder %s132, %s133
      %p145 = scmp.eq.s32.totalorder %s39, 1
      %p146 = por %p144, %p145
      %p148 = scmp.ne.s32.totalorder %s133, %s147
      %p149 = scmp.eq.s32.totalorder %s39, 0
      %p150 = por %p148, %p149
      %s152 = sadd.s32 %s151, 1
      %p155 = scmp.eq.s32.totalorder %s33, 1
      %p156 = scmp.ne.s32.totalorder %s151, %s153
      %p157 = scmp.eq.s32.totalorder %s33, 0
      %p158 = por %p156, %p157
      %p159 = scmp.ne.s32.totalorder %s151, %s153
      %p160 = scmp.eq.s32.totalorder %s38, 1
      %p161 = por %p159, %p160
      %p162 = scmp.ne.s32.totalorder %s153, %s154
      %p163 = scmp.eq.s32.totalorder %s38, 0
      %p164 = por %p162, %p163
      %p165 = scmp.ne.s32.totalorder %s153, %s154
      %p166 = scmp.eq.s32.totalorder %s39, 1
      %p167 = por %p165, %p166
      %p169 = scmp.ne.s32.totalorder %s154, %s168
      %p170 = scmp.eq.s32.totalorder %s39, 0
      %p171 = por %p169, %p170
      %s173 = sadd.s32 %s172, 1
      %p176 = scmp.eq.s32.totalorder %s33, 1
      %p177 = scmp.ne.s32.totalorder %s172, %s174
      %p178 = scmp.eq.s32.totalorder %s33, 0
      %p179 = por %p177, %p178
      %p180 = scmp.ne.s32.totalorder %s172, %s174
      %p181 = scmp.eq.s32.totalorder %s38, 1
      %p182 = por %p180, %p181
      %p183 = scmp.ne.s32.totalorder %s174, %s175
      %p184 = scmp.eq.s32.totalorder %s38, 0
      %p185 = por %p183, %p184
      %p186 = scmp.ne.s32.totalorder %s174, %s175
      %p187 = scmp.eq.s32.totalorder %s39, 1
      %p188 = por %p186, %p187
      %p190 = scmp.ne.s32.totalorder %s175, %s189
      %p191 = scmp.eq.s32.totalorder %s39, 0
      %p192 = por %p190, %p191
      %s194 = sadd.s32 %s193, 1
      %p197 = scmp.eq.s32.totalorder %s33, 1
      %p198 = scmp.ne.s32.totalorder %s193, %s195
      %p199 = scmp.eq.s32.totalorder %s33, 0
      %p200 = por %p198, %p199
      %p201 = scmp.ne.s32.totalorder %s193, %s195
      %p202 = scmp.eq.s32.totalorder %s38, 1
      %p203 = por %p201, %p202
      %p204 = scmp.ne.s32.totalorder %s195, %s196
      %p205 = scmp.eq.s32.totalorder %s38, 0
      %p206 = por %p204, %p205
      %p207 = scmp.ne.s32.totalorder %s195, %s196
      %p208 = scmp.eq.s32.totalorder %s39, 1
      %p209 = por %p207, %p208
      %p211 = scmp.ne.s32.totalorder %s196, %s210
      %p212 = scmp.eq.s32.totalorder %s39, 0
      %p213 = por %p211, %p212
      %s215 = sadd.s32 %s214, 1
      %p218 = scmp.eq.s32.totalorder %s33, 1
      %p219 = scmp.ne.s32.totalorder %s214, %s216
      %p220 = scmp.eq.s32.totalorder %s33, 0
      %p221 = por %p219, %p220
      %p222 = scmp.ne.s32.totalorder %s214, %s216
      %p223 = scmp.eq.s32.totalorder %s38, 1
      %p224 = por %p222, %p223
      %p225 = scmp.ne.s32.totalorder %s216, %s217
      %p226 = scmp.eq.s32.totalorder %s38, 0
      %p227 = por %p225, %p226
      %p228 = scmp.ne.s32.totalorder %s216, %s217
      %p229 = scmp.eq.s32.totalorder %s39, 1
      %p230 = por %p228, %p229
      %p232 = scmp.ne.s32.totalorder %s217, %s231
      %p233 = scmp.eq.s32.totalorder %s39, 0
      %p234 = por %p232, %p233
      %s236 = sadd.s32 %s235, 1
      %p239 = scmp.eq.s32.totalorder %s33, 1
      %p240 = scmp.ne.s32.totalorder %s235, %s237
      %p241 = scmp.eq.s32.totalorder %s33, 0
      %p242 = por %p240, %p241
      %p243 = scmp.ne.s32.totalorder %s235, %s237
      %p244 = scmp.eq.s32.totalorder %s38, 1
      %p245 = por %p243, %p244
      %p246 = scmp.ne.s32.totalorder %s237, %s238
      %p247 = scmp.eq.s32.totalorder %s38, 0
      %p248 = por %p246, %p247
      %p249 = scmp.ne.s32.totalorder %s237, %s238
      %p250 = scmp.eq.s32.totalorder %s39, 1
      %p251 = por %p249, %p250
      %p253 = scmp.ne.s32.totalorder %s238, %s252
      %p254 = scmp.eq.s32.totalorder %s39, 0
      %p255 = por %p253, %p254
      %s257 = sadd.s32 %s256, 1
      %p260 = scmp.eq.s32.totalorder %s33, 1
      %p261 = scmp.ne.s32.totalorder %s256, %s258
      %p262 = scmp.eq.s32.totalorder %s33, 0
      %p263 = por %p261, %p262
      %p264 = scmp.ne.s32.totalorder %s256, %s258
      %p265 = scmp.eq.s32.totalorder %s38, 1
      %p266 = por %p264, %p265
      %p267 = scmp.ne.s32.totalorder %s258, %s259
      %p268 = scmp.eq.s32.totalorder %s38, 0
      %p269 = por %p267, %p268
      %p270 = scmp.ne.s32.totalorder %s258, %s259
      %p271 = scmp.eq.s32.totalorder %s39, 1
      %p272 = por %p270, %p271
      %p274 = scmp.ne.s32.totalorder %s259, %s273
      %p275 = scmp.eq.s32.totalorder %s39, 0
      %p276 = por %p274, %p275
      %s278 = sadd.s32 %s277, 1
      %p281 = scmp.eq.s32.totalorder %s33, 1
      %p282 = scmp.ne.s32.totalorder %s277, %s279
      %p283 = scmp.eq.s32.totalorder %s33, 0
      %p284 = por %p282, %p283
      %p285 = scmp.ne.s32.totalorder %s277, %s279
      %p286 = scmp.eq.s32.totalorder %s38, 1
      %p287 = por %p285, %p286
      %p288 = scmp.ne.s32.totalorder %s279, %s280
      %p289 = scmp.eq.s32.totalorder %s38, 0
      %p290 = por %p288, %p289
      %p291 = scmp.ne.s32.totalorder %s279, %s280
      %p292 = scmp.eq.s32.totalorder %s39, 1
      %p293 = por %p291, %p292
      %p295 = scmp.ne.s32.totalorder %s280, %s294
      %p296 = scmp.eq.s32.totalorder %s39, 0
      %p297 = por %p295, %p296
      %s299 = sadd.s32 %s298, 1
      %p302 = scmp.eq.s32.totalorder %s33, 1
      %p303 = scmp.ne.s32.totalorder %s298, %s300
      %p304 = scmp.eq.s32.totalorder %s33, 0
      %p305 = por %p303, %p304
      %p306 = scmp.ne.s32.totalorder %s298, %s300
      %p307 = scmp.eq.s32.totalorder %s38, 1
      %p308 = por %p306, %p307
      %p309 = scmp.ne.s32.totalorder %s300, %s301
      %p310 = scmp.eq.s32.totalorder %s38, 0
      %p311 = por %p309, %p310
      %p312 = scmp.ne.s32.totalorder %s300, %s301
      %p313 = scmp.eq.s32.totalorder %s39, 1
      %p314 = por %p312, %p313
      %p316 = scmp.ne.s32.totalorder %s301, %s315
      %p317 = scmp.eq.s32.totalorder %s39, 0
      %p318 = por %p316, %p317
      %s320 = sadd.s32 %s319, 1
      %p323 = scmp.eq.s32.totalorder %s33, 1
      %p324 = scmp.ne.s32.totalorder %s319, %s321
      %p325 = scmp.eq.s32.totalorder %s33, 0
      %p326 = por %p324, %p325
      %p327 = scmp.ne.s32.totalorder %s319, %s321
      %p328 = scmp.eq.s32.totalorder %s38, 1
      %p329 = por %p327, %p328
      %p330 = scmp.ne.s32.totalorder %s321, %s322
      %p331 = scmp.eq.s32.totalorder %s38, 0
      %p332 = por %p330, %p331
      %p333 = scmp.ne.s32.totalorder %s321, %s322
      %p334 = scmp.eq.s32.totalorder %s39, 1
      %p335 = por %p333, %p334
      %p337 = scmp.ne.s32.totalorder %s322, %s336
      %p338 = scmp.eq.s32.totalorder %s39, 0
      %p339 = por %p337, %p338
      %s341 = sadd.s32 %s340, 1
      %p344 = scmp.eq.s32.totalorder %s33, 1
      %p345 = scmp.ne.s32.totalorder %s340, %s342
      %p346 = scmp.eq.s32.totalorder %s33, 0
      %p347 = por %p345, %p346
      %p348 = scmp.ne.s32.totalorder %s340, %s342
      %p349 = scmp.eq.s32.totalorder %s38, 1
      %p350 = por %p348, %p349
      %p351 = scmp.ne.s32.totalorder %s342, %s343
      %p352 = scmp.eq.s32.totalorder %s38, 0
      %p353 = por %p351, %p352
      %p354 = scmp.ne.s32.totalorder %s342, %s343
      %p355 = scmp.eq.s32.totalorder %s39, 1
      %p356 = por %p354, %p355
      %p358 = scmp.ne.s32.totalorder %s343, %s357
      %p359 = scmp.eq.s32.totalorder %s39, 0
      %p360 = por %p358, %p359
      %s362 = sadd.s32 %s361, 1
      %p365 = scmp.eq.s32.totalorder %s33, 1
      %p366 = scmp.ne.s32.totalorder %s361, %s363
      %p367 = scmp.eq.s32.totalorder %s33, 0
      %p368 = por %p366, %p367
      %p369 = scmp.ne.s32.totalorder %s361, %s363
      %p370 = scmp.eq.s32.totalorder %s38, 1
      %p371 = por %p369, %p370
      %p372 = scmp.ne.s32.totalorder %s363, %s364
      %p373 = scmp.eq.s32.totalorder %s38, 0
      %p374 = por %p372, %p373
      %p375 = scmp.ne.s32.totalorder %s363, %s364
      %p376 = scmp.eq.s32.totalorder %s39, 1
      %p377 = por %p375, %p376
      %p379 = scmp.ne.s32.totalorder %s364, %s378
      %p380 = scmp.eq.s32.totalorder %s39, 0
      %p381 = por %p379, %p380
      %s383 = sadd.s32 %s382, 1
      %p386 = scmp.eq.s32.totalorder %s33, 1
      %p387 = scmp.ne.s32.totalorder %s382, %s384
      %p388 = scmp.eq.s32.totalorder %s33, 0
      %p389 = por %p387, %p388
      %p390 = scmp.ne.s32.totalorder %s382, %s384
      %p391 = scmp.eq.s32.totalorder %s38, 1
      %p392 = por %p390, %p391
      %p393 = scmp.ne.s32.totalorder %s384, %s385
      %p394 = scmp.eq.s32.totalorder %s38, 0
      %p395 = por %p393, %p394
      %p396 = scmp.ne.s32.totalorder %s384, %s385
      %p397 = scmp.eq.s32.totalorder %s39, 1
      %p398 = por %p396, %p397
      %p400 = scmp.ne.s32.totalorder %s385, %s399
      %p401 = scmp.eq.s32.totalorder %s39, 0
      %p402 = por %p400, %p401
      %s404 = sadd.s32 %s403, 1
      %p407 = scmp.eq.s32.totalorder %s33, 1
      %p408 = scmp.ne.s32.totalorder %s403, %s405
      %p409 = scmp.eq.s32.totalorder %s33, 0
      %p410 = por %p408, %p409
      %p411 = scmp.ne.s32.totalorder %s403, %s405
      %p412 = scmp.eq.s32.totalorder %s38, 1
      %p413 = por %p411, %p412
      %p414 = scmp.ne.s32.totalorder %s405, %s406
      %p415 = scmp.eq.s32.totalorder %s38, 0
      %p416 = por %p414, %p415
      %p417 = scmp.ne.s32.totalorder %s405, %s406
      %p418 = scmp.eq.s32.totalorder %s39, 1
      %p419 = por %p417, %p418
      %p421 = scmp.ne.s32.totalorder %s406, %s420
      %p422 = scmp.eq.s32.totalorder %s39, 0
      %p423 = por %p421, %p422
      %s425 = sadd.s32 %s424, 1
      %p428 = scmp.eq.s32.totalorder %s33, 1
      %p429 = scmp.ne.s32.totalorder %s424, %s426
      %p430 = scmp.eq.s32.totalorder %s33, 0
      %p431 = por %p429, %p430
      %p432 = scmp.ne.s32.totalorder %s424, %s426
      %p433 = scmp.eq.s32.totalorder %s38, 1
      %p434 = por %p432, %p433
      %p435 = scmp.ne.s32.totalorder %s426, %s427
      %p436 = scmp.eq.s32.totalorder %s38, 0
      %p437 = por %p435, %p436
      %p438 = scmp.ne.s32.totalorder %s426, %s427
      %p439 = scmp.eq.s32.totalorder %s39, 1
      %p440 = por %p438, %p439
      %p442 = scmp.ne.s32.totalorder %s427, %s441
      %p443 = scmp.eq.s32.totalorder %s39, 0
      %p444 = por %p442, %p443
      %s445 = ssub.s32 %s33, %s40
      %p446 = scmp.eq.s32.totalorder %s445, 0
      %s448 = sadd.s32 %s447, 1
      %s449 = scalar_select %p446, %s447, %s448
      %p452 = pneg %p446
      %p453 = scmp.eq.s32.totalorder %s33, 1
      %p454 = por %p452, %p453
      %p455 = scmp.ne.s32.totalorder %s447, %s450
      %p456 = scmp.eq.s32.totalorder %s33, 0
      %p457 = por %p455, %p456
      %p458 = scmp.ne.s32.totalorder %s447, %s450
      %p459 = scmp.eq.s32.totalorder %s38, 1
      %p460 = por %p458, %p459
      %p461 = scmp.ne.s32.totalorder %s450, %s451
      %p462 = scmp.eq.s32.totalorder %s38, 0
      %p463 = por %p461, %p462
      %p464 = scmp.ne.s32.totalorder %s450, %s451
      %p465 = scmp.eq.s32.totalorder %s39, 1
      %p466 = por %p464, %p465
      %p468 = scmp.ne.s32.totalorder %s451, %s467
      %p469 = scmp.eq.s32.totalorder %s39, 0
      %p470 = por %p468, %p469
      %p471 = scmp.le.s32.totalorder 1, %s33
      %p472 = scmp.lt.s32.totalorder %s33, 3
      %p473 = pnand %p471, %p472
      %p474 = pneg %p473
      // Predicated region
      $region9: #{tpu_custom_call.1} parent=5 // pred_check
        _
      $region10: #{tpu_custom_call.1} parent=5 // pred_check_branch
        %476 = sbr.rel (%p473) target = $region12
      $region11: #{tpu_custom_call.1} parent=5 // pred_region
        %s477 = ssub.s32 %s33, 1
        // Predicated region
        $region13: #{tpu_custom_call.1} parent=11 // pred_check
          %p478 = pneg %p80
        $region14: #{tpu_custom_call.1} parent=11 // pred_check_branch
          %480 = sbr.rel (%p478) target = $region16
        $region15: #{tpu_custom_call.1} parent=11 // pred_region
          _
        $region16: #{tpu_custom_call.1} parent=11 // pred_fallthru
          _
        // Predicated region
        $region17: #{tpu_custom_call.1} parent=11 // pred_check
          %p481 = pneg %p101
        $region18: #{tpu_custom_call.1} parent=11 // pred_check_branch
          %483 = sbr.rel (%p481) target = $region20
        $region19: #{tpu_custom_call.1} parent=11 // pred_region
          _
        $region20: #{tpu_custom_call.1} parent=11 // pred_fallthru
          _
        // Predicated region
        $region21: #{tpu_custom_call.1} parent=11 // pred_check
          %p484 = pneg %p122
        $region22: #{tpu_custom_call.1} parent=11 // pred_check_branch
          %486 = sbr.rel (%p484) target = $region24
        $region23: #{tpu_custom_call.1} parent=11 // pred_region
          _
        $region24: #{tpu_custom_call.1} parent=11 // pred_fallthru
          _
        // Predicated region
        $region25: #{tpu_custom_call.1} parent=11 // pred_check
          %p487 = pneg %p143
        $region26: #{tpu_custom_call.1} parent=11 // pred_check_branch
          %489 = sbr.rel (%p487) target = $region28
        $region27: #{tpu_custom_call.1} parent=11 // pred_region
          _
        $region28: #{tpu_custom_call.1} parent=11 // pred_fallthru
          _
        // Predicated region
        $region29: #{tpu_custom_call.1} parent=11 // pred_check
          %p490 = pneg %p164
        $region30: #{tpu_custom_call.1} parent=11 // pred_check_branch
          %492 = sbr.rel (%p490) target = $region32
        $region31: #{tpu_custom_call.1} parent=11 // pred_region
          _
        $region32: #{tpu_custom_call.1} parent=11 // pred_fallthru
          _
        // Predicated region
        $region33: #{tpu_custom_call.1} parent=11 // pred_check
          %p493 = pneg %p185
        $region34: #{tpu_custom_call.1} parent=11 // pred_check_branch
          %495 = sbr.rel (%p493) target = $region36
        $region35: #{tpu_custom_call.1} parent=11 // pred_region
          _
        $region36: #{tpu_custom_call.1} parent=11 // pred_fallthru
          _
        // Predicated region
        $region37: #{tpu_custom_call.1} parent=11 // pred_check
          %p496 = pneg %p206
        $region38: #{tpu_custom_call.1} parent=11 // pred_check_branch
          %498 = sbr.rel (%p496) target = $region40
        $region39: #{tpu_custom_call.1} parent=11 // pred_region
          _
        $region40: #{tpu_custom_call.1} parent=11 // pred_fallthru
          _
        // Predicated region
        $region41: #{tpu_custom_call.1} parent=11 // pred_check
          %p499 = pneg %p227
        $region42: #{tpu_custom_call.1} parent=11 // pred_check_branch
          %501 = sbr.rel (%p499) target = $region44
        $region43: #{tpu_custom_call.1} parent=11 // pred_region
          %s503 = ssub.s32 384, 384
          %504 = vsyncadd [#allocation6], %s503
          %s505 = sshll.u32 [#allocation5], 4
          %s506 = int_to_ptr.vmem [resolvable:$true] %s505
          %511 = dma.hbm_to_vmem [thread:$0]  %s8, 384, %s506, [#allocation6], 128, 128, 8
        $region44: #{tpu_custom_call.1} parent=11 // pred_fallthru
          _
        // Predicated region
        $region45: #{tpu_custom_call.1} parent=11 // pred_check
          %p512 = pneg %p248
        $region46: #{tpu_custom_call.1} parent=11 // pred_check_branch
          %514 = sbr.rel (%p512) target = $region48
        $region47: #{tpu_custom_call.1} parent=11 // pred_region
          _
        $region48: #{tpu_custom_call.1} parent=11 // pred_fallthru
          _
        // Predicated region
        $region49: #{tpu_custom_call.1} parent=11 // pred_check
          %p515 = pneg %p269
        $region50: #{tpu_custom_call.1} parent=11 // pred_check_branch
          %517 = sbr.rel (%p515) target = $region52
        $region51: #{tpu_custom_call.1} parent=11 // pred_region
          %s519 = ssub.s32 128, 128
          %520 = vsyncadd [#allocation6], %s519
          %s522 = sshll.u32 [#allocation7], 4
          %s523 = int_to_ptr.vmem [resolvable:$true] %s522
          %525 = dma.hbm_to_vmem [thread:$0]  %s10, 128, %s523, [#allocation6]
        $region52: #{tpu_custom_call.1} parent=11 // pred_fallthru
          _
        // Predicated region
        $region53: #{tpu_custom_call.1} parent=11 // pred_check
          %p526 = pneg %p290
        $region54: #{tpu_custom_call.1} parent=11 // pred_check_branch
          %528 = sbr.rel (%p526) target = $region56
        $region55: #{tpu_custom_call.1} parent=11 // pred_region
          %s530 = ssub.s32 128, 128
          %531 = vsyncadd [#allocation9], %s530
          %s533 = sshll.u32 [#allocation8], 4
          %s534 = int_to_ptr.vmem [resolvable:$true] %s533
          %536 = dma.hbm_to_vmem [thread:$0]  %s11, 128, %s534, [#allocation9]
        $region56: #{tpu_custom_call.1} parent=11 // pred_fallthru
          _
        // Predicated region
        $region57: #{tpu_custom_call.1} parent=11 // pred_check
          %p537 = pneg %p311
        $region58: #{tpu_custom_call.1} parent=11 // pred_check_branch
          %539 = sbr.rel (%p537) target = $region60
        $region59: #{tpu_custom_call.1} parent=11 // pred_region
          _
        $region60: #{tpu_custom_call.1} parent=11 // pred_fallthru
          _
        // Predicated region
        $region61: #{tpu_custom_call.1} parent=11 // pred_check
          %p540 = pneg %p332
        $region62: #{tpu_custom_call.1} parent=11 // pred_check_branch
          %542 = sbr.rel (%p540) target = $region64
        $region63: #{tpu_custom_call.1} parent=11 // pred_region
          _
        $region64: #{tpu_custom_call.1} parent=11 // pred_fallthru
          _
        // Predicated region
        $region65: #{tpu_custom_call.1} parent=11 // pred_check
          %p543 = pneg %p353
        $region66: #{tpu_custom_call.1} parent=11 // pred_check_branch
          %545 = sbr.rel (%p543) target = $region68
        $region67: #{tpu_custom_call.1} parent=11 // pred_region
          _
        $region68: #{tpu_custom_call.1} parent=11 // pred_fallthru
          _
        // Predicated region
        $region69: #{tpu_custom_call.1} parent=11 // pred_check
          %p546 = pneg %p374
        $region70: #{tpu_custom_call.1} parent=11 // pred_check_branch
          %548 = sbr.rel (%p546) target = $region72
        $region71: #{tpu_custom_call.1} parent=11 // pred_region
          %s550 = ssub.s32 512, 512
          %551 = vsyncadd [#allocation9], %s550
          %s552 = sshll.u32 [#allocation10], 4
          %s553 = int_to_ptr.vmem [resolvable:$true] %s552
          %558 = dma.hbm_to_vmem [thread:$0]  %s15, 512, %s553, [#allocation9], 128, 128, 8
        $region72: #{tpu_custom_call.1} parent=11 // pred_fallthru
          _
        // Predicated region
        $region73: #{tpu_custom_call.1} parent=11 // pred_check
          %p559 = pneg %p395
        $region74: #{tpu_custom_call.1} parent=11 // pred_check_branch
          %561 = sbr.rel (%p559) target = $region76
        $region75: #{tpu_custom_call.1} parent=11 // pred_region
          _
        $region76: #{tpu_custom_call.1} parent=11 // pred_fallthru
          _
        // Predicated region
        $region77: #{tpu_custom_call.1} parent=11 // pred_check
          %p562 = pneg %p416
        $region78: #{tpu_custom_call.1} parent=11 // pred_check_branch
          %564 = sbr.rel (%p562) target = $region80
        $region79: #{tpu_custom_call.1} parent=11 // pred_region
          _
        $region80: #{tpu_custom_call.1} parent=11 // pred_fallthru
          _
        // Predicated region
        $region81: #{tpu_custom_call.1} parent=11 // pred_check
          %p565 = pneg %p437
        $region82: #{tpu_custom_call.1} parent=11 // pred_check_branch
          %567 = sbr.rel (%p565) target = $region84
        $region83: #{tpu_custom_call.1} parent=11 // pred_region
          _
        $region84: #{tpu_custom_call.1} parent=11 // pred_fallthru
          _
      $region12: #{tpu_custom_call.1} parent=5 // pred_fallthru
        _
      %p568 = scmp.lt.s32.totalorder %s33, 2
      // Predicated region
      $region85: #{tpu_custom_call.1} parent=5 // pred_check
        %p569 = pneg %p568
      $region86: #{tpu_custom_call.1} parent=5 // pred_check_branch
        %571 = sbr.rel (%p569) target = $region88
      $region87: #{tpu_custom_call.1} parent=5 // pred_region
        // Predicated region
        $region89: #{tpu_custom_call.1} parent=87 // pred_check
          %p572 = pneg %p53
        $region90: #{tpu_custom_call.1} parent=87 // pred_check_branch
          %574 = sbr.rel (%p572) target = $region92
        $region91: #{tpu_custom_call.1} parent=87 // pred_region
          %s575 = sand.u32 %s43, 1
          %s576 = scalar_lea.sflag [#allocation3], %s575
          %s577 = sand.u32 %s43, 1
          %s578 = smul.addr %s577, 8
          %s579 = scalar_lea.vmem [#allocation2], %s578
          %s581 = ssub.s32 128, 128
          %582 = vsyncadd %s576, %s581
          %s583 = smul.addr %s33, 128
          %s584 = scalar_lea.hbm %s0, %s583
          %s586 = sshll.u32 %s579, 4
          %s587 = int_to_ptr.vmem [resolvable:$true] %s586
          %589 = dma.hbm_to_vmem [thread:$0]  %s584, 128, %s587, %s576
        $region92: #{tpu_custom_call.1} parent=87 // pred_fallthru
          _
      $region88: #{tpu_custom_call.1} parent=5 // pred_fallthru
        _
      %p590 = scmp.le.s32.totalorder 1, %s33
      %p591 = scmp.lt.s32.totalorder %s33, 3
      %p592 = pnand %p590, %p591
      %p593 = pneg %p592
      // Predicated region
      $region93: #{tpu_custom_call.1} parent=5 // pred_check
        _
      $region94: #{tpu_custom_call.1} parent=5 // pred_check_branch
        %595 = sbr.rel (%p592) target = $region96
      $region95: #{tpu_custom_call.1} parent=5 // pred_region
        %s596 = ssub.s32 %s33, 1
        %s597 = sand.u32 %s46, 1
        %s598 = scalar_lea.sflag [#allocation3], %s597
        %s599 = sand.u32 %s46, 1
        %s600 = smul.addr %s599, 8
        %s601 = scalar_lea.vmem [#allocation2], %s600
        // Predicated region
        $region97: #{tpu_custom_call.1} parent=95 // pred_check
          %p602 = pneg %p59
        $region98: #{tpu_custom_call.1} parent=95 // pred_check_branch
          %604 = sbr.rel (%p602) target = $region100
        $region99: #{tpu_custom_call.1} parent=95 // pred_region
          %605 = dma.done %s598, 128
        $region100: #{tpu_custom_call.1} parent=95 // pred_fallthru
          _
        // Predicated region
        $region101: #{tpu_custom_call.1} parent=95 // pred_check
          %p606 = pneg %p227
        $region102: #{tpu_custom_call.1} parent=95 // pred_check_branch
          %608 = sbr.rel (%p606) target = $region104
        $region103: #{tpu_custom_call.1} parent=95 // pred_region
          %609 = dma.done [#allocation6], 384
        $region104: #{tpu_custom_call.1} parent=95 // pred_fallthru
          _
        // Predicated region
        $region105: #{tpu_custom_call.1} parent=95 // pred_check
          %p610 = pneg %p269
        $region106: #{tpu_custom_call.1} parent=95 // pred_check_branch
          %612 = sbr.rel (%p610) target = $region108
        $region107: #{tpu_custom_call.1} parent=95 // pred_region
          %613 = dma.done [#allocation6], 128
        $region108: #{tpu_custom_call.1} parent=95 // pred_fallthru
          _
        // Predicated region
        $region109: #{tpu_custom_call.1} parent=95 // pred_check
          %p614 = pneg %p290
        $region110: #{tpu_custom_call.1} parent=95 // pred_check_branch
          %616 = sbr.rel (%p614) target = $region112
        $region111: #{tpu_custom_call.1} parent=95 // pred_region
          %617 = dma.done [#allocation9], 128
        $region112: #{tpu_custom_call.1} parent=95 // pred_fallthru
          _
        // Predicated region
        $region113: #{tpu_custom_call.1} parent=95 // pred_check
          %p618 = pneg %p374
        $region114: #{tpu_custom_call.1} parent=95 // pred_check_branch
          %620 = sbr.rel (%p618) target = $region116
        $region115: #{tpu_custom_call.1} parent=95 // pred_region
          %621 = dma.done [#allocation9], 512
        $region116: #{tpu_custom_call.1} parent=95 // pred_fallthru
          _
        %s622 = sand.u32 %s46, 1
        %s623 = scalar_lea.sflag [#allocation3], %s622
        %s624 = sand.u32 %s46, 1
        %s625 = smul.addr %s624, 8
        %s626 = scalar_lea.vmem [#allocation2], %s625
        %p627 = pneg %p59
        %p628 = pneg %p56
        %p629 = pneg %p80
        %p630 = pneg %p77
        %p631 = pneg %p101
        %p632 = pneg %p98
        %p633 = pneg %p122
        %p634 = pneg %p119
        %p635 = pneg %p143
        %p636 = pneg %p140
        %p637 = pneg %p164
        %p638 = pneg %p161
        %p639 = pneg %p185
        %p640 = pneg %p182
        %p641 = pneg %p206
        %p642 = pneg %p203
        %p643 = pneg %p227
        %p644 = pneg %p224
        %p645 = pneg %p248
        %p646 = pneg %p245
        %p647 = pneg %p269
        %p648 = pneg %p266
        %p649 = pneg %p290
        %p650 = pneg %p287
        %p651 = pneg %p311
        %p652 = pneg %p308
        %p653 = pneg %p332
        %p654 = pneg %p329
        %p655 = pneg %p353
        %p656 = pneg %p350
        %p657 = pneg %p374
        %p658 = pneg %p371
        %p659 = pneg %p395
        %p660 = pneg %p392
        %p661 = pneg %p416
        %p662 = pneg %p413
        %p663 = pneg %p437
        %p664 = pneg %p434
        %p665 = pneg %p463
        %p666 = pneg %p460
        %s667 = sand.u32 %s450, 1
        %s668 = scalar_lea.sflag [#allocation4], %s667
        %s669 = sand.u32 %s450, 1
        %s670 = smul.addr %s669, 8
        %s671 = scalar_lea.vmem [#allocation11], %s670
        %v673 = vld [vmem:[%s601] sm:$0xff]
        %v674 = vpack.c.bf16 %v673, %v673
        %v675 = vld [vmem:[%s1] sm:$0xff]
        %v676 = vld [vmem:[%s1 + $0x8] sm:$0xff]
        %v677 = vld [vmem:[%s1 + $0x10] sm:$0xff]
        %v678 = vld [vmem:[%s1 + $0x18] sm:$0xff]
        %v679 = vld [vmem:[%s1 + $0x20] sm:$0xff]
        %v680 = vld [vmem:[%s1 + $0x28] sm:$0xff]
        %v681 = vld [vmem:[%s1 + $0x30] sm:$0xff]
        %v682 = vld [vmem:[%s1 + $0x38] sm:$0xff]
        %v691 = vunpack.c.l.b16 %v675
        %v692 = vunpack.c.h.b16 %v675
        %v693 = vunpack.c.l.b16 %v676
        %v694 = vunpack.c.h.b16 %v676
        %v695 = vunpack.c.l.b16 %v677
        %v696 = vunpack.c.h.b16 %v677
        %v697 = vunpack.c.l.b16 %v678
        %v698 = vunpack.c.h.b16 %v678
        %v699 = vunpack.c.l.b16 %v679
        %v700 = vunpack.c.h.b16 %v679
        %v701 = vunpack.c.l.b16 %v680
        %v702 = vunpack.c.h.b16 %v680
        %v703 = vunpack.c.l.b16 %v681
        %v704 = vunpack.c.h.b16 %v681
        %v705 = vunpack.c.l.b16 %v682
        %v706 = vunpack.c.h.b16 %v682
        %v707 = vpack.c.b16 %v695, %v691
        %v708 = vpack.c.b16 %v696, %v692
        %v709 = vpack.c.b16 %v697, %v693
        %v710 = vpack.c.b16 %v698, %v694
        %v711 = vpack.c.b16 %v703, %v699
        %v712 = vpack.c.b16 %v704, %v700
        %v713 = vpack.c.b16 %v705, %v701
        %v714 = vpack.c.b16 %v706, %v702
        %vm723 = vcmask 261120
        %v725 = vsel %vm723, %v674, 0
        %727 = vmatprep.subr.bf16.mxu0 %v708
        %728 = vmatpush1.bf16.msra.mxu0 %v707
        %729 = vmatprep.subr.bf16.mxu0 %v712
        %730 = vmatpush1.bf16.msra.mxu0 %v711
        %731 = vmatprep.subr.bf16.mxu0 0
        %732 = vmatpush1.bf16.msra.mxu0 0
        %733 = vmatprep.subr.bf16.mxu0 0
        %734 = vmatpush1.bf16.msra.mxu0 0
        %735 = vmatprep.subr.bf16.mxu0 0
        %736 = vmatpush1.bf16.msra.mxu0 0
        %737 = vmatprep.subr.bf16.mxu0 0
        %738 = vmatpush1.bf16.msra.mxu0 0
        %739 = vmatprep.subr.bf16.mxu0 0
        %740 = vmatpush1.bf16.msra.mxu0 0
        %741 = vmatprep.subr.bf16.mxu0 0
        %742 = vmatpush1.bf16.msra.mxu0 0
        %743 = vmatprep.subr.bf16.mxu0 0
        %744 = vmatpush1.bf16.msra.mxu0 0
        %745 = vmatprep.subr.bf16.mxu0 0
        %746 = vmatpush1.bf16.msra.mxu0 0
        %747 = vmatprep.subr.bf16.mxu0 0
        %748 = vmatpush1.bf16.msra.mxu0 0
        %749 = vmatprep.subr.bf16.mxu0 0
        %750 = vmatpush1.bf16.msra.mxu0 0
        %751 = vmatprep.subr.bf16.mxu0 0
        %752 = vmatpush1.bf16.msra.mxu0 0
        %753 = vmatprep.subr.bf16.mxu0 0
        %754 = vmatpush1.bf16.msra.mxu0 0
        %755 = vmatprep.subr.bf16.mxu0 0
        %756 = vmatpush1.bf16.msra.mxu0 0
        %757 = vmatprep.subr.bf16.mxu0 0
        %758 = vmatpush1.bf16.msra.mxu0 0
        %759 = vmatprep.mubr.bf16.mxu0 0
        %760 = vmatmul.mubr.bf16.gmra.mrb[0].mxu0 %v725
        %v761 = vpop.f32.mrb[0].mxu0
        %v762 = vadd.f32 0.0, %v761
        %v763 = vpop.f32.mrb[0].mxu0
        %v764 = vadd.f32 0.0, %v763
        %v765 = vpop.f32.mrb[0].mxu0
        %v766 = vpop.f32.mrb[0].mxu0
        %767 = vdwg.mxu0
        %768 = vmatprep.subr.bf16.mxu0 %v710
        %769 = vmatpush1.bf16.msra.mxu0 %v709
        %770 = vmatprep.subr.bf16.mxu0 %v714
        %771 = vmatpush1.bf16.msra.mxu0 %v713
        %772 = vmatprep.subr.bf16.mxu0 0
        %773 = vmatpush1.bf16.msra.mxu0 0
        %774 = vmatprep.subr.bf16.mxu0 0
        %775 = vmatpush1.bf16.msra.mxu0 0
        %776 = vmatprep.subr.bf16.mxu0 0
        %777 = vmatpush1.bf16.msra.mxu0 0
        %778 = vmatprep.subr.bf16.mxu0 0
        %779 = vmatpush1.bf16.msra.mxu0 0
        %780 = vmatprep.subr.bf16.mxu0 0
        %781 = vmatpush1.bf16.msra.mxu0 0
        %782 = vmatprep.subr.bf16.mxu0 0
        %783 = vmatpush1.bf16.msra.mxu0 0
        %784 = vmatprep.subr.bf16.mxu0 0
        %785 = vmatpush1.bf16.msra.mxu0 0
        %786 = vmatprep.subr.bf16.mxu0 0
        %787 = vmatpush1.bf16.msra.mxu0 0
        %788 = vmatprep.subr.bf16.mxu0 0
        %789 = vmatpush1.bf16.msra.mxu0 0
        %790 = vmatprep.subr.bf16.mxu0 0
        %791 = vmatpush1.bf16.msra.mxu0 0
        %792 = vmatprep.subr.bf16.mxu0 0
        %793 = vmatpush1.bf16.msra.mxu0 0
        %794 = vmatprep.subr.bf16.mxu0 0
        %795 = vmatpush1.bf16.msra.mxu0 0
        %796 = vmatprep.subr.bf16.mxu0 0
        %797 = vmatpush1.bf16.msra.mxu0 0
        %798 = vmatprep.subr.bf16.mxu0 0
        %799 = vmatpush1.bf16.msra.mxu0 0
        %800 = vmatprep.mubr.bf16.mxu0 0
        %801 = vmatmul.mubr.bf16.gmra.mrb[0].mxu0 %v725
        %v802 = vpop.f32.mrb[0].mxu0
        %v803 = vadd.f32 0.0, %v802
        %v804 = vpop.f32.mrb[0].mxu0
        %v805 = vadd.f32 0.0, %v804
        %v806 = vpop.f32.mrb[0].mxu0
        %v807 = vpop.f32.mrb[0].mxu0
        %808 = vdwg.mxu0
        %v809 = vld [vmem:[#allocation5] sm:$0x1]
        %v810 = vlaneseq
        %v811 = vshrl.u32 %v810, 7
        %v812 = vsub.s32 0, %v811
        %v813 = vrot.slane %v809, %v812
        %v814 = vadd.f32 %v762, %v813
        %v815 = vld [vmem:[#allocation5 + $0x1] sm:$0x1]
        %v816 = vlaneseq
        %v817 = vshrl.u32 %v816, 7
        %v818 = vsub.s32 0, %v817
        %v819 = vrot.slane %v815, %v818
        %v820 = vadd.f32 %v764, %v819
        %v821 = vld [vmem:[#allocation5 + $0x2] sm:$0x1]
        %v822 = vlaneseq
        %v823 = vshrl.u32 %v822, 7
        %v824 = vsub.s32 0, %v823
        %v825 = vrot.slane %v821, %v824
        %v826 = vadd.f32 %v803, %v825
        %v827 = vld [vmem:[#allocation5 + $0x3] sm:$0x1]
        %v828 = vlaneseq
        %v829 = vshrl.u32 %v828, 7
        %v830 = vsub.s32 0, %v829
        %v831 = vrot.slane %v827, %v830
        %v832 = vadd.f32 %v805, %v831
        %v833 = vld [vmem:[%s9] sm:$0xff]
        %v834 = vld [vmem:[%s9 + $0x8] sm:$0xff]
        %v835 = vld [vmem:[%s9 + $0x10] sm:$0xff]
        %v836 = vld [vmem:[%s9 + $0x18] sm:$0xff]
        %v838 = vsel %vm723, %v833, 0
        %v841 = vsel %vm723, %v834, 0
        %v844 = vsel %vm723, %v835, 0
        %v847 = vsel %vm723, %v836, 0
        %849 = vmatprep.subr.mxu0 0.0
        %850 = vmatpush1.msra.mxu0 %v814
        %851 = vmatprep.subr.mxu0 0.0
        %852 = vmatpush1.msra.mxu0 %v820
        %853 = vmatprep.subr.mxu0 0.0
        %854 = vmatpush1.msra.mxu0 %v826
        %855 = vmatprep.subr.mxu0 0.0
        %856 = vmatpush1.msra.mxu0 %v832
        %857 = vmatprep.subr.mxu0 0.0
        %858 = vmatpush1.msra.mxu0 0.0
        %859 = vmatprep.subr.mxu0 0.0
        %860 = vmatpush1.msra.mxu0 0.0
        %861 = vmatprep.subr.mxu0 0.0
        %862 = vmatpush1.msra.mxu0 0.0
        %863 = vmatprep.subr.mxu0 0.0
        %864 = vmatpush1.msra.mxu0 0.0
        %865 = vmatprep.subr.mxu0 0.0
        %866 = vmatpush1.msra.mxu0 0.0
        %867 = vmatprep.subr.mxu0 0.0
        %868 = vmatpush1.msra.mxu0 0.0
        %869 = vmatprep.subr.mxu0 0.0
        %870 = vmatpush1.msra.mxu0 0.0
        %871 = vmatprep.subr.mxu0 0.0
        %872 = vmatpush1.msra.mxu0 0.0
        %873 = vmatprep.subr.mxu0 0.0
        %874 = vmatpush1.msra.mxu0 0.0
        %875 = vmatprep.subr.mxu0 0.0
        %876 = vmatpush1.msra.mxu0 0.0
        %877 = vmatprep.subr.mxu0 0.0
        %878 = vmatpush1.msra.mxu0 0.0
        %879 = vmatprep.subr.mxu0 0.0
        %880 = vmatpush1.msra.mxu0 0.0
        %881 = vmatprep.subr.mxu0 0.0
        %882 = vmatpush1.msra.mxu0 0.0
        %883 = vmatprep.subr.mxu0 0.0
        %884 = vmatpush1.msra.mxu0 0.0
        %885 = vmatprep.subr.mxu0 0.0
        %886 = vmatpush1.msra.mxu0 0.0
        %887 = vmatprep.subr.mxu0 0.0
        %888 = vmatpush1.msra.mxu0 0.0
        %889 = vmatprep.subr.mxu0 0.0
        %890 = vmatpush1.msra.mxu0 0.0
        %891 = vmatprep.subr.mxu0 0.0
        %892 = vmatpush1.msra.mxu0 0.0
        %893 = vmatprep.subr.mxu0 0.0
        %894 = vmatpush1.msra.mxu0 0.0
        %895 = vmatprep.subr.mxu0 0.0
        %896 = vmatpush1.msra.mxu0 0.0
        %897 = vmatprep.subr.mxu0 0.0
        %898 = vmatpush1.msra.mxu0 0.0
        %899 = vmatprep.subr.mxu0 0.0
        %900 = vmatpush1.msra.mxu0 0.0
        %901 = vmatprep.subr.mxu0 0.0
        %902 = vmatpush1.msra.mxu0 0.0
        %903 = vmatprep.subr.mxu0 0.0
        %904 = vmatpush1.msra.mxu0 0.0
        %905 = vmatprep.subr.mxu0 0.0
        %906 = vmatpush1.msra.mxu0 0.0
        %907 = vmatprep.subr.mxu0 0.0
        %908 = vmatpush1.msra.mxu0 0.0
        %909 = vmatprep.subr.mxu0 0.0
        %910 = vmatpush1.msra.mxu0 0.0
        %911 = vmatprep.subr.mxu0 0.0
        %912 = vmatpush1.msra.mxu0 0.0
        %913 = vmatprep.mubr.f32.mxu0 0.0
        %914 = vmatmul.mubr.f32.gmra.mrb[0].mxu0 %v838
        %v915 = vpop.f32.mrb[0].mxu0
        %v916 = vadd.f32 0.0, %v915
        %v917 = vpop.f32.mrb[0].mxu0
        %918 = vmatprep.mubr.f32.mxu0 0.0
        %919 = vmatmul.mubr.f32.gmra.mrb[0].mxu0 %v841
        %v920 = vpop.f32.mrb[0].mxu0
        %v921 = vadd.f32 0.0, %v920
        %v922 = vpop.f32.mrb[0].mxu0
        %923 = vmatprep.mubr.f32.mxu0 0.0
        %924 = vmatmul.mubr.f32.gmra.mrb[0].mxu0 %v844
        %v925 = vpop.f32.mrb[0].mxu0
        %v926 = vadd.f32 0.0, %v925
        %v927 = vpop.f32.mrb[0].mxu0
        %928 = vmatprep.mubr.f32.mxu0 0.0
        %929 = vmatmul.mubr.f32.gmra.mrb[0].mxu0 %v847
        %v930 = vpop.f32.mrb[0].mxu0
        %v931 = vadd.f32 0.0, %v930
        %v932 = vpop.f32.mrb[0].mxu0
        %933 = vdwg.mxu0
        %v934 = vld [vmem:[%s16] sm:$0xff]
        %v935 = vld [vmem:[%s16 + $0x8] sm:$0xff]
        %v936 = vld [vmem:[%s16 + $0x10] sm:$0xff]
        %v937 = vld [vmem:[%s16 + $0x18] sm:$0xff]
        %v938 = vld [vmem:[#allocation5 + $0x4] sm:$0x1]
        %v939 = vld [vmem:[#allocation5 + $0x5] sm:$0x1]
        %v940 = vmul.f32 %v916, %v916
        %v941 = vmul.f32 %v921, %v921
        %v942 = vmul.f32 %v926, %v926
        %v943 = vmul.f32 %v931, %v931
        %v944 = vld [vmem:[%s12] sm:$0xff]
        %v945 = vld [vmem:[%s12 + $0x8] sm:$0xff]
        %v946 = vld [vmem:[%s12 + $0x10] sm:$0xff]
        %v947 = vld [vmem:[%s12 + $0x18] sm:$0xff]
        %v948 = vld [vmem:[%s12 + $0x20] sm:$0xff]
        %v949 = vld [vmem:[%s12 + $0x28] sm:$0xff]
        %v950 = vld [vmem:[%s12 + $0x30] sm:$0xff]
        %v951 = vld [vmem:[%s12 + $0x38] sm:$0xff]
        %v952 = vld [vmem:[%s12 + $0x40] sm:$0xff]
        %v953 = vld [vmem:[%s12 + $0x48] sm:$0xff]
        %v954 = vld [vmem:[%s12 + $0x50] sm:$0xff]
        %v955 = vld [vmem:[%s12 + $0x58] sm:$0xff]
        %v956 = vld [vmem:[%s12 + $0x60] sm:$0xff]
        %v957 = vld [vmem:[%s12 + $0x68] sm:$0xff]
        %v958 = vld [vmem:[%s12 + $0x70] sm:$0xff]
        %v959 = vld [vmem:[%s12 + $0x78] sm:$0xff]
        %v960 = vld [vmem:[%s12 + $0x80] sm:$0xff]
        %v961 = vld [vmem:[%s12 + $0x88] sm:$0xff]
        %v962 = vld [vmem:[%s12 + $0x90] sm:$0xff]
        %v963 = vld [vmem:[%s12 + $0x98] sm:$0xff]
        %v964 = vld [vmem:[%s12 + $0xa0] sm:$0xff]
        %v965 = vld [vmem:[%s12 + $0xa8] sm:$0xff]
        %v966 = vld [vmem:[%s12 + $0xb0] sm:$0xff]
        %v967 = vld [vmem:[%s12 + $0xb8] sm:$0xff]
        %v968 = vld [vmem:[%s12 + $0xc0] sm:$0xff]
        %v969 = vld [vmem:[%s12 + $0xc8] sm:$0xff]
        %v970 = vld [vmem:[%s12 + $0xd0] sm:$0xff]
        %v971 = vld [vmem:[%s12 + $0xd8] sm:$0xff]
        %v972 = vld [vmem:[%s12 + $0xe0] sm:$0xff]
        %v973 = vld [vmem:[%s12 + $0xe8] sm:$0xff]
        %v974 = vld [vmem:[%s12 + $0xf0] sm:$0xff]
        %v975 = vld [vmem:[%s12 + $0xf8] sm:$0xff]
        %976 = vmatprep.subr.mxu0 0.0
        %977 = vmatpush1.msra.mxu0 %v944
        %978 = vmatprep.subr.mxu0 0.0
        %979 = vmatpush1.msra.mxu0 %v945
        %980 = vmatprep.subr.mxu0 0.0
        %981 = vmatpush1.msra.mxu0 %v946
        %982 = vmatprep.subr.mxu0 0.0
        %983 = vmatpush1.msra.mxu0 %v947
        %984 = vmatprep.subr.mxu0 0.0
        %985 = vmatpush1.msra.mxu0 %v948
        %986 = vmatprep.subr.mxu0 0.0
        %987 = vmatpush1.msra.mxu0 %v949
        %988 = vmatprep.subr.mxu0 0.0
        %989 = vmatpush1.msra.mxu0 %v950
        %990 = vmatprep.subr.mxu0 0.0
        %991 = vmatpush1.msra.mxu0 %v951
        %992 = vmatprep.subr.mxu0 0.0
        %993 = vmatpush1.msra.mxu0 %v952
        %994 = vmatprep.subr.mxu0 0.0
        %995 = vmatpush1.msra.mxu0 %v953
        %996 = vmatprep.subr.mxu0 0.0
        %997 = vmatpush1.msra.mxu0 %v954
        %998 = vmatprep.subr.mxu0 0.0
        %999 = vmatpush1.msra.mxu0 %v955
        %1000 = vmatprep.subr.mxu0 0.0
        %1001 = vmatpush1.msra.mxu0 %v956
        %1002 = vmatprep.subr.mxu0 0.0
        %1003 = vmatpush1.msra.mxu0 %v957
        %1004 = vmatprep.subr.mxu0 0.0
        %1005 = vmatpush1.msra.mxu0 %v958
        %1006 = vmatprep.subr.mxu0 0.0
        %1007 = vmatpush1.msra.mxu0 %v959
        %1008 = vmatprep.subr.mxu0 0.0
        %1009 = vmatpush1.msra.mxu0 %v960
        %1010 = vmatprep.subr.mxu0 0.0
        %1011 = vmatpush1.msra.mxu0 %v961
        %1012 = vmatprep.subr.mxu0 0.0
        %1013 = vmatpush1.msra.mxu0 %v962
        %1014 = vmatprep.subr.mxu0 0.0
        %1015 = vmatpush1.msra.mxu0 %v963
        %1016 = vmatprep.subr.mxu0 0.0
        %1017 = vmatpush1.msra.mxu0 %v964
        %1018 = vmatprep.subr.mxu0 0.0
        %1019 = vmatpush1.msra.mxu0 %v965
        %1020 = vmatprep.subr.mxu0 0.0
        %1021 = vmatpush1.msra.mxu0 %v966
        %1022 = vmatprep.subr.mxu0 0.0
        %1023 = vmatpush1.msra.mxu0 %v967
        %1024 = vmatprep.subr.mxu0 0.0
        %1025 = vmatpush1.msra.mxu0 %v968
        %1026 = vmatprep.subr.mxu0 0.0
        %1027 = vmatpush1.msra.mxu0 %v969
        %1028 = vmatprep.subr.mxu0 0.0
        %1029 = vmatpush1.msra.mxu0 %v970
        %1030 = vmatprep.subr.mxu0 0.0
        %1031 = vmatpush1.msra.mxu0 %v971
        %1032 = vmatprep.subr.mxu0 0.0
        %1033 = vmatpush1.msra.mxu0 %v972
        %1034 = vmatprep.subr.mxu0 0.0
        %1035 = vmatpush1.msra.mxu0 %v973
        %1036 = vmatprep.subr.mxu0 0.0
        %1037 = vmatpush1.msra.mxu0 %v974
        %1038 = vmatprep.subr.mxu0 0.0
        %1039 = vmatpush1.msra.mxu0 %v975
        %1040 = vmatprep.mubr.f32.mxu0 %v940
        %1041 = vmatmul.mubr.f32.gmra.mrb[0].mxu0 %v916
        %v1042 = vpop.f32.mrb[0].mxu0
        %v1043 = vadd.f32 0.0, %v1042
        %v1044 = vpop.f32.mrb[0].mxu0
        %1045 = vmatprep.mubr.f32.mxu0 %v941
        %1046 = vmatmul.mubr.f32.gmra.mrb[0].mxu0 %v921
        %v1047 = vpop.f32.mrb[0].mxu0
        %v1048 = vadd.f32 0.0, %v1047
        %v1049 = vpop.f32.mrb[0].mxu0
        %1050 = vmatprep.mubr.f32.mxu0 %v942
        %1051 = vmatmul.mubr.f32.gmra.mrb[0].mxu0 %v926
        %v1052 = vpop.f32.mrb[0].mxu0
        %v1053 = vadd.f32 0.0, %v1052
        %v1054 = vpop.f32.mrb[0].mxu0
        %1055 = vmatprep.mubr.f32.mxu0 %v943
        %1056 = vmatmul.mubr.f32.gmra.mrb[0].mxu0 %v931
        %v1057 = vpop.f32.mrb[0].mxu0
        %v1058 = vadd.f32 0.0, %v1057
        %v1059 = vpop.f32.mrb[0].mxu0
        %1060 = vdwg.mxu0
        %v1061 = vld [vmem:[#allocation7] sm:$0xff]
        %v1063 = vsel %vm723, %v1061, 0
        %1065 = vmatprep.subr.mxu0 0.0
        %1066 = vmatpush1.msra.mxu0 %v1043
        %1067 = vmatprep.subr.mxu0 0.0
        %1068 = vmatpush1.msra.mxu0 %v1048
        %1069 = vmatprep.subr.mxu0 0.0
        %1070 = vmatpush1.msra.mxu0 %v1053
        %1071 = vmatprep.subr.mxu0 0.0
        %1072 = vmatpush1.msra.mxu0 %v1058
        %1073 = vmatprep.subr.mxu0 0.0
        %1074 = vmatpush1.msra.mxu0 0.0
        %1075 = vmatprep.subr.mxu0 0.0
        %1076 = vmatpush1.msra.mxu0 0.0
        %1077 = vmatprep.subr.mxu0 0.0
        %1078 = vmatpush1.msra.mxu0 0.0
        %1079 = vmatprep.subr.mxu0 0.0
        %1080 = vmatpush1.msra.mxu0 0.0
        %1081 = vmatprep.subr.mxu0 0.0
        %1082 = vmatpush1.msra.mxu0 0.0
        %1083 = vmatprep.subr.mxu0 0.0
        %1084 = vmatpush1.msra.mxu0 0.0
        %1085 = vmatprep.subr.mxu0 0.0
        %1086 = vmatpush1.msra.mxu0 0.0
        %1087 = vmatprep.subr.mxu0 0.0
        %1088 = vmatpush1.msra.mxu0 0.0
        %1089 = vmatprep.subr.mxu0 0.0
        %1090 = vmatpush1.msra.mxu0 0.0
        %1091 = vmatprep.subr.mxu0 0.0
        %1092 = vmatpush1.msra.mxu0 0.0
        %1093 = vmatprep.subr.mxu0 0.0
        %1094 = vmatpush1.msra.mxu0 0.0
        %1095 = vmatprep.subr.mxu0 0.0
        %1096 = vmatpush1.msra.mxu0 0.0
        %1097 = vmatprep.subr.mxu0 0.0
        %1098 = vmatpush1.msra.mxu0 0.0
        %1099 = vmatprep.subr.mxu0 0.0
        %1100 = vmatpush1.msra.mxu0 0.0
        %1101 = vmatprep.subr.mxu0 0.0
        %1102 = vmatpush1.msra.mxu0 0.0
        %1103 = vmatprep.subr.mxu0 0.0
        %1104 = vmatpush1.msra.mxu0 0.0
        %1105 = vmatprep.subr.mxu0 0.0
        %1106 = vmatpush1.msra.mxu0 0.0
        %1107 = vmatprep.subr.mxu0 0.0
        %1108 = vmatpush1.msra.mxu0 0.0
        %1109 = vmatprep.subr.mxu0 0.0
        %1110 = vmatpush1.msra.mxu0 0.0
        %1111 = vmatprep.subr.mxu0 0.0
        %1112 = vmatpush1.msra.mxu0 0.0
        %1113 = vmatprep.subr.mxu0 0.0
        %1114 = vmatpush1.msra.mxu0 0.0
        %1115 = vmatprep.subr.mxu0 0.0
        %1116 = vmatpush1.msra.mxu0 0.0
        %1117 = vmatprep.subr.mxu0 0.0
        %1118 = vmatpush1.msra.mxu0 0.0
        %1119 = vmatprep.subr.mxu0 0.0
        %1120 = vmatpush1.msra.mxu0 0.0
        %1121 = vmatprep.subr.mxu0 0.0
        %1122 = vmatpush1.msra.mxu0 0.0
        %1123 = vmatprep.subr.mxu0 0.0
        %1124 = vmatpush1.msra.mxu0 0.0
        %1125 = vmatprep.subr.mxu0 0.0
        %1126 = vmatpush1.msra.mxu0 0.0
        %1127 = vmatprep.subr.mxu0 0.0
        %1128 = vmatpush1.msra.mxu0 0.0
        %1129 = vmatprep.mubr.f32.mxu0 0.0
        %1130 = vmatmul.mubr.f32.gmra.mrb[0].mxu0 %v1063
        %v1131 = vpop.f32.mrb[0].mxu0
        %v1132 = vadd.f32 0.0, %v1131
        %v1133 = vpop.f32.mrb[0].mxu0
        %1134 = vdwg.mxu0
        %v1135 = vmul.f32 %v1132, 0.03125
        %v1136 = vmul.f32 %v1135, %v1135
        %1138 = vrot.lane.b32.xlu0 %v1136, 16
        %v1139 = vpop.permute.xlu0 %1138
        %v1141 = vsub.f32 %v1135, %v1139
        %v1142 = vmax.f32 %v1141, 0.0
        %v1143 = vadd.f32 %v1142, 1e-05
        %v1144 = vrsqrt.pop %v1143
        %vm1145 = vcmask 130048
        %v1146 = vsel %vm1145, %v1135, %v1144
        %v1147 = vld [vmem:[%s13] sm:$0xff]
        %v1148 = vld [vmem:[%s13 + $0x8] sm:$0xff]
        %v1149 = vld [vmem:[%s13 + $0x10] sm:$0xff]
        %v1150 = vld [vmem:[%s13 + $0x18] sm:$0xff]
        %v1151 = vld [vmem:[%s13 + $0x20] sm:$0xff]
        %v1152 = vld [vmem:[%s13 + $0x28] sm:$0xff]
        %v1153 = vld [vmem:[%s13 + $0x30] sm:$0xff]
        %v1154 = vld [vmem:[%s13 + $0x38] sm:$0xff]
        %v1156 = vsel %vm723, %v1146, 0
        %1158 = vmatprep.subr.mxu0 %v1148
        %1159 = vmatpush1.msra.mxu0 %v1147
        %1160 = vmatprep.subr.mxu0 %v1150
        %1161 = vmatpush1.msra.mxu0 %v1149
        %1162 = vmatprep.subr.mxu0 %v1152
        %1163 = vmatpush1.msra.mxu0 %v1151
        %1164 = vmatprep.subr.mxu0 %v1154
        %1165 = vmatpush1.msra.mxu0 %v1153
        %1166 = vmatprep.subr.mxu0 0.0
        %1167 = vmatpush1.msra.mxu0 0.0
        %1168 = vmatprep.subr.mxu0 0.0
        %1169 = vmatpush1.msra.mxu0 0.0
        %1170 = vmatprep.subr.mxu0 0.0
        %1171 = vmatpush1.msra.mxu0 0.0
        %1172 = vmatprep.subr.mxu0 0.0
        %1173 = vmatpush1.msra.mxu0 0.0
        %1174 = vmatprep.subr.mxu0 0.0
        %1175 = vmatpush1.msra.mxu0 0.0
        %1176 = vmatprep.subr.mxu0 0.0
        %1177 = vmatpush1.msra.mxu0 0.0
        %1178 = vmatprep.subr.mxu0 0.0
        %1179 = vmatpush1.msra.mxu0 0.0
        %1180 = vmatprep.subr.mxu0 0.0
        %1181 = vmatpush1.msra.mxu0 0.0
        %1182 = vmatprep.subr.mxu0 0.0
        %1183 = vmatpush1.msra.mxu0 0.0
        %1184 = vmatprep.subr.mxu0 0.0
        %1185 = vmatpush1.msra.mxu0 0.0
        %1186 = vmatprep.subr.mxu0 0.0
        %1187 = vmatpush1.msra.mxu0 0.0
        %1188 = vmatprep.subr.mxu0 0.0
        %1189 = vmatpush1.msra.mxu0 0.0
        %1190 = vmatprep.subr.mxu0 0.0
        %1191 = vmatpush1.msra.mxu0 0.0
        %1192 = vmatprep.subr.mxu0 0.0
        %1193 = vmatpush1.msra.mxu0 0.0
        %1194 = vmatprep.subr.mxu0 0.0
        %1195 = vmatpush1.msra.mxu0 0.0
        %1196 = vmatprep.subr.mxu0 0.0
        %1197 = vmatpush1.msra.mxu0 0.0
        %1198 = vmatprep.subr.mxu0 0.0
        %1199 = vmatpush1.msra.mxu0 0.0
        %1200 = vmatprep.subr.mxu0 0.0
        %1201 = vmatpush1.msra.mxu0 0.0
        %1202 = vmatprep.subr.mxu0 0.0
        %1203 = vmatpush1.msra.mxu0 0.0
        %1204 = vmatprep.subr.mxu0 0.0
        %1205 = vmatpush1.msra.mxu0 0.0
        %1206 = vmatprep.subr.mxu0 0.0
        %1207 = vmatpush1.msra.mxu0 0.0
        %1208 = vmatprep.subr.mxu0 0.0
        %1209 = vmatpush1.msra.mxu0 0.0
        %1210 = vmatprep.subr.mxu0 0.0
        %1211 = vmatpush1.msra.mxu0 0.0
        %1212 = vmatprep.subr.mxu0 0.0
        %1213 = vmatpush1.msra.mxu0 0.0
        %1214 = vmatprep.subr.mxu0 0.0
        %1215 = vmatpush1.msra.mxu0 0.0
        %1216 = vmatprep.subr.mxu0 0.0
        %1217 = vmatpush1.msra.mxu0 0.0
        %1218 = vmatprep.subr.mxu0 0.0
        %1219 = vmatpush1.msra.mxu0 0.0
        %1220 = vmatprep.subr.mxu0 0.0
        %1221 = vmatpush1.msra.mxu0 0.0
        %1222 = vmatprep.mubr.f32.mxu0 0.0
        %1223 = vmatmul.mubr.f32.gmra.mrb[0].mxu0 %v1156
        %v1224 = vpop.f32.mrb[0].mxu0
        %v1225 = vadd.f32 0.0, %v1224
        %v1226 = vpop.f32.mrb[0].mxu0
        %v1227 = vadd.f32 0.0, %v1226
        %1228 = vdwg.mxu0
        %v1230 = vcombine.high %v1225, %v1225
        %v1232 = vunpack.c.l.s4 1966171168
        %v1233 = vunpack.c.0.s8 %v1232
        %v1234 = vlaneseq
        %v1235 = vshrl.u32 %v1234, 7
        %v1236 = vsub.s32 %v1233, %v1235
        %v1237 = vrot.slane %v1225, %v1236
        %v1239 = vunpack.c.l.s4 1966171168
        %v1240 = vunpack.c.0.s8 %v1239
        %v1241 = vlaneseq
        %v1242 = vshrl.u32 %v1241, 7
        %v1243 = vsub.s32 %v1240, %v1242
        %v1244 = vrot.slane %v1230, %v1243
        %v1245 = vcombine.high %v1237, %v1237
        %v1246 = vcombine.high %v1244, %v1244
        %v1248 = vunpack.c.l.s4 1966171168
        %v1249 = vunpack.c.0.s8 %v1248
        %v1250 = vlaneseq
        %v1251 = vshrl.u32 %v1250, 7
        %v1252 = vsub.s32 %v1249, %v1251
        %v1253 = vrot.slane %v1237, %v1252
        %v1255 = vunpack.c.l.s4 1966171168
        %v1256 = vunpack.c.0.s8 %v1255
        %v1257 = vlaneseq
        %v1258 = vshrl.u32 %v1257, 7
        %v1259 = vsub.s32 %v1256, %v1258
        %v1260 = vrot.slane %v1244, %v1259
        %v1262 = vunpack.c.l.s4 1966171168
        %v1263 = vunpack.c.0.s8 %v1262
        %v1264 = vlaneseq
        %v1265 = vshrl.u32 %v1264, 7
        %v1266 = vsub.s32 %v1263, %v1265
        %v1267 = vrot.slane %v1245, %v1266
        %v1269 = vunpack.c.l.s4 1966171168
        %v1270 = vunpack.c.0.s8 %v1269
        %v1271 = vlaneseq
        %v1272 = vshrl.u32 %v1271, 7
        %v1273 = vsub.s32 %v1270, %v1272
        %v1274 = vrot.slane %v1246, %v1273
        %v1275 = vcombine.high %v1253, %v1253
        %v1276 = vcombine.high %v1260, %v1260
        %v1277 = vcombine.high %v1267, %v1267
        %v1278 = vcombine.high %v1274, %v1274
        %v1279 = vlaneseq
        %v1280 = vshrl.u32 %v1279, 7
        %v1281 = vsub.s32 0, %v1280
        %v1282 = vrot.slane %v1253, %v1281
        %v1283 = vlaneseq
        %v1284 = vshrl.u32 %v1283, 7
        %v1285 = vsub.s32 0, %v1284
        %v1286 = vrot.slane %v1267, %v1285
        %v1287 = vlaneseq
        %v1288 = vshrl.u32 %v1287, 7
        %v1289 = vsub.s32 0, %v1288
        %v1290 = vrot.slane %v1275, %v1289
        %v1291 = vlaneseq
        %v1292 = vshrl.u32 %v1291, 7
        %v1293 = vsub.s32 0, %v1292
        %v1294 = vrot.slane %v1277, %v1293
        %v1295 = vlaneseq
        %v1296 = vshrl.u32 %v1295, 7
        %v1297 = vsub.s32 0, %v1296
        %v1298 = vrot.slane %v1260, %v1297
        %v1299 = vlaneseq
        %v1300 = vshrl.u32 %v1299, 7
        %v1301 = vsub.s32 0, %v1300
        %v1302 = vrot.slane %v1274, %v1301
        %v1303 = vlaneseq
        %v1304 = vshrl.u32 %v1303, 7
        %v1305 = vsub.s32 0, %v1304
        %v1306 = vrot.slane %v1276, %v1305
        %v1307 = vlaneseq
        %v1308 = vshrl.u32 %v1307, 7
        %v1309 = vsub.s32 0, %v1308
        %v1310 = vrot.slane %v1278, %v1309
        %v1312 = vcombine.high %v1227, %v1227
        %v1314 = vunpack.c.l.s4 1966171168
        %v1315 = vunpack.c.0.s8 %v1314
        %v1316 = vlaneseq
        %v1317 = vshrl.u32 %v1316, 7
        %v1318 = vsub.s32 %v1315, %v1317
        %v1319 = vrot.slane %v1227, %v1318
        %v1321 = vunpack.c.l.s4 1966171168
        %v1322 = vunpack.c.0.s8 %v1321
        %v1323 = vlaneseq
        %v1324 = vshrl.u32 %v1323, 7
        %v1325 = vsub.s32 %v1322, %v1324
        %v1326 = vrot.slane %v1312, %v1325
        %v1327 = vcombine.high %v1319, %v1319
        %v1328 = vcombine.high %v1326, %v1326
        %v1330 = vunpack.c.l.s4 1966171168
        %v1331 = vunpack.c.0.s8 %v1330
        %v1332 = vlaneseq
        %v1333 = vshrl.u32 %v1332, 7
        %v1334 = vsub.s32 %v1331, %v1333
        %v1335 = vrot.slane %v1319, %v1334
        %v1337 = vunpack.c.l.s4 1966171168
        %v1338 = vunpack.c.0.s8 %v1337
        %v1339 = vlaneseq
        %v1340 = vshrl.u32 %v1339, 7
        %v1341 = vsub.s32 %v1338, %v1340
        %v1342 = vrot.slane %v1326, %v1341
        %v1344 = vunpack.c.l.s4 1966171168
        %v1345 = vunpack.c.0.s8 %v1344
        %v1346 = vlaneseq
        %v1347 = vshrl.u32 %v1346, 7
        %v1348 = vsub.s32 %v1345, %v1347
        %v1349 = vrot.slane %v1327, %v1348
        %v1351 = vunpack.c.l.s4 1966171168
        %v1352 = vunpack.c.0.s8 %v1351
        %v1353 = vlaneseq
        %v1354 = vshrl.u32 %v1353, 7
        %v1355 = vsub.s32 %v1352, %v1354
        %v1356 = vrot.slane %v1328, %v1355
        %v1357 = vcombine.high %v1335, %v1335
        %v1358 = vcombine.high %v1342, %v1342
        %v1359 = vcombine.high %v1349, %v1349
        %v1360 = vcombine.high %v1356, %v1356
        %v1361 = vlaneseq
        %v1362 = vshrl.u32 %v1361, 7
        %v1363 = vsub.s32 0, %v1362
        %v1364 = vrot.slane %v1335, %v1363
        %v1365 = vlaneseq
        %v1366 = vshrl.u32 %v1365, 7
        %v1367 = vsub.s32 0, %v1366
        %v1368 = vrot.slane %v1349, %v1367
        %v1369 = vlaneseq
        %v1370 = vshrl.u32 %v1369, 7
        %v1371 = vsub.s32 0, %v1370
        %v1372 = vrot.slane %v1357, %v1371
        %v1373 = vlaneseq
        %v1374 = vshrl.u32 %v1373, 7
        %v1375 = vsub.s32 0, %v1374
        %v1376 = vrot.slane %v1359, %v1375
        %v1377 = vlaneseq
        %v1378 = vshrl.u32 %v1377, 7
        %v1379 = vsub.s32 0, %v1378
        %v1380 = vrot.slane %v1342, %v1379
        %v1381 = vlaneseq
        %v1382 = vshrl.u32 %v1381, 7
        %v1383 = vsub.s32 0, %v1382
        %v1384 = vrot.slane %v1356, %v1383
        %v1385 = vlaneseq
        %v1386 = vshrl.u32 %v1385, 7
        %v1387 = vsub.s32 0, %v1386
        %v1388 = vrot.slane %v1358, %v1387
        %v1389 = vlaneseq
        %v1390 = vshrl.u32 %v1389, 7
        %v1391 = vsub.s32 0, %v1390
        %v1392 = vrot.slane %v1360, %v1391
        %v1393 = vcombine.low %v1282, %v1286
        %v1394 = vcombine.low %v1290, %v1294
        %v1395 = vcombine.low %v1298, %v1302
        %v1396 = vcombine.low %v1306, %v1310
        %v1401 = vsub.f32 %v916, %v1393
        %v1402 = vsub.f32 %v921, %v1394
        %v1403 = vsub.f32 %v926, %v1395
        %v1404 = vsub.f32 %v931, %v1396
        %v1405 = vcombine.low %v1364, %v1368
        %v1406 = vcombine.low %v1372, %v1376
        %v1407 = vcombine.low %v1380, %v1384
        %v1408 = vcombine.low %v1388, %v1392
        %v1413 = vmul.f32 %v1401, %v1405
        %v1414 = vmul.f32 %v1402, %v1406
        %v1415 = vmul.f32 %v1403, %v1407
        %v1416 = vmul.f32 %v1404, %v1408
        %v1417 = vlaneseq
        %v1418 = vshrl.u32 %v1417, 7
        %v1419 = vsub.s32 0, %v1418
        %v1420 = vrot.slane %v938, %v1419
        %v1421 = vmul.f32 %v1413, %v1420
        %v1422 = vmul.f32 %v1414, %v1420
        %v1423 = vmul.f32 %v1415, %v1420
        %v1424 = vmul.f32 %v1416, %v1420
        %v1425 = vlaneseq
        %v1426 = vshrl.u32 %v1425, 7
        %v1427 = vsub.s32 0, %v1426
        %v1428 = vrot.slane %v939, %v1427
        %v1429 = vadd.f32 %v1421, %v1428
        %v1430 = vadd.f32 %v1422, %v1428
        %v1431 = vadd.f32 %v1423, %v1428
        %v1432 = vadd.f32 %v1424, %v1428
        %v1433 = vmul.f32 %v1429, 0.5
        %v1434 = vmul.f32 %v1430, 0.5
        %v1435 = vmul.f32 %v1431, 0.5
        %v1436 = vmul.f32 %v1432, 0.5
        %v1437 = vmul.f32 %v1429, 0.70710677
        %v1438 = vmul.f32 %v1430, 0.70710677
        %v1439 = vmul.f32 %v1431, 0.70710677
        %v1440 = vmul.f32 %v1432, 0.70710677
        %v1441 = verf.f32.pop %v1437
        %v1442 = verf.f32.pop %v1438
        %v1443 = verf.f32.pop %v1439
        %v1444 = verf.f32.pop %v1440
        %v1445 = vadd.f32 %v1441, 1.0
        %v1446 = vadd.f32 %v1442, 1.0
        %v1447 = vadd.f32 %v1443, 1.0
        %v1448 = vadd.f32 %v1444, 1.0
        %v1449 = vmul.f32 %v1433, %v1445
        %v1450 = vmul.f32 %v1434, %v1446
        %v1451 = vmul.f32 %v1435, %v1447
        %v1452 = vmul.f32 %v1436, %v1448
        %v1453 = vld [vmem:[#allocation5 + $0x6] sm:$0x1]
        %v1454 = vpack.c.bf16 %v1450, %v1449
        %v1455 = vpack.c.bf16 %v1452, %v1451
        %v1456 = vld [vmem:[%s2] sm:$0xff]
        %v1457 = vld [vmem:[%s2 + $0x8] sm:$0xf]
        %v1458 = vld [vmem:[%s2 + $0xc] sm:$0xff]
        %v1459 = vld [vmem:[%s2 + $0x14] sm:$0xf]
        %v1460 = vld [vmem:[%s2 + $0x18] sm:$0xff]
        %v1461 = vld [vmem:[%s2 + $0x20] sm:$0xf]
        %v1462 = vld [vmem:[%s2 + $0x24] sm:$0xff]
        %v1463 = vld [vmem:[%s2 + $0x2c] sm:$0xf]
        %v1464 = vld [vmem:[%s2 + $0x30] sm:$0xff]
        %v1465 = vld [vmem:[%s2 + $0x38] sm:$0xf]
        %v1466 = vld [vmem:[%s2 + $0x3c] sm:$0xff]
        %v1467 = vld [vmem:[%s2 + $0x44] sm:$0xf]
        %v1468 = vld [vmem:[%s2 + $0x48] sm:$0xff]
        %v1469 = vld [vmem:[%s2 + $0x50] sm:$0xf]
        %v1470 = vld [vmem:[%s2 + $0x54] sm:$0xff]
        %v1471 = vld [vmem:[%s2 + $0x5c] sm:$0xf]
        %v1472 = vld [vmem:[%s2 + $0x60] sm:$0xff]
        %v1473 = vld [vmem:[%s2 + $0x68] sm:$0xf]
        %v1474 = vld [vmem:[%s2 + $0x6c] sm:$0xff]
        %v1475 = vld [vmem:[%s2 + $0x74] sm:$0xf]
        %v1476 = vld [vmem:[%s2 + $0x78] sm:$0xff]
        %v1477 = vld [vmem:[%s2 + $0x80] sm:$0xf]
        %v1478 = vld [vmem:[%s2 + $0x84] sm:$0xff]
        %v1479 = vld [vmem:[%s2 + $0x8c] sm:$0xf]
        %v1480 = vld [vmem:[%s2 + $0x90] sm:$0xff]
        %v1481 = vld [vmem:[%s2 + $0x98] sm:$0xf]
        %v1482 = vld [vmem:[%s2 + $0x9c] sm:$0xff]
        %v1483 = vld [vmem:[%s2 + $0xa4] sm:$0xf]
        %v1484 = vld [vmem:[%s2 + $0xa8] sm:$0xff]
        %v1485 = vld [vmem:[%s2 + $0xb0] sm:$0xf]
        %v1486 = vld [vmem:[%s2 + $0xb4] sm:$0xff]
        %v1487 = vld [vmem:[%s2 + $0xbc] sm:$0xf]
        %v1520 = vunpack.c.l.b16 %v1456
        %v1521 = vunpack.c.h.b16 %v1456
        %v1522 = vunpack.c.l.b16 %v1457
        %v1523 = vunpack.c.l.b16 %v1458
        %v1524 = vunpack.c.h.b16 %v1458
        %v1525 = vunpack.c.l.b16 %v1459
        %v1526 = vunpack.c.l.b16 %v1460
        %v1527 = vunpack.c.h.b16 %v1460
        %v1528 = vunpack.c.l.b16 %v1461
        %v1529 = vunpack.c.l.b16 %v1462
        %v1530 = vunpack.c.h.b16 %v1462
        %v1531 = vunpack.c.l.b16 %v1463
        %v1532 = vunpack.c.l.b16 %v1464
        %v1533 = vunpack.c.h.b16 %v1464
        %v1534 = vunpack.c.l.b16 %v1465
        %v1535 = vunpack.c.l.b16 %v1466
        %v1536 = vunpack.c.h.b16 %v1466
        %v1537 = vunpack.c.l.b16 %v1467
        %v1538 = vunpack.c.l.b16 %v1468
        %v1539 = vunpack.c.h.b16 %v1468
        %v1540 = vunpack.c.l.b16 %v1469
        %v1541 = vunpack.c.l.b16 %v1470
        %v1542 = vunpack.c.h.b16 %v1470
        %v1543 = vunpack.c.l.b16 %v1471
        %v1544 = vunpack.c.l.b16 %v1472
        %v1545 = vunpack.c.h.b16 %v1472
        %v1546 = vunpack.c.l.b16 %v1473
        %v1547 = vunpack.c.l.b16 %v1474
        %v1548 = vunpack.c.h.b16 %v1474
        %v1549 = vunpack.c.l.b16 %v1475
        %v1550 = vunpack.c.l.b16 %v1476
        %v1551 = vunpack.c.h.b16 %v1476
        %v1552 = vunpack.c.l.b16 %v1477
        %v1553 = vunpack.c.l.b16 %v1478
        %v1554 = vunpack.c.h.b16 %v1478
        %v1555 = vunpack.c.l.b16 %v1479
        %v1556 = vunpack.c.l.b16 %v1480
        %v1557 = vunpack.c.h.b16 %v1480
        %v1558 = vunpack.c.l.b16 %v1481
        %v1559 = vunpack.c.l.b16 %v1482
        %v1560 = vunpack.c.h.b16 %v1482
        %v1561 = vunpack.c.l.b16 %v1483
        %v1562 = vunpack.c.l.b16 %v1484
        %v1563 = vunpack.c.h.b16 %v1484
        %v1564 = vunpack.c.l.b16 %v1485
        %v1565 = vunpack.c.l.b16 %v1486
        %v1566 = vunpack.c.h.b16 %v1486
        %v1567 = vunpack.c.l.b16 %v1487
        %v1568 = vpack.c.b16 %v1523, %v1520
        %v1569 = vpack.c.b16 %v1524, %v1521
        %v1570 = vpack.c.b16 %v1525, %v1522
        %v1571 = vpack.c.b16 %v1529, %v1526
        %v1572 = vpack.c.b16 %v1530, %v1527
        %v1573 = vpack.c.b16 %v1531, %v1528
        %v1574 = vpack.c.b16 %v1535, %v1532
        %v1575 = vpack.c.b16 %v1536, %v1533
        %v1576 = vpack.c.b16 %v1537, %v1534
        %v1577 = vpack.c.b16 %v1541, %v1538
        %v1578 = vpack.c.b16 %v1542, %v1539
        %v1579 = vpack.c.b16 %v1543, %v1540
        %v1580 = vpack.c.b16 %v1547, %v1544
        %v1581 = vpack.c.b16 %v1548, %v1545
        %v1582 = vpack.c.b16 %v1549, %v1546
        %v1583 = vpack.c.b16 %v1553, %v1550
        %v1584 = vpack.c.b16 %v1554, %v1551
        %v1585 = vpack.c.b16 %v1555, %v1552
        %v1586 = vpack.c.b16 %v1559, %v1556
        %v1587 = vpack.c.b16 %v1560, %v1557
        %v1588 = vpack.c.b16 %v1561, %v1558
        %v1589 = vpack.c.b16 %v1565, %v1562
        %v1590 = vpack.c.b16 %v1566, %v1563
        %v1591 = vpack.c.b16 %v1567, %v1564
        %1616 = vmatprep.subr.bf16.mxu0 %v1569
        %1617 = vmatpush1.bf16.msra.mxu0 %v1568
        %1618 = vmatprep.subr.bf16.mxu0 %v1572
        %1619 = vmatpush1.bf16.msra.mxu0 %v1571
        %1620 = vmatprep.subr.bf16.mxu0 %v1575
        %1621 = vmatpush1.bf16.msra.mxu0 %v1574
        %1622 = vmatprep.subr.bf16.mxu0 %v1578
        %1623 = vmatpush1.bf16.msra.mxu0 %v1577
        %1624 = vmatprep.subr.bf16.mxu0 %v1581
        %1625 = vmatpush1.bf16.msra.mxu0 %v1580
        %1626 = vmatprep.subr.bf16.mxu0 %v1584
        %1627 = vmatpush1.bf16.msra.mxu0 %v1583
        %1628 = vmatprep.subr.bf16.mxu0 %v1587
        %1629 = vmatpush1.bf16.msra.mxu0 %v1586
        %1630 = vmatprep.subr.bf16.mxu0 %v1590
        %1631 = vmatpush1.bf16.msra.mxu0 %v1589
        %1632 = vmatprep.subr.bf16.mxu0 0
        %1633 = vmatpush1.bf16.msra.mxu0 0
        %1634 = vmatprep.subr.bf16.mxu0 0
        %1635 = vmatpush1.bf16.msra.mxu0 0
        %1636 = vmatprep.subr.bf16.mxu0 0
        %1637 = vmatpush1.bf16.msra.mxu0 0
        %1638 = vmatprep.subr.bf16.mxu0 0
        %1639 = vmatpush1.bf16.msra.mxu0 0
        %1640 = vmatprep.subr.bf16.mxu0 0
        %1641 = vmatpush1.bf16.msra.mxu0 0
        %1642 = vmatprep.subr.bf16.mxu0 0
        %1643 = vmatpush1.bf16.msra.mxu0 0
        %1644 = vmatprep.subr.bf16.mxu0 0
        %1645 = vmatpush1.bf16.msra.mxu0 0
        %1646 = vmatprep.subr.bf16.mxu0 0
        %1647 = vmatpush1.bf16.msra.mxu0 0
        %1648 = vmatprep.mubr.bf16.mxu0 0
        %1649 = vmatmul.mubr.bf16.gmra.mrb[0].mxu0 %v1454
        %v1650 = vpop.f32.mrb[0].mxu0
        %v1651 = vadd.f32 0.0, %v1650
        %v1652 = vpop.f32.mrb[0].mxu0
        %v1653 = vadd.f32 0.0, %v1652
        %v1654 = vpop.f32.mrb[0].mxu0
        %v1655 = vadd.f32 0.0, %v1654
        %v1656 = vpop.f32.mrb[0].mxu0
        %v1657 = vadd.f32 0.0, %v1656
        %1658 = vmatprep.mubr.bf16.mxu0 0
        %1659 = vmatmul.mubr.bf16.gmra.mrb[0].mxu0 %v1455
        %v1660 = vpop.f32.mrb[0].mxu0
        %v1661 = vadd.f32 0.0, %v1660
        %v1662 = vpop.f32.mrb[0].mxu0
        %v1663 = vadd.f32 0.0, %v1662
        %v1664 = vpop.f32.mrb[0].mxu0
        %v1665 = vadd.f32 0.0, %v1664
        %v1666 = vpop.f32.mrb[0].mxu0
        %v1667 = vadd.f32 0.0, %v1666
        %1668 = vdwg.mxu0
        %1669 = vmatprep.subr.bf16.mxu0 0
        %1670 = vmatpush1.bf16.msra.mxu0 %v1570
        %1671 = vmatprep.subr.bf16.mxu0 0
        %1672 = vmatpush1.bf16.msra.mxu0 %v1573
        %1673 = vmatprep.subr.bf16.mxu0 0
        %1674 = vmatpush1.bf16.msra.mxu0 %v1576
        %1675 = vmatprep.subr.bf16.mxu0 0
        %1676 = vmatpush1.bf16.msra.mxu0 %v1579
        %1677 = vmatprep.subr.bf16.mxu0 0
        %1678 = vmatpush1.bf16.msra.mxu0 %v1582
        %1679 = vmatprep.subr.bf16.mxu0 0
        %1680 = vmatpush1.bf16.msra.mxu0 %v1585
        %1681 = vmatprep.subr.bf16.mxu0 0
        %1682 = vmatpush1.bf16.msra.mxu0 %v1588
        %1683 = vmatprep.subr.bf16.mxu0 0
        %1684 = vmatpush1.bf16.msra.mxu0 %v1591
        %1685 = vmatprep.subr.bf16.mxu0 0
        %1686 = vmatpush1.bf16.msra.mxu0 0
        %1687 = vmatprep.subr.bf16.mxu0 0
        %1688 = vmatpush1.bf16.msra.mxu0 0
        %1689 = vmatprep.subr.bf16.mxu0 0
        %1690 = vmatpush1.bf16.msra.mxu0 0
        %1691 = vmatprep.subr.bf16.mxu0 0
        %1692 = vmatpush1.bf16.msra.mxu0 0
        %1693 = vmatprep.subr.bf16.mxu0 0
        %1694 = vmatpush1.bf16.msra.mxu0 0
        %1695 = vmatprep.subr.bf16.mxu0 0
        %1696 = vmatpush1.bf16.msra.mxu0 0
        %1697 = vmatprep.subr.bf16.mxu0 0
        %1698 = vmatpush1.bf16.msra.mxu0 0
        %1699 = vmatprep.subr.bf16.mxu0 0
        %1700 = vmatpush1.bf16.msra.mxu0 0
        %1701 = vmatprep.mubr.bf16.mxu0 0
        %1702 = vmatmul.mubr.bf16.gmra.mrb[0].mxu0 %v1454
        %v1703 = vpop.f32.mrb[0].mxu0
        %v1704 = vadd.f32 0.0, %v1703
        %v1705 = vpop.f32.mrb[0].mxu0
        %v1706 = vpop.f32.mrb[0].mxu0
        %v1707 = vadd.f32 0.0, %v1706
        %v1708 = vpop.f32.mrb[0].mxu0
        %1709 = vmatprep.mubr.bf16.mxu0 0
        %1710 = vmatmul.mubr.bf16.gmra.mrb[0].mxu0 %v1455
        %v1711 = vpop.f32.mrb[0].mxu0
        %v1712 = vadd.f32 0.0, %v1711
        %v1713 = vpop.f32.mrb[0].mxu0
        %v1714 = vpop.f32.mrb[0].mxu0
        %v1715 = vadd.f32 0.0, %v1714
        %v1716 = vpop.f32.mrb[0].mxu0
        %1717 = vdwg.mxu0
        %v1718 = vrot.slane %v1651, 7
        %v1719 = vrot.slane %v1655, 7
        %v1720 = vrot.slane %v1661, 7
        %v1721 = vrot.slane %v1665, 7
        %v1722 = vlaneseq
        %v1723 = vshrl.u32 %v1722, 7
        %vm1724 = vcmp.lt.s32.totalorder %v1723, 1
        %v1725 = vsel %vm1724, %v1720, %v1721
        %v1726 = vsel %vm1724, %v1719, %v1720
        %v1727 = vsel %vm1724, %v1718, %v1719
        %v1728 = vsel %vm1724, %v1721, %v1718
        %1730 = vset.pattern.permute.xlu0 0
        %1731 = vperm.xlu0 %1730, %v934
        %v1732 = vpop.permute.xlu0 %1731
        %1735 = vset.pattern.permute.xlu0 0
        %1736 = vperm.xlu0 %1735, %v935
        %v1737 = vpop.permute.xlu0 %1736
        %1740 = vset.pattern.permute.xlu0 0
        %1741 = vperm.xlu0 %1740, %v936
        %v1742 = vpop.permute.xlu0 %1741
        %1745 = vset.pattern.permute.xlu0 0
        %1746 = vperm.xlu0 %1745, %v937
        %v1747 = vpop.permute.xlu0 %1746
        %v1749 = vmul.f32 %v1728, %v1732
        %v1750 = vmul.f32 %v1727, %v1737
        %v1751 = vmul.f32 %v1726, %v1742
        %v1752 = vmul.f32 %v1725, %v1747
        %v1753 = vrot.slane %v1704, 1
        %v1754 = vrot.slane %v1707, 1
        %v1755 = vrot.slane %v1712, 1
        %v1756 = vrot.slane %v1715, 1
        %vm1757 = vcmp.lt.s32.totalorder %v1723, 7
        %v1758 = vsel %vm1757, %v1755, %v1756
        %v1759 = vsel %vm1757, %v1754, %v1755
        %v1760 = vsel %vm1757, %v1753, %v1754
        %v1761 = vsel %vm1757, %v1756, %v1753
        %1762 = vset.pattern.permute.xlu0 1
        %1763 = vperm.xlu0 %1762, %v934
        %v1764 = vpop.permute.xlu0 %1763
        %1766 = vset.pattern.permute.xlu0 1
        %1767 = vperm.xlu0 %1766, %v935
        %v1768 = vpop.permute.xlu0 %1767
        %1770 = vset.pattern.permute.xlu0 1
        %1771 = vperm.xlu0 %1770, %v936
        %v1772 = vpop.permute.xlu0 %1771
        %1774 = vset.pattern.permute.xlu0 1
        %1775 = vperm.xlu0 %1774, %v937
        %v1776 = vpop.permute.xlu0 %1775
        %v1778 = vmul.f32 %v1760, %v1764
        %v1779 = vmul.f32 %v1759, %v1768
        %v1780 = vmul.f32 %v1758, %v1772
        %v1781 = vmul.f32 %v1761, %v1776
        %v1782 = vadd.f32 %v1749, %v1653
        %v1783 = vadd.f32 %v1750, %v1657
        %v1784 = vadd.f32 %v1751, %v1663
        %v1785 = vadd.f32 %v1752, %v1667
        %v1786 = vadd.f32 %v1782, %v1778
        %v1787 = vadd.f32 %v1783, %v1779
        %v1788 = vadd.f32 %v1784, %v1780
        %v1789 = vadd.f32 %v1785, %v1781
        %v1790 = vlaneseq
        %v1791 = vshrl.u32 %v1790, 7
        %v1792 = vsub.s32 0, %v1791
        %v1793 = vrot.slane %v1453, %v1792
        %v1794 = vadd.f32 %v1786, %v1793
        %v1795 = vadd.f32 %v1787, %v1793
        %v1796 = vadd.f32 %v1788, %v1793
        %v1797 = vadd.f32 %v1789, %v1793
        %v1798 = vld [vmem:[#allocation5 + $0x7] sm:$0x1]
        %v1799 = vld [vmem:[#allocation5 + $0x8] sm:$0x1]
        %v1800 = vmul.f32 %v1794, %v1794
        %v1801 = vmul.f32 %v1795, %v1795
        %v1802 = vmul.f32 %v1796, %v1796
        %v1803 = vmul.f32 %v1797, %v1797
        %1804 = vmatprep.subr.mxu0 0.0
        %1805 = vmatpush1.msra.mxu0 %v944
        %1806 = vmatprep.subr.mxu0 0.0
        %1807 = vmatpush1.msra.mxu0 %v945
        %1808 = vmatprep.subr.mxu0 0.0
        %1809 = vmatpush1.msra.mxu0 %v946
        %1810 = vmatprep.subr.mxu0 0.0
        %1811 = vmatpush1.msra.mxu0 %v947
        %1812 = vmatprep.subr.mxu0 0.0
        %1813 = vmatpush1.msra.mxu0 %v948
        %1814 = vmatprep.subr.mxu0 0.0
        %1815 = vmatpush1.msra.mxu0 %v949
        %1816 = vmatprep.subr.mxu0 0.0
        %1817 = vmatpush1.msra.mxu0 %v950
        %1818 = vmatprep.subr.mxu0 0.0
        %1819 = vmatpush1.msra.mxu0 %v951
        %1820 = vmatprep.subr.mxu0 0.0
        %1821 = vmatpush1.msra.mxu0 %v952
        %1822 = vmatprep.subr.mxu0 0.0
        %1823 = vmatpush1.msra.mxu0 %v953
        %1824 = vmatprep.subr.mxu0 0.0
        %1825 = vmatpush1.msra.mxu0 %v954
        %1826 = vmatprep.subr.mxu0 0.0
        %1827 = vmatpush1.msra.mxu0 %v955
        %1828 = vmatprep.subr.mxu0 0.0
        %1829 = vmatpush1.msra.mxu0 %v956
        %1830 = vmatprep.subr.mxu0 0.0
        %1831 = vmatpush1.msra.mxu0 %v957
        %1832 = vmatprep.subr.mxu0 0.0
        %1833 = vmatpush1.msra.mxu0 %v958
        %1834 = vmatprep.subr.mxu0 0.0
        %1835 = vmatpush1.msra.mxu0 %v959
        %1836 = vmatprep.subr.mxu0 0.0
        %1837 = vmatpush1.msra.mxu0 %v960
        %1838 = vmatprep.subr.mxu0 0.0
        %1839 = vmatpush1.msra.mxu0 %v961
        %1840 = vmatprep.subr.mxu0 0.0
        %1841 = vmatpush1.msra.mxu0 %v962
        %1842 = vmatprep.subr.mxu0 0.0
        %1843 = vmatpush1.msra.mxu0 %v963
        %1844 = vmatprep.subr.mxu0 0.0
        %1845 = vmatpush1.msra.mxu0 %v964
        %1846 = vmatprep.subr.mxu0 0.0
        %1847 = vmatpush1.msra.mxu0 %v965
        %1848 = vmatprep.subr.mxu0 0.0
        %1849 = vmatpush1.msra.mxu0 %v966
        %1850 = vmatprep.subr.mxu0 0.0
        %1851 = vmatpush1.msra.mxu0 %v967
        %1852 = vmatprep.subr.mxu0 0.0
        %1853 = vmatpush1.msra.mxu0 %v968
        %1854 = vmatprep.subr.mxu0 0.0
        %1855 = vmatpush1.msra.mxu0 %v969
        %1856 = vmatprep.subr.mxu0 0.0
        %1857 = vmatpush1.msra.mxu0 %v970
        %1858 = vmatprep.subr.mxu0 0.0
        %1859 = vmatpush1.msra.mxu0 %v971
        %1860 = vmatprep.subr.mxu0 0.0
        %1861 = vmatpush1.msra.mxu0 %v972
        %1862 = vmatprep.subr.mxu0 0.0
        %1863 = vmatpush1.msra.mxu0 %v973
        %1864 = vmatprep.subr.mxu0 0.0
        %1865 = vmatpush1.msra.mxu0 %v974
        %1866 = vmatprep.subr.mxu0 0.0
        %1867 = vmatpush1.msra.mxu0 %v975
        %1868 = vmatprep.mubr.f32.mxu0 %v1800
        %1869 = vmatmul.mubr.f32.gmra.mrb[0].mxu0 %v1794
        %v1870 = vpop.f32.mrb[0].mxu0
        %v1871 = vadd.f32 0.0, %v1870
        %v1872 = vpop.f32.mrb[0].mxu0
        %1873 = vmatprep.mubr.f32.mxu0 %v1801
        %1874 = vmatmul.mubr.f32.gmra.mrb[0].mxu0 %v1795
        %v1875 = vpop.f32.mrb[0].mxu0
        %v1876 = vadd.f32 0.0, %v1875
        %v1877 = vpop.f32.mrb[0].mxu0
        %1878 = vmatprep.mubr.f32.mxu0 %v1802
        %1879 = vmatmul.mubr.f32.gmra.mrb[0].mxu0 %v1796
        %v1880 = vpop.f32.mrb[0].mxu0
        %v1881 = vadd.f32 0.0, %v1880
        %v1882 = vpop.f32.mrb[0].mxu0
        %1883 = vmatprep.mubr.f32.mxu0 %v1803
        %1884 = vmatmul.mubr.f32.gmra.mrb[0].mxu0 %v1797
        %v1885 = vpop.f32.mrb[0].mxu0
        %v1886 = vadd.f32 0.0, %v1885
        %v1887 = vpop.f32.mrb[0].mxu0
        %1888 = vdwg.mxu0
        %1889 = vmatprep.subr.mxu0 0.0
        %1890 = vmatpush1.msra.mxu0 %v1871
        %1891 = vmatprep.subr.mxu0 0.0
        %1892 = vmatpush1.msra.mxu0 %v1876
        %1893 = vmatprep.subr.mxu0 0.0
        %1894 = vmatpush1.msra.mxu0 %v1881
        %1895 = vmatprep.subr.mxu0 0.0
        %1896 = vmatpush1.msra.mxu0 %v1886
        %1897 = vmatprep.subr.mxu0 0.0
        %1898 = vmatpush1.msra.mxu0 0.0
        %1899 = vmatprep.subr.mxu0 0.0
        %1900 = vmatpush1.msra.mxu0 0.0
        %1901 = vmatprep.subr.mxu0 0.0
        %1902 = vmatpush1.msra.mxu0 0.0
        %1903 = vmatprep.subr.mxu0 0.0
        %1904 = vmatpush1.msra.mxu0 0.0
        %1905 = vmatprep.subr.mxu0 0.0
        %1906 = vmatpush1.msra.mxu0 0.0
        %1907 = vmatprep.subr.mxu0 0.0
        %1908 = vmatpush1.msra.mxu0 0.0
        %1909 = vmatprep.subr.mxu0 0.0
        %1910 = vmatpush1.msra.mxu0 0.0
        %1911 = vmatprep.subr.mxu0 0.0
        %1912 = vmatpush1.msra.mxu0 0.0
        %1913 = vmatprep.subr.mxu0 0.0
        %1914 = vmatpush1.msra.mxu0 0.0
        %1915 = vmatprep.subr.mxu0 0.0
        %1916 = vmatpush1.msra.mxu0 0.0
        %1917 = vmatprep.subr.mxu0 0.0
        %1918 = vmatpush1.msra.mxu0 0.0
        %1919 = vmatprep.subr.mxu0 0.0
        %1920 = vmatpush1.msra.mxu0 0.0
        %1921 = vmatprep.subr.mxu0 0.0
        %1922 = vmatpush1.msra.mxu0 0.0
        %1923 = vmatprep.subr.mxu0 0.0
        %1924 = vmatpush1.msra.mxu0 0.0
        %1925 = vmatprep.subr.mxu0 0.0
        %1926 = vmatpush1.msra.mxu0 0.0
        %1927 = vmatprep.subr.mxu0 0.0
        %1928 = vmatpush1.msra.mxu0 0.0
        %1929 = vmatprep.subr.mxu0 0.0
        %1930 = vmatpush1.msra.mxu0 0.0
        %1931 = vmatprep.subr.mxu0 0.0
        %1932 = vmatpush1.msra.mxu0 0.0
        %1933 = vmatprep.subr.mxu0 0.0
        %1934 = vmatpush1.msra.mxu0 0.0
        %1935 = vmatprep.subr.mxu0 0.0
        %1936 = vmatpush1.msra.mxu0 0.0
        %1937 = vmatprep.subr.mxu0 0.0
        %1938 = vmatpush1.msra.mxu0 0.0
        %1939 = vmatprep.subr.mxu0 0.0
        %1940 = vmatpush1.msra.mxu0 0.0
        %1941 = vmatprep.subr.mxu0 0.0
        %1942 = vmatpush1.msra.mxu0 0.0
        %1943 = vmatprep.subr.mxu0 0.0
        %1944 = vmatpush1.msra.mxu0 0.0
        %1945 = vmatprep.subr.mxu0 0.0
        %1946 = vmatpush1.msra.mxu0 0.0
        %1947 = vmatprep.subr.mxu0 0.0
        %1948 = vmatpush1.msra.mxu0 0.0
        %1949 = vmatprep.subr.mxu0 0.0
        %1950 = vmatpush1.msra.mxu0 0.0
        %1951 = vmatprep.subr.mxu0 0.0
        %1952 = vmatpush1.msra.mxu0 0.0
        %1953 = vmatprep.mubr.f32.mxu0 0.0
        %1954 = vmatmul.mubr.f32.gmra.mrb[0].mxu0 %v1063
        %v1955 = vpop.f32.mrb[0].mxu0
        %v1956 = vadd.f32 0.0, %v1955
        %v1957 = vpop.f32.mrb[0].mxu0
        %1958 = vdwg.mxu0
        %v1959 = vmul.f32 %v1956, 0.03125
        %v1960 = vmul.f32 %v1959, %v1959
        %1962 = vrot.lane.b32.xlu0 %v1960, 16
        %v1963 = vpop.permute.xlu0 %1962
        %v1965 = vsub.f32 %v1959, %v1963
        %v1966 = vmax.f32 %v1965, 0.0
        %v1967 = vadd.f32 %v1966, 1e-05
        %v1968 = vrsqrt.pop %v1967
        %v1969 = vsel %vm1145, %v1959, %v1968
        %v1971 = vsel %vm723, %v1969, 0
        %1973 = vmatprep.subr.mxu0 %v1148
        %1974 = vmatpush1.msra.mxu0 %v1147
        %1975 = vmatprep.subr.mxu0 %v1150
        %1976 = vmatpush1.msra.mxu0 %v1149
        %1977 = vmatprep.subr.mxu0 %v1152
        %1978 = vmatpush1.msra.mxu0 %v1151
        %1979 = vmatprep.subr.mxu0 %v1154
        %1980 = vmatpush1.msra.mxu0 %v1153
        %1981 = vmatprep.subr.mxu0 0.0
        %1982 = vmatpush1.msra.mxu0 0.0
        %1983 = vmatprep.subr.mxu0 0.0
        %1984 = vmatpush1.msra.mxu0 0.0
        %1985 = vmatprep.subr.mxu0 0.0
        %1986 = vmatpush1.msra.mxu0 0.0
        %1987 = vmatprep.subr.mxu0 0.0
        %1988 = vmatpush1.msra.mxu0 0.0
        %1989 = vmatprep.subr.mxu0 0.0
        %1990 = vmatpush1.msra.mxu0 0.0
        %1991 = vmatprep.subr.mxu0 0.0
        %1992 = vmatpush1.msra.mxu0 0.0
        %1993 = vmatprep.subr.mxu0 0.0
        %1994 = vmatpush1.msra.mxu0 0.0
        %1995 = vmatprep.subr.mxu0 0.0
        %1996 = vmatpush1.msra.mxu0 0.0
        %1997 = vmatprep.subr.mxu0 0.0
        %1998 = vmatpush1.msra.mxu0 0.0
        %1999 = vmatprep.subr.mxu0 0.0
        %2000 = vmatpush1.msra.mxu0 0.0
        %2001 = vmatprep.subr.mxu0 0.0
        %2002 = vmatpush1.msra.mxu0 0.0
        %2003 = vmatprep.subr.mxu0 0.0
        %2004 = vmatpush1.msra.mxu0 0.0
        %2005 = vmatprep.subr.mxu0 0.0
        %2006 = vmatpush1.msra.mxu0 0.0
        %2007 = vmatprep.subr.mxu0 0.0
        %2008 = vmatpush1.msra.mxu0 0.0
        %2009 = vmatprep.subr.mxu0 0.0
        %2010 = vmatpush1.msra.mxu0 0.0
        %2011 = vmatprep.subr.mxu0 0.0
        %2012 = vmatpush1.msra.mxu0 0.0
        %2013 = vmatprep.subr.mxu0 0.0
        %2014 = vmatpush1.msra.mxu0 0.0
        %2015 = vmatprep.subr.mxu0 0.0
        %2016 = vmatpush1.msra.mxu0 0.0
        %2017 = vmatprep.subr.mxu0 0.0
        %2018 = vmatpush1.msra.mxu0 0.0
        %2019 = vmatprep.subr.mxu0 0.0
        %2020 = vmatpush1.msra.mxu0 0.0
        %2021 = vmatprep.subr.mxu0 0.0
        %2022 = vmatpush1.msra.mxu0 0.0
        %2023 = vmatprep.subr.mxu0 0.0
        %2024 = vmatpush1.msra.mxu0 0.0
        %2025 = vmatprep.subr.mxu0 0.0
        %2026 = vmatpush1.msra.mxu0 0.0
        %2027 = vmatprep.subr.mxu0 0.0
        %2028 = vmatpush1.msra.mxu0 0.0
        %2029 = vmatprep.subr.mxu0 0.0
        %2030 = vmatpush1.msra.mxu0 0.0
        %2031 = vmatprep.subr.mxu0 0.0
        %2032 = vmatpush1.msra.mxu0 0.0
        %2033 = vmatprep.subr.mxu0 0.0
        %2034 = vmatpush1.msra.mxu0 0.0
        %2035 = vmatprep.subr.mxu0 0.0
        %2036 = vmatpush1.msra.mxu0 0.0
        %2037 = vmatprep.mubr.f32.mxu0 0.0
        %2038 = vmatmul.mubr.f32.gmra.mrb[0].mxu0 %v1971
        %v2039 = vpop.f32.mrb[0].mxu0
        %v2040 = vadd.f32 0.0, %v2039
        %v2041 = vpop.f32.mrb[0].mxu0
        %v2042 = vadd.f32 0.0, %v2041
        %2043 = vdwg.mxu0
        %v2045 = vcombine.high %v2040, %v2040
        %v2047 = vunpack.c.l.s4 1966171168
        %v2048 = vunpack.c.0.s8 %v2047
        %v2049 = vlaneseq
        %v2050 = vshrl.u32 %v2049, 7
        %v2051 = vsub.s32 %v2048, %v2050
        %v2052 = vrot.slane %v2040, %v2051
        %v2054 = vunpack.c.l.s4 1966171168
        %v2055 = vunpack.c.0.s8 %v2054
        %v2056 = vlaneseq
        %v2057 = vshrl.u32 %v2056, 7
        %v2058 = vsub.s32 %v2055, %v2057
        %v2059 = vrot.slane %v2045, %v2058
        %v2060 = vcombine.high %v2052, %v2052
        %v2061 = vcombine.high %v2059, %v2059
        %v2063 = vunpack.c.l.s4 1966171168
        %v2064 = vunpack.c.0.s8 %v2063
        %v2065 = vlaneseq
        %v2066 = vshrl.u32 %v2065, 7
        %v2067 = vsub.s32 %v2064, %v2066
        %v2068 = vrot.slane %v2052, %v2067
        %v2070 = vunpack.c.l.s4 1966171168
        %v2071 = vunpack.c.0.s8 %v2070
        %v2072 = vlaneseq
        %v2073 = vshrl.u32 %v2072, 7
        %v2074 = vsub.s32 %v2071, %v2073
        %v2075 = vrot.slane %v2059, %v2074
        %v2077 = vunpack.c.l.s4 1966171168
        %v2078 = vunpack.c.0.s8 %v2077
        %v2079 = vlaneseq
        %v2080 = vshrl.u32 %v2079, 7
        %v2081 = vsub.s32 %v2078, %v2080
        %v2082 = vrot.slane %v2060, %v2081
        %v2084 = vunpack.c.l.s4 1966171168
        %v2085 = vunpack.c.0.s8 %v2084
        %v2086 = vlaneseq
        %v2087 = vshrl.u32 %v2086, 7
        %v2088 = vsub.s32 %v2085, %v2087
        %v2089 = vrot.slane %v2061, %v2088
        %v2090 = vcombine.high %v2068, %v2068
        %v2091 = vcombine.high %v2075, %v2075
        %v2092 = vcombine.high %v2082, %v2082
        %v2093 = vcombine.high %v2089, %v2089
        %v2094 = vlaneseq
        %v2095 = vshrl.u32 %v2094, 7
        %v2096 = vsub.s32 0, %v2095
        %v2097 = vrot.slane %v2068, %v2096
        %v2098 = vlaneseq
        %v2099 = vshrl.u32 %v2098, 7
        %v2100 = vsub.s32 0, %v2099
        %v2101 = vrot.slane %v2082, %v2100
        %v2102 = vlaneseq
        %v2103 = vshrl.u32 %v2102, 7
        %v2104 = vsub.s32 0, %v2103
        %v2105 = vrot.slane %v2090, %v2104
        %v2106 = vlaneseq
        %v2107 = vshrl.u32 %v2106, 7
        %v2108 = vsub.s32 0, %v2107
        %v2109 = vrot.slane %v2092, %v2108
        %v2110 = vlaneseq
        %v2111 = vshrl.u32 %v2110, 7
        %v2112 = vsub.s32 0, %v2111
        %v2113 = vrot.slane %v2075, %v2112
        %v2114 = vlaneseq
        %v2115 = vshrl.u32 %v2114, 7
        %v2116 = vsub.s32 0, %v2115
        %v2117 = vrot.slane %v2089, %v2116
        %v2118 = vlaneseq
        %v2119 = vshrl.u32 %v2118, 7
        %v2120 = vsub.s32 0, %v2119
        %v2121 = vrot.slane %v2091, %v2120
        %v2122 = vlaneseq
        %v2123 = vshrl.u32 %v2122, 7
        %v2124 = vsub.s32 0, %v2123
        %v2125 = vrot.slane %v2093, %v2124
        %v2127 = vcombine.high %v2042, %v2042
        %v2129 = vunpack.c.l.s4 1966171168
        %v2130 = vunpack.c.0.s8 %v2129
        %v2131 = vlaneseq
        %v2132 = vshrl.u32 %v2131, 7
        %v2133 = vsub.s32 %v2130, %v2132
        %v2134 = vrot.slane %v2042, %v2133
        %v2136 = vunpack.c.l.s4 1966171168
        %v2137 = vunpack.c.0.s8 %v2136
        %v2138 = vlaneseq
        %v2139 = vshrl.u32 %v2138, 7
        %v2140 = vsub.s32 %v2137, %v2139
        %v2141 = vrot.slane %v2127, %v2140
        %v2142 = vcombine.high %v2134, %v2134
        %v2143 = vcombine.high %v2141, %v2141
        %v2145 = vunpack.c.l.s4 1966171168
        %v2146 = vunpack.c.0.s8 %v2145
        %v2147 = vlaneseq
        %v2148 = vshrl.u32 %v2147, 7
        %v2149 = vsub.s32 %v2146, %v2148
        %v2150 = vrot.slane %v2134, %v2149
        %v2152 = vunpack.c.l.s4 1966171168
        %v2153 = vunpack.c.0.s8 %v2152
        %v2154 = vlaneseq
        %v2155 = vshrl.u32 %v2154, 7
        %v2156 = vsub.s32 %v2153, %v2155
        %v2157 = vrot.slane %v2141, %v2156
        %v2159 = vunpack.c.l.s4 1966171168
        %v2160 = vunpack.c.0.s8 %v2159
        %v2161 = vlaneseq
        %v2162 = vshrl.u32 %v2161, 7
        %v2163 = vsub.s32 %v2160, %v2162
        %v2164 = vrot.slane %v2142, %v2163
        %v2166 = vunpack.c.l.s4 1966171168
        %v2167 = vunpack.c.0.s8 %v2166
        %v2168 = vlaneseq
        %v2169 = vshrl.u32 %v2168, 7
        %v2170 = vsub.s32 %v2167, %v2169
        %v2171 = vrot.slane %v2143, %v2170
        %v2172 = vcombine.high %v2150, %v2150
        %v2173 = vcombine.high %v2157, %v2157
        %v2174 = vcombine.high %v2164, %v2164
        %v2175 = vcombine.high %v2171, %v2171
        %v2176 = vlaneseq
        %v2177 = vshrl.u32 %v2176, 7
        %v2178 = vsub.s32 0, %v2177
        %v2179 = vrot.slane %v2150, %v2178
        %v2180 = vlaneseq
        %v2181 = vshrl.u32 %v2180, 7
        %v2182 = vsub.s32 0, %v2181
        %v2183 = vrot.slane %v2164, %v2182
        %v2184 = vlaneseq
        %v2185 = vshrl.u32 %v2184, 7
        %v2186 = vsub.s32 0, %v2185
        %v2187 = vrot.slane %v2172, %v2186
        %v2188 = vlaneseq
        %v2189 = vshrl.u32 %v2188, 7
        %v2190 = vsub.s32 0, %v2189
        %v2191 = vrot.slane %v2174, %v2190
        %v2192 = vlaneseq
        %v2193 = vshrl.u32 %v2192, 7
        %v2194 = vsub.s32 0, %v2193
        %v2195 = vrot.slane %v2157, %v2194
        %v2196 = vlaneseq
        %v2197 = vshrl.u32 %v2196, 7
        %v2198 = vsub.s32 0, %v2197
        %v2199 = vrot.slane %v2171, %v2198
        %v2200 = vlaneseq
        %v2201 = vshrl.u32 %v2200, 7
        %v2202 = vsub.s32 0, %v2201
        %v2203 = vrot.slane %v2173, %v2202
        %v2204 = vlaneseq
        %v2205 = vshrl.u32 %v2204, 7
        %v2206 = vsub.s32 0, %v2205
        %v2207 = vrot.slane %v2175, %v2206
        %v2208 = vcombine.low %v2097, %v2101
        %v2209 = vcombine.low %v2105, %v2109
        %v2210 = vcombine.low %v2113, %v2117
        %v2211 = vcombine.low %v2121, %v2125
        %v2216 = vsub.f32 %v1794, %v2208
        %v2217 = vsub.f32 %v1795, %v2209
        %v2218 = vsub.f32 %v1796, %v2210
        %v2219 = vsub.f32 %v1797, %v2211
        %v2220 = vcombine.low %v2179, %v2183
        %v2221 = vcombine.low %v2187, %v2191
        %v2222 = vcombine.low %v2195, %v2199
        %v2223 = vcombine.low %v2203, %v2207
        %v2228 = vmul.f32 %v2216, %v2220
        %v2229 = vmul.f32 %v2217, %v2221
        %v2230 = vmul.f32 %v2218, %v2222
        %v2231 = vmul.f32 %v2219, %v2223
        %v2232 = vlaneseq
        %v2233 = vshrl.u32 %v2232, 7
        %v2234 = vsub.s32 0, %v2233
        %v2235 = vrot.slane %v1798, %v2234
        %v2236 = vmul.f32 %v2228, %v2235
        %v2237 = vmul.f32 %v2229, %v2235
        %v2238 = vmul.f32 %v2230, %v2235
        %v2239 = vmul.f32 %v2231, %v2235
        %v2240 = vlaneseq
        %v2241 = vshrl.u32 %v2240, 7
        %v2242 = vsub.s32 0, %v2241
        %v2243 = vrot.slane %v1799, %v2242
        %v2244 = vadd.f32 %v2236, %v2243
        %v2245 = vadd.f32 %v2237, %v2243
        %v2246 = vadd.f32 %v2238, %v2243
        %v2247 = vadd.f32 %v2239, %v2243
        %v2248 = vmul.f32 %v2244, 0.5
        %v2249 = vmul.f32 %v2245, 0.5
        %v2250 = vmul.f32 %v2246, 0.5
        %v2251 = vmul.f32 %v2247, 0.5
        %v2252 = vmul.f32 %v2244, 0.70710677
        %v2253 = vmul.f32 %v2245, 0.70710677
        %v2254 = vmul.f32 %v2246, 0.70710677
        %v2255 = vmul.f32 %v2247, 0.70710677
        %v2256 = verf.f32.pop %v2252
        %v2257 = verf.f32.pop %v2253
        %v2258 = verf.f32.pop %v2254
        %v2259 = verf.f32.pop %v2255
        %v2260 = vadd.f32 %v2256, 1.0
        %v2261 = vadd.f32 %v2257, 1.0
        %v2262 = vadd.f32 %v2258, 1.0
        %v2263 = vadd.f32 %v2259, 1.0
        %v2264 = vmul.f32 %v2248, %v2260
        %v2265 = vmul.f32 %v2249, %v2261
        %v2266 = vmul.f32 %v2250, %v2262
        %v2267 = vmul.f32 %v2251, %v2263
        %v2268 = vld [vmem:[#allocation5 + $0x9] sm:$0x1]
        %v2269 = vpack.c.bf16 %v2265, %v2264
        %v2270 = vpack.c.bf16 %v2267, %v2266
        %v2271 = vld [vmem:[%s3] sm:$0xff]
        %v2272 = vld [vmem:[%s3 + $0x8] sm:$0xf]
        %v2273 = vld [vmem:[%s3 + $0xc] sm:$0xff]
        %v2274 = vld [vmem:[%s3 + $0x14] sm:$0xf]
        %v2275 = vld [vmem:[%s3 + $0x18] sm:$0xff]
        %v2276 = vld [vmem:[%s3 + $0x20] sm:$0xf]
        %v2277 = vld [vmem:[%s3 + $0x24] sm:$0xff]
        %v2278 = vld [vmem:[%s3 + $0x2c] sm:$0xf]
        %v2279 = vld [vmem:[%s3 + $0x30] sm:$0xff]
        %v2280 = vld [vmem:[%s3 + $0x38] sm:$0xf]
        %v2281 = vld [vmem:[%s3 + $0x3c] sm:$0xff]
        %v2282 = vld [vmem:[%s3 + $0x44] sm:$0xf]
        %v2283 = vld [vmem:[%s3 + $0x48] sm:$0xff]
        %v2284 = vld [vmem:[%s3 + $0x50] sm:$0xf]
        %v2285 = vld [vmem:[%s3 + $0x54] sm:$0xff]
        %v2286 = vld [vmem:[%s3 + $0x5c] sm:$0xf]
        %v2287 = vld [vmem:[%s3 + $0x60] sm:$0xff]
        %v2288 = vld [vmem:[%s3 + $0x68] sm:$0xf]
        %v2289 = vld [vmem:[%s3 + $0x6c] sm:$0xff]
        %v2290 = vld [vmem:[%s3 + $0x74] sm:$0xf]
        %v2291 = vld [vmem:[%s3 + $0x78] sm:$0xff]
        %v2292 = vld [vmem:[%s3 + $0x80] sm:$0xf]
        %v2293 = vld [vmem:[%s3 + $0x84] sm:$0xff]
        %v2294 = vld [vmem:[%s3 + $0x8c] sm:$0xf]
        %v2295 = vld [vmem:[%s3 + $0x90] sm:$0xff]
        %v2296 = vld [vmem:[%s3 + $0x98] sm:$0xf]
        %v2297 = vld [vmem:[%s3 + $0x9c] sm:$0xff]
        %v2298 = vld [vmem:[%s3 + $0xa4] sm:$0xf]
        %v2299 = vld [vmem:[%s3 + $0xa8] sm:$0xff]
        %v2300 = vld [vmem:[%s3 + $0xb0] sm:$0xf]
        %v2301 = vld [vmem:[%s3 + $0xb4] sm:$0xff]
        %v2302 = vld [vmem:[%s3 + $0xbc] sm:$0xf]
        %v2335 = vunpack.c.l.b16 %v2271
        %v2336 = vunpack.c.h.b16 %v2271
        %v2337 = vunpack.c.l.b16 %v2272
        %v2338 = vunpack.c.l.b16 %v2273
        %v2339 = vunpack.c.h.b16 %v2273
        %v2340 = vunpack.c.l.b16 %v2274
        %v2341 = vunpack.c.l.b16 %v2275
        %v2342 = vunpack.c.h.b16 %v2275
        %v2343 = vunpack.c.l.b16 %v2276
        %v2344 = vunpack.c.l.b16 %v2277
        %v2345 = vunpack.c.h.b16 %v2277
        %v2346 = vunpack.c.l.b16 %v2278
        %v2347 = vunpack.c.l.b16 %v2279
        %v2348 = vunpack.c.h.b16 %v2279
        %v2349 = vunpack.c.l.b16 %v2280
        %v2350 = vunpack.c.l.b16 %v2281
        %v2351 = vunpack.c.h.b16 %v2281
        %v2352 = vunpack.c.l.b16 %v2282
        %v2353 = vunpack.c.l.b16 %v2283
        %v2354 = vunpack.c.h.b16 %v2283
        %v2355 = vunpack.c.l.b16 %v2284
        %v2356 = vunpack.c.l.b16 %v2285
        %v2357 = vunpack.c.h.b16 %v2285
        %v2358 = vunpack.c.l.b16 %v2286
        %v2359 = vunpack.c.l.b16 %v2287
        %v2360 = vunpack.c.h.b16 %v2287
        %v2361 = vunpack.c.l.b16 %v2288
        %v2362 = vunpack.c.l.b16 %v2289
        %v2363 = vunpack.c.h.b16 %v2289
        %v2364 = vunpack.c.l.b16 %v2290
        %v2365 = vunpack.c.l.b16 %v2291
        %v2366 = vunpack.c.h.b16 %v2291
        %v2367 = vunpack.c.l.b16 %v2292
        %v2368 = vunpack.c.l.b16 %v2293
        %v2369 = vunpack.c.h.b16 %v2293
        %v2370 = vunpack.c.l.b16 %v2294
        %v2371 = vunpack.c.l.b16 %v2295
        %v2372 = vunpack.c.h.b16 %v2295
        %v2373 = vunpack.c.l.b16 %v2296
        %v2374 = vunpack.c.l.b16 %v2297
        %v2375 = vunpack.c.h.b16 %v2297
        %v2376 = vunpack.c.l.b16 %v2298
        %v2377 = vunpack.c.l.b16 %v2299
        %v2378 = vunpack.c.h.b16 %v2299
        %v2379 = vunpack.c.l.b16 %v2300
        %v2380 = vunpack.c.l.b16 %v2301
        %v2381 = vunpack.c.h.b16 %v2301
        %v2382 = vunpack.c.l.b16 %v2302
        %v2383 = vpack.c.b16 %v2338, %v2335
        %v2384 = vpack.c.b16 %v2339, %v2336
        %v2385 = vpack.c.b16 %v2340, %v2337
        %v2386 = vpack.c.b16 %v2344, %v2341
        %v2387 = vpack.c.b16 %v2345, %v2342
        %v2388 = vpack.c.b16 %v2346, %v2343
        %v2389 = vpack.c.b16 %v2350, %v2347
        %v2390 = vpack.c.b16 %v2351, %v2348
        %v2391 = vpack.c.b16 %v2352, %v2349
        %v2392 = vpack.c.b16 %v2356, %v2353
        %v2393 = vpack.c.b16 %v2357, %v2354
        %v2394 = vpack.c.b16 %v2358, %v2355
        %v2395 = vpack.c.b16 %v2362, %v2359
        %v2396 = vpack.c.b16 %v2363, %v2360
        %v2397 = vpack.c.b16 %v2364, %v2361
        %v2398 = vpack.c.b16 %v2368, %v2365
        %v2399 = vpack.c.b16 %v2369, %v2366
        %v2400 = vpack.c.b16 %v2370, %v2367
        %v2401 = vpack.c.b16 %v2374, %v2371
        %v2402 = vpack.c.b16 %v2375, %v2372
        %v2403 = vpack.c.b16 %v2376, %v2373
        %v2404 = vpack.c.b16 %v2380, %v2377
        %v2405 = vpack.c.b16 %v2381, %v2378
        %v2406 = vpack.c.b16 %v2382, %v2379
        %2431 = vmatprep.subr.bf16.mxu0 %v2384
        %2432 = vmatpush1.bf16.msra.mxu0 %v2383
        %2433 = vmatprep.subr.bf16.mxu0 %v2387
        %2434 = vmatpush1.bf16.msra.mxu0 %v2386
        %2435 = vmatprep.subr.bf16.mxu0 %v2390
        %2436 = vmatpush1.bf16.msra.mxu0 %v2389
        %2437 = vmatprep.subr.bf16.mxu0 %v2393
        %2438 = vmatpush1.bf16.msra.mxu0 %v2392
        %2439 = vmatprep.subr.bf16.mxu0 %v2396
        %2440 = vmatpush1.bf16.msra.mxu0 %v2395
        %2441 = vmatprep.subr.bf16.mxu0 %v2399
        %2442 = vmatpush1.bf16.msra.mxu0 %v2398
        %2443 = vmatprep.subr.bf16.mxu0 %v2402
        %2444 = vmatpush1.bf16.msra.mxu0 %v2401
        %2445 = vmatprep.subr.bf16.mxu0 %v2405
        %2446 = vmatpush1.bf16.msra.mxu0 %v2404
        %2447 = vmatprep.subr.bf16.mxu0 0
        %2448 = vmatpush1.bf16.msra.mxu0 0
        %2449 = vmatprep.subr.bf16.mxu0 0
        %2450 = vmatpush1.bf16.msra.mxu0 0
        %2451 = vmatprep.subr.bf16.mxu0 0
        %2452 = vmatpush1.bf16.msra.mxu0 0
        %2453 = vmatprep.subr.bf16.mxu0 0
        %2454 = vmatpush1.bf16.msra.mxu0 0
        %2455 = vmatprep.subr.bf16.mxu0 0
        %2456 = vmatpush1.bf16.msra.mxu0 0
        %2457 = vmatprep.subr.bf16.mxu0 0
        %2458 = vmatpush1.bf16.msra.mxu0 0
        %2459 = vmatprep.subr.bf16.mxu0 0
        %2460 = vmatpush1.bf16.msra.mxu0 0
        %2461 = vmatprep.subr.bf16.mxu0 0
        %2462 = vmatpush1.bf16.msra.mxu0 0
        %2463 = vmatprep.mubr.bf16.mxu0 0
        %2464 = vmatmul.mubr.bf16.gmra.mrb[0].mxu0 %v2269
        %v2465 = vpop.f32.mrb[0].mxu0
        %v2466 = vadd.f32 0.0, %v2465
        %v2467 = vpop.f32.mrb[0].mxu0
        %v2468 = vadd.f32 0.0, %v2467
        %v2469 = vpop.f32.mrb[0].mxu0
        %v2470 = vadd.f32 0.0, %v2469
        %v2471 = vpop.f32.mrb[0].mxu0
        %v2472 = vadd.f32 0.0, %v2471
        %2473 = vmatprep.mubr.bf16.mxu0 0
        %2474 = vmatmul.mubr.bf16.gmra.mrb[0].mxu0 %v2270
        %v2475 = vpop.f32.mrb[0].mxu0
        %v2476 = vadd.f32 0.0, %v2475
        %v2477 = vpop.f32.mrb[0].mxu0
        %v2478 = vadd.f32 0.0, %v2477
        %v2479 = vpop.f32.mrb[0].mxu0
        %v2480 = vadd.f32 0.0, %v2479
        %v2481 = vpop.f32.mrb[0].mxu0
        %v2482 = vadd.f32 0.0, %v2481
        %2483 = vdwg.mxu0
        %2484 = vmatprep.subr.bf16.mxu0 0
        %2485 = vmatpush1.bf16.msra.mxu0 %v2385
        %2486 = vmatprep.subr.bf16.mxu0 0
        %2487 = vmatpush1.bf16.msra.mxu0 %v2388
        %2488 = vmatprep.subr.bf16.mxu0 0
        %2489 = vmatpush1.bf16.msra.mxu0 %v2391
        %2490 = vmatprep.subr.bf16.mxu0 0
        %2491 = vmatpush1.bf16.msra.mxu0 %v2394
        %2492 = vmatprep.subr.bf16.mxu0 0
        %2493 = vmatpush1.bf16.msra.mxu0 %v2397
        %2494 = vmatprep.subr.bf16.mxu0 0
        %2495 = vmatpush1.bf16.msra.mxu0 %v2400
        %2496 = vmatprep.subr.bf16.mxu0 0
        %2497 = vmatpush1.bf16.msra.mxu0 %v2403
        %2498 = vmatprep.subr.bf16.mxu0 0
        %2499 = vmatpush1.bf16.msra.mxu0 %v2406
        %2500 = vmatprep.subr.bf16.mxu0 0
        %2501 = vmatpush1.bf16.msra.mxu0 0
        %2502 = vmatprep.subr.bf16.mxu0 0
        %2503 = vmatpush1.bf16.msra.mxu0 0
        %2504 = vmatprep.subr.bf16.mxu0 0
        %2505 = vmatpush1.bf16.msra.mxu0 0
        %2506 = vmatprep.subr.bf16.mxu0 0
        %2507 = vmatpush1.bf16.msra.mxu0 0
        %2508 = vmatprep.subr.bf16.mxu0 0
        %2509 = vmatpush1.bf16.msra.mxu0 0
        %2510 = vmatprep.subr.bf16.mxu0 0
        %2511 = vmatpush1.bf16.msra.mxu0 0
        %2512 = vmatprep.subr.bf16.mxu0 0
        %2513 = vmatpush1.bf16.msra.mxu0 0
        %2514 = vmatprep.subr.bf16.mxu0 0
        %2515 = vmatpush1.bf16.msra.mxu0 0
        %2516 = vmatprep.mubr.bf16.mxu0 0
        %2517 = vmatmul.mubr.bf16.gmra.mrb[0].mxu0 %v2269
        %v2518 = vpop.f32.mrb[0].mxu0
        %v2519 = vadd.f32 0.0, %v2518
        %v2520 = vpop.f32.mrb[0].mxu0
        %v2521 = vpop.f32.mrb[0].mxu0
        %v2522 = vadd.f32 0.0, %v2521
        %v2523 = vpop.f32.mrb[0].mxu0
        %2524 = vmatprep.mubr.bf16.mxu0 0
        %2525 = vmatmul.mubr.bf16.gmra.mrb[0].mxu0 %v2270
        %v2526 = vpop.f32.mrb[0].mxu0
        %v2527 = vadd.f32 0.0, %v2526
        %v2528 = vpop.f32.mrb[0].mxu0
        %v2529 = vpop.f32.mrb[0].mxu0
        %v2530 = vadd.f32 0.0, %v2529
        %v2531 = vpop.f32.mrb[0].mxu0
        %2532 = vdwg.mxu0
        %v2533 = vrot.slane %v2466, 7
        %v2534 = vrot.slane %v2470, 7
        %v2535 = vrot.slane %v2476, 7
        %v2536 = vrot.slane %v2480, 7
        %v2537 = vsel %vm1724, %v2535, %v2536
        %v2538 = vsel %vm1724, %v2534, %v2535
        %v2539 = vsel %vm1724, %v2533, %v2534
        %v2540 = vsel %vm1724, %v2536, %v2533
        %v2541 = vmul.f32 %v2540, %v1732
        %v2542 = vmul.f32 %v2539, %v1737
        %v2543 = vmul.f32 %v2538, %v1742
        %v2544 = vmul.f32 %v2537, %v1747
        %v2545 = vrot.slane %v2519, 1
        %v2546 = vrot.slane %v2522, 1
        %v2547 = vrot.slane %v2527, 1
        %v2548 = vrot.slane %v2530, 1
        %v2549 = vsel %vm1757, %v2547, %v2548
        %v2550 = vsel %vm1757, %v2546, %v2547
        %v2551 = vsel %vm1757, %v2545, %v2546
        %v2552 = vsel %vm1757, %v2548, %v2545
        %v2553 = vmul.f32 %v2551, %v1764
        %v2554 = vmul.f32 %v2550, %v1768
        %v2555 = vmul.f32 %v2549, %v1772
        %v2556 = vmul.f32 %v2552, %v1776
        %v2557 = vadd.f32 %v2541, %v2468
        %v2558 = vadd.f32 %v2542, %v2472
        %v2559 = vadd.f32 %v2543, %v2478
        %v2560 = vadd.f32 %v2544, %v2482
        %v2561 = vadd.f32 %v2557, %v2553
        %v2562 = vadd.f32 %v2558, %v2554
        %v2563 = vadd.f32 %v2559, %v2555
        %v2564 = vadd.f32 %v2560, %v2556
        %v2565 = vlaneseq
        %v2566 = vshrl.u32 %v2565, 7
        %v2567 = vsub.s32 0, %v2566
        %v2568 = vrot.slane %v2268, %v2567
        %v2569 = vadd.f32 %v2561, %v2568
        %v2570 = vadd.f32 %v2562, %v2568
        %v2571 = vadd.f32 %v2563, %v2568
        %v2572 = vadd.f32 %v2564, %v2568
        %v2573 = vadd.f32 %v916, %v2569
        %v2574 = vadd.f32 %v921, %v2570
        %v2575 = vadd.f32 %v926, %v2571
        %v2576 = vadd.f32 %v931, %v2572
        %v2577 = vmul.f32 %v2573, 0.5
        %v2578 = vmul.f32 %v2574, 0.5
        %v2579 = vmul.f32 %v2575, 0.5
        %v2580 = vmul.f32 %v2576, 0.5
        %v2581 = vmul.f32 %v2573, 0.70710677
        %v2582 = vmul.f32 %v2574, 0.70710677
        %v2583 = vmul.f32 %v2575, 0.70710677
        %v2584 = vmul.f32 %v2576, 0.70710677
        %v2585 = verf.f32.pop %v2581
        %v2586 = verf.f32.pop %v2582
        %v2587 = verf.f32.pop %v2583
        %v2588 = verf.f32.pop %v2584
        %v2589 = vadd.f32 %v2585, 1.0
        %v2590 = vadd.f32 %v2586, 1.0
        %v2591 = vadd.f32 %v2587, 1.0
        %v2592 = vadd.f32 %v2588, 1.0
        %v2593 = vmul.f32 %v2577, %v2589
        %v2594 = vmul.f32 %v2578, %v2590
        %v2595 = vmul.f32 %v2579, %v2591
        %v2596 = vmul.f32 %v2580, %v2592
        %v2597 = vld [vmem:[%s17] sm:$0xff]
        %v2598 = vld [vmem:[%s17 + $0x8] sm:$0xff]
        %v2599 = vld [vmem:[%s17 + $0x10] sm:$0xff]
        %v2600 = vld [vmem:[%s17 + $0x18] sm:$0xff]
        %v2601 = vld [vmem:[%s17 + $0x20] sm:$0xff]
        %v2602 = vld [vmem:[%s17 + $0x28] sm:$0xff]
        %v2603 = vld [vmem:[%s17 + $0x30] sm:$0xff]
        %v2604 = vld [vmem:[%s17 + $0x38] sm:$0xff]
        %v2605 = vld [vmem:[%s17 + $0x40] sm:$0xff]
        %v2606 = vld [vmem:[%s17 + $0x48] sm:$0xff]
        %v2607 = vld [vmem:[%s17 + $0x50] sm:$0xff]
        %v2608 = vld [vmem:[%s17 + $0x58] sm:$0xff]
        %v2609 = vld [vmem:[%s17 + $0x60] sm:$0xff]
        %v2610 = vld [vmem:[%s17 + $0x68] sm:$0xff]
        %v2611 = vld [vmem:[%s17 + $0x70] sm:$0xff]
        %v2612 = vld [vmem:[%s17 + $0x78] sm:$0xff]
        %v2617 = vcombine.high %v2593, %v2593
        %v2619 = vunpack.c.l.s4 1966171168
        %v2620 = vunpack.c.0.s8 %v2619
        %v2621 = vlaneseq
        %v2622 = vshrl.u32 %v2621, 7
        %v2623 = vsub.s32 %v2620, %v2622
        %v2624 = vrot.slane %v2593, %v2623
        %v2626 = vunpack.c.l.s4 1966171168
        %v2627 = vunpack.c.0.s8 %v2626
        %v2628 = vlaneseq
        %v2629 = vshrl.u32 %v2628, 7
        %v2630 = vsub.s32 %v2627, %v2629
        %v2631 = vrot.slane %v2617, %v2630
        %v2632 = vcombine.high %v2624, %v2624
        %v2633 = vcombine.high %v2631, %v2631
        %v2635 = vunpack.c.l.s4 1966171168
        %v2636 = vunpack.c.0.s8 %v2635
        %v2637 = vlaneseq
        %v2638 = vshrl.u32 %v2637, 7
        %v2639 = vsub.s32 %v2636, %v2638
        %v2640 = vrot.slane %v2624, %v2639
        %v2642 = vunpack.c.l.s4 1966171168
        %v2643 = vunpack.c.0.s8 %v2642
        %v2644 = vlaneseq
        %v2645 = vshrl.u32 %v2644, 7
        %v2646 = vsub.s32 %v2643, %v2645
        %v2647 = vrot.slane %v2631, %v2646
        %v2649 = vunpack.c.l.s4 1966171168
        %v2650 = vunpack.c.0.s8 %v2649
        %v2651 = vlaneseq
        %v2652 = vshrl.u32 %v2651, 7
        %v2653 = vsub.s32 %v2650, %v2652
        %v2654 = vrot.slane %v2632, %v2653
        %v2656 = vunpack.c.l.s4 1966171168
        %v2657 = vunpack.c.0.s8 %v2656
        %v2658 = vlaneseq
        %v2659 = vshrl.u32 %v2658, 7
        %v2660 = vsub.s32 %v2657, %v2659
        %v2661 = vrot.slane %v2633, %v2660
        %v2662 = vcombine.high %v2640, %v2640
        %v2663 = vcombine.high %v2647, %v2647
        %v2664 = vcombine.high %v2654, %v2654
        %v2665 = vcombine.high %v2661, %v2661
        %v2666 = vcombine.high %v2594, %v2594
        %v2668 = vunpack.c.l.s4 1966171168
        %v2669 = vunpack.c.0.s8 %v2668
        %v2670 = vlaneseq
        %v2671 = vshrl.u32 %v2670, 7
        %v2672 = vsub.s32 %v2669, %v2671
        %v2673 = vrot.slane %v2594, %v2672
        %v2675 = vunpack.c.l.s4 1966171168
        %v2676 = vunpack.c.0.s8 %v2675
        %v2677 = vlaneseq
        %v2678 = vshrl.u32 %v2677, 7
        %v2679 = vsub.s32 %v2676, %v2678
        %v2680 = vrot.slane %v2666, %v2679
        %v2681 = vcombine.high %v2673, %v2673
        %v2682 = vcombine.high %v2680, %v2680
        %v2684 = vunpack.c.l.s4 1966171168
        %v2685 = vunpack.c.0.s8 %v2684
        %v2686 = vlaneseq
        %v2687 = vshrl.u32 %v2686, 7
        %v2688 = vsub.s32 %v2685, %v2687
        %v2689 = vrot.slane %v2673, %v2688
        %v2691 = vunpack.c.l.s4 1966171168
        %v2692 = vunpack.c.0.s8 %v2691
        %v2693 = vlaneseq
        %v2694 = vshrl.u32 %v2693, 7
        %v2695 = vsub.s32 %v2692, %v2694
        %v2696 = vrot.slane %v2680, %v2695
        %v2698 = vunpack.c.l.s4 1966171168
        %v2699 = vunpack.c.0.s8 %v2698
        %v2700 = vlaneseq
        %v2701 = vshrl.u32 %v2700, 7
        %v2702 = vsub.s32 %v2699, %v2701
        %v2703 = vrot.slane %v2681, %v2702
        %v2705 = vunpack.c.l.s4 1966171168
        %v2706 = vunpack.c.0.s8 %v2705
        %v2707 = vlaneseq
        %v2708 = vshrl.u32 %v2707, 7
        %v2709 = vsub.s32 %v2706, %v2708
        %v2710 = vrot.slane %v2682, %v2709
        %v2711 = vcombine.high %v2689, %v2689
        %v2712 = vcombine.high %v2696, %v2696
        %v2713 = vcombine.high %v2703, %v2703
        %v2714 = vcombine.high %v2710, %v2710
        %v2715 = vcombine.high %v2595, %v2595
        %v2717 = vunpack.c.l.s4 1966171168
        %v2718 = vunpack.c.0.s8 %v2717
        %v2719 = vlaneseq
        %v2720 = vshrl.u32 %v2719, 7
        %v2721 = vsub.s32 %v2718, %v2720
        %v2722 = vrot.slane %v2595, %v2721
        %v2724 = vunpack.c.l.s4 1966171168
        %v2725 = vunpack.c.0.s8 %v2724
        %v2726 = vlaneseq
        %v2727 = vshrl.u32 %v2726, 7
        %v2728 = vsub.s32 %v2725, %v2727
        %v2729 = vrot.slane %v2715, %v2728
        %v2730 = vcombine.high %v2722, %v2722
        %v2731 = vcombine.high %v2729, %v2729
        %v2733 = vunpack.c.l.s4 1966171168
        %v2734 = vunpack.c.0.s8 %v2733
        %v2735 = vlaneseq
        %v2736 = vshrl.u32 %v2735, 7
        %v2737 = vsub.s32 %v2734, %v2736
        %v2738 = vrot.slane %v2722, %v2737
        %v2740 = vunpack.c.l.s4 1966171168
        %v2741 = vunpack.c.0.s8 %v2740
        %v2742 = vlaneseq
        %v2743 = vshrl.u32 %v2742, 7
        %v2744 = vsub.s32 %v2741, %v2743
        %v2745 = vrot.slane %v2729, %v2744
        %v2747 = vunpack.c.l.s4 1966171168
        %v2748 = vunpack.c.0.s8 %v2747
        %v2749 = vlaneseq
        %v2750 = vshrl.u32 %v2749, 7
        %v2751 = vsub.s32 %v2748, %v2750
        %v2752 = vrot.slane %v2730, %v2751
        %v2754 = vunpack.c.l.s4 1966171168
        %v2755 = vunpack.c.0.s8 %v2754
        %v2756 = vlaneseq
        %v2757 = vshrl.u32 %v2756, 7
        %v2758 = vsub.s32 %v2755, %v2757
        %v2759 = vrot.slane %v2731, %v2758
        %v2760 = vcombine.high %v2738, %v2738
        %v2761 = vcombine.high %v2745, %v2745
        %v2762 = vcombine.high %v2752, %v2752
        %v2763 = vcombine.high %v2759, %v2759
        %v2764 = vcombine.high %v2596, %v2596
        %v2766 = vunpack.c.l.s4 1966171168
        %v2767 = vunpack.c.0.s8 %v2766
        %v2768 = vlaneseq
        %v2769 = vshrl.u32 %v2768, 7
        %v2770 = vsub.s32 %v2767, %v2769
        %v2771 = vrot.slane %v2596, %v2770
        %v2773 = vunpack.c.l.s4 1966171168
        %v2774 = vunpack.c.0.s8 %v2773
        %v2775 = vlaneseq
        %v2776 = vshrl.u32 %v2775, 7
        %v2777 = vsub.s32 %v2774, %v2776
        %v2778 = vrot.slane %v2764, %v2777
        %v2779 = vcombine.high %v2771, %v2771
        %v2780 = vcombine.high %v2778, %v2778
        %v2782 = vunpack.c.l.s4 1966171168
        %v2783 = vunpack.c.0.s8 %v2782
        %v2784 = vlaneseq
        %v2785 = vshrl.u32 %v2784, 7
        %v2786 = vsub.s32 %v2783, %v2785
        %v2787 = vrot.slane %v2771, %v2786
        %v2789 = vunpack.c.l.s4 1966171168
        %v2790 = vunpack.c.0.s8 %v2789
        %v2791 = vlaneseq
        %v2792 = vshrl.u32 %v2791, 7
        %v2793 = vsub.s32 %v2790, %v2792
        %v2794 = vrot.slane %v2778, %v2793
        %v2796 = vunpack.c.l.s4 1966171168
        %v2797 = vunpack.c.0.s8 %v2796
        %v2798 = vlaneseq
        %v2799 = vshrl.u32 %v2798, 7
        %v2800 = vsub.s32 %v2797, %v2799
        %v2801 = vrot.slane %v2779, %v2800
        %v2803 = vunpack.c.l.s4 1966171168
        %v2804 = vunpack.c.0.s8 %v2803
        %v2805 = vlaneseq
        %v2806 = vshrl.u32 %v2805, 7
        %v2807 = vsub.s32 %v2804, %v2806
        %v2808 = vrot.slane %v2780, %v2807
        %v2809 = vcombine.high %v2787, %v2787
        %v2810 = vcombine.high %v2794, %v2794
        %v2811 = vcombine.high %v2801, %v2801
        %v2812 = vcombine.high %v2808, %v2808
        %v2813 = vlaneseq
        %v2814 = vshrl.u32 %v2813, 7
        %v2815 = vsub.s32 0, %v2814
        %v2816 = vrot.slane %v2640, %v2815
        %v2817 = vlaneseq
        %v2818 = vshrl.u32 %v2817, 7
        %v2819 = vsub.s32 0, %v2818
        %v2820 = vrot.slane %v2654, %v2819
        %v2821 = vlaneseq
        %v2822 = vshrl.u32 %v2821, 7
        %v2823 = vsub.s32 0, %v2822
        %v2824 = vrot.slane %v2662, %v2823
        %v2825 = vlaneseq
        %v2826 = vshrl.u32 %v2825, 7
        %v2827 = vsub.s32 0, %v2826
        %v2828 = vrot.slane %v2664, %v2827
        %v2829 = vlaneseq
        %v2830 = vshrl.u32 %v2829, 7
        %v2831 = vsub.s32 0, %v2830
        %v2832 = vrot.slane %v2647, %v2831
        %v2833 = vlaneseq
        %v2834 = vshrl.u32 %v2833, 7
        %v2835 = vsub.s32 0, %v2834
        %v2836 = vrot.slane %v2661, %v2835
        %v2837 = vlaneseq
        %v2838 = vshrl.u32 %v2837, 7
        %v2839 = vsub.s32 0, %v2838
        %v2840 = vrot.slane %v2663, %v2839
        %v2841 = vlaneseq
        %v2842 = vshrl.u32 %v2841, 7
        %v2843 = vsub.s32 0, %v2842
        %v2844 = vrot.slane %v2665, %v2843
        %v2845 = vlaneseq
        %v2846 = vshrl.u32 %v2845, 7
        %v2847 = vsub.s32 0, %v2846
        %v2848 = vrot.slane %v2689, %v2847
        %v2849 = vlaneseq
        %v2850 = vshrl.u32 %v2849, 7
        %v2851 = vsub.s32 0, %v2850
        %v2852 = vrot.slane %v2703, %v2851
        %v2853 = vlaneseq
        %v2854 = vshrl.u32 %v2853, 7
        %v2855 = vsub.s32 0, %v2854
        %v2856 = vrot.slane %v2711, %v2855
        %v2857 = vlaneseq
        %v2858 = vshrl.u32 %v2857, 7
        %v2859 = vsub.s32 0, %v2858
        %v2860 = vrot.slane %v2713, %v2859
        %v2861 = vlaneseq
        %v2862 = vshrl.u32 %v2861, 7
        %v2863 = vsub.s32 0, %v2862
        %v2864 = vrot.slane %v2696, %v2863
        %v2865 = vlaneseq
        %v2866 = vshrl.u32 %v2865, 7
        %v2867 = vsub.s32 0, %v2866
        %v2868 = vrot.slane %v2710, %v2867
        %v2869 = vlaneseq
        %v2870 = vshrl.u32 %v2869, 7
        %v2871 = vsub.s32 0, %v2870
        %v2872 = vrot.slane %v2712, %v2871
        %v2873 = vlaneseq
        %v2874 = vshrl.u32 %v2873, 7
        %v2875 = vsub.s32 0, %v2874
        %v2876 = vrot.slane %v2714, %v2875
        %v2877 = vlaneseq
        %v2878 = vshrl.u32 %v2877, 7
        %v2879 = vsub.s32 0, %v2878
        %v2880 = vrot.slane %v2738, %v2879
        %v2881 = vlaneseq
        %v2882 = vshrl.u32 %v2881, 7
        %v2883 = vsub.s32 0, %v2882
        %v2884 = vrot.slane %v2752, %v2883
        %v2885 = vlaneseq
        %v2886 = vshrl.u32 %v2885, 7
        %v2887 = vsub.s32 0, %v2886
        %v2888 = vrot.slane %v2760, %v2887
        %v2889 = vlaneseq
        %v2890 = vshrl.u32 %v2889, 7
        %v2891 = vsub.s32 0, %v2890
        %v2892 = vrot.slane %v2762, %v2891
        %v2893 = vlaneseq
        %v2894 = vshrl.u32 %v2893, 7
        %v2895 = vsub.s32 0, %v2894
        %v2896 = vrot.slane %v2745, %v2895
        %v2897 = vlaneseq
        %v2898 = vshrl.u32 %v2897, 7
        %v2899 = vsub.s32 0, %v2898
        %v2900 = vrot.slane %v2759, %v2899
        %v2901 = vlaneseq
        %v2902 = vshrl.u32 %v2901, 7
        %v2903 = vsub.s32 0, %v2902
        %v2904 = vrot.slane %v2761, %v2903
        %v2905 = vlaneseq
        %v2906 = vshrl.u32 %v2905, 7
        %v2907 = vsub.s32 0, %v2906
        %v2908 = vrot.slane %v2763, %v2907
        %v2909 = vlaneseq
        %v2910 = vshrl.u32 %v2909, 7
        %v2911 = vsub.s32 0, %v2910
        %v2912 = vrot.slane %v2787, %v2911
        %v2913 = vlaneseq
        %v2914 = vshrl.u32 %v2913, 7
        %v2915 = vsub.s32 0, %v2914
        %v2916 = vrot.slane %v2801, %v2915
        %v2917 = vlaneseq
        %v2918 = vshrl.u32 %v2917, 7
        %v2919 = vsub.s32 0, %v2918
        %v2920 = vrot.slane %v2809, %v2919
        %v2921 = vlaneseq
        %v2922 = vshrl.u32 %v2921, 7
        %v2923 = vsub.s32 0, %v2922
        %v2924 = vrot.slane %v2811, %v2923
        %v2925 = vlaneseq
        %v2926 = vshrl.u32 %v2925, 7
        %v2927 = vsub.s32 0, %v2926
        %v2928 = vrot.slane %v2794, %v2927
        %v2929 = vlaneseq
        %v2930 = vshrl.u32 %v2929, 7
        %v2931 = vsub.s32 0, %v2930
        %v2932 = vrot.slane %v2808, %v2931
        %v2933 = vlaneseq
        %v2934 = vshrl.u32 %v2933, 7
        %v2935 = vsub.s32 0, %v2934
        %v2936 = vrot.slane %v2810, %v2935
        %v2937 = vlaneseq
        %v2938 = vshrl.u32 %v2937, 7
        %v2939 = vsub.s32 0, %v2938
        %v2940 = vrot.slane %v2812, %v2939
        %v2941 = vld [vmem:[#allocation5 + $0xa] sm:$0x1]
        %v2942 = vcombine.low %v2816, %v2820
        %v2943 = vcombine.low %v2824, %v2828
        %v2944 = vcombine.low %v2832, %v2836
        %v2945 = vcombine.low %v2840, %v2844
        %v2946 = vcombine.low %v2848, %v2852
        %v2947 = vcombine.low %v2856, %v2860
        %v2948 = vcombine.low %v2864, %v2868
        %v2949 = vcombine.low %v2872, %v2876
        %v2950 = vcombine.low %v2880, %v2884
        %v2951 = vcombine.low %v2888, %v2892
        %v2952 = vcombine.low %v2896, %v2900
        %v2953 = vcombine.low %v2904, %v2908
        %v2954 = vcombine.low %v2912, %v2916
        %v2955 = vcombine.low %v2920, %v2924
        %v2956 = vcombine.low %v2928, %v2932
        %v2957 = vcombine.low %v2936, %v2940
        %v2974 = vpack.c.bf16 %v2943, %v2942
        %v2975 = vpack.c.bf16 %v2945, %v2944
        %v2976 = vpack.c.bf16 %v2947, %v2946
        %v2977 = vpack.c.bf16 %v2949, %v2948
        %v2978 = vpack.c.bf16 %v2951, %v2950
        %v2979 = vpack.c.bf16 %v2953, %v2952
        %v2980 = vpack.c.bf16 %v2955, %v2954
        %v2981 = vpack.c.bf16 %v2957, %v2956
        %v2982 = vld [vmem:[%s4] sm:$0xff]
        %v2983 = vld [vmem:[%s4 + $0x8] sm:$0xf]
        %v2984 = vld [vmem:[%s4 + $0xc] sm:$0xff]
        %v2985 = vld [vmem:[%s4 + $0x14] sm:$0xf]
        %v2986 = vld [vmem:[%s4 + $0x18] sm:$0xff]
        %v2987 = vld [vmem:[%s4 + $0x20] sm:$0xf]
        %v2988 = vld [vmem:[%s4 + $0x24] sm:$0xff]
        %v2989 = vld [vmem:[%s4 + $0x2c] sm:$0xf]
        %v2990 = vld [vmem:[%s4 + $0x30] sm:$0xff]
        %v2991 = vld [vmem:[%s4 + $0x38] sm:$0xf]
        %v2992 = vld [vmem:[%s4 + $0x3c] sm:$0xff]
        %v2993 = vld [vmem:[%s4 + $0x44] sm:$0xf]
        %v2994 = vld [vmem:[%s4 + $0x48] sm:$0xff]
        %v2995 = vld [vmem:[%s4 + $0x50] sm:$0xf]
        %v2996 = vld [vmem:[%s4 + $0x54] sm:$0xff]
        %v2997 = vld [vmem:[%s4 + $0x5c] sm:$0xf]
        %v2998 = vld [vmem:[%s4 + $0x60] sm:$0xff]
        %v2999 = vld [vmem:[%s4 + $0x68] sm:$0xf]
        %v3000 = vld [vmem:[%s4 + $0x6c] sm:$0xff]
        %v3001 = vld [vmem:[%s4 + $0x74] sm:$0xf]
        %v3002 = vld [vmem:[%s4 + $0x78] sm:$0xff]
        %v3003 = vld [vmem:[%s4 + $0x80] sm:$0xf]
        %v3004 = vld [vmem:[%s4 + $0x84] sm:$0xff]
        %v3005 = vld [vmem:[%s4 + $0x8c] sm:$0xf]
        %v3006 = vld [vmem:[%s4 + $0x90] sm:$0xff]
        %v3007 = vld [vmem:[%s4 + $0x98] sm:$0xf]
        %v3008 = vld [vmem:[%s4 + $0x9c] sm:$0xff]
        %v3009 = vld [vmem:[%s4 + $0xa4] sm:$0xf]
        %v3010 = vld [vmem:[%s4 + $0xa8] sm:$0xff]
        %v3011 = vld [vmem:[%s4 + $0xb0] sm:$0xf]
        %v3012 = vld [vmem:[%s4 + $0xb4] sm:$0xff]
        %v3013 = vld [vmem:[%s4 + $0xbc] sm:$0xf]
        %v3046 = vunpack.c.l.b16 %v2982
        %v3047 = vunpack.c.h.b16 %v2982
        %v3048 = vunpack.c.l.b16 %v2983
        %v3049 = vunpack.c.l.b16 %v2984
        %v3050 = vunpack.c.h.b16 %v2984
        %v3051 = vunpack.c.l.b16 %v2985
        %v3052 = vunpack.c.l.b16 %v2986
        %v3053 = vunpack.c.h.b16 %v2986
        %v3054 = vunpack.c.l.b16 %v2987
        %v3055 = vunpack.c.l.b16 %v2988
        %v3056 = vunpack.c.h.b16 %v2988
        %v3057 = vunpack.c.l.b16 %v2989
        %v3058 = vunpack.c.l.b16 %v2990
        %v3059 = vunpack.c.h.b16 %v2990
        %v3060 = vunpack.c.l.b16 %v2991
        %v3061 = vunpack.c.l.b16 %v2992
        %v3062 = vunpack.c.h.b16 %v2992
        %v3063 = vunpack.c.l.b16 %v2993
        %v3064 = vunpack.c.l.b16 %v2994
        %v3065 = vunpack.c.h.b16 %v2994
        %v3066 = vunpack.c.l.b16 %v2995
        %v3067 = vunpack.c.l.b16 %v2996
        %v3068 = vunpack.c.h.b16 %v2996
        %v3069 = vunpack.c.l.b16 %v2997
        %v3070 = vunpack.c.l.b16 %v2998
        %v3071 = vunpack.c.h.b16 %v2998
        %v3072 = vunpack.c.l.b16 %v2999
        %v3073 = vunpack.c.l.b16 %v3000
        %v3074 = vunpack.c.h.b16 %v3000
        %v3075 = vunpack.c.l.b16 %v3001
        %v3076 = vunpack.c.l.b16 %v3002
        %v3077 = vunpack.c.h.b16 %v3002
        %v3078 = vunpack.c.l.b16 %v3003
        %v3079 = vunpack.c.l.b16 %v3004
        %v3080 = vunpack.c.h.b16 %v3004
        %v3081 = vunpack.c.l.b16 %v3005
        %v3082 = vunpack.c.l.b16 %v3006
        %v3083 = vunpack.c.h.b16 %v3006
        %v3084 = vunpack.c.l.b16 %v3007
        %v3085 = vunpack.c.l.b16 %v3008
        %v3086 = vunpack.c.h.b16 %v3008
        %v3087 = vunpack.c.l.b16 %v3009
        %v3088 = vunpack.c.l.b16 %v3010
        %v3089 = vunpack.c.h.b16 %v3010
        %v3090 = vunpack.c.l.b16 %v3011
        %v3091 = vunpack.c.l.b16 %v3012
        %v3092 = vunpack.c.h.b16 %v3012
        %v3093 = vunpack.c.l.b16 %v3013
        %v3094 = vpack.c.b16 %v3049, %v3046
        %v3095 = vpack.c.b16 %v3050, %v3047
        %v3096 = vpack.c.b16 %v3051, %v3048
        %v3097 = vpack.c.b16 %v3055, %v3052
        %v3098 = vpack.c.b16 %v3056, %v3053
        %v3099 = vpack.c.b16 %v3057, %v3054
        %v3100 = vpack.c.b16 %v3061, %v3058
        %v3101 = vpack.c.b16 %v3062, %v3059
        %v3102 = vpack.c.b16 %v3063, %v3060
        %v3103 = vpack.c.b16 %v3067, %v3064
        %v3104 = vpack.c.b16 %v3068, %v3065
        %v3105 = vpack.c.b16 %v3069, %v3066
        %v3106 = vpack.c.b16 %v3073, %v3070
        %v3107 = vpack.c.b16 %v3074, %v3071
        %v3108 = vpack.c.b16 %v3075, %v3072
        %v3109 = vpack.c.b16 %v3079, %v3076
        %v3110 = vpack.c.b16 %v3080, %v3077
        %v3111 = vpack.c.b16 %v3081, %v3078
        %v3112 = vpack.c.b16 %v3085, %v3082
        %v3113 = vpack.c.b16 %v3086, %v3083
        %v3114 = vpack.c.b16 %v3087, %v3084
        %v3115 = vpack.c.b16 %v3091, %v3088
        %v3116 = vpack.c.b16 %v3092, %v3089
        %v3117 = vpack.c.b16 %v3093, %v3090
        %3142 = vmatprep.subr.bf16.mxu0 %v3095
        %3143 = vmatpush1.bf16.msra.mxu0 %v3094
        %3144 = vmatprep.subr.bf16.mxu0 %v3098
        %3145 = vmatpush1.bf16.msra.mxu0 %v3097
        %3146 = vmatprep.subr.bf16.mxu0 %v3101
        %3147 = vmatpush1.bf16.msra.mxu0 %v3100
        %3148 = vmatprep.subr.bf16.mxu0 %v3104
        %3149 = vmatpush1.bf16.msra.mxu0 %v3103
        %3150 = vmatprep.subr.bf16.mxu0 %v3107
        %3151 = vmatpush1.bf16.msra.mxu0 %v3106
        %3152 = vmatprep.subr.bf16.mxu0 %v3110
        %3153 = vmatpush1.bf16.msra.mxu0 %v3109
        %3154 = vmatprep.subr.bf16.mxu0 %v3113
        %3155 = vmatpush1.bf16.msra.mxu0 %v3112
        %3156 = vmatprep.subr.bf16.mxu0 %v3116
        %3157 = vmatpush1.bf16.msra.mxu0 %v3115
        %3158 = vmatprep.subr.bf16.mxu0 0
        %3159 = vmatpush1.bf16.msra.mxu0 0
        %3160 = vmatprep.subr.bf16.mxu0 0
        %3161 = vmatpush1.bf16.msra.mxu0 0
        %3162 = vmatprep.subr.bf16.mxu0 0
        %3163 = vmatpush1.bf16.msra.mxu0 0
        %3164 = vmatprep.subr.bf16.mxu0 0
        %3165 = vmatpush1.bf16.msra.mxu0 0
        %3166 = vmatprep.subr.bf16.mxu0 0
        %3167 = vmatpush1.bf16.msra.mxu0 0
        %3168 = vmatprep.subr.bf16.mxu0 0
        %3169 = vmatpush1.bf16.msra.mxu0 0
        %3170 = vmatprep.subr.bf16.mxu0 0
        %3171 = vmatpush1.bf16.msra.mxu0 0
        %3172 = vmatprep.subr.bf16.mxu0 0
        %3173 = vmatpush1.bf16.msra.mxu0 0
        %3174 = vmatprep.mubr.bf16.mxu0 0
        %3175 = vmatmul.mubr.bf16.gmra.mrb[0].mxu0 %v2974
        %v3176 = vpop.f32.mrb[0].mxu0
        %v3177 = vadd.f32 0.0, %v3176
        %v3178 = vpop.f32.mrb[0].mxu0
        %v3179 = vadd.f32 0.0, %v3178
        %v3180 = vpop.f32.mrb[0].mxu0
        %v3181 = vadd.f32 0.0, %v3180
        %v3182 = vpop.f32.mrb[0].mxu0
        %v3183 = vadd.f32 0.0, %v3182
        %3184 = vmatprep.mubr.bf16.mxu0 0
        %3185 = vmatmul.mubr.bf16.gmra.mrb[0].mxu0 %v2975
        %v3186 = vpop.f32.mrb[0].mxu0
        %v3187 = vadd.f32 0.0, %v3186
        %v3188 = vpop.f32.mrb[0].mxu0
        %v3189 = vadd.f32 0.0, %v3188
        %v3190 = vpop.f32.mrb[0].mxu0
        %v3191 = vadd.f32 0.0, %v3190
        %v3192 = vpop.f32.mrb[0].mxu0
        %v3193 = vadd.f32 0.0, %v3192
        %3194 = vmatprep.mubr.bf16.mxu0 0
        %3195 = vmatmul.mubr.bf16.gmra.mrb[0].mxu0 %v2976
        %v3196 = vpop.f32.mrb[0].mxu0
        %v3197 = vadd.f32 0.0, %v3196
        %v3198 = vpop.f32.mrb[0].mxu0
        %v3199 = vadd.f32 0.0, %v3198
        %v3200 = vpop.f32.mrb[0].mxu0
        %v3201 = vadd.f32 0.0, %v3200
        %v3202 = vpop.f32.mrb[0].mxu0
        %v3203 = vadd.f32 0.0, %v3202
        %3204 = vmatprep.mubr.bf16.mxu0 0
        %3205 = vmatmul.mubr.bf16.gmra.mrb[0].mxu0 %v2977
        %v3206 = vpop.f32.mrb[0].mxu0
        %v3207 = vadd.f32 0.0, %v3206
        %v3208 = vpop.f32.mrb[0].mxu0
        %v3209 = vadd.f32 0.0, %v3208
        %v3210 = vpop.f32.mrb[0].mxu0
        %v3211 = vadd.f32 0.0, %v3210
        %v3212 = vpop.f32.mrb[0].mxu0
        %v3213 = vadd.f32 0.0, %v3212
        %3214 = vmatprep.mubr.bf16.mxu0 0
        %3215 = vmatmul.mubr.bf16.gmra.mrb[0].mxu0 %v2978
        %v3216 = vpop.f32.mrb[0].mxu0
        %v3217 = vadd.f32 0.0, %v3216
        %v3218 = vpop.f32.mrb[0].mxu0
        %v3219 = vadd.f32 0.0, %v3218
        %v3220 = vpop.f32.mrb[0].mxu0
        %v3221 = vadd.f32 0.0, %v3220
        %v3222 = vpop.f32.mrb[0].mxu0
        %v3223 = vadd.f32 0.0, %v3222
        %3224 = vmatprep.mubr.bf16.mxu0 0
        %3225 = vmatmul.mubr.bf16.gmra.mrb[0].mxu0 %v2979
        %v3226 = vpop.f32.mrb[0].mxu0
        %v3227 = vadd.f32 0.0, %v3226
        %v3228 = vpop.f32.mrb[0].mxu0
        %v3229 = vadd.f32 0.0, %v3228
        %v3230 = vpop.f32.mrb[0].mxu0
        %v3231 = vadd.f32 0.0, %v3230
        %v3232 = vpop.f32.mrb[0].mxu0
        %v3233 = vadd.f32 0.0, %v3232
        %3234 = vmatprep.mubr.bf16.mxu0 0
        %3235 = vmatmul.mubr.bf16.gmra.mrb[0].mxu0 %v2980
        %v3236 = vpop.f32.mrb[0].mxu0
        %v3237 = vadd.f32 0.0, %v3236
        %v3238 = vpop.f32.mrb[0].mxu0
        %v3239 = vadd.f32 0.0, %v3238
        %v3240 = vpop.f32.mrb[0].mxu0
        %v3241 = vadd.f32 0.0, %v3240
        %v3242 = vpop.f32.mrb[0].mxu0
        %v3243 = vadd.f32 0.0, %v3242
        %3244 = vmatprep.mubr.bf16.mxu0 0
        %3245 = vmatmul.mubr.bf16.gmra.mrb[0].mxu0 %v2981
        %v3246 = vpop.f32.mrb[0].mxu0
        %v3247 = vadd.f32 0.0, %v3246
        %v3248 = vpop.f32.mrb[0].mxu0
        %v3249 = vadd.f32 0.0, %v3248
        %v3250 = vpop.f32.mrb[0].mxu0
        %v3251 = vadd.f32 0.0, %v3250
        %v3252 = vpop.f32.mrb[0].mxu0
        %v3253 = vadd.f32 0.0, %v3252
        %3254 = vdwg.mxu0
        %3255 = vmatprep.subr.bf16.mxu0 0
        %3256 = vmatpush1.bf16.msra.mxu0 %v3096
        %3257 = vmatprep.subr.bf16.mxu0 0
        %3258 = vmatpush1.bf16.msra.mxu0 %v3099
        %3259 = vmatprep.subr.bf16.mxu0 0
        %3260 = vmatpush1.bf16.msra.mxu0 %v3102
        %3261 = vmatprep.subr.bf16.mxu0 0
        %3262 = vmatpush1.bf16.msra.mxu0 %v3105
        %3263 = vmatprep.subr.bf16.mxu0 0
        %3264 = vmatpush1.bf16.msra.mxu0 %v3108
        %3265 = vmatprep.subr.bf16.mxu0 0
        %3266 = vmatpush1.bf16.msra.mxu0 %v3111
        %3267 = vmatprep.subr.bf16.mxu0 0
        %3268 = vmatpush1.bf16.msra.mxu0 %v3114
        %3269 = vmatprep.subr.bf16.mxu0 0
        %3270 = vmatpush1.bf16.msra.mxu0 %v3117
        %3271 = vmatprep.subr.bf16.mxu0 0
        %3272 = vmatpush1.bf16.msra.mxu0 0
        %3273 = vmatprep.subr.bf16.mxu0 0
        %3274 = vmatpush1.bf16.msra.mxu0 0
        %3275 = vmatprep.subr.bf16.mxu0 0
        %3276 = vmatpush1.bf16.msra.mxu0 0
        %3277 = vmatprep.subr.bf16.mxu0 0
        %3278 = vmatpush1.bf16.msra.mxu0 0
        %3279 = vmatprep.subr.bf16.mxu0 0
        %3280 = vmatpush1.bf16.msra.mxu0 0
        %3281 = vmatprep.subr.bf16.mxu0 0
        %3282 = vmatpush1.bf16.msra.mxu0 0
        %3283 = vmatprep.subr.bf16.mxu0 0
        %3284 = vmatpush1.bf16.msra.mxu0 0
        %3285 = vmatprep.subr.bf16.mxu0 0
        %3286 = vmatpush1.bf16.msra.mxu0 0
        %3287 = vmatprep.mubr.bf16.mxu0 0
        %3288 = vmatmul.mubr.bf16.gmra.mrb[0].mxu0 %v2974
        %v3289 = vpop.f32.mrb[0].mxu0
        %v3290 = vadd.f32 0.0, %v3289
        %v3291 = vpop.f32.mrb[0].mxu0
        %v3292 = vpop.f32.mrb[0].mxu0
        %v3293 = vadd.f32 0.0, %v3292
        %v3294 = vpop.f32.mrb[0].mxu0
        %3295 = vmatprep.mubr.bf16.mxu0 0
        %3296 = vmatmul.mubr.bf16.gmra.mrb[0].mxu0 %v2975
        %v3297 = vpop.f32.mrb[0].mxu0
        %v3298 = vadd.f32 0.0, %v3297
        %v3299 = vpop.f32.mrb[0].mxu0
        %v3300 = vpop.f32.mrb[0].mxu0
        %v3301 = vadd.f32 0.0, %v3300
        %v3302 = vpop.f32.mrb[0].mxu0
        %3303 = vmatprep.mubr.bf16.mxu0 0
        %3304 = vmatmul.mubr.bf16.gmra.mrb[0].mxu0 %v2976
        %v3305 = vpop.f32.mrb[0].mxu0
        %v3306 = vadd.f32 0.0, %v3305
        %v3307 = vpop.f32.mrb[0].mxu0
        %v3308 = vpop.f32.mrb[0].mxu0
        %v3309 = vadd.f32 0.0, %v3308
        %v3310 = vpop.f32.mrb[0].mxu0
        %3311 = vmatprep.mubr.bf16.mxu0 0
        %3312 = vmatmul.mubr.bf16.gmra.mrb[0].mxu0 %v2977
        %v3313 = vpop.f32.mrb[0].mxu0
        %v3314 = vadd.f32 0.0, %v3313
        %v3315 = vpop.f32.mrb[0].mxu0
        %v3316 = vpop.f32.mrb[0].mxu0
        %v3317 = vadd.f32 0.0, %v3316
        %v3318 = vpop.f32.mrb[0].mxu0
        %3319 = vmatprep.mubr.bf16.mxu0 0
        %3320 = vmatmul.mubr.bf16.gmra.mrb[0].mxu0 %v2978
        %v3321 = vpop.f32.mrb[0].mxu0
        %v3322 = vadd.f32 0.0, %v3321
        %v3323 = vpop.f32.mrb[0].mxu0
        %v3324 = vpop.f32.mrb[0].mxu0
        %v3325 = vadd.f32 0.0, %v3324
        %v3326 = vpop.f32.mrb[0].mxu0
        %3327 = vmatprep.mubr.bf16.mxu0 0
        %3328 = vmatmul.mubr.bf16.gmra.mrb[0].mxu0 %v2979
        %v3329 = vpop.f32.mrb[0].mxu0
        %v3330 = vadd.f32 0.0, %v3329
        %v3331 = vpop.f32.mrb[0].mxu0
        %v3332 = vpop.f32.mrb[0].mxu0
        %v3333 = vadd.f32 0.0, %v3332
        %v3334 = vpop.f32.mrb[0].mxu0
        %3335 = vmatprep.mubr.bf16.mxu0 0
        %3336 = vmatmul.mubr.bf16.gmra.mrb[0].mxu0 %v2980
        %v3337 = vpop.f32.mrb[0].mxu0
        %v3338 = vadd.f32 0.0, %v3337
        %v3339 = vpop.f32.mrb[0].mxu0
        %v3340 = vpop.f32.mrb[0].mxu0
        %v3341 = vadd.f32 0.0, %v3340
        %v3342 = vpop.f32.mrb[0].mxu0
        %3343 = vmatprep.mubr.bf16.mxu0 0
        %3344 = vmatmul.mubr.bf16.gmra.mrb[0].mxu0 %v2981
        %v3345 = vpop.f32.mrb[0].mxu0
        %v3346 = vadd.f32 0.0, %v3345
        %v3347 = vpop.f32.mrb[0].mxu0
        %v3348 = vpop.f32.mrb[0].mxu0
        %v3349 = vadd.f32 0.0, %v3348
        %v3350 = vpop.f32.mrb[0].mxu0
        %3351 = vdwg.mxu0
        %v3352 = vrot.slane %v3177, 7
        %v3353 = vrot.slane %v3181, 7
        %v3354 = vrot.slane %v3187, 7
        %v3355 = vrot.slane %v3191, 7
        %v3356 = vrot.slane %v3197, 7
        %v3357 = vrot.slane %v3201, 7
        %v3358 = vrot.slane %v3207, 7
        %v3359 = vrot.slane %v3211, 7
        %v3360 = vrot.slane %v3217, 7
        %v3361 = vrot.slane %v3221, 7
        %v3362 = vrot.slane %v3227, 7
        %v3363 = vrot.slane %v3231, 7
        %v3364 = vrot.slane %v3237, 7
        %v3365 = vrot.slane %v3241, 7
        %v3366 = vrot.slane %v3247, 7
        %v3367 = vrot.slane %v3251, 7
        %v3368 = vsel %vm1724, %v3366, %v3367
        %v3369 = vsel %vm1724, %v3365, %v3366
        %v3370 = vsel %vm1724, %v3364, %v3365
        %v3371 = vsel %vm1724, %v3363, %v3364
        %v3372 = vsel %vm1724, %v3362, %v3363
        %v3373 = vsel %vm1724, %v3361, %v3362
        %v3374 = vsel %vm1724, %v3360, %v3361
        %v3375 = vsel %vm1724, %v3359, %v3360
        %v3376 = vsel %vm1724, %v3358, %v3359
        %v3377 = vsel %vm1724, %v3357, %v3358
        %v3378 = vsel %vm1724, %v3356, %v3357
        %v3379 = vsel %vm1724, %v3355, %v3356
        %v3380 = vsel %vm1724, %v3354, %v3355
        %v3381 = vsel %vm1724, %v3353, %v3354
        %v3382 = vsel %vm1724, %v3352, %v3353
        %v3383 = vsel %vm1724, %v3367, %v3352
        %3385 = vset.pattern.permute.xlu0 0
        %3386 = vperm.xlu0 %3385, %v2597
        %v3387 = vpop.permute.xlu0 %3386
        %3390 = vset.pattern.permute.xlu0 0
        %3391 = vperm.xlu0 %3390, %v2598
        %v3392 = vpop.permute.xlu0 %3391
        %3395 = vset.pattern.permute.xlu0 0
        %3396 = vperm.xlu0 %3395, %v2599
        %v3397 = vpop.permute.xlu0 %3396
        %3400 = vset.pattern.permute.xlu0 0
        %3401 = vperm.xlu0 %3400, %v2600
        %v3402 = vpop.permute.xlu0 %3401
        %3405 = vset.pattern.permute.xlu0 0
        %3406 = vperm.xlu0 %3405, %v2601
        %v3407 = vpop.permute.xlu0 %3406
        %3410 = vset.pattern.permute.xlu0 0
        %3411 = vperm.xlu0 %3410, %v2602
        %v3412 = vpop.permute.xlu0 %3411
        %3415 = vset.pattern.permute.xlu0 0
        %3416 = vperm.xlu0 %3415, %v2603
        %v3417 = vpop.permute.xlu0 %3416
        %3420 = vset.pattern.permute.xlu0 0
        %3421 = vperm.xlu0 %3420, %v2604
        %v3422 = vpop.permute.xlu0 %3421
        %3425 = vset.pattern.permute.xlu0 0
        %3426 = vperm.xlu0 %3425, %v2605
        %v3427 = vpop.permute.xlu0 %3426
        %3430 = vset.pattern.permute.xlu0 0
        %3431 = vperm.xlu0 %3430, %v2606
        %v3432 = vpop.permute.xlu0 %3431
        %3435 = vset.pattern.permute.xlu0 0
        %3436 = vperm.xlu0 %3435, %v2607
        %v3437 = vpop.permute.xlu0 %3436
        %3440 = vset.pattern.permute.xlu0 0
        %3441 = vperm.xlu0 %3440, %v2608
        %v3442 = vpop.permute.xlu0 %3441
        %3445 = vset.pattern.permute.xlu0 0
        %3446 = vperm.xlu0 %3445, %v2609
        %v3447 = vpop.permute.xlu0 %3446
        %3450 = vset.pattern.permute.xlu0 0
        %3451 = vperm.xlu0 %3450, %v2610
        %v3452 = vpop.permute.xlu0 %3451
        %3455 = vset.pattern.permute.xlu0 0
        %3456 = vperm.xlu0 %3455, %v2611
        %v3457 = vpop.permute.xlu0 %3456
        %3460 = vset.pattern.permute.xlu0 0
        %3461 = vperm.xlu0 %3460, %v2612
        %v3462 = vpop.permute.xlu0 %3461
        %v3464 = vmul.f32 %v3383, %v3387
        %v3465 = vmul.f32 %v3382, %v3392
        %v3466 = vmul.f32 %v3381, %v3397
        %v3467 = vmul.f32 %v3380, %v3402
        %v3468 = vmul.f32 %v3379, %v3407
        %v3469 = vmul.f32 %v3378, %v3412
        %v3470 = vmul.f32 %v3377, %v3417
        %v3471 = vmul.f32 %v3376, %v3422
        %v3472 = vmul.f32 %v3375, %v3427
        %v3473 = vmul.f32 %v3374, %v3432
        %v3474 = vmul.f32 %v3373, %v3437
        %v3475 = vmul.f32 %v3372, %v3442
        %v3476 = vmul.f32 %v3371, %v3447
        %v3477 = vmul.f32 %v3370, %v3452
        %v3478 = vmul.f32 %v3369, %v3457
        %v3479 = vmul.f32 %v3368, %v3462
        %v3480 = vrot.slane %v3290, 1
        %v3481 = vrot.slane %v3293, 1
        %v3482 = vrot.slane %v3298, 1
        %v3483 = vrot.slane %v3301, 1
        %v3484 = vrot.slane %v3306, 1
        %v3485 = vrot.slane %v3309, 1
        %v3486 = vrot.slane %v3314, 1
        %v3487 = vrot.slane %v3317, 1
        %v3488 = vrot.slane %v3322, 1
        %v3489 = vrot.slane %v3325, 1
        %v3490 = vrot.slane %v3330, 1
        %v3491 = vrot.slane %v3333, 1
        %v3492 = vrot.slane %v3338, 1
        %v3493 = vrot.slane %v3341, 1
        %v3494 = vrot.slane %v3346, 1
        %v3495 = vrot.slane %v3349, 1
        %v3496 = vsel %vm1757, %v3494, %v3495
        %v3497 = vsel %vm1757, %v3493, %v3494
        %v3498 = vsel %vm1757, %v3492, %v3493
        %v3499 = vsel %vm1757, %v3491, %v3492
        %v3500 = vsel %vm1757, %v3490, %v3491
        %v3501 = vsel %vm1757, %v3489, %v3490
        %v3502 = vsel %vm1757, %v3488, %v3489
        %v3503 = vsel %vm1757, %v3487, %v3488
        %v3504 = vsel %vm1757, %v3486, %v3487
        %v3505 = vsel %vm1757, %v3485, %v3486
        %v3506 = vsel %vm1757, %v3484, %v3485
        %v3507 = vsel %vm1757, %v3483, %v3484
        %v3508 = vsel %vm1757, %v3482, %v3483
        %v3509 = vsel %vm1757, %v3481, %v3482
        %v3510 = vsel %vm1757, %v3480, %v3481
        %v3511 = vsel %vm1757, %v3495, %v3480
        %3512 = vset.pattern.permute.xlu0 1
        %3513 = vperm.xlu0 %3512, %v2597
        %v3514 = vpop.permute.xlu0 %3513
        %3516 = vset.pattern.permute.xlu0 1
        %3517 = vperm.xlu0 %3516, %v2598
        %v3518 = vpop.permute.xlu0 %3517
        %3520 = vset.pattern.permute.xlu0 1
        %3521 = vperm.xlu0 %3520, %v2599
        %v3522 = vpop.permute.xlu0 %3521
        %3524 = vset.pattern.permute.xlu0 1
        %3525 = vperm.xlu0 %3524, %v2600
        %v3526 = vpop.permute.xlu0 %3525
        %3528 = vset.pattern.permute.xlu0 1
        %3529 = vperm.xlu0 %3528, %v2601
        %v3530 = vpop.permute.xlu0 %3529
        %3532 = vset.pattern.permute.xlu0 1
        %3533 = vperm.xlu0 %3532, %v2602
        %v3534 = vpop.permute.xlu0 %3533
        %3536 = vset.pattern.permute.xlu0 1
        %3537 = vperm.xlu0 %3536, %v2603
        %v3538 = vpop.permute.xlu0 %3537
        %3540 = vset.pattern.permute.xlu0 1
        %3541 = vperm.xlu0 %3540, %v2604
        %v3542 = vpop.permute.xlu0 %3541
        %3544 = vset.pattern.permute.xlu0 1
        %3545 = vperm.xlu0 %3544, %v2605
        %v3546 = vpop.permute.xlu0 %3545
        %3548 = vset.pattern.permute.xlu0 1
        %3549 = vperm.xlu0 %3548, %v2606
        %v3550 = vpop.permute.xlu0 %3549
        %3552 = vset.pattern.permute.xlu0 1
        %3553 = vperm.xlu0 %3552, %v2607
        %v3554 = vpop.permute.xlu0 %3553
        %3556 = vset.pattern.permute.xlu0 1
        %3557 = vperm.xlu0 %3556, %v2608
        %v3558 = vpop.permute.xlu0 %3557
        %3560 = vset.pattern.permute.xlu0 1
        %3561 = vperm.xlu0 %3560, %v2609
        %v3562 = vpop.permute.xlu0 %3561
        %3564 = vset.pattern.permute.xlu0 1
        %3565 = vperm.xlu0 %3564, %v2610
        %v3566 = vpop.permute.xlu0 %3565
        %3568 = vset.pattern.permute.xlu0 1
        %3569 = vperm.xlu0 %3568, %v2611
        %v3570 = vpop.permute.xlu0 %3569
        %3572 = vset.pattern.permute.xlu0 1
        %3573 = vperm.xlu0 %3572, %v2612
        %v3574 = vpop.permute.xlu0 %3573
        %v3576 = vmul.f32 %v3510, %v3514
        %v3577 = vmul.f32 %v3509, %v3518
        %v3578 = vmul.f32 %v3508, %v3522
        %v3579 = vmul.f32 %v3507, %v3526
        %v3580 = vmul.f32 %v3506, %v3530
        %v3581 = vmul.f32 %v3505, %v3534
        %v3582 = vmul.f32 %v3504, %v3538
        %v3583 = vmul.f32 %v3503, %v3542
        %v3584 = vmul.f32 %v3502, %v3546
        %v3585 = vmul.f32 %v3501, %v3550
        %v3586 = vmul.f32 %v3500, %v3554
        %v3587 = vmul.f32 %v3499, %v3558
        %v3588 = vmul.f32 %v3498, %v3562
        %v3589 = vmul.f32 %v3497, %v3566
        %v3590 = vmul.f32 %v3496, %v3570
        %v3591 = vmul.f32 %v3511, %v3574
        %v3592 = vadd.f32 %v3464, %v3179
        %v3593 = vadd.f32 %v3465, %v3183
        %v3594 = vadd.f32 %v3466, %v3189
        %v3595 = vadd.f32 %v3467, %v3193
        %v3596 = vadd.f32 %v3468, %v3199
        %v3597 = vadd.f32 %v3469, %v3203
        %v3598 = vadd.f32 %v3470, %v3209
        %v3599 = vadd.f32 %v3471, %v3213
        %v3600 = vadd.f32 %v3472, %v3219
        %v3601 = vadd.f32 %v3473, %v3223
        %v3602 = vadd.f32 %v3474, %v3229
        %v3603 = vadd.f32 %v3475, %v3233
        %v3604 = vadd.f32 %v3476, %v3239
        %v3605 = vadd.f32 %v3477, %v3243
        %v3606 = vadd.f32 %v3478, %v3249
        %v3607 = vadd.f32 %v3479, %v3253
        %v3608 = vadd.f32 %v3592, %v3576
        %v3609 = vadd.f32 %v3593, %v3577
        %v3610 = vadd.f32 %v3594, %v3578
        %v3611 = vadd.f32 %v3595, %v3579
        %v3612 = vadd.f32 %v3596, %v3580
        %v3613 = vadd.f32 %v3597, %v3581
        %v3614 = vadd.f32 %v3598, %v3582
        %v3615 = vadd.f32 %v3599, %v3583
        %v3616 = vadd.f32 %v3600, %v3584
        %v3617 = vadd.f32 %v3601, %v3585
        %v3618 = vadd.f32 %v3602, %v3586
        %v3619 = vadd.f32 %v3603, %v3587
        %v3620 = vadd.f32 %v3604, %v3588
        %v3621 = vadd.f32 %v3605, %v3589
        %v3622 = vadd.f32 %v3606, %v3590
        %v3623 = vadd.f32 %v3607, %v3591
        %v3624 = vlaneseq
        %v3625 = vshrl.u32 %v3624, 7
        %v3626 = vsub.s32 0, %v3625
        %v3627 = vrot.slane %v2941, %v3626
        %v3628 = vadd.f32 %v3608, %v3627
        %v3629 = vadd.f32 %v3609, %v3627
        %v3630 = vadd.f32 %v3610, %v3627
        %v3631 = vadd.f32 %v3611, %v3627
        %v3632 = vadd.f32 %v3612, %v3627
        %v3633 = vadd.f32 %v3613, %v3627
        %v3634 = vadd.f32 %v3614, %v3627
        %v3635 = vadd.f32 %v3615, %v3627
        %v3636 = vadd.f32 %v3616, %v3627
        %v3637 = vadd.f32 %v3617, %v3627
        %v3638 = vadd.f32 %v3618, %v3627
        %v3639 = vadd.f32 %v3619, %v3627
        %v3640 = vadd.f32 %v3620, %v3627
        %v3641 = vadd.f32 %v3621, %v3627
        %v3642 = vadd.f32 %v3622, %v3627
        %v3643 = vadd.f32 %v3623, %v3627
        %v3644 = vld [vmem:[#allocation5 + $0xc] sm:$0x1]
        %v3645 = vld [vmem:[#allocation5 + $0xd] sm:$0x1]
        %v3646 = vmul.f32 %v3628, %v3628
        %v3647 = vmul.f32 %v3629, %v3629
        %v3648 = vmul.f32 %v3630, %v3630
        %v3649 = vmul.f32 %v3631, %v3631
        %v3650 = vmul.f32 %v3632, %v3632
        %v3651 = vmul.f32 %v3633, %v3633
        %v3652 = vmul.f32 %v3634, %v3634
        %v3653 = vmul.f32 %v3635, %v3635
        %v3654 = vmul.f32 %v3636, %v3636
        %v3655 = vmul.f32 %v3637, %v3637
        %v3656 = vmul.f32 %v3638, %v3638
        %v3657 = vmul.f32 %v3639, %v3639
        %v3658 = vmul.f32 %v3640, %v3640
        %v3659 = vmul.f32 %v3641, %v3641
        %v3660 = vmul.f32 %v3642, %v3642
        %v3661 = vmul.f32 %v3643, %v3643
        %3662 = vmatprep.subr.mxu0 0.0
        %3663 = vmatpush1.msra.mxu0 %v944
        %3664 = vmatprep.subr.mxu0 0.0
        %3665 = vmatpush1.msra.mxu0 %v945
        %3666 = vmatprep.subr.mxu0 0.0
        %3667 = vmatpush1.msra.mxu0 %v946
        %3668 = vmatprep.subr.mxu0 0.0
        %3669 = vmatpush1.msra.mxu0 %v947
        %3670 = vmatprep.subr.mxu0 0.0
        %3671 = vmatpush1.msra.mxu0 %v948
        %3672 = vmatprep.subr.mxu0 0.0
        %3673 = vmatpush1.msra.mxu0 %v949
        %3674 = vmatprep.subr.mxu0 0.0
        %3675 = vmatpush1.msra.mxu0 %v950
        %3676 = vmatprep.subr.mxu0 0.0
        %3677 = vmatpush1.msra.mxu0 %v951
        %3678 = vmatprep.subr.mxu0 0.0
        %3679 = vmatpush1.msra.mxu0 %v952
        %3680 = vmatprep.subr.mxu0 0.0
        %3681 = vmatpush1.msra.mxu0 %v953
        %3682 = vmatprep.subr.mxu0 0.0
        %3683 = vmatpush1.msra.mxu0 %v954
        %3684 = vmatprep.subr.mxu0 0.0
        %3685 = vmatpush1.msra.mxu0 %v955
        %3686 = vmatprep.subr.mxu0 0.0
        %3687 = vmatpush1.msra.mxu0 %v956
        %3688 = vmatprep.subr.mxu0 0.0
        %3689 = vmatpush1.msra.mxu0 %v957
        %3690 = vmatprep.subr.mxu0 0.0
        %3691 = vmatpush1.msra.mxu0 %v958
        %3692 = vmatprep.subr.mxu0 0.0
        %3693 = vmatpush1.msra.mxu0 %v959
        %3694 = vmatprep.subr.mxu0 0.0
        %3695 = vmatpush1.msra.mxu0 %v960
        %3696 = vmatprep.subr.mxu0 0.0
        %3697 = vmatpush1.msra.mxu0 %v961
        %3698 = vmatprep.subr.mxu0 0.0
        %3699 = vmatpush1.msra.mxu0 %v962
        %3700 = vmatprep.subr.mxu0 0.0
        %3701 = vmatpush1.msra.mxu0 %v963
        %3702 = vmatprep.subr.mxu0 0.0
        %3703 = vmatpush1.msra.mxu0 %v964
        %3704 = vmatprep.subr.mxu0 0.0
        %3705 = vmatpush1.msra.mxu0 %v965
        %3706 = vmatprep.subr.mxu0 0.0
        %3707 = vmatpush1.msra.mxu0 %v966
        %3708 = vmatprep.subr.mxu0 0.0
        %3709 = vmatpush1.msra.mxu0 %v967
        %3710 = vmatprep.subr.mxu0 0.0
        %3711 = vmatpush1.msra.mxu0 %v968
        %3712 = vmatprep.subr.mxu0 0.0
        %3713 = vmatpush1.msra.mxu0 %v969
        %3714 = vmatprep.subr.mxu0 0.0
        %3715 = vmatpush1.msra.mxu0 %v970
        %3716 = vmatprep.subr.mxu0 0.0
        %3717 = vmatpush1.msra.mxu0 %v971
        %3718 = vmatprep.subr.mxu0 0.0
        %3719 = vmatpush1.msra.mxu0 %v972
        %3720 = vmatprep.subr.mxu0 0.0
        %3721 = vmatpush1.msra.mxu0 %v973
        %3722 = vmatprep.subr.mxu0 0.0
        %3723 = vmatpush1.msra.mxu0 %v974
        %3724 = vmatprep.subr.mxu0 0.0
        %3725 = vmatpush1.msra.mxu0 %v975
        %3726 = vmatprep.mubr.f32.mxu0 %v3646
        %3727 = vmatmul.mubr.f32.gmra.mrb[0].mxu0 %v3628
        %v3728 = vpop.f32.mrb[0].mxu0
        %v3729 = vadd.f32 0.0, %v3728
        %v3730 = vpop.f32.mrb[0].mxu0
        %3731 = vmatprep.mubr.f32.mxu0 %v3647
        %3732 = vmatmul.mubr.f32.gmra.mrb[0].mxu0 %v3629
        %v3733 = vpop.f32.mrb[0].mxu0
        %v3734 = vadd.f32 0.0, %v3733
        %v3735 = vpop.f32.mrb[0].mxu0
        %3736 = vmatprep.mubr.f32.mxu0 %v3648
        %3737 = vmatmul.mubr.f32.gmra.mrb[0].mxu0 %v3630
        %v3738 = vpop.f32.mrb[0].mxu0
        %v3739 = vadd.f32 0.0, %v3738
        %v3740 = vpop.f32.mrb[0].mxu0
        %3741 = vmatprep.mubr.f32.mxu0 %v3649
        %3742 = vmatmul.mubr.f32.gmra.mrb[0].mxu0 %v3631
        %v3743 = vpop.f32.mrb[0].mxu0
        %v3744 = vadd.f32 0.0, %v3743
        %v3745 = vpop.f32.mrb[0].mxu0
        %3746 = vmatprep.mubr.f32.mxu0 %v3650
        %3747 = vmatmul.mubr.f32.gmra.mrb[0].mxu0 %v3632
        %v3748 = vpop.f32.mrb[0].mxu0
        %v3749 = vadd.f32 0.0, %v3748
        %v3750 = vpop.f32.mrb[0].mxu0
        %3751 = vmatprep.mubr.f32.mxu0 %v3651
        %3752 = vmatmul.mubr.f32.gmra.mrb[0].mxu0 %v3633
        %v3753 = vpop.f32.mrb[0].mxu0
        %v3754 = vadd.f32 0.0, %v3753
        %v3755 = vpop.f32.mrb[0].mxu0
        %3756 = vmatprep.mubr.f32.mxu0 %v3652
        %3757 = vmatmul.mubr.f32.gmra.mrb[0].mxu0 %v3634
        %v3758 = vpop.f32.mrb[0].mxu0
        %v3759 = vadd.f32 0.0, %v3758
        %v3760 = vpop.f32.mrb[0].mxu0
        %3761 = vmatprep.mubr.f32.mxu0 %v3653
        %3762 = vmatmul.mubr.f32.gmra.mrb[0].mxu0 %v3635
        %v3763 = vpop.f32.mrb[0].mxu0
        %v3764 = vadd.f32 0.0, %v3763
        %v3765 = vpop.f32.mrb[0].mxu0
        %3766 = vmatprep.mubr.f32.mxu0 %v3654
        %3767 = vmatmul.mubr.f32.gmra.mrb[0].mxu0 %v3636
        %v3768 = vpop.f32.mrb[0].mxu0
        %v3769 = vadd.f32 0.0, %v3768
        %v3770 = vpop.f32.mrb[0].mxu0
        %3771 = vmatprep.mubr.f32.mxu0 %v3655
        %3772 = vmatmul.mubr.f32.gmra.mrb[0].mxu0 %v3637
        %v3773 = vpop.f32.mrb[0].mxu0
        %v3774 = vadd.f32 0.0, %v3773
        %v3775 = vpop.f32.mrb[0].mxu0
        %3776 = vmatprep.mubr.f32.mxu0 %v3656
        %3777 = vmatmul.mubr.f32.gmra.mrb[0].mxu0 %v3638
        %v3778 = vpop.f32.mrb[0].mxu0
        %v3779 = vadd.f32 0.0, %v3778
        %v3780 = vpop.f32.mrb[0].mxu0
        %3781 = vmatprep.mubr.f32.mxu0 %v3657
        %3782 = vmatmul.mubr.f32.gmra.mrb[0].mxu0 %v3639
        %v3783 = vpop.f32.mrb[0].mxu0
        %v3784 = vadd.f32 0.0, %v3783
        %v3785 = vpop.f32.mrb[0].mxu0
        %3786 = vmatprep.mubr.f32.mxu0 %v3658
        %3787 = vmatmul.mubr.f32.gmra.mrb[0].mxu0 %v3640
        %v3788 = vpop.f32.mrb[0].mxu0
        %v3789 = vadd.f32 0.0, %v3788
        %v3790 = vpop.f32.mrb[0].mxu0
        %3791 = vmatprep.mubr.f32.mxu0 %v3659
        %3792 = vmatmul.mubr.f32.gmra.mrb[0].mxu0 %v3641
        %v3793 = vpop.f32.mrb[0].mxu0
        %v3794 = vadd.f32 0.0, %v3793
        %v3795 = vpop.f32.mrb[0].mxu0
        %3796 = vmatprep.mubr.f32.mxu0 %v3660
        %3797 = vmatmul.mubr.f32.gmra.mrb[0].mxu0 %v3642
        %v3798 = vpop.f32.mrb[0].mxu0
        %v3799 = vadd.f32 0.0, %v3798
        %v3800 = vpop.f32.mrb[0].mxu0
        %3801 = vmatprep.mubr.f32.mxu0 %v3661
        %3802 = vmatmul.mubr.f32.gmra.mrb[0].mxu0 %v3643
        %v3803 = vpop.f32.mrb[0].mxu0
        %v3804 = vadd.f32 0.0, %v3803
        %v3805 = vpop.f32.mrb[0].mxu0
        %3806 = vdwg.mxu0
        %v3807 = vld [vmem:[#allocation8] sm:$0xff]
        %3808 = vmatprep.subr.mxu0 0.0
        %3809 = vmatpush1.msra.mxu0 %v3729
        %3810 = vmatprep.subr.mxu0 0.0
        %3811 = vmatpush1.msra.mxu0 %v3734
        %3812 = vmatprep.subr.mxu0 0.0
        %3813 = vmatpush1.msra.mxu0 %v3739
        %3814 = vmatprep.subr.mxu0 0.0
        %3815 = vmatpush1.msra.mxu0 %v3744
        %3816 = vmatprep.subr.mxu0 0.0
        %3817 = vmatpush1.msra.mxu0 %v3749
        %3818 = vmatprep.subr.mxu0 0.0
        %3819 = vmatpush1.msra.mxu0 %v3754
        %3820 = vmatprep.subr.mxu0 0.0
        %3821 = vmatpush1.msra.mxu0 %v3759
        %3822 = vmatprep.subr.mxu0 0.0
        %3823 = vmatpush1.msra.mxu0 %v3764
        %3824 = vmatprep.subr.mxu0 0.0
        %3825 = vmatpush1.msra.mxu0 %v3769
        %3826 = vmatprep.subr.mxu0 0.0
        %3827 = vmatpush1.msra.mxu0 %v3774
        %3828 = vmatprep.subr.mxu0 0.0
        %3829 = vmatpush1.msra.mxu0 %v3779
        %3830 = vmatprep.subr.mxu0 0.0
        %3831 = vmatpush1.msra.mxu0 %v3784
        %3832 = vmatprep.subr.mxu0 0.0
        %3833 = vmatpush1.msra.mxu0 %v3789
        %3834 = vmatprep.subr.mxu0 0.0
        %3835 = vmatpush1.msra.mxu0 %v3794
        %3836 = vmatprep.subr.mxu0 0.0
        %3837 = vmatpush1.msra.mxu0 %v3799
        %3838 = vmatprep.subr.mxu0 0.0
        %3839 = vmatpush1.msra.mxu0 %v3804
        %3840 = vmatprep.subr.mxu0 0.0
        %3841 = vmatpush1.msra.mxu0 0.0
        %3842 = vmatprep.subr.mxu0 0.0
        %3843 = vmatpush1.msra.mxu0 0.0
        %3844 = vmatprep.subr.mxu0 0.0
        %3845 = vmatpush1.msra.mxu0 0.0
        %3846 = vmatprep.subr.mxu0 0.0
        %3847 = vmatpush1.msra.mxu0 0.0
        %3848 = vmatprep.subr.mxu0 0.0
        %3849 = vmatpush1.msra.mxu0 0.0
        %3850 = vmatprep.subr.mxu0 0.0
        %3851 = vmatpush1.msra.mxu0 0.0
        %3852 = vmatprep.subr.mxu0 0.0
        %3853 = vmatpush1.msra.mxu0 0.0
        %3854 = vmatprep.subr.mxu0 0.0
        %3855 = vmatpush1.msra.mxu0 0.0
        %3856 = vmatprep.subr.mxu0 0.0
        %3857 = vmatpush1.msra.mxu0 0.0
        %3858 = vmatprep.subr.mxu0 0.0
        %3859 = vmatpush1.msra.mxu0 0.0
        %3860 = vmatprep.subr.mxu0 0.0
        %3861 = vmatpush1.msra.mxu0 0.0
        %3862 = vmatprep.subr.mxu0 0.0
        %3863 = vmatpush1.msra.mxu0 0.0
        %3864 = vmatprep.subr.mxu0 0.0
        %3865 = vmatpush1.msra.mxu0 0.0
        %3866 = vmatprep.subr.mxu0 0.0
        %3867 = vmatpush1.msra.mxu0 0.0
        %3868 = vmatprep.subr.mxu0 0.0
        %3869 = vmatpush1.msra.mxu0 0.0
        %3870 = vmatprep.subr.mxu0 0.0
        %3871 = vmatpush1.msra.mxu0 0.0
        %3872 = vmatprep.mubr.f32.mxu0 0.0
        %3873 = vmatmul.mubr.f32.gmra.mrb[0].mxu0 %v3807
        %v3874 = vpop.f32.mrb[0].mxu0
        %v3875 = vadd.f32 0.0, %v3874
        %v3876 = vpop.f32.mrb[0].mxu0
        %3877 = vdwg.mxu0
        %v3878 = vmul.f32 %v3875, 0.0078125
        %v3879 = vmul.f32 %v3878, %v3878
        %3881 = vrot.lane.b32.xlu0 %v3879, 16
        %v3882 = vpop.permute.xlu0 %3881
        %v3884 = vsub.f32 %v3878, %v3882
        %v3885 = vmax.f32 %v3884, 0.0
        %v3886 = vadd.f32 %v3885, 1e-05
        %v3887 = vrsqrt.pop %v3886
        %v3888 = vsel %vm1145, %v3878, %v3887
        %v3890 = vsel %vm723, %v3888, 0
        %3892 = vmatprep.subr.mxu0 %v1148
        %3893 = vmatpush1.msra.mxu0 %v1147
        %3894 = vmatprep.subr.mxu0 %v1150
        %3895 = vmatpush1.msra.mxu0 %v1149
        %3896 = vmatprep.subr.mxu0 %v1152
        %3897 = vmatpush1.msra.mxu0 %v1151
        %3898 = vmatprep.subr.mxu0 %v1154
        %3899 = vmatpush1.msra.mxu0 %v1153
        %3900 = vmatprep.subr.mxu0 0.0
        %3901 = vmatpush1.msra.mxu0 0.0
        %3902 = vmatprep.subr.mxu0 0.0
        %3903 = vmatpush1.msra.mxu0 0.0
        %3904 = vmatprep.subr.mxu0 0.0
        %3905 = vmatpush1.msra.mxu0 0.0
        %3906 = vmatprep.subr.mxu0 0.0
        %3907 = vmatpush1.msra.mxu0 0.0
        %3908 = vmatprep.subr.mxu0 0.0
        %3909 = vmatpush1.msra.mxu0 0.0
        %3910 = vmatprep.subr.mxu0 0.0
        %3911 = vmatpush1.msra.mxu0 0.0
        %3912 = vmatprep.subr.mxu0 0.0
        %3913 = vmatpush1.msra.mxu0 0.0
        %3914 = vmatprep.subr.mxu0 0.0
        %3915 = vmatpush1.msra.mxu0 0.0
        %3916 = vmatprep.subr.mxu0 0.0
        %3917 = vmatpush1.msra.mxu0 0.0
        %3918 = vmatprep.subr.mxu0 0.0
        %3919 = vmatpush1.msra.mxu0 0.0
        %3920 = vmatprep.subr.mxu0 0.0
        %3921 = vmatpush1.msra.mxu0 0.0
        %3922 = vmatprep.subr.mxu0 0.0
        %3923 = vmatpush1.msra.mxu0 0.0
        %3924 = vmatprep.subr.mxu0 0.0
        %3925 = vmatpush1.msra.mxu0 0.0
        %3926 = vmatprep.subr.mxu0 0.0
        %3927 = vmatpush1.msra.mxu0 0.0
        %3928 = vmatprep.subr.mxu0 0.0
        %3929 = vmatpush1.msra.mxu0 0.0
        %3930 = vmatprep.subr.mxu0 0.0
        %3931 = vmatpush1.msra.mxu0 0.0
        %3932 = vmatprep.subr.mxu0 0.0
        %3933 = vmatpush1.msra.mxu0 0.0
        %3934 = vmatprep.subr.mxu0 0.0
        %3935 = vmatpush1.msra.mxu0 0.0
        %3936 = vmatprep.subr.mxu0 0.0
        %3937 = vmatpush1.msra.mxu0 0.0
        %3938 = vmatprep.subr.mxu0 0.0
        %3939 = vmatpush1.msra.mxu0 0.0
        %3940 = vmatprep.subr.mxu0 0.0
        %3941 = vmatpush1.msra.mxu0 0.0
        %3942 = vmatprep.subr.mxu0 0.0
        %3943 = vmatpush1.msra.mxu0 0.0
        %3944 = vmatprep.subr.mxu0 0.0
        %3945 = vmatpush1.msra.mxu0 0.0
        %3946 = vmatprep.subr.mxu0 0.0
        %3947 = vmatpush1.msra.mxu0 0.0
        %3948 = vmatprep.subr.mxu0 0.0
        %3949 = vmatpush1.msra.mxu0 0.0
        %3950 = vmatprep.subr.mxu0 0.0
        %3951 = vmatpush1.msra.mxu0 0.0
        %3952 = vmatprep.subr.mxu0 0.0
        %3953 = vmatpush1.msra.mxu0 0.0
        %3954 = vmatprep.subr.mxu0 0.0
        %3955 = vmatpush1.msra.mxu0 0.0
        %3956 = vmatprep.mubr.f32.mxu0 0.0
        %3957 = vmatmul.mubr.f32.gmra.mrb[0].mxu0 %v3890
        %v3958 = vpop.f32.mrb[0].mxu0
        %v3959 = vadd.f32 0.0, %v3958
        %v3960 = vpop.f32.mrb[0].mxu0
        %v3961 = vadd.f32 0.0, %v3960
        %3962 = vdwg.mxu0
        %v3964 = vcombine.high %v3959, %v3959
        %v3966 = vunpack.c.l.s4 1966171168
        %v3967 = vunpack.c.0.s8 %v3966
        %v3968 = vlaneseq
        %v3969 = vshrl.u32 %v3968, 7
        %v3970 = vsub.s32 %v3967, %v3969
        %v3971 = vrot.slane %v3959, %v3970
        %v3973 = vunpack.c.l.s4 1966171168
        %v3974 = vunpack.c.0.s8 %v3973
        %v3975 = vlaneseq
        %v3976 = vshrl.u32 %v3975, 7
        %v3977 = vsub.s32 %v3974, %v3976
        %v3978 = vrot.slane %v3964, %v3977
        %v3979 = vcombine.high %v3971, %v3971
        %v3980 = vcombine.high %v3978, %v3978
        %v3982 = vunpack.c.l.s4 1966171168
        %v3983 = vunpack.c.0.s8 %v3982
        %v3984 = vlaneseq
        %v3985 = vshrl.u32 %v3984, 7
        %v3986 = vsub.s32 %v3983, %v3985
        %v3987 = vrot.slane %v3971, %v3986
        %v3989 = vunpack.c.l.s4 1966171168
        %v3990 = vunpack.c.0.s8 %v3989
        %v3991 = vlaneseq
        %v3992 = vshrl.u32 %v3991, 7
        %v3993 = vsub.s32 %v3990, %v3992
        %v3994 = vrot.slane %v3978, %v3993
        %v3996 = vunpack.c.l.s4 1966171168
        %v3997 = vunpack.c.0.s8 %v3996
        %v3998 = vlaneseq
        %v3999 = vshrl.u32 %v3998, 7
        %v4000 = vsub.s32 %v3997, %v3999
        %v4001 = vrot.slane %v3979, %v4000
        %v4003 = vunpack.c.l.s4 1966171168
        %v4004 = vunpack.c.0.s8 %v4003
        %v4005 = vlaneseq
        %v4006 = vshrl.u32 %v4005, 7
        %v4007 = vsub.s32 %v4004, %v4006
        %v4008 = vrot.slane %v3980, %v4007
        %v4009 = vcombine.high %v3987, %v3987
        %v4010 = vcombine.high %v3994, %v3994
        %v4011 = vcombine.high %v4001, %v4001
        %v4012 = vcombine.high %v4008, %v4008
        %v4013 = vlaneseq
        %v4014 = vshrl.u32 %v4013, 7
        %v4015 = vsub.s32 0, %v4014
        %v4016 = vrot.slane %v3987, %v4015
        %v4017 = vlaneseq
        %v4018 = vshrl.u32 %v4017, 7
        %v4019 = vsub.s32 0, %v4018
        %v4020 = vrot.slane %v4001, %v4019
        %v4021 = vlaneseq
        %v4022 = vshrl.u32 %v4021, 7
        %v4023 = vsub.s32 0, %v4022
        %v4024 = vrot.slane %v4009, %v4023
        %v4025 = vlaneseq
        %v4026 = vshrl.u32 %v4025, 7
        %v4027 = vsub.s32 0, %v4026
        %v4028 = vrot.slane %v4011, %v4027
        %v4029 = vlaneseq
        %v4030 = vshrl.u32 %v4029, 7
        %v4031 = vsub.s32 0, %v4030
        %v4032 = vrot.slane %v3994, %v4031
        %v4033 = vlaneseq
        %v4034 = vshrl.u32 %v4033, 7
        %v4035 = vsub.s32 0, %v4034
        %v4036 = vrot.slane %v4008, %v4035
        %v4037 = vlaneseq
        %v4038 = vshrl.u32 %v4037, 7
        %v4039 = vsub.s32 0, %v4038
        %v4040 = vrot.slane %v4010, %v4039
        %v4041 = vlaneseq
        %v4042 = vshrl.u32 %v4041, 7
        %v4043 = vsub.s32 0, %v4042
        %v4044 = vrot.slane %v4012, %v4043
        %v4054 = vcombine.high %v3961, %v3961
        %v4056 = vunpack.c.l.s4 1966171168
        %v4057 = vunpack.c.0.s8 %v4056
        %v4058 = vlaneseq
        %v4059 = vshrl.u32 %v4058, 7
        %v4060 = vsub.s32 %v4057, %v4059
        %v4061 = vrot.slane %v3961, %v4060
        %v4063 = vunpack.c.l.s4 1966171168
        %v4064 = vunpack.c.0.s8 %v4063
        %v4065 = vlaneseq
        %v4066 = vshrl.u32 %v4065, 7
        %v4067 = vsub.s32 %v4064, %v4066
        %v4068 = vrot.slane %v4054, %v4067
        %v4069 = vcombine.high %v4061, %v4061
        %v4070 = vcombine.high %v4068, %v4068
        %v4072 = vunpack.c.l.s4 1966171168
        %v4073 = vunpack.c.0.s8 %v4072
        %v4074 = vlaneseq
        %v4075 = vshrl.u32 %v4074, 7
        %v4076 = vsub.s32 %v4073, %v4075
        %v4077 = vrot.slane %v4061, %v4076
        %v4079 = vunpack.c.l.s4 1966171168
        %v4080 = vunpack.c.0.s8 %v4079
        %v4081 = vlaneseq
        %v4082 = vshrl.u32 %v4081, 7
        %v4083 = vsub.s32 %v4080, %v4082
        %v4084 = vrot.slane %v4068, %v4083
        %v4086 = vunpack.c.l.s4 1966171168
        %v4087 = vunpack.c.0.s8 %v4086
        %v4088 = vlaneseq
        %v4089 = vshrl.u32 %v4088, 7
        %v4090 = vsub.s32 %v4087, %v4089
        %v4091 = vrot.slane %v4069, %v4090
        %v4093 = vunpack.c.l.s4 1966171168
        %v4094 = vunpack.c.0.s8 %v4093
        %v4095 = vlaneseq
        %v4096 = vshrl.u32 %v4095, 7
        %v4097 = vsub.s32 %v4094, %v4096
        %v4098 = vrot.slane %v4070, %v4097
        %v4099 = vcombine.high %v4077, %v4077
        %v4100 = vcombine.high %v4084, %v4084
        %v4101 = vcombine.high %v4091, %v4091
        %v4102 = vcombine.high %v4098, %v4098
        %v4103 = vlaneseq
        %v4104 = vshrl.u32 %v4103, 7
        %v4105 = vsub.s32 0, %v4104
        %v4106 = vrot.slane %v4077, %v4105
        %v4107 = vlaneseq
        %v4108 = vshrl.u32 %v4107, 7
        %v4109 = vsub.s32 0, %v4108
        %v4110 = vrot.slane %v4091, %v4109
        %v4111 = vlaneseq
        %v4112 = vshrl.u32 %v4111, 7
        %v4113 = vsub.s32 0, %v4112
        %v4114 = vrot.slane %v4099, %v4113
        %v4115 = vlaneseq
        %v4116 = vshrl.u32 %v4115, 7
        %v4117 = vsub.s32 0, %v4116
        %v4118 = vrot.slane %v4101, %v4117
        %v4119 = vlaneseq
        %v4120 = vshrl.u32 %v4119, 7
        %v4121 = vsub.s32 0, %v4120
        %v4122 = vrot.slane %v4084, %v4121
        %v4123 = vlaneseq
        %v4124 = vshrl.u32 %v4123, 7
        %v4125 = vsub.s32 0, %v4124
        %v4126 = vrot.slane %v4098, %v4125
        %v4127 = vlaneseq
        %v4128 = vshrl.u32 %v4127, 7
        %v4129 = vsub.s32 0, %v4128
        %v4130 = vrot.slane %v4100, %v4129
        %v4131 = vlaneseq
        %v4132 = vshrl.u32 %v4131, 7
        %v4133 = vsub.s32 0, %v4132
        %v4134 = vrot.slane %v4102, %v4133
        %v4143 = vsub.f32 %v3628, %v4016
        %v4144 = vsub.f32 %v3629, %v4016
        %v4145 = vsub.f32 %v3630, %v4020
        %v4146 = vsub.f32 %v3631, %v4020
        %v4147 = vsub.f32 %v3632, %v4024
        %v4148 = vsub.f32 %v3633, %v4024
        %v4149 = vsub.f32 %v3634, %v4028
        %v4150 = vsub.f32 %v3635, %v4028
        %v4151 = vsub.f32 %v3636, %v4032
        %v4152 = vsub.f32 %v3637, %v4032
        %v4153 = vsub.f32 %v3638, %v4036
        %v4154 = vsub.f32 %v3639, %v4036
        %v4155 = vsub.f32 %v3640, %v4040
        %v4156 = vsub.f32 %v3641, %v4040
        %v4157 = vsub.f32 %v3642, %v4044
        %v4158 = vsub.f32 %v3643, %v4044
        %v4159 = vmul.f32 %v4143, %v4106
        %v4160 = vmul.f32 %v4144, %v4106
        %v4161 = vmul.f32 %v4145, %v4110
        %v4162 = vmul.f32 %v4146, %v4110
        %v4163 = vmul.f32 %v4147, %v4114
        %v4164 = vmul.f32 %v4148, %v4114
        %v4165 = vmul.f32 %v4149, %v4118
        %v4166 = vmul.f32 %v4150, %v4118
        %v4167 = vmul.f32 %v4151, %v4122
        %v4168 = vmul.f32 %v4152, %v4122
        %v4169 = vmul.f32 %v4153, %v4126
        %v4170 = vmul.f32 %v4154, %v4126
        %v4171 = vmul.f32 %v4155, %v4130
        %v4172 = vmul.f32 %v4156, %v4130
        %v4173 = vmul.f32 %v4157, %v4134
        %v4174 = vmul.f32 %v4158, %v4134
        %v4175 = vlaneseq
        %v4176 = vshrl.u32 %v4175, 7
        %v4177 = vsub.s32 0, %v4176
        %v4178 = vrot.slane %v3644, %v4177
        %v4179 = vmul.f32 %v4159, %v4178
        %v4180 = vmul.f32 %v4160, %v4178
        %v4181 = vmul.f32 %v4161, %v4178
        %v4182 = vmul.f32 %v4162, %v4178
        %v4183 = vmul.f32 %v4163, %v4178
        %v4184 = vmul.f32 %v4164, %v4178
        %v4185 = vmul.f32 %v4165, %v4178
        %v4186 = vmul.f32 %v4166, %v4178
        %v4187 = vmul.f32 %v4167, %v4178
        %v4188 = vmul.f32 %v4168, %v4178
        %v4189 = vmul.f32 %v4169, %v4178
        %v4190 = vmul.f32 %v4170, %v4178
        %v4191 = vmul.f32 %v4171, %v4178
        %v4192 = vmul.f32 %v4172, %v4178
        %v4193 = vmul.f32 %v4173, %v4178
        %v4194 = vmul.f32 %v4174, %v4178
        %v4195 = vlaneseq
        %v4196 = vshrl.u32 %v4195, 7
        %v4197 = vsub.s32 0, %v4196
        %v4198 = vrot.slane %v3645, %v4197
        %v4199 = vadd.f32 %v4179, %v4198
        %v4200 = vadd.f32 %v4180, %v4198
        %v4201 = vadd.f32 %v4181, %v4198
        %v4202 = vadd.f32 %v4182, %v4198
        %v4203 = vadd.f32 %v4183, %v4198
        %v4204 = vadd.f32 %v4184, %v4198
        %v4205 = vadd.f32 %v4185, %v4198
        %v4206 = vadd.f32 %v4186, %v4198
        %v4207 = vadd.f32 %v4187, %v4198
        %v4208 = vadd.f32 %v4188, %v4198
        %v4209 = vadd.f32 %v4189, %v4198
        %v4210 = vadd.f32 %v4190, %v4198
        %v4211 = vadd.f32 %v4191, %v4198
        %v4212 = vadd.f32 %v4192, %v4198
        %v4213 = vadd.f32 %v4193, %v4198
        %v4214 = vadd.f32 %v4194, %v4198
        %v4215 = vmul.f32 %v4199, 0.5
        %v4216 = vmul.f32 %v4200, 0.5
        %v4217 = vmul.f32 %v4201, 0.5
        %v4218 = vmul.f32 %v4202, 0.5
        %v4219 = vmul.f32 %v4203, 0.5
        %v4220 = vmul.f32 %v4204, 0.5
        %v4221 = vmul.f32 %v4205, 0.5
        %v4222 = vmul.f32 %v4206, 0.5
        %v4223 = vmul.f32 %v4207, 0.5
        %v4224 = vmul.f32 %v4208, 0.5
        %v4225 = vmul.f32 %v4209, 0.5
        %v4226 = vmul.f32 %v4210, 0.5
        %v4227 = vmul.f32 %v4211, 0.5
        %v4228 = vmul.f32 %v4212, 0.5
        %v4229 = vmul.f32 %v4213, 0.5
        %v4230 = vmul.f32 %v4214, 0.5
        %v4231 = vmul.f32 %v4199, 0.70710677
        %v4232 = vmul.f32 %v4200, 0.70710677
        %v4233 = vmul.f32 %v4201, 0.70710677
        %v4234 = vmul.f32 %v4202, 0.70710677
        %v4235 = vmul.f32 %v4203, 0.70710677
        %v4236 = vmul.f32 %v4204, 0.70710677
        %v4237 = vmul.f32 %v4205, 0.70710677
        %v4238 = vmul.f32 %v4206, 0.70710677
        %v4239 = vmul.f32 %v4207, 0.70710677
        %v4240 = vmul.f32 %v4208, 0.70710677
        %v4241 = vmul.f32 %v4209, 0.70710677
        %v4242 = vmul.f32 %v4210, 0.70710677
        %v4243 = vmul.f32 %v4211, 0.70710677
        %v4244 = vmul.f32 %v4212, 0.70710677
        %v4245 = vmul.f32 %v4213, 0.70710677
        %v4246 = vmul.f32 %v4214, 0.70710677
        %v4247 = verf.f32.pop %v4231
        %v4248 = verf.f32.pop %v4232
        %v4249 = verf.f32.pop %v4233
        %v4250 = verf.f32.pop %v4234
        %v4251 = verf.f32.pop %v4235
        %v4252 = verf.f32.pop %v4236
        %v4253 = verf.f32.pop %v4237
        %v4254 = verf.f32.pop %v4238
        %v4255 = verf.f32.pop %v4239
        %v4256 = verf.f32.pop %v4240
        %v4257 = verf.f32.pop %v4241
        %v4258 = verf.f32.pop %v4242
        %v4259 = verf.f32.pop %v4243
        %v4260 = verf.f32.pop %v4244
        %v4261 = verf.f32.pop %v4245
        %v4262 = verf.f32.pop %v4246
        %v4263 = vadd.f32 %v4247, 1.0
        %v4264 = vadd.f32 %v4248, 1.0
        %v4265 = vadd.f32 %v4249, 1.0
        %v4266 = vadd.f32 %v4250, 1.0
        %v4267 = vadd.f32 %v4251, 1.0
        %v4268 = vadd.f32 %v4252, 1.0
        %v4269 = vadd.f32 %v4253, 1.0
        %v4270 = vadd.f32 %v4254, 1.0
        %v4271 = vadd.f32 %v4255, 1.0
        %v4272 = vadd.f32 %v4256, 1.0
        %v4273 = vadd.f32 %v4257, 1.0
        %v4274 = vadd.f32 %v4258, 1.0
        %v4275 = vadd.f32 %v4259, 1.0
        %v4276 = vadd.f32 %v4260, 1.0
        %v4277 = vadd.f32 %v4261, 1.0
        %v4278 = vadd.f32 %v4262, 1.0
        %v4279 = vmul.f32 %v4215, %v4263
        %v4280 = vmul.f32 %v4216, %v4264
        %v4281 = vmul.f32 %v4217, %v4265
        %v4282 = vmul.f32 %v4218, %v4266
        %v4283 = vmul.f32 %v4219, %v4267
        %v4284 = vmul.f32 %v4220, %v4268
        %v4285 = vmul.f32 %v4221, %v4269
        %v4286 = vmul.f32 %v4222, %v4270
        %v4287 = vmul.f32 %v4223, %v4271
        %v4288 = vmul.f32 %v4224, %v4272
        %v4289 = vmul.f32 %v4225, %v4273
        %v4290 = vmul.f32 %v4226, %v4274
        %v4291 = vmul.f32 %v4227, %v4275
        %v4292 = vmul.f32 %v4228, %v4276
        %v4293 = vmul.f32 %v4229, %v4277
        %v4294 = vmul.f32 %v4230, %v4278
        %v4295 = vpack.c.bf16 %v4280, %v4279
        %v4296 = vpack.c.bf16 %v4282, %v4281
        %v4297 = vpack.c.bf16 %v4284, %v4283
        %v4298 = vpack.c.bf16 %v4286, %v4285
        %v4299 = vpack.c.bf16 %v4288, %v4287
        %v4300 = vpack.c.bf16 %v4290, %v4289
        %v4301 = vpack.c.bf16 %v4292, %v4291
        %v4302 = vpack.c.bf16 %v4294, %v4293
        %v4303 = vpack.c.bf16 %v3629, %v3628
        %v4304 = vpack.c.bf16 %v3631, %v3630
        %v4305 = vpack.c.bf16 %v3633, %v3632
        %v4306 = vpack.c.bf16 %v3635, %v3634
        %v4307 = vpack.c.bf16 %v3637, %v3636
        %v4308 = vpack.c.bf16 %v3639, %v3638
        %v4309 = vpack.c.bf16 %v3641, %v3640
        %v4310 = vpack.c.bf16 %v3643, %v3642
        %v4311 = vld [vmem:[%s5] sm:$0xff]
        %v4312 = vld [vmem:[%s5 + $0x8] sm:$0xff]
        %v4313 = vld [vmem:[%s5 + $0x10] sm:$0xff]
        %v4314 = vld [vmem:[%s5 + $0x18] sm:$0xff]
        %v4315 = vld [vmem:[%s5 + $0x20] sm:$0xff]
        %v4316 = vld [vmem:[%s5 + $0x28] sm:$0xff]
        %v4317 = vld [vmem:[%s5 + $0x30] sm:$0xff]
        %v4318 = vld [vmem:[%s5 + $0x38] sm:$0xff]
        %v4319 = vld [vmem:[%s5 + $0x40] sm:$0xff]
        %v4320 = vld [vmem:[%s5 + $0x48] sm:$0xff]
        %v4321 = vld [vmem:[%s5 + $0x50] sm:$0xff]
        %v4322 = vld [vmem:[%s5 + $0x58] sm:$0xff]
        %v4323 = vld [vmem:[%s5 + $0x60] sm:$0xff]
        %v4324 = vld [vmem:[%s5 + $0x68] sm:$0xff]
        %v4325 = vld [vmem:[%s5 + $0x70] sm:$0xff]
        %v4326 = vld [vmem:[%s5 + $0x78] sm:$0xff]
        %v4327 = vld [vmem:[%s5 + $0x80] sm:$0xff]
        %v4328 = vld [vmem:[%s5 + $0x88] sm:$0xff]
        %v4329 = vld [vmem:[%s5 + $0x90] sm:$0xff]
        %v4330 = vld [vmem:[%s5 + $0x98] sm:$0xff]
        %v4331 = vld [vmem:[%s5 + $0xa0] sm:$0xff]
        %v4332 = vld [vmem:[%s5 + $0xa8] sm:$0xff]
        %v4333 = vld [vmem:[%s5 + $0xb0] sm:$0xff]
        %v4334 = vld [vmem:[%s5 + $0xb8] sm:$0xff]
        %v4335 = vld [vmem:[%s5 + $0xc0] sm:$0xff]
        %v4336 = vld [vmem:[%s5 + $0xc8] sm:$0xff]
        %v4337 = vld [vmem:[%s5 + $0xd0] sm:$0xff]
        %v4338 = vld [vmem:[%s5 + $0xd8] sm:$0xff]
        %v4339 = vld [vmem:[%s5 + $0xe0] sm:$0xff]
        %v4340 = vld [vmem:[%s5 + $0xe8] sm:$0xff]
        %v4341 = vld [vmem:[%s5 + $0xf0] sm:$0xff]
        %v4342 = vld [vmem:[%s5 + $0xf8] sm:$0xff]
        %v4375 = vunpack.c.l.b16 %v4311
        %v4376 = vunpack.c.h.b16 %v4311
        %v4377 = vunpack.c.l.b16 %v4312
        %v4378 = vunpack.c.h.b16 %v4312
        %v4379 = vunpack.c.l.b16 %v4313
        %v4380 = vunpack.c.h.b16 %v4313
        %v4381 = vunpack.c.l.b16 %v4314
        %v4382 = vunpack.c.h.b16 %v4314
        %v4383 = vunpack.c.l.b16 %v4315
        %v4384 = vunpack.c.h.b16 %v4315
        %v4385 = vunpack.c.l.b16 %v4316
        %v4386 = vunpack.c.h.b16 %v4316
        %v4387 = vunpack.c.l.b16 %v4317
        %v4388 = vunpack.c.h.b16 %v4317
        %v4389 = vunpack.c.l.b16 %v4318
        %v4390 = vunpack.c.h.b16 %v4318
        %v4391 = vunpack.c.l.b16 %v4319
        %v4392 = vunpack.c.h.b16 %v4319
        %v4393 = vunpack.c.l.b16 %v4320
        %v4394 = vunpack.c.h.b16 %v4320
        %v4395 = vunpack.c.l.b16 %v4321
        %v4396 = vunpack.c.h.b16 %v4321
        %v4397 = vunpack.c.l.b16 %v4322
        %v4398 = vunpack.c.h.b16 %v4322
        %v4399 = vunpack.c.l.b16 %v4323
        %v4400 = vunpack.c.h.b16 %v4323
        %v4401 = vunpack.c.l.b16 %v4324
        %v4402 = vunpack.c.h.b16 %v4324
        %v4403 = vunpack.c.l.b16 %v4325
        %v4404 = vunpack.c.h.b16 %v4325
        %v4405 = vunpack.c.l.b16 %v4326
        %v4406 = vunpack.c.h.b16 %v4326
        %v4407 = vunpack.c.l.b16 %v4327
        %v4408 = vunpack.c.h.b16 %v4327
        %v4409 = vunpack.c.l.b16 %v4328
        %v4410 = vunpack.c.h.b16 %v4328
        %v4411 = vunpack.c.l.b16 %v4329
        %v4412 = vunpack.c.h.b16 %v4329
        %v4413 = vunpack.c.l.b16 %v4330
        %v4414 = vunpack.c.h.b16 %v4330
        %v4415 = vunpack.c.l.b16 %v4331
        %v4416 = vunpack.c.h.b16 %v4331
        %v4417 = vunpack.c.l.b16 %v4332
        %v4418 = vunpack.c.h.b16 %v4332
        %v4419 = vunpack.c.l.b16 %v4333
        %v4420 = vunpack.c.h.b16 %v4333
        %v4421 = vunpack.c.l.b16 %v4334
        %v4422 = vunpack.c.h.b16 %v4334
        %v4423 = vunpack.c.l.b16 %v4335
        %v4424 = vunpack.c.h.b16 %v4335
        %v4425 = vunpack.c.l.b16 %v4336
        %v4426 = vunpack.c.h.b16 %v4336
        %v4427 = vunpack.c.l.b16 %v4337
        %v4428 = vunpack.c.h.b16 %v4337
        %v4429 = vunpack.c.l.b16 %v4338
        %v4430 = vunpack.c.h.b16 %v4338
        %v4431 = vunpack.c.l.b16 %v4339
        %v4432 = vunpack.c.h.b16 %v4339
        %v4433 = vunpack.c.l.b16 %v4340
        %v4434 = vunpack.c.h.b16 %v4340
        %v4435 = vunpack.c.l.b16 %v4341
        %v4436 = vunpack.c.h.b16 %v4341
        %v4437 = vunpack.c.l.b16 %v4342
        %v4438 = vunpack.c.h.b16 %v4342
        %v4439 = vpack.c.b16 %v4377, %v4375
        %v4440 = vpack.c.b16 %v4378, %v4376
        %v4441 = vpack.c.b16 %v4381, %v4379
        %v4442 = vpack.c.b16 %v4382, %v4380
        %v4443 = vpack.c.b16 %v4385, %v4383
        %v4444 = vpack.c.b16 %v4386, %v4384
        %v4445 = vpack.c.b16 %v4389, %v4387
        %v4446 = vpack.c.b16 %v4390, %v4388
        %v4447 = vpack.c.b16 %v4393, %v4391
        %v4448 = vpack.c.b16 %v4394, %v4392
        %v4449 = vpack.c.b16 %v4397, %v4395
        %v4450 = vpack.c.b16 %v4398, %v4396
        %v4451 = vpack.c.b16 %v4401, %v4399
        %v4452 = vpack.c.b16 %v4402, %v4400
        %v4453 = vpack.c.b16 %v4405, %v4403
        %v4454 = vpack.c.b16 %v4406, %v4404
        %v4455 = vpack.c.b16 %v4409, %v4407
        %v4456 = vpack.c.b16 %v4410, %v4408
        %v4457 = vpack.c.b16 %v4413, %v4411
        %v4458 = vpack.c.b16 %v4414, %v4412
        %v4459 = vpack.c.b16 %v4417, %v4415
        %v4460 = vpack.c.b16 %v4418, %v4416
        %v4461 = vpack.c.b16 %v4421, %v4419
        %v4462 = vpack.c.b16 %v4422, %v4420
        %v4463 = vpack.c.b16 %v4425, %v4423
        %v4464 = vpack.c.b16 %v4426, %v4424
        %v4465 = vpack.c.b16 %v4429, %v4427
        %v4466 = vpack.c.b16 %v4430, %v4428
        %v4467 = vpack.c.b16 %v4433, %v4431
        %v4468 = vpack.c.b16 %v4434, %v4432
        %v4469 = vpack.c.b16 %v4437, %v4435
        %v4470 = vpack.c.b16 %v4438, %v4436
        %4503 = vmatprep.subr.bf16.mxu0 %v4440
        %4504 = vmatpush1.bf16.msra.mxu0 %v4439
        %4505 = vmatprep.subr.bf16.mxu0 %v4442
        %4506 = vmatpush1.bf16.msra.mxu0 %v4441
        %4507 = vmatprep.subr.bf16.mxu0 %v4444
        %4508 = vmatpush1.bf16.msra.mxu0 %v4443
        %4509 = vmatprep.subr.bf16.mxu0 %v4446
        %4510 = vmatpush1.bf16.msra.mxu0 %v4445
        %4511 = vmatprep.subr.bf16.mxu0 %v4448
        %4512 = vmatpush1.bf16.msra.mxu0 %v4447
        %4513 = vmatprep.subr.bf16.mxu0 %v4450
        %4514 = vmatpush1.bf16.msra.mxu0 %v4449
        %4515 = vmatprep.subr.bf16.mxu0 %v4452
        %4516 = vmatpush1.bf16.msra.mxu0 %v4451
        %4517 = vmatprep.subr.bf16.mxu0 %v4454
        %4518 = vmatpush1.bf16.msra.mxu0 %v4453
        %4519 = vmatprep.subr.bf16.mxu0 %v4456
        %4520 = vmatpush1.bf16.msra.mxu0 %v4455
        %4521 = vmatprep.subr.bf16.mxu0 %v4458
        %4522 = vmatpush1.bf16.msra.mxu0 %v4457
        %4523 = vmatprep.subr.bf16.mxu0 %v4460
        %4524 = vmatpush1.bf16.msra.mxu0 %v4459
        %4525 = vmatprep.subr.bf16.mxu0 %v4462
        %4526 = vmatpush1.bf16.msra.mxu0 %v4461
        %4527 = vmatprep.subr.bf16.mxu0 %v4464
        %4528 = vmatpush1.bf16.msra.mxu0 %v4463
        %4529 = vmatprep.subr.bf16.mxu0 %v4466
        %4530 = vmatpush1.bf16.msra.mxu0 %v4465
        %4531 = vmatprep.subr.bf16.mxu0 %v4468
        %4532 = vmatpush1.bf16.msra.mxu0 %v4467
        %4533 = vmatprep.subr.bf16.mxu0 %v4470
        %4534 = vmatpush1.bf16.msra.mxu0 %v4469
        %4535 = vmatprep.mubr.bf16.mxu0 %v4303
        %4536 = vmatmul.mubr.bf16.gmra.mrb[0].mxu0 %v4295
        %v4537 = vpop.f32.mrb[0].mxu0
        %v4538 = vadd.f32 0.0, %v4537
        %v4539 = vpop.f32.mrb[0].mxu0
        %v4540 = vadd.f32 0.0, %v4539
        %v4541 = vpop.f32.mrb[0].mxu0
        %v4542 = vadd.f32 0.0, %v4541
        %v4543 = vpop.f32.mrb[0].mxu0
        %v4544 = vadd.f32 0.0, %v4543
        %4545 = vmatprep.mubr.bf16.mxu0 %v4304
        %4546 = vmatmul.mubr.bf16.gmra.mrb[0].mxu0 %v4296
        %v4547 = vpop.f32.mrb[0].mxu0
        %v4548 = vadd.f32 0.0, %v4547
        %v4549 = vpop.f32.mrb[0].mxu0
        %v4550 = vadd.f32 0.0, %v4549
        %v4551 = vpop.f32.mrb[0].mxu0
        %v4552 = vadd.f32 0.0, %v4551
        %v4553 = vpop.f32.mrb[0].mxu0
        %v4554 = vadd.f32 0.0, %v4553
        %4555 = vmatprep.mubr.bf16.mxu0 %v4305
        %4556 = vmatmul.mubr.bf16.gmra.mrb[0].mxu0 %v4297
        %v4557 = vpop.f32.mrb[0].mxu0
        %v4558 = vadd.f32 0.0, %v4557
        %v4559 = vpop.f32.mrb[0].mxu0
        %v4560 = vadd.f32 0.0, %v4559
        %v4561 = vpop.f32.mrb[0].mxu0
        %v4562 = vadd.f32 0.0, %v4561
        %v4563 = vpop.f32.mrb[0].mxu0
        %v4564 = vadd.f32 0.0, %v4563
        %4565 = vmatprep.mubr.bf16.mxu0 %v4306
        %4566 = vmatmul.mubr.bf16.gmra.mrb[0].mxu0 %v4298
        %v4567 = vpop.f32.mrb[0].mxu0
        %v4568 = vadd.f32 0.0, %v4567
        %v4569 = vpop.f32.mrb[0].mxu0
        %v4570 = vadd.f32 0.0, %v4569
        %v4571 = vpop.f32.mrb[0].mxu0
        %v4572 = vadd.f32 0.0, %v4571
        %v4573 = vpop.f32.mrb[0].mxu0
        %v4574 = vadd.f32 0.0, %v4573
        %4575 = vmatprep.mubr.bf16.mxu0 %v4307
        %4576 = vmatmul.mubr.bf16.gmra.mrb[0].mxu0 %v4299
        %v4577 = vpop.f32.mrb[0].mxu0
        %v4578 = vadd.f32 0.0, %v4577
        %v4579 = vpop.f32.mrb[0].mxu0
        %v4580 = vadd.f32 0.0, %v4579
        %v4581 = vpop.f32.mrb[0].mxu0
        %v4582 = vadd.f32 0.0, %v4581
        %v4583 = vpop.f32.mrb[0].mxu0
        %v4584 = vadd.f32 0.0, %v4583
        %4585 = vmatprep.mubr.bf16.mxu0 %v4308
        %4586 = vmatmul.mubr.bf16.gmra.mrb[0].mxu0 %v4300
        %v4587 = vpop.f32.mrb[0].mxu0
        %v4588 = vadd.f32 0.0, %v4587
        %v4589 = vpop.f32.mrb[0].mxu0
        %v4590 = vadd.f32 0.0, %v4589
        %v4591 = vpop.f32.mrb[0].mxu0
        %v4592 = vadd.f32 0.0, %v4591
        %v4593 = vpop.f32.mrb[0].mxu0
        %v4594 = vadd.f32 0.0, %v4593
        %4595 = vmatprep.mubr.bf16.mxu0 %v4309
        %4596 = vmatmul.mubr.bf16.gmra.mrb[0].mxu0 %v4301
        %v4597 = vpop.f32.mrb[0].mxu0
        %v4598 = vadd.f32 0.0, %v4597
        %v4599 = vpop.f32.mrb[0].mxu0
        %v4600 = vadd.f32 0.0, %v4599
        %v4601 = vpop.f32.mrb[0].mxu0
        %v4602 = vadd.f32 0.0, %v4601
        %v4603 = vpop.f32.mrb[0].mxu0
        %v4604 = vadd.f32 0.0, %v4603
        %4605 = vmatprep.mubr.bf16.mxu0 %v4310
        %4606 = vmatmul.mubr.bf16.gmra.mrb[0].mxu0 %v4302
        %v4607 = vpop.f32.mrb[0].mxu0
        %v4608 = vadd.f32 0.0, %v4607
        %v4609 = vpop.f32.mrb[0].mxu0
        %v4610 = vadd.f32 0.0, %v4609
        %v4611 = vpop.f32.mrb[0].mxu0
        %v4612 = vadd.f32 0.0, %v4611
        %v4613 = vpop.f32.mrb[0].mxu0
        %v4614 = vadd.f32 0.0, %v4613
        %4615 = vdwg.mxu0
        %v4616 = vrot.slane %v4538, 7
        %v4617 = vrot.slane %v4542, 7
        %v4618 = vrot.slane %v4548, 7
        %v4619 = vrot.slane %v4552, 7
        %v4620 = vrot.slane %v4558, 7
        %v4621 = vrot.slane %v4562, 7
        %v4622 = vrot.slane %v4568, 7
        %v4623 = vrot.slane %v4572, 7
        %v4624 = vrot.slane %v4578, 7
        %v4625 = vrot.slane %v4582, 7
        %v4626 = vrot.slane %v4588, 7
        %v4627 = vrot.slane %v4592, 7
        %v4628 = vrot.slane %v4598, 7
        %v4629 = vrot.slane %v4602, 7
        %v4630 = vrot.slane %v4608, 7
        %v4631 = vrot.slane %v4612, 7
        %v4632 = vsel %vm1724, %v4630, %v4631
        %v4633 = vsel %vm1724, %v4629, %v4630
        %v4634 = vsel %vm1724, %v4628, %v4629
        %v4635 = vsel %vm1724, %v4627, %v4628
        %v4636 = vsel %vm1724, %v4626, %v4627
        %v4637 = vsel %vm1724, %v4625, %v4626
        %v4638 = vsel %vm1724, %v4624, %v4625
        %v4639 = vsel %vm1724, %v4623, %v4624
        %v4640 = vsel %vm1724, %v4622, %v4623
        %v4641 = vsel %vm1724, %v4621, %v4622
        %v4642 = vsel %vm1724, %v4620, %v4621
        %v4643 = vsel %vm1724, %v4619, %v4620
        %v4644 = vsel %vm1724, %v4618, %v4619
        %v4645 = vsel %vm1724, %v4617, %v4618
        %v4646 = vsel %vm1724, %v4616, %v4617
        %v4647 = vsel %vm1724, %v4631, %v4616
        %v4648 = vmul.f32 %v4647, %v3387
        %v4649 = vmul.f32 %v4646, %v3392
        %v4650 = vmul.f32 %v4645, %v3397
        %v4651 = vmul.f32 %v4644, %v3402
        %v4652 = vmul.f32 %v4643, %v3407
        %v4653 = vmul.f32 %v4642, %v3412
        %v4654 = vmul.f32 %v4641, %v3417
        %v4655 = vmul.f32 %v4640, %v3422
        %v4656 = vmul.f32 %v4639, %v3427
        %v4657 = vmul.f32 %v4638, %v3432
        %v4658 = vmul.f32 %v4637, %v3437
        %v4659 = vmul.f32 %v4636, %v3442
        %v4660 = vmul.f32 %v4635, %v3447
        %v4661 = vmul.f32 %v4634, %v3452
        %v4662 = vmul.f32 %v4633, %v3457
        %v4663 = vmul.f32 %v4632, %v3462
        %4680 = vrot.lane.b32.xlu0 %v4538, 64
        %v4681 = vpop.permute.xlu0 %4680
        %4682 = vrot.lane.b32.xlu0 %v4542, 64
        %v4683 = vpop.permute.xlu0 %4682
        %4684 = vrot.lane.b32.xlu0 %v4548, 64
        %v4685 = vpop.permute.xlu0 %4684
        %4686 = vrot.lane.b32.xlu0 %v4552, 64
        %v4687 = vpop.permute.xlu0 %4686
        %4688 = vrot.lane.b32.xlu0 %v4558, 64
        %v4689 = vpop.permute.xlu0 %4688
        %4690 = vrot.lane.b32.xlu0 %v4562, 64
        %v4691 = vpop.permute.xlu0 %4690
        %4692 = vrot.lane.b32.xlu0 %v4568, 64
        %v4693 = vpop.permute.xlu0 %4692
        %4694 = vrot.lane.b32.xlu0 %v4572, 64
        %v4695 = vpop.permute.xlu0 %4694
        %4696 = vrot.lane.b32.xlu0 %v4578, 64
        %v4697 = vpop.permute.xlu0 %4696
        %4698 = vrot.lane.b32.xlu0 %v4582, 64
        %v4699 = vpop.permute.xlu0 %4698
        %4700 = vrot.lane.b32.xlu0 %v4588, 64
        %v4701 = vpop.permute.xlu0 %4700
        %4702 = vrot.lane.b32.xlu0 %v4592, 64
        %v4703 = vpop.permute.xlu0 %4702
        %4704 = vrot.lane.b32.xlu0 %v4598, 64
        %v4705 = vpop.permute.xlu0 %4704
        %4706 = vrot.lane.b32.xlu0 %v4602, 64
        %v4707 = vpop.permute.xlu0 %4706
        %4708 = vrot.lane.b32.xlu0 %v4608, 64
        %v4709 = vpop.permute.xlu0 %4708
        %4710 = vrot.lane.b32.xlu0 %v4612, 64
        %v4711 = vpop.permute.xlu0 %4710
        %v4728 = vadd.f32 %v4648, %v4681
        %v4729 = vadd.f32 %v4649, %v4683
        %v4730 = vadd.f32 %v4650, %v4685
        %v4731 = vadd.f32 %v4651, %v4687
        %v4732 = vadd.f32 %v4652, %v4689
        %v4733 = vadd.f32 %v4653, %v4691
        %v4734 = vadd.f32 %v4654, %v4693
        %v4735 = vadd.f32 %v4655, %v4695
        %v4736 = vadd.f32 %v4656, %v4697
        %v4737 = vadd.f32 %v4657, %v4699
        %v4738 = vadd.f32 %v4658, %v4701
        %v4739 = vadd.f32 %v4659, %v4703
        %v4740 = vadd.f32 %v4660, %v4705
        %v4741 = vadd.f32 %v4661, %v4707
        %v4742 = vadd.f32 %v4662, %v4709
        %v4743 = vadd.f32 %v4663, %v4711
        %v4744 = vrot.slane %v4540, 1
        %v4745 = vrot.slane %v4544, 1
        %v4746 = vrot.slane %v4550, 1
        %v4747 = vrot.slane %v4554, 1
        %v4748 = vrot.slane %v4560, 1
        %v4749 = vrot.slane %v4564, 1
        %v4750 = vrot.slane %v4570, 1
        %v4751 = vrot.slane %v4574, 1
        %v4752 = vrot.slane %v4580, 1
        %v4753 = vrot.slane %v4584, 1
        %v4754 = vrot.slane %v4590, 1
        %v4755 = vrot.slane %v4594, 1
        %v4756 = vrot.slane %v4600, 1
        %v4757 = vrot.slane %v4604, 1
        %v4758 = vrot.slane %v4610, 1
        %v4759 = vrot.slane %v4614, 1
        %v4760 = vsel %vm1757, %v4758, %v4759
        %v4761 = vsel %vm1757, %v4757, %v4758
        %v4762 = vsel %vm1757, %v4756, %v4757
        %v4763 = vsel %vm1757, %v4755, %v4756
        %v4764 = vsel %vm1757, %v4754, %v4755
        %v4765 = vsel %vm1757, %v4753, %v4754
        %v4766 = vsel %vm1757, %v4752, %v4753
        %v4767 = vsel %vm1757, %v4751, %v4752
        %v4768 = vsel %vm1757, %v4750, %v4751
        %v4769 = vsel %vm1757, %v4749, %v4750
        %v4770 = vsel %vm1757, %v4748, %v4749
        %v4771 = vsel %vm1757, %v4747, %v4748
        %v4772 = vsel %vm1757, %v4746, %v4747
        %v4773 = vsel %vm1757, %v4745, %v4746
        %v4774 = vsel %vm1757, %v4744, %v4745
        %v4775 = vsel %vm1757, %v4759, %v4744
        %v4776 = vmul.f32 %v4774, %v3514
        %v4777 = vmul.f32 %v4773, %v3518
        %v4778 = vmul.f32 %v4772, %v3522
        %v4779 = vmul.f32 %v4771, %v3526
        %v4780 = vmul.f32 %v4770, %v3530
        %v4781 = vmul.f32 %v4769, %v3534
        %v4782 = vmul.f32 %v4768, %v3538
        %v4783 = vmul.f32 %v4767, %v3542
        %v4784 = vmul.f32 %v4766, %v3546
        %v4785 = vmul.f32 %v4765, %v3550
        %v4786 = vmul.f32 %v4764, %v3554
        %v4787 = vmul.f32 %v4763, %v3558
        %v4788 = vmul.f32 %v4762, %v3562
        %v4789 = vmul.f32 %v4761, %v3566
        %v4790 = vmul.f32 %v4760, %v3570
        %v4791 = vmul.f32 %v4775, %v3574
        %v4792 = vadd.f32 %v4728, %v4776
        %v4793 = vadd.f32 %v4729, %v4777
        %v4794 = vadd.f32 %v4730, %v4778
        %v4795 = vadd.f32 %v4731, %v4779
        %v4796 = vadd.f32 %v4732, %v4780
        %v4797 = vadd.f32 %v4733, %v4781
        %v4798 = vadd.f32 %v4734, %v4782
        %v4799 = vadd.f32 %v4735, %v4783
        %v4800 = vadd.f32 %v4736, %v4784
        %v4801 = vadd.f32 %v4737, %v4785
        %v4802 = vadd.f32 %v4738, %v4786
        %v4803 = vadd.f32 %v4739, %v4787
        %v4804 = vadd.f32 %v4740, %v4788
        %v4805 = vadd.f32 %v4741, %v4789
        %v4806 = vadd.f32 %v4742, %v4790
        %v4807 = vadd.f32 %v4743, %v4791
        %v4808 = vld [vmem:[#allocation5 + $0xe] sm:$0x1]
        %v4809 = vlaneseq
        %v4810 = vshrl.u32 %v4809, 7
        %v4811 = vsub.s32 0, %v4810
        %v4812 = vrot.slane %v4808, %v4811
        %v4813 = vadd.f32 %v4792, %v4812
        %v4814 = vadd.f32 %v4793, %v4812
        %v4815 = vadd.f32 %v4794, %v4812
        %v4816 = vadd.f32 %v4795, %v4812
        %v4817 = vadd.f32 %v4796, %v4812
        %v4818 = vadd.f32 %v4797, %v4812
        %v4819 = vadd.f32 %v4798, %v4812
        %v4820 = vadd.f32 %v4799, %v4812
        %v4821 = vadd.f32 %v4800, %v4812
        %v4822 = vadd.f32 %v4801, %v4812
        %v4823 = vadd.f32 %v4802, %v4812
        %v4824 = vadd.f32 %v4803, %v4812
        %v4825 = vadd.f32 %v4804, %v4812
        %v4826 = vadd.f32 %v4805, %v4812
        %v4827 = vadd.f32 %v4806, %v4812
        %v4828 = vadd.f32 %v4807, %v4812
        %v4829 = vld [vmem:[#allocation5 + $0xb] sm:$0x1]
        %v4830 = vlaneseq
        %v4831 = vshrl.u32 %v4830, 7
        %v4832 = vsub.s32 0, %v4831
        %v4833 = vrot.slane %v4829, %v4832
        %4835 = vrot.lane.b32.xlu0 %v4833, 64
        %v4836 = vpop.permute.xlu0 %4835
        %v4838 = vadd.f32 %v4540, %v4836
        %v4839 = vadd.f32 %v4544, %v4836
        %v4840 = vadd.f32 %v4550, %v4836
        %v4841 = vadd.f32 %v4554, %v4836
        %v4842 = vadd.f32 %v4560, %v4836
        %v4843 = vadd.f32 %v4564, %v4836
        %v4844 = vadd.f32 %v4570, %v4836
        %v4845 = vadd.f32 %v4574, %v4836
        %v4846 = vadd.f32 %v4580, %v4836
        %v4847 = vadd.f32 %v4584, %v4836
        %v4848 = vadd.f32 %v4590, %v4836
        %v4849 = vadd.f32 %v4594, %v4836
        %v4850 = vadd.f32 %v4600, %v4836
        %v4851 = vadd.f32 %v4604, %v4836
        %v4852 = vadd.f32 %v4610, %v4836
        %v4853 = vadd.f32 %v4614, %v4836
        %v4854 = vld [vmem:[#allocation5 + $0xf] sm:$0x1]
        %v4855 = vld [vmem:[#allocation5 + $0x10] sm:$0x1]
        %v4856 = vmul.f32 %v4813, %v4813
        %v4857 = vmul.f32 %v4814, %v4814
        %v4858 = vmul.f32 %v4815, %v4815
        %v4859 = vmul.f32 %v4816, %v4816
        %v4860 = vmul.f32 %v4817, %v4817
        %v4861 = vmul.f32 %v4818, %v4818
        %v4862 = vmul.f32 %v4819, %v4819
        %v4863 = vmul.f32 %v4820, %v4820
        %v4864 = vmul.f32 %v4821, %v4821
        %v4865 = vmul.f32 %v4822, %v4822
        %v4866 = vmul.f32 %v4823, %v4823
        %v4867 = vmul.f32 %v4824, %v4824
        %v4868 = vmul.f32 %v4825, %v4825
        %v4869 = vmul.f32 %v4826, %v4826
        %v4870 = vmul.f32 %v4827, %v4827
        %v4871 = vmul.f32 %v4828, %v4828
        %4888 = vrot.lane.b32.xlu0 %v4856, 64
        %v4889 = vpop.permute.xlu0 %4888
        %4890 = vrot.lane.b32.xlu0 %v4857, 64
        %v4891 = vpop.permute.xlu0 %4890
        %4892 = vrot.lane.b32.xlu0 %v4858, 64
        %v4893 = vpop.permute.xlu0 %4892
        %4894 = vrot.lane.b32.xlu0 %v4859, 64
        %v4895 = vpop.permute.xlu0 %4894
        %4896 = vrot.lane.b32.xlu0 %v4860, 64
        %v4897 = vpop.permute.xlu0 %4896
        %4898 = vrot.lane.b32.xlu0 %v4861, 64
        %v4899 = vpop.permute.xlu0 %4898
        %4900 = vrot.lane.b32.xlu0 %v4862, 64
        %v4901 = vpop.permute.xlu0 %4900
        %4902 = vrot.lane.b32.xlu0 %v4863, 64
        %v4903 = vpop.permute.xlu0 %4902
        %4904 = vrot.lane.b32.xlu0 %v4864, 64
        %v4905 = vpop.permute.xlu0 %4904
        %4906 = vrot.lane.b32.xlu0 %v4865, 64
        %v4907 = vpop.permute.xlu0 %4906
        %4908 = vrot.lane.b32.xlu0 %v4866, 64
        %v4909 = vpop.permute.xlu0 %4908
        %4910 = vrot.lane.b32.xlu0 %v4867, 64
        %v4911 = vpop.permute.xlu0 %4910
        %4912 = vrot.lane.b32.xlu0 %v4868, 64
        %v4913 = vpop.permute.xlu0 %4912
        %4914 = vrot.lane.b32.xlu0 %v4869, 64
        %v4915 = vpop.permute.xlu0 %4914
        %4916 = vrot.lane.b32.xlu0 %v4870, 64
        %v4917 = vpop.permute.xlu0 %4916
        %4918 = vrot.lane.b32.xlu0 %v4871, 64
        %v4919 = vpop.permute.xlu0 %4918
        %vm4936 = vcmask 523264
        %v4937 = vsel %vm4936, %v4813, %v4889
        %v4938 = vsel %vm4936, %v4814, %v4891
        %v4939 = vsel %vm4936, %v4815, %v4893
        %v4940 = vsel %vm4936, %v4816, %v4895
        %v4941 = vsel %vm4936, %v4817, %v4897
        %v4942 = vsel %vm4936, %v4818, %v4899
        %v4943 = vsel %vm4936, %v4819, %v4901
        %v4944 = vsel %vm4936, %v4820, %v4903
        %v4945 = vsel %vm4936, %v4821, %v4905
        %v4946 = vsel %vm4936, %v4822, %v4907
        %v4947 = vsel %vm4936, %v4823, %v4909
        %v4948 = vsel %vm4936, %v4824, %v4911
        %v4949 = vsel %vm4936, %v4825, %v4913
        %v4950 = vsel %vm4936, %v4826, %v4915
        %v4951 = vsel %vm4936, %v4827, %v4917
        %v4952 = vsel %vm4936, %v4828, %v4919
        %v4953 = vld [vmem:[%s14] sm:$0xff]
        %v4954 = vld [vmem:[%s14 + $0x8] sm:$0xff]
        %v4955 = vld [vmem:[%s14 + $0x10] sm:$0xff]
        %v4956 = vld [vmem:[%s14 + $0x18] sm:$0xff]
        %v4957 = vld [vmem:[%s14 + $0x20] sm:$0xff]
        %v4958 = vld [vmem:[%s14 + $0x28] sm:$0xff]
        %v4959 = vld [vmem:[%s14 + $0x30] sm:$0xff]
        %v4960 = vld [vmem:[%s14 + $0x38] sm:$0xff]
        %v4961 = vld [vmem:[%s14 + $0x40] sm:$0xff]
        %v4962 = vld [vmem:[%s14 + $0x48] sm:$0xff]
        %v4963 = vld [vmem:[%s14 + $0x50] sm:$0xff]
        %v4964 = vld [vmem:[%s14 + $0x58] sm:$0xff]
        %v4965 = vld [vmem:[%s14 + $0x60] sm:$0xff]
        %v4966 = vld [vmem:[%s14 + $0x68] sm:$0xff]
        %v4967 = vld [vmem:[%s14 + $0x70] sm:$0xff]
        %v4968 = vld [vmem:[%s14 + $0x78] sm:$0xff]
        %4969 = vmatprep.subr.mxu0 0.0
        %4970 = vmatpush1.msra.mxu0 %v4953
        %4971 = vmatprep.subr.mxu0 0.0
        %4972 = vmatpush1.msra.mxu0 %v4954
        %4973 = vmatprep.subr.mxu0 0.0
        %4974 = vmatpush1.msra.mxu0 %v4955
        %4975 = vmatprep.subr.mxu0 0.0
        %4976 = vmatpush1.msra.mxu0 %v4956
        %4977 = vmatprep.subr.mxu0 0.0
        %4978 = vmatpush1.msra.mxu0 %v4957
        %4979 = vmatprep.subr.mxu0 0.0
        %4980 = vmatpush1.msra.mxu0 %v4958
        %4981 = vmatprep.subr.mxu0 0.0
        %4982 = vmatpush1.msra.mxu0 %v4959
        %4983 = vmatprep.subr.mxu0 0.0
        %4984 = vmatpush1.msra.mxu0 %v4960
        %4985 = vmatprep.subr.mxu0 0.0
        %4986 = vmatpush1.msra.mxu0 %v4961
        %4987 = vmatprep.subr.mxu0 0.0
        %4988 = vmatpush1.msra.mxu0 %v4962
        %4989 = vmatprep.subr.mxu0 0.0
        %4990 = vmatpush1.msra.mxu0 %v4963
        %4991 = vmatprep.subr.mxu0 0.0
        %4992 = vmatpush1.msra.mxu0 %v4964
        %4993 = vmatprep.subr.mxu0 0.0
        %4994 = vmatpush1.msra.mxu0 %v4965
        %4995 = vmatprep.subr.mxu0 0.0
        %4996 = vmatpush1.msra.mxu0 %v4966
        %4997 = vmatprep.subr.mxu0 0.0
        %4998 = vmatpush1.msra.mxu0 %v4967
        %4999 = vmatprep.subr.mxu0 0.0
        %5000 = vmatpush1.msra.mxu0 %v4968
        %5001 = vmatprep.subr.mxu0 0.0
        %5002 = vmatpush1.msra.mxu0 0.0
        %5003 = vmatprep.subr.mxu0 0.0
        %5004 = vmatpush1.msra.mxu0 0.0
        %5005 = vmatprep.subr.mxu0 0.0
        %5006 = vmatpush1.msra.mxu0 0.0
        %5007 = vmatprep.subr.mxu0 0.0
        %5008 = vmatpush1.msra.mxu0 0.0
        %5009 = vmatprep.subr.mxu0 0.0
        %5010 = vmatpush1.msra.mxu0 0.0
        %5011 = vmatprep.subr.mxu0 0.0
        %5012 = vmatpush1.msra.mxu0 0.0
        %5013 = vmatprep.subr.mxu0 0.0
        %5014 = vmatpush1.msra.mxu0 0.0
        %5015 = vmatprep.subr.mxu0 0.0
        %5016 = vmatpush1.msra.mxu0 0.0
        %5017 = vmatprep.subr.mxu0 0.0
        %5018 = vmatpush1.msra.mxu0 0.0
        %5019 = vmatprep.subr.mxu0 0.0
        %5020 = vmatpush1.msra.mxu0 0.0
        %5021 = vmatprep.subr.mxu0 0.0
        %5022 = vmatpush1.msra.mxu0 0.0
        %5023 = vmatprep.subr.mxu0 0.0
        %5024 = vmatpush1.msra.mxu0 0.0
        %5025 = vmatprep.subr.mxu0 0.0
        %5026 = vmatpush1.msra.mxu0 0.0
        %5027 = vmatprep.subr.mxu0 0.0
        %5028 = vmatpush1.msra.mxu0 0.0
        %5029 = vmatprep.subr.mxu0 0.0
        %5030 = vmatpush1.msra.mxu0 0.0
        %5031 = vmatprep.subr.mxu0 0.0
        %5032 = vmatpush1.msra.mxu0 0.0
        %5033 = vmatprep.mubr.f32.mxu0 0.0
        %5034 = vmatmul.mubr.f32.gmra.mrb[0].mxu0 %v4937
        %v5035 = vpop.f32.mrb[0].mxu0
        %v5036 = vadd.f32 0.0, %v5035
        %v5037 = vpop.f32.mrb[0].mxu0
        %5038 = vmatprep.mubr.f32.mxu0 0.0
        %5039 = vmatmul.mubr.f32.gmra.mrb[0].mxu0 %v4938
        %v5040 = vpop.f32.mrb[0].mxu0
        %v5041 = vadd.f32 0.0, %v5040
        %v5042 = vpop.f32.mrb[0].mxu0
        %5043 = vmatprep.mubr.f32.mxu0 0.0
        %5044 = vmatmul.mubr.f32.gmra.mrb[0].mxu0 %v4939
        %v5045 = vpop.f32.mrb[0].mxu0
        %v5046 = vadd.f32 0.0, %v5045
        %v5047 = vpop.f32.mrb[0].mxu0
        %5048 = vmatprep.mubr.f32.mxu0 0.0
        %5049 = vmatmul.mubr.f32.gmra.mrb[0].mxu0 %v4940
        %v5050 = vpop.f32.mrb[0].mxu0
        %v5051 = vadd.f32 0.0, %v5050
        %v5052 = vpop.f32.mrb[0].mxu0
        %5053 = vmatprep.mubr.f32.mxu0 0.0
        %5054 = vmatmul.mubr.f32.gmra.mrb[0].mxu0 %v4941
        %v5055 = vpop.f32.mrb[0].mxu0
        %v5056 = vadd.f32 0.0, %v5055
        %v5057 = vpop.f32.mrb[0].mxu0
        %5058 = vmatprep.mubr.f32.mxu0 0.0
        %5059 = vmatmul.mubr.f32.gmra.mrb[0].mxu0 %v4942
        %v5060 = vpop.f32.mrb[0].mxu0
        %v5061 = vadd.f32 0.0, %v5060
        %v5062 = vpop.f32.mrb[0].mxu0
        %5063 = vmatprep.mubr.f32.mxu0 0.0
        %5064 = vmatmul.mubr.f32.gmra.mrb[0].mxu0 %v4943
        %v5065 = vpop.f32.mrb[0].mxu0
        %v5066 = vadd.f32 0.0, %v5065
        %v5067 = vpop.f32.mrb[0].mxu0
        %5068 = vmatprep.mubr.f32.mxu0 0.0
        %5069 = vmatmul.mubr.f32.gmra.mrb[0].mxu0 %v4944
        %v5070 = vpop.f32.mrb[0].mxu0
        %v5071 = vadd.f32 0.0, %v5070
        %v5072 = vpop.f32.mrb[0].mxu0
        %5073 = vmatprep.mubr.f32.mxu0 0.0
        %5074 = vmatmul.mubr.f32.gmra.mrb[0].mxu0 %v4945
        %v5075 = vpop.f32.mrb[0].mxu0
        %v5076 = vadd.f32 0.0, %v5075
        %v5077 = vpop.f32.mrb[0].mxu0
        %5078 = vmatprep.mubr.f32.mxu0 0.0
        %5079 = vmatmul.mubr.f32.gmra.mrb[0].mxu0 %v4946
        %v5080 = vpop.f32.mrb[0].mxu0
        %v5081 = vadd.f32 0.0, %v5080
        %v5082 = vpop.f32.mrb[0].mxu0
        %5083 = vmatprep.mubr.f32.mxu0 0.0
        %5084 = vmatmul.mubr.f32.gmra.mrb[0].mxu0 %v4947
        %v5085 = vpop.f32.mrb[0].mxu0
        %v5086 = vadd.f32 0.0, %v5085
        %v5087 = vpop.f32.mrb[0].mxu0
        %5088 = vmatprep.mubr.f32.mxu0 0.0
        %5089 = vmatmul.mubr.f32.gmra.mrb[0].mxu0 %v4948
        %v5090 = vpop.f32.mrb[0].mxu0
        %v5091 = vadd.f32 0.0, %v5090
        %v5092 = vpop.f32.mrb[0].mxu0
        %5093 = vmatprep.mubr.f32.mxu0 0.0
        %5094 = vmatmul.mubr.f32.gmra.mrb[0].mxu0 %v4949
        %v5095 = vpop.f32.mrb[0].mxu0
        %v5096 = vadd.f32 0.0, %v5095
        %v5097 = vpop.f32.mrb[0].mxu0
        %5098 = vmatprep.mubr.f32.mxu0 0.0
        %5099 = vmatmul.mubr.f32.gmra.mrb[0].mxu0 %v4950
        %v5100 = vpop.f32.mrb[0].mxu0
        %v5101 = vadd.f32 0.0, %v5100
        %v5102 = vpop.f32.mrb[0].mxu0
        %5103 = vmatprep.mubr.f32.mxu0 0.0
        %5104 = vmatmul.mubr.f32.gmra.mrb[0].mxu0 %v4951
        %v5105 = vpop.f32.mrb[0].mxu0
        %v5106 = vadd.f32 0.0, %v5105
        %v5107 = vpop.f32.mrb[0].mxu0
        %5108 = vmatprep.mubr.f32.mxu0 0.0
        %5109 = vmatmul.mubr.f32.gmra.mrb[0].mxu0 %v4952
        %v5110 = vpop.f32.mrb[0].mxu0
        %v5111 = vadd.f32 0.0, %v5110
        %v5112 = vpop.f32.mrb[0].mxu0
        %5113 = vdwg.mxu0
        %5114 = vmatprep.subr.mxu0 0.0
        %5115 = vmatpush1.msra.mxu0 %v5036
        %5116 = vmatprep.subr.mxu0 0.0
        %5117 = vmatpush1.msra.mxu0 %v5041
        %5118 = vmatprep.subr.mxu0 0.0
        %5119 = vmatpush1.msra.mxu0 %v5046
        %5120 = vmatprep.subr.mxu0 0.0
        %5121 = vmatpush1.msra.mxu0 %v5051
        %5122 = vmatprep.subr.mxu0 0.0
        %5123 = vmatpush1.msra.mxu0 %v5056
        %5124 = vmatprep.subr.mxu0 0.0
        %5125 = vmatpush1.msra.mxu0 %v5061
        %5126 = vmatprep.subr.mxu0 0.0
        %5127 = vmatpush1.msra.mxu0 %v5066
        %5128 = vmatprep.subr.mxu0 0.0
        %5129 = vmatpush1.msra.mxu0 %v5071
        %5130 = vmatprep.subr.mxu0 0.0
        %5131 = vmatpush1.msra.mxu0 %v5076
        %5132 = vmatprep.subr.mxu0 0.0
        %5133 = vmatpush1.msra.mxu0 %v5081
        %5134 = vmatprep.subr.mxu0 0.0
        %5135 = vmatpush1.msra.mxu0 %v5086
        %5136 = vmatprep.subr.mxu0 0.0
        %5137 = vmatpush1.msra.mxu0 %v5091
        %5138 = vmatprep.subr.mxu0 0.0
        %5139 = vmatpush1.msra.mxu0 %v5096
        %5140 = vmatprep.subr.mxu0 0.0
        %5141 = vmatpush1.msra.mxu0 %v5101
        %5142 = vmatprep.subr.mxu0 0.0
        %5143 = vmatpush1.msra.mxu0 %v5106
        %5144 = vmatprep.subr.mxu0 0.0
        %5145 = vmatpush1.msra.mxu0 %v5111
        %5146 = vmatprep.subr.mxu0 0.0
        %5147 = vmatpush1.msra.mxu0 0.0
        %5148 = vmatprep.subr.mxu0 0.0
        %5149 = vmatpush1.msra.mxu0 0.0
        %5150 = vmatprep.subr.mxu0 0.0
        %5151 = vmatpush1.msra.mxu0 0.0
        %5152 = vmatprep.subr.mxu0 0.0
        %5153 = vmatpush1.msra.mxu0 0.0
        %5154 = vmatprep.subr.mxu0 0.0
        %5155 = vmatpush1.msra.mxu0 0.0
        %5156 = vmatprep.subr.mxu0 0.0
        %5157 = vmatpush1.msra.mxu0 0.0
        %5158 = vmatprep.subr.mxu0 0.0
        %5159 = vmatpush1.msra.mxu0 0.0
        %5160 = vmatprep.subr.mxu0 0.0
        %5161 = vmatpush1.msra.mxu0 0.0
        %5162 = vmatprep.subr.mxu0 0.0
        %5163 = vmatpush1.msra.mxu0 0.0
        %5164 = vmatprep.subr.mxu0 0.0
        %5165 = vmatpush1.msra.mxu0 0.0
        %5166 = vmatprep.subr.mxu0 0.0
        %5167 = vmatpush1.msra.mxu0 0.0
        %5168 = vmatprep.subr.mxu0 0.0
        %5169 = vmatpush1.msra.mxu0 0.0
        %5170 = vmatprep.subr.mxu0 0.0
        %5171 = vmatpush1.msra.mxu0 0.0
        %5172 = vmatprep.subr.mxu0 0.0
        %5173 = vmatpush1.msra.mxu0 0.0
        %5174 = vmatprep.subr.mxu0 0.0
        %5175 = vmatpush1.msra.mxu0 0.0
        %5176 = vmatprep.subr.mxu0 0.0
        %5177 = vmatpush1.msra.mxu0 0.0
        %5178 = vmatprep.mubr.f32.mxu0 0.0
        %5179 = vmatmul.mubr.f32.gmra.mrb[0].mxu0 %v3807
        %v5180 = vpop.f32.mrb[0].mxu0
        %v5181 = vadd.f32 0.0, %v5180
        %v5182 = vpop.f32.mrb[0].mxu0
        %5183 = vdwg.mxu0
        %v5184 = vmul.f32 %v5181, 0.015625
        %v5185 = vmul.f32 %v5184, %v5184
        %5187 = vrot.lane.b32.xlu0 %v5185, 16
        %v5188 = vpop.permute.xlu0 %5187
        %v5190 = vsub.f32 %v5184, %v5188
        %v5191 = vmax.f32 %v5190, 0.0
        %v5192 = vadd.f32 %v5191, 1e-05
        %v5193 = vrsqrt.pop %v5192
        %v5194 = vsel %vm1145, %v5184, %v5193
        %v5195 = vld [vmem:[#allocation10] sm:$0xff]
        %v5196 = vld [vmem:[#allocation10 + $0x8] sm:$0xff]
        %v5197 = vld [vmem:[#allocation10 + $0x10] sm:$0xff]
        %v5198 = vld [vmem:[#allocation10 + $0x18] sm:$0xff]
        %v5200 = vsel %vm723, %v5194, 0
        %5202 = vmatprep.subr.mxu0 0.0
        %5203 = vmatpush1.msra.mxu0 %v5195
        %5204 = vmatprep.subr.mxu0 0.0
        %5205 = vmatpush1.msra.mxu0 %v5196
        %5206 = vmatprep.subr.mxu0 0.0
        %5207 = vmatpush1.msra.mxu0 %v5197
        %5208 = vmatprep.subr.mxu0 0.0
        %5209 = vmatpush1.msra.mxu0 %v5198
        %5210 = vmatprep.subr.mxu0 0.0
        %5211 = vmatpush1.msra.mxu0 0.0
        %5212 = vmatprep.subr.mxu0 0.0
        %5213 = vmatpush1.msra.mxu0 0.0
        %5214 = vmatprep.subr.mxu0 0.0
        %5215 = vmatpush1.msra.mxu0 0.0
        %5216 = vmatprep.subr.mxu0 0.0
        %5217 = vmatpush1.msra.mxu0 0.0
        %5218 = vmatprep.subr.mxu0 0.0
        %5219 = vmatpush1.msra.mxu0 0.0
        %5220 = vmatprep.subr.mxu0 0.0
        %5221 = vmatpush1.msra.mxu0 0.0
        %5222 = vmatprep.subr.mxu0 0.0
        %5223 = vmatpush1.msra.mxu0 0.0
        %5224 = vmatprep.subr.mxu0 0.0
        %5225 = vmatpush1.msra.mxu0 0.0
        %5226 = vmatprep.subr.mxu0 0.0
        %5227 = vmatpush1.msra.mxu0 0.0
        %5228 = vmatprep.subr.mxu0 0.0
        %5229 = vmatpush1.msra.mxu0 0.0
        %5230 = vmatprep.subr.mxu0 0.0
        %5231 = vmatpush1.msra.mxu0 0.0
        %5232 = vmatprep.subr.mxu0 0.0
        %5233 = vmatpush1.msra.mxu0 0.0
        %5234 = vmatprep.subr.mxu0 0.0
        %5235 = vmatpush1.msra.mxu0 0.0
        %5236 = vmatprep.subr.mxu0 0.0
        %5237 = vmatpush1.msra.mxu0 0.0
        %5238 = vmatprep.subr.mxu0 0.0
        %5239 = vmatpush1.msra.mxu0 0.0
        %5240 = vmatprep.subr.mxu0 0.0
        %5241 = vmatpush1.msra.mxu0 0.0
        %5242 = vmatprep.subr.mxu0 0.0
        %5243 = vmatpush1.msra.mxu0 0.0
        %5244 = vmatprep.subr.mxu0 0.0
        %5245 = vmatpush1.msra.mxu0 0.0
        %5246 = vmatprep.subr.mxu0 0.0
        %5247 = vmatpush1.msra.mxu0 0.0
        %5248 = vmatprep.subr.mxu0 0.0
        %5249 = vmatpush1.msra.mxu0 0.0
        %5250 = vmatprep.subr.mxu0 0.0
        %5251 = vmatpush1.msra.mxu0 0.0
        %5252 = vmatprep.subr.mxu0 0.0
        %5253 = vmatpush1.msra.mxu0 0.0
        %5254 = vmatprep.subr.mxu0 0.0
        %5255 = vmatpush1.msra.mxu0 0.0
        %5256 = vmatprep.subr.mxu0 0.0
        %5257 = vmatpush1.msra.mxu0 0.0
        %5258 = vmatprep.subr.mxu0 0.0
        %5259 = vmatpush1.msra.mxu0 0.0
        %5260 = vmatprep.subr.mxu0 0.0
        %5261 = vmatpush1.msra.mxu0 0.0
        %5262 = vmatprep.subr.mxu0 0.0
        %5263 = vmatpush1.msra.mxu0 0.0
        %5264 = vmatprep.subr.mxu0 0.0
        %5265 = vmatpush1.msra.mxu0 0.0
        %5266 = vmatprep.mubr.f32.mxu0 0.0
        %5267 = vmatmul.mubr.f32.gmra.mrb[0].mxu0 %v5200
        %v5268 = vpop.f32.mrb[0].mxu0
        %v5269 = vadd.f32 0.0, %v5268
        %v5270 = vpop.f32.mrb[0].mxu0
        %5271 = vdwg.mxu0
        %v5273 = vcombine.high %v5269, %v5269
        %v5275 = vunpack.c.l.s4 1966171168
        %v5276 = vunpack.c.0.s8 %v5275
        %v5277 = vlaneseq
        %v5278 = vshrl.u32 %v5277, 7
        %v5279 = vsub.s32 %v5276, %v5278
        %v5280 = vrot.slane %v5269, %v5279
        %v5282 = vunpack.c.l.s4 1966171168
        %v5283 = vunpack.c.0.s8 %v5282
        %v5284 = vlaneseq
        %v5285 = vshrl.u32 %v5284, 7
        %v5286 = vsub.s32 %v5283, %v5285
        %v5287 = vrot.slane %v5273, %v5286
        %v5288 = vcombine.high %v5280, %v5280
        %v5289 = vcombine.high %v5287, %v5287
        %v5291 = vunpack.c.l.s4 1966171168
        %v5292 = vunpack.c.0.s8 %v5291
        %v5293 = vlaneseq
        %v5294 = vshrl.u32 %v5293, 7
        %v5295 = vsub.s32 %v5292, %v5294
        %v5296 = vrot.slane %v5280, %v5295
        %v5298 = vunpack.c.l.s4 1966171168
        %v5299 = vunpack.c.0.s8 %v5298
        %v5300 = vlaneseq
        %v5301 = vshrl.u32 %v5300, 7
        %v5302 = vsub.s32 %v5299, %v5301
        %v5303 = vrot.slane %v5287, %v5302
        %v5305 = vunpack.c.l.s4 1966171168
        %v5306 = vunpack.c.0.s8 %v5305
        %v5307 = vlaneseq
        %v5308 = vshrl.u32 %v5307, 7
        %v5309 = vsub.s32 %v5306, %v5308
        %v5310 = vrot.slane %v5288, %v5309
        %v5312 = vunpack.c.l.s4 1966171168
        %v5313 = vunpack.c.0.s8 %v5312
        %v5314 = vlaneseq
        %v5315 = vshrl.u32 %v5314, 7
        %v5316 = vsub.s32 %v5313, %v5315
        %v5317 = vrot.slane %v5289, %v5316
        %v5318 = vcombine.high %v5296, %v5296
        %v5319 = vcombine.high %v5303, %v5303
        %v5320 = vcombine.high %v5310, %v5310
        %v5321 = vcombine.high %v5317, %v5317
        %v5322 = vlaneseq
        %v5323 = vshrl.u32 %v5322, 7
        %v5324 = vsub.s32 0, %v5323
        %v5325 = vrot.slane %v5296, %v5324
        %v5326 = vlaneseq
        %v5327 = vshrl.u32 %v5326, 7
        %v5328 = vsub.s32 0, %v5327
        %v5329 = vrot.slane %v5310, %v5328
        %v5330 = vlaneseq
        %v5331 = vshrl.u32 %v5330, 7
        %v5332 = vsub.s32 0, %v5331
        %v5333 = vrot.slane %v5318, %v5332
        %v5334 = vlaneseq
        %v5335 = vshrl.u32 %v5334, 7
        %v5336 = vsub.s32 0, %v5335
        %v5337 = vrot.slane %v5320, %v5336
        %v5338 = vlaneseq
        %v5339 = vshrl.u32 %v5338, 7
        %v5340 = vsub.s32 0, %v5339
        %v5341 = vrot.slane %v5303, %v5340
        %v5342 = vlaneseq
        %v5343 = vshrl.u32 %v5342, 7
        %v5344 = vsub.s32 0, %v5343
        %v5345 = vrot.slane %v5317, %v5344
        %v5346 = vlaneseq
        %v5347 = vshrl.u32 %v5346, 7
        %v5348 = vsub.s32 0, %v5347
        %v5349 = vrot.slane %v5319, %v5348
        %v5350 = vlaneseq
        %v5351 = vshrl.u32 %v5350, 7
        %v5352 = vsub.s32 0, %v5351
        %v5353 = vrot.slane %v5321, %v5352
        %v5362 = vsub.f32 %v4813, %v5325
        %v5363 = vsub.f32 %v4814, %v5325
        %v5364 = vsub.f32 %v4815, %v5329
        %v5365 = vsub.f32 %v4816, %v5329
        %v5366 = vsub.f32 %v4817, %v5333
        %v5367 = vsub.f32 %v4818, %v5333
        %v5368 = vsub.f32 %v4819, %v5337
        %v5369 = vsub.f32 %v4820, %v5337
        %v5370 = vsub.f32 %v4821, %v5341
        %v5371 = vsub.f32 %v4822, %v5341
        %v5372 = vsub.f32 %v4823, %v5345
        %v5373 = vsub.f32 %v4824, %v5345
        %v5374 = vsub.f32 %v4825, %v5349
        %v5375 = vsub.f32 %v4826, %v5349
        %v5376 = vsub.f32 %v4827, %v5353
        %v5377 = vsub.f32 %v4828, %v5353
        %5378 = vrot.lane.b32.xlu0 %v5325, 64
        %v5379 = vpop.permute.xlu0 %5378
        %5380 = vrot.lane.b32.xlu0 %v5329, 64
        %v5381 = vpop.permute.xlu0 %5380
        %5382 = vrot.lane.b32.xlu0 %v5333, 64
        %v5383 = vpop.permute.xlu0 %5382
        %5384 = vrot.lane.b32.xlu0 %v5337, 64
        %v5385 = vpop.permute.xlu0 %5384
        %5386 = vrot.lane.b32.xlu0 %v5341, 64
        %v5387 = vpop.permute.xlu0 %5386
        %5388 = vrot.lane.b32.xlu0 %v5345, 64
        %v5389 = vpop.permute.xlu0 %5388
        %5390 = vrot.lane.b32.xlu0 %v5349, 64
        %v5391 = vpop.permute.xlu0 %5390
        %5392 = vrot.lane.b32.xlu0 %v5353, 64
        %v5393 = vpop.permute.xlu0 %5392
        %v5402 = vmul.f32 %v5362, %v5379
        %v5403 = vmul.f32 %v5363, %v5379
        %v5404 = vmul.f32 %v5364, %v5381
        %v5405 = vmul.f32 %v5365, %v5381
        %v5406 = vmul.f32 %v5366, %v5383
        %v5407 = vmul.f32 %v5367, %v5383
        %v5408 = vmul.f32 %v5368, %v5385
        %v5409 = vmul.f32 %v5369, %v5385
        %v5410 = vmul.f32 %v5370, %v5387
        %v5411 = vmul.f32 %v5371, %v5387
        %v5412 = vmul.f32 %v5372, %v5389
        %v5413 = vmul.f32 %v5373, %v5389
        %v5414 = vmul.f32 %v5374, %v5391
        %v5415 = vmul.f32 %v5375, %v5391
        %v5416 = vmul.f32 %v5376, %v5393
        %v5417 = vmul.f32 %v5377, %v5393
        %v5418 = vlaneseq
        %v5419 = vshrl.u32 %v5418, 7
        %v5420 = vsub.s32 0, %v5419
        %v5421 = vrot.slane %v4854, %v5420
        %v5422 = vmul.f32 %v5402, %v5421
        %v5423 = vmul.f32 %v5403, %v5421
        %v5424 = vmul.f32 %v5404, %v5421
        %v5425 = vmul.f32 %v5405, %v5421
        %v5426 = vmul.f32 %v5406, %v5421
        %v5427 = vmul.f32 %v5407, %v5421
        %v5428 = vmul.f32 %v5408, %v5421
        %v5429 = vmul.f32 %v5409, %v5421
        %v5430 = vmul.f32 %v5410, %v5421
        %v5431 = vmul.f32 %v5411, %v5421
        %v5432 = vmul.f32 %v5412, %v5421
        %v5433 = vmul.f32 %v5413, %v5421
        %v5434 = vmul.f32 %v5414, %v5421
        %v5435 = vmul.f32 %v5415, %v5421
        %v5436 = vmul.f32 %v5416, %v5421
        %v5437 = vmul.f32 %v5417, %v5421
        %v5438 = vlaneseq
        %v5439 = vshrl.u32 %v5438, 7
        %v5440 = vsub.s32 0, %v5439
        %v5441 = vrot.slane %v4855, %v5440
        %v5442 = vadd.f32 %v5422, %v5441
        %v5443 = vadd.f32 %v5423, %v5441
        %v5444 = vadd.f32 %v5424, %v5441
        %v5445 = vadd.f32 %v5425, %v5441
        %v5446 = vadd.f32 %v5426, %v5441
        %v5447 = vadd.f32 %v5427, %v5441
        %v5448 = vadd.f32 %v5428, %v5441
        %v5449 = vadd.f32 %v5429, %v5441
        %v5450 = vadd.f32 %v5430, %v5441
        %v5451 = vadd.f32 %v5431, %v5441
        %v5452 = vadd.f32 %v5432, %v5441
        %v5453 = vadd.f32 %v5433, %v5441
        %v5454 = vadd.f32 %v5434, %v5441
        %v5455 = vadd.f32 %v5435, %v5441
        %v5456 = vadd.f32 %v5436, %v5441
        %v5457 = vadd.f32 %v5437, %v5441
        %v5458 = vmul.f32 %v5442, 0.5
        %v5459 = vmul.f32 %v5443, 0.5
        %v5460 = vmul.f32 %v5444, 0.5
        %v5461 = vmul.f32 %v5445, 0.5
        %v5462 = vmul.f32 %v5446, 0.5
        %v5463 = vmul.f32 %v5447, 0.5
        %v5464 = vmul.f32 %v5448, 0.5
        %v5465 = vmul.f32 %v5449, 0.5
        %v5466 = vmul.f32 %v5450, 0.5
        %v5467 = vmul.f32 %v5451, 0.5
        %v5468 = vmul.f32 %v5452, 0.5
        %v5469 = vmul.f32 %v5453, 0.5
        %v5470 = vmul.f32 %v5454, 0.5
        %v5471 = vmul.f32 %v5455, 0.5
        %v5472 = vmul.f32 %v5456, 0.5
        %v5473 = vmul.f32 %v5457, 0.5
        %v5474 = vmul.f32 %v5442, 0.70710677
        %v5475 = vmul.f32 %v5443, 0.70710677
        %v5476 = vmul.f32 %v5444, 0.70710677
        %v5477 = vmul.f32 %v5445, 0.70710677
        %v5478 = vmul.f32 %v5446, 0.70710677
        %v5479 = vmul.f32 %v5447, 0.70710677
        %v5480 = vmul.f32 %v5448, 0.70710677
        %v5481 = vmul.f32 %v5449, 0.70710677
        %v5482 = vmul.f32 %v5450, 0.70710677
        %v5483 = vmul.f32 %v5451, 0.70710677
        %v5484 = vmul.f32 %v5452, 0.70710677
        %v5485 = vmul.f32 %v5453, 0.70710677
        %v5486 = vmul.f32 %v5454, 0.70710677
        %v5487 = vmul.f32 %v5455, 0.70710677
        %v5488 = vmul.f32 %v5456, 0.70710677
        %v5489 = vmul.f32 %v5457, 0.70710677
        %v5490 = verf.f32.pop %v5474
        %v5491 = verf.f32.pop %v5475
        %v5492 = verf.f32.pop %v5476
        %v5493 = verf.f32.pop %v5477
        %v5494 = verf.f32.pop %v5478
        %v5495 = verf.f32.pop %v5479
        %v5496 = verf.f32.pop %v5480
        %v5497 = verf.f32.pop %v5481
        %v5498 = verf.f32.pop %v5482
        %v5499 = verf.f32.pop %v5483
        %v5500 = verf.f32.pop %v5484
        %v5501 = verf.f32.pop %v5485
        %v5502 = verf.f32.pop %v5486
        %v5503 = verf.f32.pop %v5487
        %v5504 = verf.f32.pop %v5488
        %v5505 = verf.f32.pop %v5489
        %v5506 = vadd.f32 %v5490, 1.0
        %v5507 = vadd.f32 %v5491, 1.0
        %v5508 = vadd.f32 %v5492, 1.0
        %v5509 = vadd.f32 %v5493, 1.0
        %v5510 = vadd.f32 %v5494, 1.0
        %v5511 = vadd.f32 %v5495, 1.0
        %v5512 = vadd.f32 %v5496, 1.0
        %v5513 = vadd.f32 %v5497, 1.0
        %v5514 = vadd.f32 %v5498, 1.0
        %v5515 = vadd.f32 %v5499, 1.0
        %v5516 = vadd.f32 %v5500, 1.0
        %v5517 = vadd.f32 %v5501, 1.0
        %v5518 = vadd.f32 %v5502, 1.0
        %v5519 = vadd.f32 %v5503, 1.0
        %v5520 = vadd.f32 %v5504, 1.0
        %v5521 = vadd.f32 %v5505, 1.0
        %v5522 = vmul.f32 %v5458, %v5506
        %v5523 = vmul.f32 %v5459, %v5507
        %v5524 = vmul.f32 %v5460, %v5508
        %v5525 = vmul.f32 %v5461, %v5509
        %v5526 = vmul.f32 %v5462, %v5510
        %v5527 = vmul.f32 %v5463, %v5511
        %v5528 = vmul.f32 %v5464, %v5512
        %v5529 = vmul.f32 %v5465, %v5513
        %v5530 = vmul.f32 %v5466, %v5514
        %v5531 = vmul.f32 %v5467, %v5515
        %v5532 = vmul.f32 %v5468, %v5516
        %v5533 = vmul.f32 %v5469, %v5517
        %v5534 = vmul.f32 %v5470, %v5518
        %v5535 = vmul.f32 %v5471, %v5519
        %v5536 = vmul.f32 %v5472, %v5520
        %v5537 = vmul.f32 %v5473, %v5521
        %v5538 = vld [vmem:[#allocation5 + $0x11] sm:$0x1]
        %v5539 = vpack.c.bf16 %v5523, %v5522
        %v5540 = vpack.c.bf16 %v5525, %v5524
        %v5541 = vpack.c.bf16 %v5527, %v5526
        %v5542 = vpack.c.bf16 %v5529, %v5528
        %v5543 = vpack.c.bf16 %v5531, %v5530
        %v5544 = vpack.c.bf16 %v5533, %v5532
        %v5545 = vpack.c.bf16 %v5535, %v5534
        %v5546 = vpack.c.bf16 %v5537, %v5536
        %v5547 = vld [vmem:[%s6] sm:$0xff]
        %v5548 = vld [vmem:[%s6 + $0x8] sm:$0xff]
        %v5549 = vld [vmem:[%s6 + $0x10] sm:$0xff]
        %v5550 = vld [vmem:[%s6 + $0x18] sm:$0xff]
        %v5551 = vld [vmem:[%s6 + $0x20] sm:$0xff]
        %v5552 = vld [vmem:[%s6 + $0x28] sm:$0xff]
        %v5553 = vld [vmem:[%s6 + $0x30] sm:$0xff]
        %v5554 = vld [vmem:[%s6 + $0x38] sm:$0xff]
        %v5563 = vunpack.c.l.b16 %v5547
        %v5564 = vunpack.c.h.b16 %v5547
        %v5565 = vunpack.c.l.b16 %v5548
        %v5566 = vunpack.c.h.b16 %v5548
        %v5567 = vunpack.c.l.b16 %v5549
        %v5568 = vunpack.c.h.b16 %v5549
        %v5569 = vunpack.c.l.b16 %v5550
        %v5570 = vunpack.c.h.b16 %v5550
        %v5571 = vunpack.c.l.b16 %v5551
        %v5572 = vunpack.c.h.b16 %v5551
        %v5573 = vunpack.c.l.b16 %v5552
        %v5574 = vunpack.c.h.b16 %v5552
        %v5575 = vunpack.c.l.b16 %v5553
        %v5576 = vunpack.c.h.b16 %v5553
        %v5577 = vunpack.c.l.b16 %v5554
        %v5578 = vunpack.c.h.b16 %v5554
        %v5579 = vpack.c.b16 %v5565, %v5563
        %v5580 = vpack.c.b16 %v5566, %v5564
        %v5581 = vpack.c.b16 %v5569, %v5567
        %v5582 = vpack.c.b16 %v5570, %v5568
        %v5583 = vpack.c.b16 %v5573, %v5571
        %v5584 = vpack.c.b16 %v5574, %v5572
        %v5585 = vpack.c.b16 %v5577, %v5575
        %v5586 = vpack.c.b16 %v5578, %v5576
        %v5596 = vsel %vm4936, %v5539, 0
        %v5599 = vsel %vm4936, %v5540, 0
        %v5602 = vsel %vm4936, %v5541, 0
        %v5605 = vsel %vm4936, %v5542, 0
        %v5608 = vsel %vm4936, %v5543, 0
        %v5611 = vsel %vm4936, %v5544, 0
        %v5614 = vsel %vm4936, %v5545, 0
        %v5617 = vsel %vm4936, %v5546, 0
        %5619 = vmatprep.subr.bf16.mxu0 %v5580
        %5620 = vmatpush1.bf16.msra.mxu0 %v5579
        %5621 = vmatprep.subr.bf16.mxu0 %v5582
        %5622 = vmatpush1.bf16.msra.mxu0 %v5581
        %5623 = vmatprep.subr.bf16.mxu0 %v5584
        %5624 = vmatpush1.bf16.msra.mxu0 %v5583
        %5625 = vmatprep.subr.bf16.mxu0 %v5586
        %5626 = vmatpush1.bf16.msra.mxu0 %v5585
        %5627 = vmatprep.subr.bf16.mxu0 0
        %5628 = vmatpush1.bf16.msra.mxu0 0
        %5629 = vmatprep.subr.bf16.mxu0 0
        %5630 = vmatpush1.bf16.msra.mxu0 0
        %5631 = vmatprep.subr.bf16.mxu0 0
        %5632 = vmatpush1.bf16.msra.mxu0 0
        %5633 = vmatprep.subr.bf16.mxu0 0
        %5634 = vmatpush1.bf16.msra.mxu0 0
        %5635 = vmatprep.subr.bf16.mxu0 0
        %5636 = vmatpush1.bf16.msra.mxu0 0
        %5637 = vmatprep.subr.bf16.mxu0 0
        %5638 = vmatpush1.bf16.msra.mxu0 0
        %5639 = vmatprep.subr.bf16.mxu0 0
        %5640 = vmatpush1.bf16.msra.mxu0 0
        %5641 = vmatprep.subr.bf16.mxu0 0
        %5642 = vmatpush1.bf16.msra.mxu0 0
        %5643 = vmatprep.subr.bf16.mxu0 0
        %5644 = vmatpush1.bf16.msra.mxu0 0
        %5645 = vmatprep.subr.bf16.mxu0 0
        %5646 = vmatpush1.bf16.msra.mxu0 0
        %5647 = vmatprep.subr.bf16.mxu0 0
        %5648 = vmatpush1.bf16.msra.mxu0 0
        %5649 = vmatprep.subr.bf16.mxu0 0
        %5650 = vmatpush1.bf16.msra.mxu0 0
        %5651 = vmatprep.mubr.bf16.mxu0 0
        %5652 = vmatmul.mubr.bf16.gmra.mrb[0].mxu0 %v5596
        %v5653 = vpop.f32.mrb[0].mxu0
        %v5654 = vadd.f32 0.0, %v5653
        %v5655 = vpop.f32.mrb[0].mxu0
        %v5656 = vadd.f32 0.0, %v5655
        %v5657 = vpop.f32.mrb[0].mxu0
        %v5658 = vadd.f32 0.0, %v5657
        %v5659 = vpop.f32.mrb[0].mxu0
        %v5660 = vadd.f32 0.0, %v5659
        %5661 = vmatprep.mubr.bf16.mxu0 0
        %5662 = vmatmul.mubr.bf16.gmra.mrb[0].mxu0 %v5599
        %v5663 = vpop.f32.mrb[0].mxu0
        %v5664 = vadd.f32 0.0, %v5663
        %v5665 = vpop.f32.mrb[0].mxu0
        %v5666 = vadd.f32 0.0, %v5665
        %v5667 = vpop.f32.mrb[0].mxu0
        %v5668 = vadd.f32 0.0, %v5667
        %v5669 = vpop.f32.mrb[0].mxu0
        %v5670 = vadd.f32 0.0, %v5669
        %5671 = vmatprep.mubr.bf16.mxu0 0
        %5672 = vmatmul.mubr.bf16.gmra.mrb[0].mxu0 %v5602
        %v5673 = vpop.f32.mrb[0].mxu0
        %v5674 = vadd.f32 0.0, %v5673
        %v5675 = vpop.f32.mrb[0].mxu0
        %v5676 = vadd.f32 0.0, %v5675
        %v5677 = vpop.f32.mrb[0].mxu0
        %v5678 = vadd.f32 0.0, %v5677
        %v5679 = vpop.f32.mrb[0].mxu0
        %v5680 = vadd.f32 0.0, %v5679
        %5681 = vmatprep.mubr.bf16.mxu0 0
        %5682 = vmatmul.mubr.bf16.gmra.mrb[0].mxu0 %v5605
        %v5683 = vpop.f32.mrb[0].mxu0
        %v5684 = vadd.f32 0.0, %v5683
        %v5685 = vpop.f32.mrb[0].mxu0
        %v5686 = vadd.f32 0.0, %v5685
        %v5687 = vpop.f32.mrb[0].mxu0
        %v5688 = vadd.f32 0.0, %v5687
        %v5689 = vpop.f32.mrb[0].mxu0
        %v5690 = vadd.f32 0.0, %v5689
        %5691 = vmatprep.mubr.bf16.mxu0 0
        %5692 = vmatmul.mubr.bf16.gmra.mrb[0].mxu0 %v5608
        %v5693 = vpop.f32.mrb[0].mxu0
        %v5694 = vadd.f32 0.0, %v5693
        %v5695 = vpop.f32.mrb[0].mxu0
        %v5696 = vadd.f32 0.0, %v5695
        %v5697 = vpop.f32.mrb[0].mxu0
        %v5698 = vadd.f32 0.0, %v5697
        %v5699 = vpop.f32.mrb[0].mxu0
        %v5700 = vadd.f32 0.0, %v5699
        %5701 = vmatprep.mubr.bf16.mxu0 0
        %5702 = vmatmul.mubr.bf16.gmra.mrb[0].mxu0 %v5611
        %v5703 = vpop.f32.mrb[0].mxu0
        %v5704 = vadd.f32 0.0, %v5703
        %v5705 = vpop.f32.mrb[0].mxu0
        %v5706 = vadd.f32 0.0, %v5705
        %v5707 = vpop.f32.mrb[0].mxu0
        %v5708 = vadd.f32 0.0, %v5707
        %v5709 = vpop.f32.mrb[0].mxu0
        %v5710 = vadd.f32 0.0, %v5709
        %5711 = vmatprep.mubr.bf16.mxu0 0
        %5712 = vmatmul.mubr.bf16.gmra.mrb[0].mxu0 %v5614
        %v5713 = vpop.f32.mrb[0].mxu0
        %v5714 = vadd.f32 0.0, %v5713
        %v5715 = vpop.f32.mrb[0].mxu0
        %v5716 = vadd.f32 0.0, %v5715
        %v5717 = vpop.f32.mrb[0].mxu0
        %v5718 = vadd.f32 0.0, %v5717
        %v5719 = vpop.f32.mrb[0].mxu0
        %v5720 = vadd.f32 0.0, %v5719
        %5721 = vmatprep.mubr.bf16.mxu0 0
        %5722 = vmatmul.mubr.bf16.gmra.mrb[0].mxu0 %v5617
        %v5723 = vpop.f32.mrb[0].mxu0
        %v5724 = vadd.f32 0.0, %v5723
        %v5725 = vpop.f32.mrb[0].mxu0
        %v5726 = vadd.f32 0.0, %v5725
        %v5727 = vpop.f32.mrb[0].mxu0
        %v5728 = vadd.f32 0.0, %v5727
        %v5729 = vpop.f32.mrb[0].mxu0
        %v5730 = vadd.f32 0.0, %v5729
        %5731 = vdwg.mxu0
        %v5732 = vrot.slane %v5654, 7
        %v5733 = vrot.slane %v5658, 7
        %v5734 = vrot.slane %v5664, 7
        %v5735 = vrot.slane %v5668, 7
        %v5736 = vrot.slane %v5674, 7
        %v5737 = vrot.slane %v5678, 7
        %v5738 = vrot.slane %v5684, 7
        %v5739 = vrot.slane %v5688, 7
        %v5740 = vrot.slane %v5694, 7
        %v5741 = vrot.slane %v5698, 7
        %v5742 = vrot.slane %v5704, 7
        %v5743 = vrot.slane %v5708, 7
        %v5744 = vrot.slane %v5714, 7
        %v5745 = vrot.slane %v5718, 7
        %v5746 = vrot.slane %v5724, 7
        %v5747 = vrot.slane %v5728, 7
        %v5748 = vsel %vm1724, %v5746, %v5747
        %v5749 = vsel %vm1724, %v5745, %v5746
        %v5750 = vsel %vm1724, %v5744, %v5745
        %v5751 = vsel %vm1724, %v5743, %v5744
        %v5752 = vsel %vm1724, %v5742, %v5743
        %v5753 = vsel %vm1724, %v5741, %v5742
        %v5754 = vsel %vm1724, %v5740, %v5741
        %v5755 = vsel %vm1724, %v5739, %v5740
        %v5756 = vsel %vm1724, %v5738, %v5739
        %v5757 = vsel %vm1724, %v5737, %v5738
        %v5758 = vsel %vm1724, %v5736, %v5737
        %v5759 = vsel %vm1724, %v5735, %v5736
        %v5760 = vsel %vm1724, %v5734, %v5735
        %v5761 = vsel %vm1724, %v5733, %v5734
        %v5762 = vsel %vm1724, %v5732, %v5733
        %v5763 = vsel %vm1724, %v5747, %v5732
        %v5764 = vmul.f32 %v5763, %v3387
        %v5765 = vmul.f32 %v5762, %v3392
        %v5766 = vmul.f32 %v5761, %v3397
        %v5767 = vmul.f32 %v5760, %v3402
        %v5768 = vmul.f32 %v5759, %v3407
        %v5769 = vmul.f32 %v5758, %v3412
        %v5770 = vmul.f32 %v5757, %v3417
        %v5771 = vmul.f32 %v5756, %v3422
        %v5772 = vmul.f32 %v5755, %v3427
        %v5773 = vmul.f32 %v5754, %v3432
        %v5774 = vmul.f32 %v5753, %v3437
        %v5775 = vmul.f32 %v5752, %v3442
        %v5776 = vmul.f32 %v5751, %v3447
        %v5777 = vmul.f32 %v5750, %v3452
        %v5778 = vmul.f32 %v5749, %v3457
        %v5779 = vmul.f32 %v5748, %v3462
        %v5780 = vrot.slane %v5656, 1
        %v5781 = vrot.slane %v5660, 1
        %v5782 = vrot.slane %v5666, 1
        %v5783 = vrot.slane %v5670, 1
        %v5784 = vrot.slane %v5676, 1
        %v5785 = vrot.slane %v5680, 1
        %v5786 = vrot.slane %v5686, 1
        %v5787 = vrot.slane %v5690, 1
        %v5788 = vrot.slane %v5696, 1
        %v5789 = vrot.slane %v5700, 1
        %v5790 = vrot.slane %v5706, 1
        %v5791 = vrot.slane %v5710, 1
        %v5792 = vrot.slane %v5716, 1
        %v5793 = vrot.slane %v5720, 1
        %v5794 = vrot.slane %v5726, 1
        %v5795 = vrot.slane %v5730, 1
        %v5796 = vsel %vm1757, %v5794, %v5795
        %v5797 = vsel %vm1757, %v5793, %v5794
        %v5798 = vsel %vm1757, %v5792, %v5793
        %v5799 = vsel %vm1757, %v5791, %v5792
        %v5800 = vsel %vm1757, %v5790, %v5791
        %v5801 = vsel %vm1757, %v5789, %v5790
        %v5802 = vsel %vm1757, %v5788, %v5789
        %v5803 = vsel %vm1757, %v5787, %v5788
        %v5804 = vsel %vm1757, %v5786, %v5787
        %v5805 = vsel %vm1757, %v5785, %v5786
        %v5806 = vsel %vm1757, %v5784, %v5785
        %v5807 = vsel %vm1757, %v5783, %v5784
        %v5808 = vsel %vm1757, %v5782, %v5783
        %v5809 = vsel %vm1757, %v5781, %v5782
        %v5810 = vsel %vm1757, %v5780, %v5781
        %v5811 = vsel %vm1757, %v5795, %v5780
        %v5812 = vmul.f32 %v5810, %v3514
        %v5813 = vmul.f32 %v5809, %v3518
        %v5814 = vmul.f32 %v5808, %v3522
        %v5815 = vmul.f32 %v5807, %v3526
        %v5816 = vmul.f32 %v5806, %v3530
        %v5817 = vmul.f32 %v5805, %v3534
        %v5818 = vmul.f32 %v5804, %v3538
        %v5819 = vmul.f32 %v5803, %v3542
        %v5820 = vmul.f32 %v5802, %v3546
        %v5821 = vmul.f32 %v5801, %v3550
        %v5822 = vmul.f32 %v5800, %v3554
        %v5823 = vmul.f32 %v5799, %v3558
        %v5824 = vmul.f32 %v5798, %v3562
        %v5825 = vmul.f32 %v5797, %v3566
        %v5826 = vmul.f32 %v5796, %v3570
        %v5827 = vmul.f32 %v5811, %v3574
        %5844 = vrot.lane.b32.xlu0 %v5654, 64
        %v5845 = vpop.permute.xlu0 %5844
        %5846 = vrot.lane.b32.xlu0 %v5658, 64
        %v5847 = vpop.permute.xlu0 %5846
        %5848 = vrot.lane.b32.xlu0 %v5664, 64
        %v5849 = vpop.permute.xlu0 %5848
        %5850 = vrot.lane.b32.xlu0 %v5668, 64
        %v5851 = vpop.permute.xlu0 %5850
        %5852 = vrot.lane.b32.xlu0 %v5674, 64
        %v5853 = vpop.permute.xlu0 %5852
        %5854 = vrot.lane.b32.xlu0 %v5678, 64
        %v5855 = vpop.permute.xlu0 %5854
        %5856 = vrot.lane.b32.xlu0 %v5684, 64
        %v5857 = vpop.permute.xlu0 %5856
        %5858 = vrot.lane.b32.xlu0 %v5688, 64
        %v5859 = vpop.permute.xlu0 %5858
        %5860 = vrot.lane.b32.xlu0 %v5694, 64
        %v5861 = vpop.permute.xlu0 %5860
        %5862 = vrot.lane.b32.xlu0 %v5698, 64
        %v5863 = vpop.permute.xlu0 %5862
        %5864 = vrot.lane.b32.xlu0 %v5704, 64
        %v5865 = vpop.permute.xlu0 %5864
        %5866 = vrot.lane.b32.xlu0 %v5708, 64
        %v5867 = vpop.permute.xlu0 %5866
        %5868 = vrot.lane.b32.xlu0 %v5714, 64
        %v5869 = vpop.permute.xlu0 %5868
        %5870 = vrot.lane.b32.xlu0 %v5718, 64
        %v5871 = vpop.permute.xlu0 %5870
        %5872 = vrot.lane.b32.xlu0 %v5724, 64
        %v5873 = vpop.permute.xlu0 %5872
        %5874 = vrot.lane.b32.xlu0 %v5728, 64
        %v5875 = vpop.permute.xlu0 %5874
        %v5892 = vadd.f32 %v5764, %v5845
        %v5893 = vadd.f32 %v5765, %v5847
        %v5894 = vadd.f32 %v5766, %v5849
        %v5895 = vadd.f32 %v5767, %v5851
        %v5896 = vadd.f32 %v5768, %v5853
        %v5897 = vadd.f32 %v5769, %v5855
        %v5898 = vadd.f32 %v5770, %v5857
        %v5899 = vadd.f32 %v5771, %v5859
        %v5900 = vadd.f32 %v5772, %v5861
        %v5901 = vadd.f32 %v5773, %v5863
        %v5902 = vadd.f32 %v5774, %v5865
        %v5903 = vadd.f32 %v5775, %v5867
        %v5904 = vadd.f32 %v5776, %v5869
        %v5905 = vadd.f32 %v5777, %v5871
        %v5906 = vadd.f32 %v5778, %v5873
        %v5907 = vadd.f32 %v5779, %v5875
        %v5908 = vadd.f32 %v5892, %v5812
        %v5909 = vadd.f32 %v5893, %v5813
        %v5910 = vadd.f32 %v5894, %v5814
        %v5911 = vadd.f32 %v5895, %v5815
        %v5912 = vadd.f32 %v5896, %v5816
        %v5913 = vadd.f32 %v5897, %v5817
        %v5914 = vadd.f32 %v5898, %v5818
        %v5915 = vadd.f32 %v5899, %v5819
        %v5916 = vadd.f32 %v5900, %v5820
        %v5917 = vadd.f32 %v5901, %v5821
        %v5918 = vadd.f32 %v5902, %v5822
        %v5919 = vadd.f32 %v5903, %v5823
        %v5920 = vadd.f32 %v5904, %v5824
        %v5921 = vadd.f32 %v5905, %v5825
        %v5922 = vadd.f32 %v5906, %v5826
        %v5923 = vadd.f32 %v5907, %v5827
        %v5924 = vlaneseq
        %v5925 = vshrl.u32 %v5924, 7
        %v5926 = vsub.s32 0, %v5925
        %v5927 = vrot.slane %v5538, %v5926
        %v5928 = vadd.f32 %v5908, %v5927
        %v5929 = vadd.f32 %v5909, %v5927
        %v5930 = vadd.f32 %v5910, %v5927
        %v5931 = vadd.f32 %v5911, %v5927
        %v5932 = vadd.f32 %v5912, %v5927
        %v5933 = vadd.f32 %v5913, %v5927
        %v5934 = vadd.f32 %v5914, %v5927
        %v5935 = vadd.f32 %v5915, %v5927
        %v5936 = vadd.f32 %v5916, %v5927
        %v5937 = vadd.f32 %v5917, %v5927
        %v5938 = vadd.f32 %v5918, %v5927
        %v5939 = vadd.f32 %v5919, %v5927
        %v5940 = vadd.f32 %v5920, %v5927
        %v5941 = vadd.f32 %v5921, %v5927
        %v5942 = vadd.f32 %v5922, %v5927
        %v5943 = vadd.f32 %v5923, %v5927
        %5960 = vrot.lane.b32.xlu0 %v5928, 64
        %v5961 = vpop.permute.xlu0 %5960
        %5962 = vrot.lane.b32.xlu0 %v5929, 64
        %v5963 = vpop.permute.xlu0 %5962
        %5964 = vrot.lane.b32.xlu0 %v5930, 64
        %v5965 = vpop.permute.xlu0 %5964
        %5966 = vrot.lane.b32.xlu0 %v5931, 64
        %v5967 = vpop.permute.xlu0 %5966
        %5968 = vrot.lane.b32.xlu0 %v5932, 64
        %v5969 = vpop.permute.xlu0 %5968
        %5970 = vrot.lane.b32.xlu0 %v5933, 64
        %v5971 = vpop.permute.xlu0 %5970
        %5972 = vrot.lane.b32.xlu0 %v5934, 64
        %v5973 = vpop.permute.xlu0 %5972
        %5974 = vrot.lane.b32.xlu0 %v5935, 64
        %v5975 = vpop.permute.xlu0 %5974
        %5976 = vrot.lane.b32.xlu0 %v5936, 64
        %v5977 = vpop.permute.xlu0 %5976
        %5978 = vrot.lane.b32.xlu0 %v5937, 64
        %v5979 = vpop.permute.xlu0 %5978
        %5980 = vrot.lane.b32.xlu0 %v5938, 64
        %v5981 = vpop.permute.xlu0 %5980
        %5982 = vrot.lane.b32.xlu0 %v5939, 64
        %v5983 = vpop.permute.xlu0 %5982
        %5984 = vrot.lane.b32.xlu0 %v5940, 64
        %v5985 = vpop.permute.xlu0 %5984
        %5986 = vrot.lane.b32.xlu0 %v5941, 64
        %v5987 = vpop.permute.xlu0 %5986
        %5988 = vrot.lane.b32.xlu0 %v5942, 64
        %v5989 = vpop.permute.xlu0 %5988
        %5990 = vrot.lane.b32.xlu0 %v5943, 64
        %v5991 = vpop.permute.xlu0 %5990
        %v6008 = vadd.f32 %v4838, %v5961
        %v6009 = vadd.f32 %v4839, %v5963
        %v6010 = vadd.f32 %v4840, %v5965
        %v6011 = vadd.f32 %v4841, %v5967
        %v6012 = vadd.f32 %v4842, %v5969
        %v6013 = vadd.f32 %v4843, %v5971
        %v6014 = vadd.f32 %v4844, %v5973
        %v6015 = vadd.f32 %v4845, %v5975
        %v6016 = vadd.f32 %v4846, %v5977
        %v6017 = vadd.f32 %v4847, %v5979
        %v6018 = vadd.f32 %v4848, %v5981
        %v6019 = vadd.f32 %v4849, %v5983
        %v6020 = vadd.f32 %v4850, %v5985
        %v6021 = vadd.f32 %v4851, %v5987
        %v6022 = vadd.f32 %v4852, %v5989
        %v6023 = vadd.f32 %v4853, %v5991
        %v6024 = vmul.f32 %v6008, 0.5
        %v6025 = vmul.f32 %v6009, 0.5
        %v6026 = vmul.f32 %v6010, 0.5
        %v6027 = vmul.f32 %v6011, 0.5
        %v6028 = vmul.f32 %v6012, 0.5
        %v6029 = vmul.f32 %v6013, 0.5
        %v6030 = vmul.f32 %v6014, 0.5
        %v6031 = vmul.f32 %v6015, 0.5
        %v6032 = vmul.f32 %v6016, 0.5
        %v6033 = vmul.f32 %v6017, 0.5
        %v6034 = vmul.f32 %v6018, 0.5
        %v6035 = vmul.f32 %v6019, 0.5
        %v6036 = vmul.f32 %v6020, 0.5
        %v6037 = vmul.f32 %v6021, 0.5
        %v6038 = vmul.f32 %v6022, 0.5
        %v6039 = vmul.f32 %v6023, 0.5
        %v6040 = vmul.f32 %v6008, 0.70710677
        %v6041 = vmul.f32 %v6009, 0.70710677
        %v6042 = vmul.f32 %v6010, 0.70710677
        %v6043 = vmul.f32 %v6011, 0.70710677
        %v6044 = vmul.f32 %v6012, 0.70710677
        %v6045 = vmul.f32 %v6013, 0.70710677
        %v6046 = vmul.f32 %v6014, 0.70710677
        %v6047 = vmul.f32 %v6015, 0.70710677
        %v6048 = vmul.f32 %v6016, 0.70710677
        %v6049 = vmul.f32 %v6017, 0.70710677
        %v6050 = vmul.f32 %v6018, 0.70710677
        %v6051 = vmul.f32 %v6019, 0.70710677
        %v6052 = vmul.f32 %v6020, 0.70710677
        %v6053 = vmul.f32 %v6021, 0.70710677
        %v6054 = vmul.f32 %v6022, 0.70710677
        %v6055 = vmul.f32 %v6023, 0.70710677
        %v6056 = verf.f32.pop %v6040
        %v6057 = verf.f32.pop %v6041
        %v6058 = verf.f32.pop %v6042
        %v6059 = verf.f32.pop %v6043
        %v6060 = verf.f32.pop %v6044
        %v6061 = verf.f32.pop %v6045
        %v6062 = verf.f32.pop %v6046
        %v6063 = verf.f32.pop %v6047
        %v6064 = verf.f32.pop %v6048
        %v6065 = verf.f32.pop %v6049
        %v6066 = verf.f32.pop %v6050
        %v6067 = verf.f32.pop %v6051
        %v6068 = verf.f32.pop %v6052
        %v6069 = verf.f32.pop %v6053
        %v6070 = verf.f32.pop %v6054
        %v6071 = verf.f32.pop %v6055
        %v6072 = vadd.f32 %v6056, 1.0
        %v6073 = vadd.f32 %v6057, 1.0
        %v6074 = vadd.f32 %v6058, 1.0
        %v6075 = vadd.f32 %v6059, 1.0
        %v6076 = vadd.f32 %v6060, 1.0
        %v6077 = vadd.f32 %v6061, 1.0
        %v6078 = vadd.f32 %v6062, 1.0
        %v6079 = vadd.f32 %v6063, 1.0
        %v6080 = vadd.f32 %v6064, 1.0
        %v6081 = vadd.f32 %v6065, 1.0
        %v6082 = vadd.f32 %v6066, 1.0
        %v6083 = vadd.f32 %v6067, 1.0
        %v6084 = vadd.f32 %v6068, 1.0
        %v6085 = vadd.f32 %v6069, 1.0
        %v6086 = vadd.f32 %v6070, 1.0
        %v6087 = vadd.f32 %v6071, 1.0
        %v6088 = vmul.f32 %v6024, %v6072
        %v6089 = vmul.f32 %v6025, %v6073
        %v6090 = vmul.f32 %v6026, %v6074
        %v6091 = vmul.f32 %v6027, %v6075
        %v6092 = vmul.f32 %v6028, %v6076
        %v6093 = vmul.f32 %v6029, %v6077
        %v6094 = vmul.f32 %v6030, %v6078
        %v6095 = vmul.f32 %v6031, %v6079
        %v6096 = vmul.f32 %v6032, %v6080
        %v6097 = vmul.f32 %v6033, %v6081
        %v6098 = vmul.f32 %v6034, %v6082
        %v6099 = vmul.f32 %v6035, %v6083
        %v6100 = vmul.f32 %v6036, %v6084
        %v6101 = vmul.f32 %v6037, %v6085
        %v6102 = vmul.f32 %v6038, %v6086
        %v6103 = vmul.f32 %v6039, %v6087
        %v6104 = vld [vmem:[%s18] sm:$0xff]
        %v6105 = vld [vmem:[%s18 + $0x8] sm:$0xff]
        %v6106 = vld [vmem:[%s18 + $0x10] sm:$0xff]
        %v6107 = vld [vmem:[%s18 + $0x18] sm:$0xff]
        %v6108 = vld [vmem:[%s18 + $0x20] sm:$0xff]
        %v6109 = vld [vmem:[%s18 + $0x28] sm:$0xff]
        %v6110 = vld [vmem:[%s18 + $0x30] sm:$0xff]
        %v6111 = vld [vmem:[%s18 + $0x38] sm:$0xff]
        %v6112 = vld [vmem:[%s18 + $0x40] sm:$0xff]
        %v6113 = vld [vmem:[%s18 + $0x48] sm:$0xff]
        %v6114 = vld [vmem:[%s18 + $0x50] sm:$0xff]
        %v6115 = vld [vmem:[%s18 + $0x58] sm:$0xff]
        %v6116 = vld [vmem:[%s18 + $0x60] sm:$0xff]
        %v6117 = vld [vmem:[%s18 + $0x68] sm:$0xff]
        %v6118 = vld [vmem:[%s18 + $0x70] sm:$0xff]
        %v6119 = vld [vmem:[%s18 + $0x78] sm:$0xff]
        %v6120 = vld [vmem:[%s18 + $0x80] sm:$0xff]
        %v6121 = vld [vmem:[%s18 + $0x88] sm:$0xff]
        %v6122 = vld [vmem:[%s18 + $0x90] sm:$0xff]
        %v6123 = vld [vmem:[%s18 + $0x98] sm:$0xff]
        %v6124 = vld [vmem:[%s18 + $0xa0] sm:$0xff]
        %v6125 = vld [vmem:[%s18 + $0xa8] sm:$0xff]
        %v6126 = vld [vmem:[%s18 + $0xb0] sm:$0xff]
        %v6127 = vld [vmem:[%s18 + $0xb8] sm:$0xff]
        %v6128 = vld [vmem:[%s18 + $0xc0] sm:$0xff]
        %v6129 = vld [vmem:[%s18 + $0xc8] sm:$0xff]
        %v6130 = vld [vmem:[%s18 + $0xd0] sm:$0xff]
        %v6131 = vld [vmem:[%s18 + $0xd8] sm:$0xff]
        %v6132 = vld [vmem:[%s18 + $0xe0] sm:$0xff]
        %v6133 = vld [vmem:[%s18 + $0xe8] sm:$0xff]
        %v6134 = vld [vmem:[%s18 + $0xf0] sm:$0xff]
        %v6135 = vld [vmem:[%s18 + $0xf8] sm:$0xff]
        %v6136 = vld [vmem:[%s18 + $0x100] sm:$0xff]
        %v6137 = vld [vmem:[%s18 + $0x108] sm:$0xff]
        %v6138 = vld [vmem:[%s18 + $0x110] sm:$0xff]
        %v6139 = vld [vmem:[%s18 + $0x118] sm:$0xff]
        %v6140 = vld [vmem:[%s18 + $0x120] sm:$0xff]
        %v6141 = vld [vmem:[%s18 + $0x128] sm:$0xff]
        %v6142 = vld [vmem:[%s18 + $0x130] sm:$0xff]
        %v6143 = vld [vmem:[%s18 + $0x138] sm:$0xff]
        %v6144 = vld [vmem:[%s18 + $0x140] sm:$0xff]
        %v6145 = vld [vmem:[%s18 + $0x148] sm:$0xff]
        %v6146 = vld [vmem:[%s18 + $0x150] sm:$0xff]
        %v6147 = vld [vmem:[%s18 + $0x158] sm:$0xff]
        %v6148 = vld [vmem:[%s18 + $0x160] sm:$0xff]
        %v6149 = vld [vmem:[%s18 + $0x168] sm:$0xff]
        %v6150 = vld [vmem:[%s18 + $0x170] sm:$0xff]
        %v6151 = vld [vmem:[%s18 + $0x178] sm:$0xff]
        %v6152 = vld [vmem:[%s18 + $0x180] sm:$0xff]
        %v6153 = vld [vmem:[%s18 + $0x188] sm:$0xff]
        %v6154 = vld [vmem:[%s18 + $0x190] sm:$0xff]
        %v6155 = vld [vmem:[%s18 + $0x198] sm:$0xff]
        %v6156 = vld [vmem:[%s18 + $0x1a0] sm:$0xff]
        %v6157 = vld [vmem:[%s18 + $0x1a8] sm:$0xff]
        %v6158 = vld [vmem:[%s18 + $0x1b0] sm:$0xff]
        %v6159 = vld [vmem:[%s18 + $0x1b8] sm:$0xff]
        %v6160 = vld [vmem:[%s18 + $0x1c0] sm:$0xff]
        %v6161 = vld [vmem:[%s18 + $0x1c8] sm:$0xff]
        %v6162 = vld [vmem:[%s18 + $0x1d0] sm:$0xff]
        %v6163 = vld [vmem:[%s18 + $0x1d8] sm:$0xff]
        %v6164 = vld [vmem:[%s18 + $0x1e0] sm:$0xff]
        %v6165 = vld [vmem:[%s18 + $0x1e8] sm:$0xff]
        %v6166 = vld [vmem:[%s18 + $0x1f0] sm:$0xff]
        %v6167 = vld [vmem:[%s18 + $0x1f8] sm:$0xff]
        %v6184 = vcombine.high %v6088, %v6088
        %v6186 = vunpack.c.l.s4 1966171168
        %v6187 = vunpack.c.0.s8 %v6186
        %v6188 = vlaneseq
        %v6189 = vshrl.u32 %v6188, 7
        %v6190 = vsub.s32 %v6187, %v6189
        %v6191 = vrot.slane %v6088, %v6190
        %v6193 = vunpack.c.l.s4 1966171168
        %v6194 = vunpack.c.0.s8 %v6193
        %v6195 = vlaneseq
        %v6196 = vshrl.u32 %v6195, 7
        %v6197 = vsub.s32 %v6194, %v6196
        %v6198 = vrot.slane %v6184, %v6197
        %v6199 = vcombine.high %v6191, %v6191
        %v6200 = vcombine.high %v6198, %v6198
        %v6202 = vunpack.c.l.s4 1966171168
        %v6203 = vunpack.c.0.s8 %v6202
        %v6204 = vlaneseq
        %v6205 = vshrl.u32 %v6204, 7
        %v6206 = vsub.s32 %v6203, %v6205
        %v6207 = vrot.slane %v6191, %v6206
        %v6209 = vunpack.c.l.s4 1966171168
        %v6210 = vunpack.c.0.s8 %v6209
        %v6211 = vlaneseq
        %v6212 = vshrl.u32 %v6211, 7
        %v6213 = vsub.s32 %v6210, %v6212
        %v6214 = vrot.slane %v6198, %v6213
        %v6216 = vunpack.c.l.s4 1966171168
        %v6217 = vunpack.c.0.s8 %v6216
        %v6218 = vlaneseq
        %v6219 = vshrl.u32 %v6218, 7
        %v6220 = vsub.s32 %v6217, %v6219
        %v6221 = vrot.slane %v6199, %v6220
        %v6223 = vunpack.c.l.s4 1966171168
        %v6224 = vunpack.c.0.s8 %v6223
        %v6225 = vlaneseq
        %v6226 = vshrl.u32 %v6225, 7
        %v6227 = vsub.s32 %v6224, %v6226
        %v6228 = vrot.slane %v6200, %v6227
        %v6229 = vcombine.high %v6207, %v6207
        %v6230 = vcombine.high %v6214, %v6214
        %v6231 = vcombine.high %v6221, %v6221
        %v6232 = vcombine.high %v6228, %v6228
        %v6233 = vcombine.high %v6089, %v6089
        %v6235 = vunpack.c.l.s4 1966171168
        %v6236 = vunpack.c.0.s8 %v6235
        %v6237 = vlaneseq
        %v6238 = vshrl.u32 %v6237, 7
        %v6239 = vsub.s32 %v6236, %v6238
        %v6240 = vrot.slane %v6089, %v6239
        %v6242 = vunpack.c.l.s4 1966171168
        %v6243 = vunpack.c.0.s8 %v6242
        %v6244 = vlaneseq
        %v6245 = vshrl.u32 %v6244, 7
        %v6246 = vsub.s32 %v6243, %v6245
        %v6247 = vrot.slane %v6233, %v6246
        %v6248 = vcombine.high %v6240, %v6240
        %v6249 = vcombine.high %v6247, %v6247
        %v6251 = vunpack.c.l.s4 1966171168
        %v6252 = vunpack.c.0.s8 %v6251
        %v6253 = vlaneseq
        %v6254 = vshrl.u32 %v6253, 7
        %v6255 = vsub.s32 %v6252, %v6254
        %v6256 = vrot.slane %v6240, %v6255
        %v6258 = vunpack.c.l.s4 1966171168
        %v6259 = vunpack.c.0.s8 %v6258
        %v6260 = vlaneseq
        %v6261 = vshrl.u32 %v6260, 7
        %v6262 = vsub.s32 %v6259, %v6261
        %v6263 = vrot.slane %v6247, %v6262
        %v6265 = vunpack.c.l.s4 1966171168
        %v6266 = vunpack.c.0.s8 %v6265
        %v6267 = vlaneseq
        %v6268 = vshrl.u32 %v6267, 7
        %v6269 = vsub.s32 %v6266, %v6268
        %v6270 = vrot.slane %v6248, %v6269
        %v6272 = vunpack.c.l.s4 1966171168
        %v6273 = vunpack.c.0.s8 %v6272
        %v6274 = vlaneseq
        %v6275 = vshrl.u32 %v6274, 7
        %v6276 = vsub.s32 %v6273, %v6275
        %v6277 = vrot.slane %v6249, %v6276
        %v6278 = vcombine.high %v6256, %v6256
        %v6279 = vcombine.high %v6263, %v6263
        %v6280 = vcombine.high %v6270, %v6270
        %v6281 = vcombine.high %v6277, %v6277
        %v6282 = vcombine.high %v6090, %v6090
        %v6284 = vunpack.c.l.s4 1966171168
        %v6285 = vunpack.c.0.s8 %v6284
        %v6286 = vlaneseq
        %v6287 = vshrl.u32 %v6286, 7
        %v6288 = vsub.s32 %v6285, %v6287
        %v6289 = vrot.slane %v6090, %v6288
        %v6291 = vunpack.c.l.s4 1966171168
        %v6292 = vunpack.c.0.s8 %v6291
        %v6293 = vlaneseq
        %v6294 = vshrl.u32 %v6293, 7
        %v6295 = vsub.s32 %v6292, %v6294
        %v6296 = vrot.slane %v6282, %v6295
        %v6297 = vcombine.high %v6289, %v6289
        %v6298 = vcombine.high %v6296, %v6296
        %v6300 = vunpack.c.l.s4 1966171168
        %v6301 = vunpack.c.0.s8 %v6300
        %v6302 = vlaneseq
        %v6303 = vshrl.u32 %v6302, 7
        %v6304 = vsub.s32 %v6301, %v6303
        %v6305 = vrot.slane %v6289, %v6304
        %v6307 = vunpack.c.l.s4 1966171168
        %v6308 = vunpack.c.0.s8 %v6307
        %v6309 = vlaneseq
        %v6310 = vshrl.u32 %v6309, 7
        %v6311 = vsub.s32 %v6308, %v6310
        %v6312 = vrot.slane %v6296, %v6311
        %v6314 = vunpack.c.l.s4 1966171168
        %v6315 = vunpack.c.0.s8 %v6314
        %v6316 = vlaneseq
        %v6317 = vshrl.u32 %v6316, 7
        %v6318 = vsub.s32 %v6315, %v6317
        %v6319 = vrot.slane %v6297, %v6318
        %v6321 = vunpack.c.l.s4 1966171168
        %v6322 = vunpack.c.0.s8 %v6321
        %v6323 = vlaneseq
        %v6324 = vshrl.u32 %v6323, 7
        %v6325 = vsub.s32 %v6322, %v6324
        %v6326 = vrot.slane %v6298, %v6325
        %v6327 = vcombine.high %v6305, %v6305
        %v6328 = vcombine.high %v6312, %v6312
        %v6329 = vcombine.high %v6319, %v6319
        %v6330 = vcombine.high %v6326, %v6326
        %v6331 = vcombine.high %v6091, %v6091
        %v6333 = vunpack.c.l.s4 1966171168
        %v6334 = vunpack.c.0.s8 %v6333
        %v6335 = vlaneseq
        %v6336 = vshrl.u32 %v6335, 7
        %v6337 = vsub.s32 %v6334, %v6336
        %v6338 = vrot.slane %v6091, %v6337
        %v6340 = vunpack.c.l.s4 1966171168
        %v6341 = vunpack.c.0.s8 %v6340
        %v6342 = vlaneseq
        %v6343 = vshrl.u32 %v6342, 7
        %v6344 = vsub.s32 %v6341, %v6343
        %v6345 = vrot.slane %v6331, %v6344
        %v6346 = vcombine.high %v6338, %v6338
        %v6347 = vcombine.high %v6345, %v6345
        %v6349 = vunpack.c.l.s4 1966171168
        %v6350 = vunpack.c.0.s8 %v6349
        %v6351 = vlaneseq
        %v6352 = vshrl.u32 %v6351, 7
        %v6353 = vsub.s32 %v6350, %v6352
        %v6354 = vrot.slane %v6338, %v6353
        %v6356 = vunpack.c.l.s4 1966171168
        %v6357 = vunpack.c.0.s8 %v6356
        %v6358 = vlaneseq
        %v6359 = vshrl.u32 %v6358, 7
        %v6360 = vsub.s32 %v6357, %v6359
        %v6361 = vrot.slane %v6345, %v6360
        %v6363 = vunpack.c.l.s4 1966171168
        %v6364 = vunpack.c.0.s8 %v6363
        %v6365 = vlaneseq
        %v6366 = vshrl.u32 %v6365, 7
        %v6367 = vsub.s32 %v6364, %v6366
        %v6368 = vrot.slane %v6346, %v6367
        %v6370 = vunpack.c.l.s4 1966171168
        %v6371 = vunpack.c.0.s8 %v6370
        %v6372 = vlaneseq
        %v6373 = vshrl.u32 %v6372, 7
        %v6374 = vsub.s32 %v6371, %v6373
        %v6375 = vrot.slane %v6347, %v6374
        %v6376 = vcombine.high %v6354, %v6354
        %v6377 = vcombine.high %v6361, %v6361
        %v6378 = vcombine.high %v6368, %v6368
        %v6379 = vcombine.high %v6375, %v6375
        %v6380 = vcombine.high %v6092, %v6092
        %v6382 = vunpack.c.l.s4 1966171168
        %v6383 = vunpack.c.0.s8 %v6382
        %v6384 = vlaneseq
        %v6385 = vshrl.u32 %v6384, 7
        %v6386 = vsub.s32 %v6383, %v6385
        %v6387 = vrot.slane %v6092, %v6386
        %v6389 = vunpack.c.l.s4 1966171168
        %v6390 = vunpack.c.0.s8 %v6389
        %v6391 = vlaneseq
        %v6392 = vshrl.u32 %v6391, 7
        %v6393 = vsub.s32 %v6390, %v6392
        %v6394 = vrot.slane %v6380, %v6393
        %v6395 = vcombine.high %v6387, %v6387
        %v6396 = vcombine.high %v6394, %v6394
        %v6398 = vunpack.c.l.s4 1966171168
        %v6399 = vunpack.c.0.s8 %v6398
        %v6400 = vlaneseq
        %v6401 = vshrl.u32 %v6400, 7
        %v6402 = vsub.s32 %v6399, %v6401
        %v6403 = vrot.slane %v6387, %v6402
        %v6405 = vunpack.c.l.s4 1966171168
        %v6406 = vunpack.c.0.s8 %v6405
        %v6407 = vlaneseq
        %v6408 = vshrl.u32 %v6407, 7
        %v6409 = vsub.s32 %v6406, %v6408
        %v6410 = vrot.slane %v6394, %v6409
        %v6412 = vunpack.c.l.s4 1966171168
        %v6413 = vunpack.c.0.s8 %v6412
        %v6414 = vlaneseq
        %v6415 = vshrl.u32 %v6414, 7
        %v6416 = vsub.s32 %v6413, %v6415
        %v6417 = vrot.slane %v6395, %v6416
        %v6419 = vunpack.c.l.s4 1966171168
        %v6420 = vunpack.c.0.s8 %v6419
        %v6421 = vlaneseq
        %v6422 = vshrl.u32 %v6421, 7
        %v6423 = vsub.s32 %v6420, %v6422
        %v6424 = vrot.slane %v6396, %v6423
        %v6425 = vcombine.high %v6403, %v6403
        %v6426 = vcombine.high %v6410, %v6410
        %v6427 = vcombine.high %v6417, %v6417
        %v6428 = vcombine.high %v6424, %v6424
        %v6429 = vcombine.high %v6093, %v6093
        %v6431 = vunpack.c.l.s4 1966171168
        %v6432 = vunpack.c.0.s8 %v6431
        %v6433 = vlaneseq
        %v6434 = vshrl.u32 %v6433, 7
        %v6435 = vsub.s32 %v6432, %v6434
        %v6436 = vrot.slane %v6093, %v6435
        %v6438 = vunpack.c.l.s4 1966171168
        %v6439 = vunpack.c.0.s8 %v6438
        %v6440 = vlaneseq
        %v6441 = vshrl.u32 %v6440, 7
        %v6442 = vsub.s32 %v6439, %v6441
        %v6443 = vrot.slane %v6429, %v6442
        %v6444 = vcombine.high %v6436, %v6436
        %v6445 = vcombine.high %v6443, %v6443
        %v6447 = vunpack.c.l.s4 1966171168
        %v6448 = vunpack.c.0.s8 %v6447
        %v6449 = vlaneseq
        %v6450 = vshrl.u32 %v6449, 7
        %v6451 = vsub.s32 %v6448, %v6450
        %v6452 = vrot.slane %v6436, %v6451
        %v6454 = vunpack.c.l.s4 1966171168
        %v6455 = vunpack.c.0.s8 %v6454
        %v6456 = vlaneseq
        %v6457 = vshrl.u32 %v6456, 7
        %v6458 = vsub.s32 %v6455, %v6457
        %v6459 = vrot.slane %v6443, %v6458
        %v6461 = vunpack.c.l.s4 1966171168
        %v6462 = vunpack.c.0.s8 %v6461
        %v6463 = vlaneseq
        %v6464 = vshrl.u32 %v6463, 7
        %v6465 = vsub.s32 %v6462, %v6464
        %v6466 = vrot.slane %v6444, %v6465
        %v6468 = vunpack.c.l.s4 1966171168
        %v6469 = vunpack.c.0.s8 %v6468
        %v6470 = vlaneseq
        %v6471 = vshrl.u32 %v6470, 7
        %v6472 = vsub.s32 %v6469, %v6471
        %v6473 = vrot.slane %v6445, %v6472
        %v6474 = vcombine.high %v6452, %v6452
        %v6475 = vcombine.high %v6459, %v6459
        %v6476 = vcombine.high %v6466, %v6466
        %v6477 = vcombine.high %v6473, %v6473
        %v6478 = vcombine.high %v6094, %v6094
        %v6480 = vunpack.c.l.s4 1966171168
        %v6481 = vunpack.c.0.s8 %v6480
        %v6482 = vlaneseq
        %v6483 = vshrl.u32 %v6482, 7
        %v6484 = vsub.s32 %v6481, %v6483
        %v6485 = vrot.slane %v6094, %v6484
        %v6487 = vunpack.c.l.s4 1966171168
        %v6488 = vunpack.c.0.s8 %v6487
        %v6489 = vlaneseq
        %v6490 = vshrl.u32 %v6489, 7
        %v6491 = vsub.s32 %v6488, %v6490
        %v6492 = vrot.slane %v6478, %v6491
        %v6493 = vcombine.high %v6485, %v6485
        %v6494 = vcombine.high %v6492, %v6492
        %v6496 = vunpack.c.l.s4 1966171168
        %v6497 = vunpack.c.0.s8 %v6496
        %v6498 = vlaneseq
        %v6499 = vshrl.u32 %v6498, 7
        %v6500 = vsub.s32 %v6497, %v6499
        %v6501 = vrot.slane %v6485, %v6500
        %v6503 = vunpack.c.l.s4 1966171168
        %v6504 = vunpack.c.0.s8 %v6503
        %v6505 = vlaneseq
        %v6506 = vshrl.u32 %v6505, 7
        %v6507 = vsub.s32 %v6504, %v6506
        %v6508 = vrot.slane %v6492, %v6507
        %v6510 = vunpack.c.l.s4 1966171168
        %v6511 = vunpack.c.0.s8 %v6510
        %v6512 = vlaneseq
        %v6513 = vshrl.u32 %v6512, 7
        %v6514 = vsub.s32 %v6511, %v6513
        %v6515 = vrot.slane %v6493, %v6514
        %v6517 = vunpack.c.l.s4 1966171168
        %v6518 = vunpack.c.0.s8 %v6517
        %v6519 = vlaneseq
        %v6520 = vshrl.u32 %v6519, 7
        %v6521 = vsub.s32 %v6518, %v6520
        %v6522 = vrot.slane %v6494, %v6521
        %v6523 = vcombine.high %v6501, %v6501
        %v6524 = vcombine.high %v6508, %v6508
        %v6525 = vcombine.high %v6515, %v6515
        %v6526 = vcombine.high %v6522, %v6522
        %v6527 = vcombine.high %v6095, %v6095
        %v6529 = vunpack.c.l.s4 1966171168
        %v6530 = vunpack.c.0.s8 %v6529
        %v6531 = vlaneseq
        %v6532 = vshrl.u32 %v6531, 7
        %v6533 = vsub.s32 %v6530, %v6532
        %v6534 = vrot.slane %v6095, %v6533
        %v6536 = vunpack.c.l.s4 1966171168
        %v6537 = vunpack.c.0.s8 %v6536
        %v6538 = vlaneseq
        %v6539 = vshrl.u32 %v6538, 7
        %v6540 = vsub.s32 %v6537, %v6539
        %v6541 = vrot.slane %v6527, %v6540
        %v6542 = vcombine.high %v6534, %v6534
        %v6543 = vcombine.high %v6541, %v6541
        %v6545 = vunpack.c.l.s4 1966171168
        %v6546 = vunpack.c.0.s8 %v6545
        %v6547 = vlaneseq
        %v6548 = vshrl.u32 %v6547, 7
        %v6549 = vsub.s32 %v6546, %v6548
        %v6550 = vrot.slane %v6534, %v6549
        %v6552 = vunpack.c.l.s4 1966171168
        %v6553 = vunpack.c.0.s8 %v6552
        %v6554 = vlaneseq
        %v6555 = vshrl.u32 %v6554, 7
        %v6556 = vsub.s32 %v6553, %v6555
        %v6557 = vrot.slane %v6541, %v6556
        %v6559 = vunpack.c.l.s4 1966171168
        %v6560 = vunpack.c.0.s8 %v6559
        %v6561 = vlaneseq
        %v6562 = vshrl.u32 %v6561, 7
        %v6563 = vsub.s32 %v6560, %v6562
        %v6564 = vrot.slane %v6542, %v6563
        %v6566 = vunpack.c.l.s4 1966171168
        %v6567 = vunpack.c.0.s8 %v6566
        %v6568 = vlaneseq
        %v6569 = vshrl.u32 %v6568, 7
        %v6570 = vsub.s32 %v6567, %v6569
        %v6571 = vrot.slane %v6543, %v6570
        %v6572 = vcombine.high %v6550, %v6550
        %v6573 = vcombine.high %v6557, %v6557
        %v6574 = vcombine.high %v6564, %v6564
        %v6575 = vcombine.high %v6571, %v6571
        %v6576 = vcombine.high %v6096, %v6096
        %v6578 = vunpack.c.l.s4 1966171168
        %v6579 = vunpack.c.0.s8 %v6578
        %v6580 = vlaneseq
        %v6581 = vshrl.u32 %v6580, 7
        %v6582 = vsub.s32 %v6579, %v6581
        %v6583 = vrot.slane %v6096, %v6582
        %v6585 = vunpack.c.l.s4 1966171168
        %v6586 = vunpack.c.0.s8 %v6585
        %v6587 = vlaneseq
        %v6588 = vshrl.u32 %v6587, 7
        %v6589 = vsub.s32 %v6586, %v6588
        %v6590 = vrot.slane %v6576, %v6589
        %v6591 = vcombine.high %v6583, %v6583
        %v6592 = vcombine.high %v6590, %v6590
        %v6594 = vunpack.c.l.s4 1966171168
        %v6595 = vunpack.c.0.s8 %v6594
        %v6596 = vlaneseq
        %v6597 = vshrl.u32 %v6596, 7
        %v6598 = vsub.s32 %v6595, %v6597
        %v6599 = vrot.slane %v6583, %v6598
        %v6601 = vunpack.c.l.s4 1966171168
        %v6602 = vunpack.c.0.s8 %v6601
        %v6603 = vlaneseq
        %v6604 = vshrl.u32 %v6603, 7
        %v6605 = vsub.s32 %v6602, %v6604
        %v6606 = vrot.slane %v6590, %v6605
        %v6608 = vunpack.c.l.s4 1966171168
        %v6609 = vunpack.c.0.s8 %v6608
        %v6610 = vlaneseq
        %v6611 = vshrl.u32 %v6610, 7
        %v6612 = vsub.s32 %v6609, %v6611
        %v6613 = vrot.slane %v6591, %v6612
        %v6615 = vunpack.c.l.s4 1966171168
        %v6616 = vunpack.c.0.s8 %v6615
        %v6617 = vlaneseq
        %v6618 = vshrl.u32 %v6617, 7
        %v6619 = vsub.s32 %v6616, %v6618
        %v6620 = vrot.slane %v6592, %v6619
        %v6621 = vcombine.high %v6599, %v6599
        %v6622 = vcombine.high %v6606, %v6606
        %v6623 = vcombine.high %v6613, %v6613
        %v6624 = vcombine.high %v6620, %v6620
        %v6625 = vcombine.high %v6097, %v6097
        %v6627 = vunpack.c.l.s4 1966171168
        %v6628 = vunpack.c.0.s8 %v6627
        %v6629 = vlaneseq
        %v6630 = vshrl.u32 %v6629, 7
        %v6631 = vsub.s32 %v6628, %v6630
        %v6632 = vrot.slane %v6097, %v6631
        %v6634 = vunpack.c.l.s4 1966171168
        %v6635 = vunpack.c.0.s8 %v6634
        %v6636 = vlaneseq
        %v6637 = vshrl.u32 %v6636, 7
        %v6638 = vsub.s32 %v6635, %v6637
        %v6639 = vrot.slane %v6625, %v6638
        %v6640 = vcombine.high %v6632, %v6632
        %v6641 = vcombine.high %v6639, %v6639
        %v6643 = vunpack.c.l.s4 1966171168
        %v6644 = vunpack.c.0.s8 %v6643
        %v6645 = vlaneseq
        %v6646 = vshrl.u32 %v6645, 7
        %v6647 = vsub.s32 %v6644, %v6646
        %v6648 = vrot.slane %v6632, %v6647
        %v6650 = vunpack.c.l.s4 1966171168
        %v6651 = vunpack.c.0.s8 %v6650
        %v6652 = vlaneseq
        %v6653 = vshrl.u32 %v6652, 7
        %v6654 = vsub.s32 %v6651, %v6653
        %v6655 = vrot.slane %v6639, %v6654
        %v6657 = vunpack.c.l.s4 1966171168
        %v6658 = vunpack.c.0.s8 %v6657
        %v6659 = vlaneseq
        %v6660 = vshrl.u32 %v6659, 7
        %v6661 = vsub.s32 %v6658, %v6660
        %v6662 = vrot.slane %v6640, %v6661
        %v6664 = vunpack.c.l.s4 1966171168
        %v6665 = vunpack.c.0.s8 %v6664
        %v6666 = vlaneseq
        %v6667 = vshrl.u32 %v6666, 7
        %v6668 = vsub.s32 %v6665, %v6667
        %v6669 = vrot.slane %v6641, %v6668
        %v6670 = vcombine.high %v6648, %v6648
        %v6671 = vcombine.high %v6655, %v6655
        %v6672 = vcombine.high %v6662, %v6662
        %v6673 = vcombine.high %v6669, %v6669
        %v6674 = vcombine.high %v6098, %v6098
        %v6676 = vunpack.c.l.s4 1966171168
        %v6677 = vunpack.c.0.s8 %v6676
        %v6678 = vlaneseq
        %v6679 = vshrl.u32 %v6678, 7
        %v6680 = vsub.s32 %v6677, %v6679
        %v6681 = vrot.slane %v6098, %v6680
        %v6683 = vunpack.c.l.s4 1966171168
        %v6684 = vunpack.c.0.s8 %v6683
        %v6685 = vlaneseq
        %v6686 = vshrl.u32 %v6685, 7
        %v6687 = vsub.s32 %v6684, %v6686
        %v6688 = vrot.slane %v6674, %v6687
        %v6689 = vcombine.high %v6681, %v6681
        %v6690 = vcombine.high %v6688, %v6688
        %v6692 = vunpack.c.l.s4 1966171168
        %v6693 = vunpack.c.0.s8 %v6692
        %v6694 = vlaneseq
        %v6695 = vshrl.u32 %v6694, 7
        %v6696 = vsub.s32 %v6693, %v6695
        %v6697 = vrot.slane %v6681, %v6696
        %v6699 = vunpack.c.l.s4 1966171168
        %v6700 = vunpack.c.0.s8 %v6699
        %v6701 = vlaneseq
        %v6702 = vshrl.u32 %v6701, 7
        %v6703 = vsub.s32 %v6700, %v6702
        %v6704 = vrot.slane %v6688, %v6703
        %v6706 = vunpack.c.l.s4 1966171168
        %v6707 = vunpack.c.0.s8 %v6706
        %v6708 = vlaneseq
        %v6709 = vshrl.u32 %v6708, 7
        %v6710 = vsub.s32 %v6707, %v6709
        %v6711 = vrot.slane %v6689, %v6710
        %v6713 = vunpack.c.l.s4 1966171168
        %v6714 = vunpack.c.0.s8 %v6713
        %v6715 = vlaneseq
        %v6716 = vshrl.u32 %v6715, 7
        %v6717 = vsub.s32 %v6714, %v6716
        %v6718 = vrot.slane %v6690, %v6717
        %v6719 = vcombine.high %v6697, %v6697
        %v6720 = vcombine.high %v6704, %v6704
        %v6721 = vcombine.high %v6711, %v6711
        %v6722 = vcombine.high %v6718, %v6718
        %v6723 = vcombine.high %v6099, %v6099
        %v6725 = vunpack.c.l.s4 1966171168
        %v6726 = vunpack.c.0.s8 %v6725
        %v6727 = vlaneseq
        %v6728 = vshrl.u32 %v6727, 7
        %v6729 = vsub.s32 %v6726, %v6728
        %v6730 = vrot.slane %v6099, %v6729
        %v6732 = vunpack.c.l.s4 1966171168
        %v6733 = vunpack.c.0.s8 %v6732
        %v6734 = vlaneseq
        %v6735 = vshrl.u32 %v6734, 7
        %v6736 = vsub.s32 %v6733, %v6735
        %v6737 = vrot.slane %v6723, %v6736
        %v6738 = vcombine.high %v6730, %v6730
        %v6739 = vcombine.high %v6737, %v6737
        %v6741 = vunpack.c.l.s4 1966171168
        %v6742 = vunpack.c.0.s8 %v6741
        %v6743 = vlaneseq
        %v6744 = vshrl.u32 %v6743, 7
        %v6745 = vsub.s32 %v6742, %v6744
        %v6746 = vrot.slane %v6730, %v6745
        %v6748 = vunpack.c.l.s4 1966171168
        %v6749 = vunpack.c.0.s8 %v6748
        %v6750 = vlaneseq
        %v6751 = vshrl.u32 %v6750, 7
        %v6752 = vsub.s32 %v6749, %v6751
        %v6753 = vrot.slane %v6737, %v6752
        %v6755 = vunpack.c.l.s4 1966171168
        %v6756 = vunpack.c.0.s8 %v6755
        %v6757 = vlaneseq
        %v6758 = vshrl.u32 %v6757, 7
        %v6759 = vsub.s32 %v6756, %v6758
        %v6760 = vrot.slane %v6738, %v6759
        %v6762 = vunpack.c.l.s4 1966171168
        %v6763 = vunpack.c.0.s8 %v6762
        %v6764 = vlaneseq
        %v6765 = vshrl.u32 %v6764, 7
        %v6766 = vsub.s32 %v6763, %v6765
        %v6767 = vrot.slane %v6739, %v6766
        %v6768 = vcombine.high %v6746, %v6746
        %v6769 = vcombine.high %v6753, %v6753
        %v6770 = vcombine.high %v6760, %v6760
        %v6771 = vcombine.high %v6767, %v6767
        %v6772 = vcombine.high %v6100, %v6100
        %v6774 = vunpack.c.l.s4 1966171168
        %v6775 = vunpack.c.0.s8 %v6774
        %v6776 = vlaneseq
        %v6777 = vshrl.u32 %v6776, 7
        %v6778 = vsub.s32 %v6775, %v6777
        %v6779 = vrot.slane %v6100, %v6778
        %v6781 = vunpack.c.l.s4 1966171168
        %v6782 = vunpack.c.0.s8 %v6781
        %v6783 = vlaneseq
        %v6784 = vshrl.u32 %v6783, 7
        %v6785 = vsub.s32 %v6782, %v6784
        %v6786 = vrot.slane %v6772, %v6785
        %v6787 = vcombine.high %v6779, %v6779
        %v6788 = vcombine.high %v6786, %v6786
        %v6790 = vunpack.c.l.s4 1966171168
        %v6791 = vunpack.c.0.s8 %v6790
        %v6792 = vlaneseq
        %v6793 = vshrl.u32 %v6792, 7
        %v6794 = vsub.s32 %v6791, %v6793
        %v6795 = vrot.slane %v6779, %v6794
        %v6797 = vunpack.c.l.s4 1966171168
        %v6798 = vunpack.c.0.s8 %v6797
        %v6799 = vlaneseq
        %v6800 = vshrl.u32 %v6799, 7
        %v6801 = vsub.s32 %v6798, %v6800
        %v6802 = vrot.slane %v6786, %v6801
        %v6804 = vunpack.c.l.s4 1966171168
        %v6805 = vunpack.c.0.s8 %v6804
        %v6806 = vlaneseq
        %v6807 = vshrl.u32 %v6806, 7
        %v6808 = vsub.s32 %v6805, %v6807
        %v6809 = vrot.slane %v6787, %v6808
        %v6811 = vunpack.c.l.s4 1966171168
        %v6812 = vunpack.c.0.s8 %v6811
        %v6813 = vlaneseq
        %v6814 = vshrl.u32 %v6813, 7
        %v6815 = vsub.s32 %v6812, %v6814
        %v6816 = vrot.slane %v6788, %v6815
        %v6817 = vcombine.high %v6795, %v6795
        %v6818 = vcombine.high %v6802, %v6802
        %v6819 = vcombine.high %v6809, %v6809
        %v6820 = vcombine.high %v6816, %v6816
        %v6821 = vcombine.high %v6101, %v6101
        %v6823 = vunpack.c.l.s4 1966171168
        %v6824 = vunpack.c.0.s8 %v6823
        %v6825 = vlaneseq
        %v6826 = vshrl.u32 %v6825, 7
        %v6827 = vsub.s32 %v6824, %v6826
        %v6828 = vrot.slane %v6101, %v6827
        %v6830 = vunpack.c.l.s4 1966171168
        %v6831 = vunpack.c.0.s8 %v6830
        %v6832 = vlaneseq
        %v6833 = vshrl.u32 %v6832, 7
        %v6834 = vsub.s32 %v6831, %v6833
        %v6835 = vrot.slane %v6821, %v6834
        %v6836 = vcombine.high %v6828, %v6828
        %v6837 = vcombine.high %v6835, %v6835
        %v6839 = vunpack.c.l.s4 1966171168
        %v6840 = vunpack.c.0.s8 %v6839
        %v6841 = vlaneseq
        %v6842 = vshrl.u32 %v6841, 7
        %v6843 = vsub.s32 %v6840, %v6842
        %v6844 = vrot.slane %v6828, %v6843
        %v6846 = vunpack.c.l.s4 1966171168
        %v6847 = vunpack.c.0.s8 %v6846
        %v6848 = vlaneseq
        %v6849 = vshrl.u32 %v6848, 7
        %v6850 = vsub.s32 %v6847, %v6849
        %v6851 = vrot.slane %v6835, %v6850
        %v6853 = vunpack.c.l.s4 1966171168
        %v6854 = vunpack.c.0.s8 %v6853
        %v6855 = vlaneseq
        %v6856 = vshrl.u32 %v6855, 7
        %v6857 = vsub.s32 %v6854, %v6856
        %v6858 = vrot.slane %v6836, %v6857
        %v6860 = vunpack.c.l.s4 1966171168
        %v6861 = vunpack.c.0.s8 %v6860
        %v6862 = vlaneseq
        %v6863 = vshrl.u32 %v6862, 7
        %v6864 = vsub.s32 %v6861, %v6863
        %v6865 = vrot.slane %v6837, %v6864
        %v6866 = vcombine.high %v6844, %v6844
        %v6867 = vcombine.high %v6851, %v6851
        %v6868 = vcombine.high %v6858, %v6858
        %v6869 = vcombine.high %v6865, %v6865
        %v6870 = vcombine.high %v6102, %v6102
        %v6872 = vunpack.c.l.s4 1966171168
        %v6873 = vunpack.c.0.s8 %v6872
        %v6874 = vlaneseq
        %v6875 = vshrl.u32 %v6874, 7
        %v6876 = vsub.s32 %v6873, %v6875
        %v6877 = vrot.slane %v6102, %v6876
        %v6879 = vunpack.c.l.s4 1966171168
        %v6880 = vunpack.c.0.s8 %v6879
        %v6881 = vlaneseq
        %v6882 = vshrl.u32 %v6881, 7
        %v6883 = vsub.s32 %v6880, %v6882
        %v6884 = vrot.slane %v6870, %v6883
        %v6885 = vcombine.high %v6877, %v6877
        %v6886 = vcombine.high %v6884, %v6884
        %v6888 = vunpack.c.l.s4 1966171168
        %v6889 = vunpack.c.0.s8 %v6888
        %v6890 = vlaneseq
        %v6891 = vshrl.u32 %v6890, 7
        %v6892 = vsub.s32 %v6889, %v6891
        %v6893 = vrot.slane %v6877, %v6892
        %v6895 = vunpack.c.l.s4 1966171168
        %v6896 = vunpack.c.0.s8 %v6895
        %v6897 = vlaneseq
        %v6898 = vshrl.u32 %v6897, 7
        %v6899 = vsub.s32 %v6896, %v6898
        %v6900 = vrot.slane %v6884, %v6899
        %v6902 = vunpack.c.l.s4 1966171168
        %v6903 = vunpack.c.0.s8 %v6902
        %v6904 = vlaneseq
        %v6905 = vshrl.u32 %v6904, 7
        %v6906 = vsub.s32 %v6903, %v6905
        %v6907 = vrot.slane %v6885, %v6906
        %v6909 = vunpack.c.l.s4 1966171168
        %v6910 = vunpack.c.0.s8 %v6909
        %v6911 = vlaneseq
        %v6912 = vshrl.u32 %v6911, 7
        %v6913 = vsub.s32 %v6910, %v6912
        %v6914 = vrot.slane %v6886, %v6913
        %v6915 = vcombine.high %v6893, %v6893
        %v6916 = vcombine.high %v6900, %v6900
        %v6917 = vcombine.high %v6907, %v6907
        %v6918 = vcombine.high %v6914, %v6914
        %v6919 = vcombine.high %v6103, %v6103
        %v6921 = vunpack.c.l.s4 1966171168
        %v6922 = vunpack.c.0.s8 %v6921
        %v6923 = vlaneseq
        %v6924 = vshrl.u32 %v6923, 7
        %v6925 = vsub.s32 %v6922, %v6924
        %v6926 = vrot.slane %v6103, %v6925
        %v6928 = vunpack.c.l.s4 1966171168
        %v6929 = vunpack.c.0.s8 %v6928
        %v6930 = vlaneseq
        %v6931 = vshrl.u32 %v6930, 7
        %v6932 = vsub.s32 %v6929, %v6931
        %v6933 = vrot.slane %v6919, %v6932
        %v6934 = vcombine.high %v6926, %v6926
        %v6935 = vcombine.high %v6933, %v6933
        %v6937 = vunpack.c.l.s4 1966171168
        %v6938 = vunpack.c.0.s8 %v6937
        %v6939 = vlaneseq
        %v6940 = vshrl.u32 %v6939, 7
        %v6941 = vsub.s32 %v6938, %v6940
        %v6942 = vrot.slane %v6926, %v6941
        %v6944 = vunpack.c.l.s4 1966171168
        %v6945 = vunpack.c.0.s8 %v6944
        %v6946 = vlaneseq
        %v6947 = vshrl.u32 %v6946, 7
        %v6948 = vsub.s32 %v6945, %v6947
        %v6949 = vrot.slane %v6933, %v6948
        %v6951 = vunpack.c.l.s4 1966171168
        %v6952 = vunpack.c.0.s8 %v6951
        %v6953 = vlaneseq
        %v6954 = vshrl.u32 %v6953, 7
        %v6955 = vsub.s32 %v6952, %v6954
        %v6956 = vrot.slane %v6934, %v6955
        %v6958 = vunpack.c.l.s4 1966171168
        %v6959 = vunpack.c.0.s8 %v6958
        %v6960 = vlaneseq
        %v6961 = vshrl.u32 %v6960, 7
        %v6962 = vsub.s32 %v6959, %v6961
        %v6963 = vrot.slane %v6935, %v6962
        %v6964 = vcombine.high %v6942, %v6942
        %v6965 = vcombine.high %v6949, %v6949
        %v6966 = vcombine.high %v6956, %v6956
        %v6967 = vcombine.high %v6963, %v6963
        %v6968 = vlaneseq
        %v6969 = vshrl.u32 %v6968, 7
        %v6970 = vsub.s32 0, %v6969
        %v6971 = vrot.slane %v6207, %v6970
        %v6972 = vlaneseq
        %v6973 = vshrl.u32 %v6972, 7
        %v6974 = vsub.s32 0, %v6973
        %v6975 = vrot.slane %v6221, %v6974
        %v6976 = vlaneseq
        %v6977 = vshrl.u32 %v6976, 7
        %v6978 = vsub.s32 0, %v6977
        %v6979 = vrot.slane %v6229, %v6978
        %v6980 = vlaneseq
        %v6981 = vshrl.u32 %v6980, 7
        %v6982 = vsub.s32 0, %v6981
        %v6983 = vrot.slane %v6231, %v6982
        %v6984 = vlaneseq
        %v6985 = vshrl.u32 %v6984, 7
        %v6986 = vsub.s32 0, %v6985
        %v6987 = vrot.slane %v6214, %v6986
        %v6988 = vlaneseq
        %v6989 = vshrl.u32 %v6988, 7
        %v6990 = vsub.s32 0, %v6989
        %v6991 = vrot.slane %v6228, %v6990
        %v6992 = vlaneseq
        %v6993 = vshrl.u32 %v6992, 7
        %v6994 = vsub.s32 0, %v6993
        %v6995 = vrot.slane %v6230, %v6994
        %v6996 = vlaneseq
        %v6997 = vshrl.u32 %v6996, 7
        %v6998 = vsub.s32 0, %v6997
        %v6999 = vrot.slane %v6232, %v6998
        %v7000 = vlaneseq
        %v7001 = vshrl.u32 %v7000, 7
        %v7002 = vsub.s32 0, %v7001
        %v7003 = vrot.slane %v6256, %v7002
        %v7004 = vlaneseq
        %v7005 = vshrl.u32 %v7004, 7
        %v7006 = vsub.s32 0, %v7005
        %v7007 = vrot.slane %v6270, %v7006
        %v7008 = vlaneseq
        %v7009 = vshrl.u32 %v7008, 7
        %v7010 = vsub.s32 0, %v7009
        %v7011 = vrot.slane %v6278, %v7010
        %v7012 = vlaneseq
        %v7013 = vshrl.u32 %v7012, 7
        %v7014 = vsub.s32 0, %v7013
        %v7015 = vrot.slane %v6280, %v7014
        %v7016 = vlaneseq
        %v7017 = vshrl.u32 %v7016, 7
        %v7018 = vsub.s32 0, %v7017
        %v7019 = vrot.slane %v6263, %v7018
        %v7020 = vlaneseq
        %v7021 = vshrl.u32 %v7020, 7
        %v7022 = vsub.s32 0, %v7021
        %v7023 = vrot.slane %v6277, %v7022
        %v7024 = vlaneseq
        %v7025 = vshrl.u32 %v7024, 7
        %v7026 = vsub.s32 0, %v7025
        %v7027 = vrot.slane %v6279, %v7026
        %v7028 = vlaneseq
        %v7029 = vshrl.u32 %v7028, 7
        %v7030 = vsub.s32 0, %v7029
        %v7031 = vrot.slane %v6281, %v7030
        %v7032 = vlaneseq
        %v7033 = vshrl.u32 %v7032, 7
        %v7034 = vsub.s32 0, %v7033
        %v7035 = vrot.slane %v6305, %v7034
        %v7036 = vlaneseq
        %v7037 = vshrl.u32 %v7036, 7
        %v7038 = vsub.s32 0, %v7037
        %v7039 = vrot.slane %v6319, %v7038
        %v7040 = vlaneseq
        %v7041 = vshrl.u32 %v7040, 7
        %v7042 = vsub.s32 0, %v7041
        %v7043 = vrot.slane %v6327, %v7042
        %v7044 = vlaneseq
        %v7045 = vshrl.u32 %v7044, 7
        %v7046 = vsub.s32 0, %v7045
        %v7047 = vrot.slane %v6329, %v7046
        %v7048 = vlaneseq
        %v7049 = vshrl.u32 %v7048, 7
        %v7050 = vsub.s32 0, %v7049
        %v7051 = vrot.slane %v6312, %v7050
        %v7052 = vlaneseq
        %v7053 = vshrl.u32 %v7052, 7
        %v7054 = vsub.s32 0, %v7053
        %v7055 = vrot.slane %v6326, %v7054
        %v7056 = vlaneseq
        %v7057 = vshrl.u32 %v7056, 7
        %v7058 = vsub.s32 0, %v7057
        %v7059 = vrot.slane %v6328, %v7058
        %v7060 = vlaneseq
        %v7061 = vshrl.u32 %v7060, 7
        %v7062 = vsub.s32 0, %v7061
        %v7063 = vrot.slane %v6330, %v7062
        %v7064 = vlaneseq
        %v7065 = vshrl.u32 %v7064, 7
        %v7066 = vsub.s32 0, %v7065
        %v7067 = vrot.slane %v6354, %v7066
        %v7068 = vlaneseq
        %v7069 = vshrl.u32 %v7068, 7
        %v7070 = vsub.s32 0, %v7069
        %v7071 = vrot.slane %v6368, %v7070
        %v7072 = vlaneseq
        %v7073 = vshrl.u32 %v7072, 7
        %v7074 = vsub.s32 0, %v7073
        %v7075 = vrot.slane %v6376, %v7074
        %v7076 = vlaneseq
        %v7077 = vshrl.u32 %v7076, 7
        %v7078 = vsub.s32 0, %v7077
        %v7079 = vrot.slane %v6378, %v7078
        %v7080 = vlaneseq
        %v7081 = vshrl.u32 %v7080, 7
        %v7082 = vsub.s32 0, %v7081
        %v7083 = vrot.slane %v6361, %v7082
        %v7084 = vlaneseq
        %v7085 = vshrl.u32 %v7084, 7
        %v7086 = vsub.s32 0, %v7085
        %v7087 = vrot.slane %v6375, %v7086
        %v7088 = vlaneseq
        %v7089 = vshrl.u32 %v7088, 7
        %v7090 = vsub.s32 0, %v7089
        %v7091 = vrot.slane %v6377, %v7090
        %v7092 = vlaneseq
        %v7093 = vshrl.u32 %v7092, 7
        %v7094 = vsub.s32 0, %v7093
        %v7095 = vrot.slane %v6379, %v7094
        %v7096 = vlaneseq
        %v7097 = vshrl.u32 %v7096, 7
        %v7098 = vsub.s32 0, %v7097
        %v7099 = vrot.slane %v6403, %v7098
        %v7100 = vlaneseq
        %v7101 = vshrl.u32 %v7100, 7
        %v7102 = vsub.s32 0, %v7101
        %v7103 = vrot.slane %v6417, %v7102
        %v7104 = vlaneseq
        %v7105 = vshrl.u32 %v7104, 7
        %v7106 = vsub.s32 0, %v7105
        %v7107 = vrot.slane %v6425, %v7106
        %v7108 = vlaneseq
        %v7109 = vshrl.u32 %v7108, 7
        %v7110 = vsub.s32 0, %v7109
        %v7111 = vrot.slane %v6427, %v7110
        %v7112 = vlaneseq
        %v7113 = vshrl.u32 %v7112, 7
        %v7114 = vsub.s32 0, %v7113
        %v7115 = vrot.slane %v6410, %v7114
        %v7116 = vlaneseq
        %v7117 = vshrl.u32 %v7116, 7
        %v7118 = vsub.s32 0, %v7117
        %v7119 = vrot.slane %v6424, %v7118
        %v7120 = vlaneseq
        %v7121 = vshrl.u32 %v7120, 7
        %v7122 = vsub.s32 0, %v7121
        %v7123 = vrot.slane %v6426, %v7122
        %v7124 = vlaneseq
        %v7125 = vshrl.u32 %v7124, 7
        %v7126 = vsub.s32 0, %v7125
        %v7127 = vrot.slane %v6428, %v7126
        %v7128 = vlaneseq
        %v7129 = vshrl.u32 %v7128, 7
        %v7130 = vsub.s32 0, %v7129
        %v7131 = vrot.slane %v6452, %v7130
        %v7132 = vlaneseq
        %v7133 = vshrl.u32 %v7132, 7
        %v7134 = vsub.s32 0, %v7133
        %v7135 = vrot.slane %v6466, %v7134
        %v7136 = vlaneseq
        %v7137 = vshrl.u32 %v7136, 7
        %v7138 = vsub.s32 0, %v7137
        %v7139 = vrot.slane %v6474, %v7138
        %v7140 = vlaneseq
        %v7141 = vshrl.u32 %v7140, 7
        %v7142 = vsub.s32 0, %v7141
        %v7143 = vrot.slane %v6476, %v7142
        %v7144 = vlaneseq
        %v7145 = vshrl.u32 %v7144, 7
        %v7146 = vsub.s32 0, %v7145
        %v7147 = vrot.slane %v6459, %v7146
        %v7148 = vlaneseq
        %v7149 = vshrl.u32 %v7148, 7
        %v7150 = vsub.s32 0, %v7149
        %v7151 = vrot.slane %v6473, %v7150
        %v7152 = vlaneseq
        %v7153 = vshrl.u32 %v7152, 7
        %v7154 = vsub.s32 0, %v7153
        %v7155 = vrot.slane %v6475, %v7154
        %v7156 = vlaneseq
        %v7157 = vshrl.u32 %v7156, 7
        %v7158 = vsub.s32 0, %v7157
        %v7159 = vrot.slane %v6477, %v7158
        %v7160 = vlaneseq
        %v7161 = vshrl.u32 %v7160, 7
        %v7162 = vsub.s32 0, %v7161
        %v7163 = vrot.slane %v6501, %v7162
        %v7164 = vlaneseq
        %v7165 = vshrl.u32 %v7164, 7
        %v7166 = vsub.s32 0, %v7165
        %v7167 = vrot.slane %v6515, %v7166
        %v7168 = vlaneseq
        %v7169 = vshrl.u32 %v7168, 7
        %v7170 = vsub.s32 0, %v7169
        %v7171 = vrot.slane %v6523, %v7170
        %v7172 = vlaneseq
        %v7173 = vshrl.u32 %v7172, 7
        %v7174 = vsub.s32 0, %v7173
        %v7175 = vrot.slane %v6525, %v7174
        %v7176 = vlaneseq
        %v7177 = vshrl.u32 %v7176, 7
        %v7178 = vsub.s32 0, %v7177
        %v7179 = vrot.slane %v6508, %v7178
        %v7180 = vlaneseq
        %v7181 = vshrl.u32 %v7180, 7
        %v7182 = vsub.s32 0, %v7181
        %v7183 = vrot.slane %v6522, %v7182
        %v7184 = vlaneseq
        %v7185 = vshrl.u32 %v7184, 7
        %v7186 = vsub.s32 0, %v7185
        %v7187 = vrot.slane %v6524, %v7186
        %v7188 = vlaneseq
        %v7189 = vshrl.u32 %v7188, 7
        %v7190 = vsub.s32 0, %v7189
        %v7191 = vrot.slane %v6526, %v7190
        %v7192 = vlaneseq
        %v7193 = vshrl.u32 %v7192, 7
        %v7194 = vsub.s32 0, %v7193
        %v7195 = vrot.slane %v6550, %v7194
        %v7196 = vlaneseq
        %v7197 = vshrl.u32 %v7196, 7
        %v7198 = vsub.s32 0, %v7197
        %v7199 = vrot.slane %v6564, %v7198
        %v7200 = vlaneseq
        %v7201 = vshrl.u32 %v7200, 7
        %v7202 = vsub.s32 0, %v7201
        %v7203 = vrot.slane %v6572, %v7202
        %v7204 = vlaneseq
        %v7205 = vshrl.u32 %v7204, 7
        %v7206 = vsub.s32 0, %v7205
        %v7207 = vrot.slane %v6574, %v7206
        %v7208 = vlaneseq
        %v7209 = vshrl.u32 %v7208, 7
        %v7210 = vsub.s32 0, %v7209
        %v7211 = vrot.slane %v6557, %v7210
        %v7212 = vlaneseq
        %v7213 = vshrl.u32 %v7212, 7
        %v7214 = vsub.s32 0, %v7213
        %v7215 = vrot.slane %v6571, %v7214
        %v7216 = vlaneseq
        %v7217 = vshrl.u32 %v7216, 7
        %v7218 = vsub.s32 0, %v7217
        %v7219 = vrot.slane %v6573, %v7218
        %v7220 = vlaneseq
        %v7221 = vshrl.u32 %v7220, 7
        %v7222 = vsub.s32 0, %v7221
        %v7223 = vrot.slane %v6575, %v7222
        %v7224 = vlaneseq
        %v7225 = vshrl.u32 %v7224, 7
        %v7226 = vsub.s32 0, %v7225
        %v7227 = vrot.slane %v6599, %v7226
        %v7228 = vlaneseq
        %v7229 = vshrl.u32 %v7228, 7
        %v7230 = vsub.s32 0, %v7229
        %v7231 = vrot.slane %v6613, %v7230
        %v7232 = vlaneseq
        %v7233 = vshrl.u32 %v7232, 7
        %v7234 = vsub.s32 0, %v7233
        %v7235 = vrot.slane %v6621, %v7234
        %v7236 = vlaneseq
        %v7237 = vshrl.u32 %v7236, 7
        %v7238 = vsub.s32 0, %v7237
        %v7239 = vrot.slane %v6623, %v7238
        %v7240 = vlaneseq
        %v7241 = vshrl.u32 %v7240, 7
        %v7242 = vsub.s32 0, %v7241
        %v7243 = vrot.slane %v6606, %v7242
        %v7244 = vlaneseq
        %v7245 = vshrl.u32 %v7244, 7
        %v7246 = vsub.s32 0, %v7245
        %v7247 = vrot.slane %v6620, %v7246
        %v7248 = vlaneseq
        %v7249 = vshrl.u32 %v7248, 7
        %v7250 = vsub.s32 0, %v7249
        %v7251 = vrot.slane %v6622, %v7250
        %v7252 = vlaneseq
        %v7253 = vshrl.u32 %v7252, 7
        %v7254 = vsub.s32 0, %v7253
        %v7255 = vrot.slane %v6624, %v7254
        %v7256 = vlaneseq
        %v7257 = vshrl.u32 %v7256, 7
        %v7258 = vsub.s32 0, %v7257
        %v7259 = vrot.slane %v6648, %v7258
        %v7260 = vlaneseq
        %v7261 = vshrl.u32 %v7260, 7
        %v7262 = vsub.s32 0, %v7261
        %v7263 = vrot.slane %v6662, %v7262
        %v7264 = vlaneseq
        %v7265 = vshrl.u32 %v7264, 7
        %v7266 = vsub.s32 0, %v7265
        %v7267 = vrot.slane %v6670, %v7266
        %v7268 = vlaneseq
        %v7269 = vshrl.u32 %v7268, 7
        %v7270 = vsub.s32 0, %v7269
        %v7271 = vrot.slane %v6672, %v7270
        %v7272 = vlaneseq
        %v7273 = vshrl.u32 %v7272, 7
        %v7274 = vsub.s32 0, %v7273
        %v7275 = vrot.slane %v6655, %v7274
        %v7276 = vlaneseq
        %v7277 = vshrl.u32 %v7276, 7
        %v7278 = vsub.s32 0, %v7277
        %v7279 = vrot.slane %v6669, %v7278
        %v7280 = vlaneseq
        %v7281 = vshrl.u32 %v7280, 7
        %v7282 = vsub.s32 0, %v7281
        %v7283 = vrot.slane %v6671, %v7282
        %v7284 = vlaneseq
        %v7285 = vshrl.u32 %v7284, 7
        %v7286 = vsub.s32 0, %v7285
        %v7287 = vrot.slane %v6673, %v7286
        %v7288 = vlaneseq
        %v7289 = vshrl.u32 %v7288, 7
        %v7290 = vsub.s32 0, %v7289
        %v7291 = vrot.slane %v6697, %v7290
        %v7292 = vlaneseq
        %v7293 = vshrl.u32 %v7292, 7
        %v7294 = vsub.s32 0, %v7293
        %v7295 = vrot.slane %v6711, %v7294
        %v7296 = vlaneseq
        %v7297 = vshrl.u32 %v7296, 7
        %v7298 = vsub.s32 0, %v7297
        %v7299 = vrot.slane %v6719, %v7298
        %v7300 = vlaneseq
        %v7301 = vshrl.u32 %v7300, 7
        %v7302 = vsub.s32 0, %v7301
        %v7303 = vrot.slane %v6721, %v7302
        %v7304 = vlaneseq
        %v7305 = vshrl.u32 %v7304, 7
        %v7306 = vsub.s32 0, %v7305
        %v7307 = vrot.slane %v6704, %v7306
        %v7308 = vlaneseq
        %v7309 = vshrl.u32 %v7308, 7
        %v7310 = vsub.s32 0, %v7309
        %v7311 = vrot.slane %v6718, %v7310
        %v7312 = vlaneseq
        %v7313 = vshrl.u32 %v7312, 7
        %v7314 = vsub.s32 0, %v7313
        %v7315 = vrot.slane %v6720, %v7314
        %v7316 = vlaneseq
        %v7317 = vshrl.u32 %v7316, 7
        %v7318 = vsub.s32 0, %v7317
        %v7319 = vrot.slane %v6722, %v7318
        %v7320 = vlaneseq
        %v7321 = vshrl.u32 %v7320, 7
        %v7322 = vsub.s32 0, %v7321
        %v7323 = vrot.slane %v6746, %v7322
        %v7324 = vlaneseq
        %v7325 = vshrl.u32 %v7324, 7
        %v7326 = vsub.s32 0, %v7325
        %v7327 = vrot.slane %v6760, %v7326
        %v7328 = vlaneseq
        %v7329 = vshrl.u32 %v7328, 7
        %v7330 = vsub.s32 0, %v7329
        %v7331 = vrot.slane %v6768, %v7330
        %v7332 = vlaneseq
        %v7333 = vshrl.u32 %v7332, 7
        %v7334 = vsub.s32 0, %v7333
        %v7335 = vrot.slane %v6770, %v7334
        %v7336 = vlaneseq
        %v7337 = vshrl.u32 %v7336, 7
        %v7338 = vsub.s32 0, %v7337
        %v7339 = vrot.slane %v6753, %v7338
        %v7340 = vlaneseq
        %v7341 = vshrl.u32 %v7340, 7
        %v7342 = vsub.s32 0, %v7341
        %v7343 = vrot.slane %v6767, %v7342
        %v7344 = vlaneseq
        %v7345 = vshrl.u32 %v7344, 7
        %v7346 = vsub.s32 0, %v7345
        %v7347 = vrot.slane %v6769, %v7346
        %v7348 = vlaneseq
        %v7349 = vshrl.u32 %v7348, 7
        %v7350 = vsub.s32 0, %v7349
        %v7351 = vrot.slane %v6771, %v7350
        %v7352 = vlaneseq
        %v7353 = vshrl.u32 %v7352, 7
        %v7354 = vsub.s32 0, %v7353
        %v7355 = vrot.slane %v6795, %v7354
        %v7356 = vlaneseq
        %v7357 = vshrl.u32 %v7356, 7
        %v7358 = vsub.s32 0, %v7357
        %v7359 = vrot.slane %v6809, %v7358
        %v7360 = vlaneseq
        %v7361 = vshrl.u32 %v7360, 7
        %v7362 = vsub.s32 0, %v7361
        %v7363 = vrot.slane %v6817, %v7362
        %v7364 = vlaneseq
        %v7365 = vshrl.u32 %v7364, 7
        %v7366 = vsub.s32 0, %v7365
        %v7367 = vrot.slane %v6819, %v7366
        %v7368 = vlaneseq
        %v7369 = vshrl.u32 %v7368, 7
        %v7370 = vsub.s32 0, %v7369
        %v7371 = vrot.slane %v6802, %v7370
        %v7372 = vlaneseq
        %v7373 = vshrl.u32 %v7372, 7
        %v7374 = vsub.s32 0, %v7373
        %v7375 = vrot.slane %v6816, %v7374
        %v7376 = vlaneseq
        %v7377 = vshrl.u32 %v7376, 7
        %v7378 = vsub.s32 0, %v7377
        %v7379 = vrot.slane %v6818, %v7378
        %v7380 = vlaneseq
        %v7381 = vshrl.u32 %v7380, 7
        %v7382 = vsub.s32 0, %v7381
        %v7383 = vrot.slane %v6820, %v7382
        %v7384 = vlaneseq
        %v7385 = vshrl.u32 %v7384, 7
        %v7386 = vsub.s32 0, %v7385
        %v7387 = vrot.slane %v6844, %v7386
        %v7388 = vlaneseq
        %v7389 = vshrl.u32 %v7388, 7
        %v7390 = vsub.s32 0, %v7389
        %v7391 = vrot.slane %v6858, %v7390
        %v7392 = vlaneseq
        %v7393 = vshrl.u32 %v7392, 7
        %v7394 = vsub.s32 0, %v7393
        %v7395 = vrot.slane %v6866, %v7394
        %v7396 = vlaneseq
        %v7397 = vshrl.u32 %v7396, 7
        %v7398 = vsub.s32 0, %v7397
        %v7399 = vrot.slane %v6868, %v7398
        %v7400 = vlaneseq
        %v7401 = vshrl.u32 %v7400, 7
        %v7402 = vsub.s32 0, %v7401
        %v7403 = vrot.slane %v6851, %v7402
        %v7404 = vlaneseq
        %v7405 = vshrl.u32 %v7404, 7
        %v7406 = vsub.s32 0, %v7405
        %v7407 = vrot.slane %v6865, %v7406
        %v7408 = vlaneseq
        %v7409 = vshrl.u32 %v7408, 7
        %v7410 = vsub.s32 0, %v7409
        %v7411 = vrot.slane %v6867, %v7410
        %v7412 = vlaneseq
        %v7413 = vshrl.u32 %v7412, 7
        %v7414 = vsub.s32 0, %v7413
        %v7415 = vrot.slane %v6869, %v7414
        %v7416 = vlaneseq
        %v7417 = vshrl.u32 %v7416, 7
        %v7418 = vsub.s32 0, %v7417
        %v7419 = vrot.slane %v6893, %v7418
        %v7420 = vlaneseq
        %v7421 = vshrl.u32 %v7420, 7
        %v7422 = vsub.s32 0, %v7421
        %v7423 = vrot.slane %v6907, %v7422
        %v7424 = vlaneseq
        %v7425 = vshrl.u32 %v7424, 7
        %v7426 = vsub.s32 0, %v7425
        %v7427 = vrot.slane %v6915, %v7426
        %v7428 = vlaneseq
        %v7429 = vshrl.u32 %v7428, 7
        %v7430 = vsub.s32 0, %v7429
        %v7431 = vrot.slane %v6917, %v7430
        %v7432 = vlaneseq
        %v7433 = vshrl.u32 %v7432, 7
        %v7434 = vsub.s32 0, %v7433
        %v7435 = vrot.slane %v6900, %v7434
        %v7436 = vlaneseq
        %v7437 = vshrl.u32 %v7436, 7
        %v7438 = vsub.s32 0, %v7437
        %v7439 = vrot.slane %v6914, %v7438
        %v7440 = vlaneseq
        %v7441 = vshrl.u32 %v7440, 7
        %v7442 = vsub.s32 0, %v7441
        %v7443 = vrot.slane %v6916, %v7442
        %v7444 = vlaneseq
        %v7445 = vshrl.u32 %v7444, 7
        %v7446 = vsub.s32 0, %v7445
        %v7447 = vrot.slane %v6918, %v7446
        %v7448 = vlaneseq
        %v7449 = vshrl.u32 %v7448, 7
        %v7450 = vsub.s32 0, %v7449
        %v7451 = vrot.slane %v6942, %v7450
        %v7452 = vlaneseq
        %v7453 = vshrl.u32 %v7452, 7
        %v7454 = vsub.s32 0, %v7453
        %v7455 = vrot.slane %v6956, %v7454
        %v7456 = vlaneseq
        %v7457 = vshrl.u32 %v7456, 7
        %v7458 = vsub.s32 0, %v7457
        %v7459 = vrot.slane %v6964, %v7458
        %v7460 = vlaneseq
        %v7461 = vshrl.u32 %v7460, 7
        %v7462 = vsub.s32 0, %v7461
        %v7463 = vrot.slane %v6966, %v7462
        %v7464 = vlaneseq
        %v7465 = vshrl.u32 %v7464, 7
        %v7466 = vsub.s32 0, %v7465
        %v7467 = vrot.slane %v6949, %v7466
        %v7468 = vlaneseq
        %v7469 = vshrl.u32 %v7468, 7
        %v7470 = vsub.s32 0, %v7469
        %v7471 = vrot.slane %v6963, %v7470
        %v7472 = vlaneseq
        %v7473 = vshrl.u32 %v7472, 7
        %v7474 = vsub.s32 0, %v7473
        %v7475 = vrot.slane %v6965, %v7474
        %v7476 = vlaneseq
        %v7477 = vshrl.u32 %v7476, 7
        %v7478 = vsub.s32 0, %v7477
        %v7479 = vrot.slane %v6967, %v7478
        %v7480 = vld [vmem:[#allocation5 + $0x12] sm:$0x1]
        %v7481 = vcombine.low %v6971, %v6975
        %v7482 = vcombine.low %v6979, %v6983
        %v7483 = vcombine.low %v6987, %v6991
        %v7484 = vcombine.low %v6995, %v6999
        %v7485 = vcombine.low %v7003, %v7007
        %v7486 = vcombine.low %v7011, %v7015
        %v7487 = vcombine.low %v7019, %v7023
        %v7488 = vcombine.low %v7027, %v7031
        %v7489 = vcombine.low %v7035, %v7039
        %v7490 = vcombine.low %v7043, %v7047
        %v7491 = vcombine.low %v7051, %v7055
        %v7492 = vcombine.low %v7059, %v7063
        %v7493 = vcombine.low %v7067, %v7071
        %v7494 = vcombine.low %v7075, %v7079
        %v7495 = vcombine.low %v7083, %v7087
        %v7496 = vcombine.low %v7091, %v7095
        %v7497 = vcombine.low %v7099, %v7103
        %v7498 = vcombine.low %v7107, %v7111
        %v7499 = vcombine.low %v7115, %v7119
        %v7500 = vcombine.low %v7123, %v7127
        %v7501 = vcombine.low %v7131, %v7135
        %v7502 = vcombine.low %v7139, %v7143
        %v7503 = vcombine.low %v7147, %v7151
        %v7504 = vcombine.low %v7155, %v7159
        %v7505 = vcombine.low %v7163, %v7167
        %v7506 = vcombine.low %v7171, %v7175
        %v7507 = vcombine.low %v7179, %v7183
        %v7508 = vcombine.low %v7187, %v7191
        %v7509 = vcombine.low %v7195, %v7199
        %v7510 = vcombine.low %v7203, %v7207
        %v7511 = vcombine.low %v7211, %v7215
        %v7512 = vcombine.low %v7219, %v7223
        %v7513 = vcombine.low %v7227, %v7231
        %v7514 = vcombine.low %v7235, %v7239
        %v7515 = vcombine.low %v7243, %v7247
        %v7516 = vcombine.low %v7251, %v7255
        %v7517 = vcombine.low %v7259, %v7263
        %v7518 = vcombine.low %v7267, %v7271
        %v7519 = vcombine.low %v7275, %v7279
        %v7520 = vcombine.low %v7283, %v7287
        %v7521 = vcombine.low %v7291, %v7295
        %v7522 = vcombine.low %v7299, %v7303
        %v7523 = vcombine.low %v7307, %v7311
        %v7524 = vcombine.low %v7315, %v7319
        %v7525 = vcombine.low %v7323, %v7327
        %v7526 = vcombine.low %v7331, %v7335
        %v7527 = vcombine.low %v7339, %v7343
        %v7528 = vcombine.low %v7347, %v7351
        %v7529 = vcombine.low %v7355, %v7359
        %v7530 = vcombine.low %v7363, %v7367
        %v7531 = vcombine.low %v7371, %v7375
        %v7532 = vcombine.low %v7379, %v7383
        %v7533 = vcombine.low %v7387, %v7391
        %v7534 = vcombine.low %v7395, %v7399
        %v7535 = vcombine.low %v7403, %v7407
        %v7536 = vcombine.low %v7411, %v7415
        %v7537 = vcombine.low %v7419, %v7423
        %v7538 = vcombine.low %v7427, %v7431
        %v7539 = vcombine.low %v7435, %v7439
        %v7540 = vcombine.low %v7443, %v7447
        %v7541 = vcombine.low %v7451, %v7455
        %v7542 = vcombine.low %v7459, %v7463
        %v7543 = vcombine.low %v7467, %v7471
        %v7544 = vcombine.low %v7475, %v7479
        %v7609 = vpack.c.bf16 %v7482, %v7481
        %v7610 = vpack.c.bf16 %v7484, %v7483
        %v7611 = vpack.c.bf16 %v7486, %v7485
        %v7612 = vpack.c.bf16 %v7488, %v7487
        %v7613 = vpack.c.bf16 %v7490, %v7489
        %v7614 = vpack.c.bf16 %v7492, %v7491
        %v7615 = vpack.c.bf16 %v7494, %v7493
        %v7616 = vpack.c.bf16 %v7496, %v7495
        %v7617 = vpack.c.bf16 %v7498, %v7497
        %v7618 = vpack.c.bf16 %v7500, %v7499
        %v7619 = vpack.c.bf16 %v7502, %v7501
        %v7620 = vpack.c.bf16 %v7504, %v7503
        %v7621 = vpack.c.bf16 %v7506, %v7505
        %v7622 = vpack.c.bf16 %v7508, %v7507
        %v7623 = vpack.c.bf16 %v7510, %v7509
        %v7624 = vpack.c.bf16 %v7512, %v7511
        %v7625 = vpack.c.bf16 %v7514, %v7513
        %v7626 = vpack.c.bf16 %v7516, %v7515
        %v7627 = vpack.c.bf16 %v7518, %v7517
        %v7628 = vpack.c.bf16 %v7520, %v7519
        %v7629 = vpack.c.bf16 %v7522, %v7521
        %v7630 = vpack.c.bf16 %v7524, %v7523
        %v7631 = vpack.c.bf16 %v7526, %v7525
        %v7632 = vpack.c.bf16 %v7528, %v7527
        %v7633 = vpack.c.bf16 %v7530, %v7529
        %v7634 = vpack.c.bf16 %v7532, %v7531
        %v7635 = vpack.c.bf16 %v7534, %v7533
        %v7636 = vpack.c.bf16 %v7536, %v7535
        %v7637 = vpack.c.bf16 %v7538, %v7537
        %v7638 = vpack.c.bf16 %v7540, %v7539
        %v7639 = vpack.c.bf16 %v7542, %v7541
        %v7640 = vpack.c.bf16 %v7544, %v7543
        %v7641 = vld [vmem:[%s7] sm:$0xff]
        %v7642 = vld [vmem:[%s7 + $0x8] sm:$0xff]
        %v7643 = vld [vmem:[%s7 + $0x10] sm:$0xff]
        %v7644 = vld [vmem:[%s7 + $0x18] sm:$0xff]
        %v7645 = vld [vmem:[%s7 + $0x20] sm:$0xff]
        %v7646 = vld [vmem:[%s7 + $0x28] sm:$0xff]
        %v7647 = vld [vmem:[%s7 + $0x30] sm:$0xff]
        %v7648 = vld [vmem:[%s7 + $0x38] sm:$0xff]
        %7681 = vrot.lane.b32.xlu0 %v7609, 64
        %v7682 = vpop.permute.xlu0 %7681
        %7683 = vrot.lane.b32.xlu0 %v7610, 64
        %v7684 = vpop.permute.xlu0 %7683
        %7685 = vrot.lane.b32.xlu0 %v7611, 64
        %v7686 = vpop.permute.xlu0 %7685
        %7687 = vrot.lane.b32.xlu0 %v7612, 64
        %v7688 = vpop.permute.xlu0 %7687
        %7689 = vrot.lane.b32.xlu0 %v7613, 64
        %v7690 = vpop.permute.xlu0 %7689
        %7691 = vrot.lane.b32.xlu0 %v7614, 64
        %v7692 = vpop.permute.xlu0 %7691
        %7693 = vrot.lane.b32.xlu0 %v7615, 64
        %v7694 = vpop.permute.xlu0 %7693
        %7695 = vrot.lane.b32.xlu0 %v7616, 64
        %v7696 = vpop.permute.xlu0 %7695
        %7697 = vrot.lane.b32.xlu0 %v7617, 64
        %v7698 = vpop.permute.xlu0 %7697
        %7699 = vrot.lane.b32.xlu0 %v7618, 64
        %v7700 = vpop.permute.xlu0 %7699
        %7701 = vrot.lane.b32.xlu0 %v7619, 64
        %v7702 = vpop.permute.xlu0 %7701
        %7703 = vrot.lane.b32.xlu0 %v7620, 64
        %v7704 = vpop.permute.xlu0 %7703
        %7705 = vrot.lane.b32.xlu0 %v7621, 64
        %v7706 = vpop.permute.xlu0 %7705
        %7707 = vrot.lane.b32.xlu0 %v7622, 64
        %v7708 = vpop.permute.xlu0 %7707
        %7709 = vrot.lane.b32.xlu0 %v7623, 64
        %v7710 = vpop.permute.xlu0 %7709
        %7711 = vrot.lane.b32.xlu0 %v7624, 64
        %v7712 = vpop.permute.xlu0 %7711
        %7713 = vrot.lane.b32.xlu0 %v7625, 64
        %v7714 = vpop.permute.xlu0 %7713
        %7715 = vrot.lane.b32.xlu0 %v7626, 64
        %v7716 = vpop.permute.xlu0 %7715
        %7717 = vrot.lane.b32.xlu0 %v7627, 64
        %v7718 = vpop.permute.xlu0 %7717
        %7719 = vrot.lane.b32.xlu0 %v7628, 64
        %v7720 = vpop.permute.xlu0 %7719
        %7721 = vrot.lane.b32.xlu0 %v7629, 64
        %v7722 = vpop.permute.xlu0 %7721
        %7723 = vrot.lane.b32.xlu0 %v7630, 64
        %v7724 = vpop.permute.xlu0 %7723
        %7725 = vrot.lane.b32.xlu0 %v7631, 64
        %v7726 = vpop.permute.xlu0 %7725
        %7727 = vrot.lane.b32.xlu0 %v7632, 64
        %v7728 = vpop.permute.xlu0 %7727
        %7729 = vrot.lane.b32.xlu0 %v7633, 64
        %v7730 = vpop.permute.xlu0 %7729
        %7731 = vrot.lane.b32.xlu0 %v7634, 64
        %v7732 = vpop.permute.xlu0 %7731
        %7733 = vrot.lane.b32.xlu0 %v7635, 64
        %v7734 = vpop.permute.xlu0 %7733
        %7735 = vrot.lane.b32.xlu0 %v7636, 64
        %v7736 = vpop.permute.xlu0 %7735
        %7737 = vrot.lane.b32.xlu0 %v7637, 64
        %v7738 = vpop.permute.xlu0 %7737
        %7739 = vrot.lane.b32.xlu0 %v7638, 64
        %v7740 = vpop.permute.xlu0 %7739
        %7741 = vrot.lane.b32.xlu0 %v7639, 64
        %v7742 = vpop.permute.xlu0 %7741
        %7743 = vrot.lane.b32.xlu0 %v7640, 64
        %v7744 = vpop.permute.xlu0 %7743
        %v7753 = vunpack.c.l.b16 %v7641
        %v7754 = vunpack.c.h.b16 %v7641
        %v7755 = vunpack.c.l.b16 %v7642
        %v7756 = vunpack.c.h.b16 %v7642
        %v7757 = vunpack.c.l.b16 %v7643
        %v7758 = vunpack.c.h.b16 %v7643
        %v7759 = vunpack.c.l.b16 %v7644
        %v7760 = vunpack.c.h.b16 %v7644
        %v7761 = vunpack.c.l.b16 %v7645
        %v7762 = vunpack.c.h.b16 %v7645
        %v7763 = vunpack.c.l.b16 %v7646
        %v7764 = vunpack.c.h.b16 %v7646
        %v7765 = vunpack.c.l.b16 %v7647
        %v7766 = vunpack.c.h.b16 %v7647
        %v7767 = vunpack.c.l.b16 %v7648
        %v7768 = vunpack.c.h.b16 %v7648
        %v7769 = vpack.c.b16 %v7755, %v7753
        %v7770 = vpack.c.b16 %v7756, %v7754
        %v7771 = vpack.c.b16 %v7759, %v7757
        %v7772 = vpack.c.b16 %v7760, %v7758
        %v7773 = vpack.c.b16 %v7763, %v7761
        %v7774 = vpack.c.b16 %v7764, %v7762
        %v7775 = vpack.c.b16 %v7767, %v7765
        %v7776 = vpack.c.b16 %v7768, %v7766
        %v7786 = vsel %vm4936, %v7682, 0
        %v7789 = vsel %vm4936, %v7684, 0
        %v7792 = vsel %vm4936, %v7686, 0
        %v7795 = vsel %vm4936, %v7688, 0
        %v7798 = vsel %vm4936, %v7690, 0
        %v7801 = vsel %vm4936, %v7692, 0
        %v7804 = vsel %vm4936, %v7694, 0
        %v7807 = vsel %vm4936, %v7696, 0
        %v7810 = vsel %vm4936, %v7698, 0
        %v7813 = vsel %vm4936, %v7700, 0
        %v7816 = vsel %vm4936, %v7702, 0
        %v7819 = vsel %vm4936, %v7704, 0
        %v7822 = vsel %vm4936, %v7706, 0
        %v7825 = vsel %vm4936, %v7708, 0
        %v7828 = vsel %vm4936, %v7710, 0
        %v7831 = vsel %vm4936, %v7712, 0
        %v7834 = vsel %vm4936, %v7714, 0
        %v7837 = vsel %vm4936, %v7716, 0
        %v7840 = vsel %vm4936, %v7718, 0
        %v7843 = vsel %vm4936, %v7720, 0
        %v7846 = vsel %vm4936, %v7722, 0
        %v7849 = vsel %vm4936, %v7724, 0
        %v7852 = vsel %vm4936, %v7726, 0
        %v7855 = vsel %vm4936, %v7728, 0
        %v7858 = vsel %vm4936, %v7730, 0
        %v7861 = vsel %vm4936, %v7732, 0
        %v7864 = vsel %vm4936, %v7734, 0
        %v7867 = vsel %vm4936, %v7736, 0
        %v7870 = vsel %vm4936, %v7738, 0
        %v7873 = vsel %vm4936, %v7740, 0
        %v7876 = vsel %vm4936, %v7742, 0
        %v7879 = vsel %vm4936, %v7744, 0
        %7881 = vmatprep.subr.bf16.mxu0 %v7770
        %7882 = vmatpush1.bf16.msra.mxu0 %v7769
        %7883 = vmatprep.subr.bf16.mxu0 %v7772
        %7884 = vmatpush1.bf16.msra.mxu0 %v7771
        %7885 = vmatprep.subr.bf16.mxu0 %v7774
        %7886 = vmatpush1.bf16.msra.mxu0 %v7773
        %7887 = vmatprep.subr.bf16.mxu0 %v7776
        %7888 = vmatpush1.bf16.msra.mxu0 %v7775
        %7889 = vmatprep.subr.bf16.mxu0 0
        %7890 = vmatpush1.bf16.msra.mxu0 0
        %7891 = vmatprep.subr.bf16.mxu0 0
        %7892 = vmatpush1.bf16.msra.mxu0 0
        %7893 = vmatprep.subr.bf16.mxu0 0
        %7894 = vmatpush1.bf16.msra.mxu0 0
        %7895 = vmatprep.subr.bf16.mxu0 0
        %7896 = vmatpush1.bf16.msra.mxu0 0
        %7897 = vmatprep.subr.bf16.mxu0 0
        %7898 = vmatpush1.bf16.msra.mxu0 0
        %7899 = vmatprep.subr.bf16.mxu0 0
        %7900 = vmatpush1.bf16.msra.mxu0 0
        %7901 = vmatprep.subr.bf16.mxu0 0
        %7902 = vmatpush1.bf16.msra.mxu0 0
        %7903 = vmatprep.subr.bf16.mxu0 0
        %7904 = vmatpush1.bf16.msra.mxu0 0
        %7905 = vmatprep.subr.bf16.mxu0 0
        %7906 = vmatpush1.bf16.msra.mxu0 0
        %7907 = vmatprep.subr.bf16.mxu0 0
        %7908 = vmatpush1.bf16.msra.mxu0 0
        %7909 = vmatprep.subr.bf16.mxu0 0
        %7910 = vmatpush1.bf16.msra.mxu0 0
        %7911 = vmatprep.subr.bf16.mxu0 0
        %7912 = vmatpush1.bf16.msra.mxu0 0
        %7913 = vmatprep.mubr.bf16.mxu0 0
        %7914 = vmatmul.mubr.bf16.gmra.mrb[0].mxu0 %v7786
        %v7915 = vpop.f32.mrb[0].mxu0
        %v7916 = vadd.f32 0.0, %v7915
        %v7917 = vpop.f32.mrb[0].mxu0
        %v7918 = vadd.f32 0.0, %v7917
        %v7919 = vpop.f32.mrb[0].mxu0
        %v7920 = vadd.f32 0.0, %v7919
        %v7921 = vpop.f32.mrb[0].mxu0
        %v7922 = vadd.f32 0.0, %v7921
        %7923 = vmatprep.mubr.bf16.mxu0 0
        %7924 = vmatmul.mubr.bf16.gmra.mrb[0].mxu0 %v7789
        %v7925 = vpop.f32.mrb[0].mxu0
        %v7926 = vadd.f32 0.0, %v7925
        %v7927 = vpop.f32.mrb[0].mxu0
        %v7928 = vadd.f32 0.0, %v7927
        %v7929 = vpop.f32.mrb[0].mxu0
        %v7930 = vadd.f32 0.0, %v7929
        %v7931 = vpop.f32.mrb[0].mxu0
        %v7932 = vadd.f32 0.0, %v7931
        %7933 = vmatprep.mubr.bf16.mxu0 0
        %7934 = vmatmul.mubr.bf16.gmra.mrb[0].mxu0 %v7792
        %v7935 = vpop.f32.mrb[0].mxu0
        %v7936 = vadd.f32 0.0, %v7935
        %v7937 = vpop.f32.mrb[0].mxu0
        %v7938 = vadd.f32 0.0, %v7937
        %v7939 = vpop.f32.mrb[0].mxu0
        %v7940 = vadd.f32 0.0, %v7939
        %v7941 = vpop.f32.mrb[0].mxu0
        %v7942 = vadd.f32 0.0, %v7941
        %7943 = vmatprep.mubr.bf16.mxu0 0
        %7944 = vmatmul.mubr.bf16.gmra.mrb[0].mxu0 %v7795
        %v7945 = vpop.f32.mrb[0].mxu0
        %v7946 = vadd.f32 0.0, %v7945
        %v7947 = vpop.f32.mrb[0].mxu0
        %v7948 = vadd.f32 0.0, %v7947
        %v7949 = vpop.f32.mrb[0].mxu0
        %v7950 = vadd.f32 0.0, %v7949
        %v7951 = vpop.f32.mrb[0].mxu0
        %v7952 = vadd.f32 0.0, %v7951
        %7953 = vmatprep.mubr.bf16.mxu0 0
        %7954 = vmatmul.mubr.bf16.gmra.mrb[0].mxu0 %v7798
        %v7955 = vpop.f32.mrb[0].mxu0
        %v7956 = vadd.f32 0.0, %v7955
        %v7957 = vpop.f32.mrb[0].mxu0
        %v7958 = vadd.f32 0.0, %v7957
        %v7959 = vpop.f32.mrb[0].mxu0
        %v7960 = vadd.f32 0.0, %v7959
        %v7961 = vpop.f32.mrb[0].mxu0
        %v7962 = vadd.f32 0.0, %v7961
        %7963 = vmatprep.mubr.bf16.mxu0 0
        %7964 = vmatmul.mubr.bf16.gmra.mrb[0].mxu0 %v7801
        %v7965 = vpop.f32.mrb[0].mxu0
        %v7966 = vadd.f32 0.0, %v7965
        %v7967 = vpop.f32.mrb[0].mxu0
        %v7968 = vadd.f32 0.0, %v7967
        %v7969 = vpop.f32.mrb[0].mxu0
        %v7970 = vadd.f32 0.0, %v7969
        %v7971 = vpop.f32.mrb[0].mxu0
        %v7972 = vadd.f32 0.0, %v7971
        %7973 = vmatprep.mubr.bf16.mxu0 0
        %7974 = vmatmul.mubr.bf16.gmra.mrb[0].mxu0 %v7804
        %v7975 = vpop.f32.mrb[0].mxu0
        %v7976 = vadd.f32 0.0, %v7975
        %v7977 = vpop.f32.mrb[0].mxu0
        %v7978 = vadd.f32 0.0, %v7977
        %v7979 = vpop.f32.mrb[0].mxu0
        %v7980 = vadd.f32 0.0, %v7979
        %v7981 = vpop.f32.mrb[0].mxu0
        %v7982 = vadd.f32 0.0, %v7981
        %7983 = vmatprep.mubr.bf16.mxu0 0
        %7984 = vmatmul.mubr.bf16.gmra.mrb[0].mxu0 %v7807
        %v7985 = vpop.f32.mrb[0].mxu0
        %v7986 = vadd.f32 0.0, %v7985
        %v7987 = vpop.f32.mrb[0].mxu0
        %v7988 = vadd.f32 0.0, %v7987
        %v7989 = vpop.f32.mrb[0].mxu0
        %v7990 = vadd.f32 0.0, %v7989
        %v7991 = vpop.f32.mrb[0].mxu0
        %v7992 = vadd.f32 0.0, %v7991
        %7993 = vmatprep.mubr.bf16.mxu0 0
        %7994 = vmatmul.mubr.bf16.gmra.mrb[0].mxu0 %v7810
        %v7995 = vpop.f32.mrb[0].mxu0
        %v7996 = vadd.f32 0.0, %v7995
        %v7997 = vpop.f32.mrb[0].mxu0
        %v7998 = vadd.f32 0.0, %v7997
        %v7999 = vpop.f32.mrb[0].mxu0
        %v8000 = vadd.f32 0.0, %v7999
        %v8001 = vpop.f32.mrb[0].mxu0
        %v8002 = vadd.f32 0.0, %v8001
        %8003 = vmatprep.mubr.bf16.mxu0 0
        %8004 = vmatmul.mubr.bf16.gmra.mrb[0].mxu0 %v7813
        %v8005 = vpop.f32.mrb[0].mxu0
        %v8006 = vadd.f32 0.0, %v8005
        %v8007 = vpop.f32.mrb[0].mxu0
        %v8008 = vadd.f32 0.0, %v8007
        %v8009 = vpop.f32.mrb[0].mxu0
        %v8010 = vadd.f32 0.0, %v8009
        %v8011 = vpop.f32.mrb[0].mxu0
        %v8012 = vadd.f32 0.0, %v8011
        %8013 = vmatprep.mubr.bf16.mxu0 0
        %8014 = vmatmul.mubr.bf16.gmra.mrb[0].mxu0 %v7816
        %v8015 = vpop.f32.mrb[0].mxu0
        %v8016 = vadd.f32 0.0, %v8015
        %v8017 = vpop.f32.mrb[0].mxu0
        %v8018 = vadd.f32 0.0, %v8017
        %v8019 = vpop.f32.mrb[0].mxu0
        %v8020 = vadd.f32 0.0, %v8019
        %v8021 = vpop.f32.mrb[0].mxu0
        %v8022 = vadd.f32 0.0, %v8021
        %8023 = vmatprep.mubr.bf16.mxu0 0
        %8024 = vmatmul.mubr.bf16.gmra.mrb[0].mxu0 %v7819
        %v8025 = vpop.f32.mrb[0].mxu0
        %v8026 = vadd.f32 0.0, %v8025
        %v8027 = vpop.f32.mrb[0].mxu0
        %v8028 = vadd.f32 0.0, %v8027
        %v8029 = vpop.f32.mrb[0].mxu0
        %v8030 = vadd.f32 0.0, %v8029
        %v8031 = vpop.f32.mrb[0].mxu0
        %v8032 = vadd.f32 0.0, %v8031
        %8033 = vmatprep.mubr.bf16.mxu0 0
        %8034 = vmatmul.mubr.bf16.gmra.mrb[0].mxu0 %v7822
        %v8035 = vpop.f32.mrb[0].mxu0
        %v8036 = vadd.f32 0.0, %v8035
        %v8037 = vpop.f32.mrb[0].mxu0
        %v8038 = vadd.f32 0.0, %v8037
        %v8039 = vpop.f32.mrb[0].mxu0
        %v8040 = vadd.f32 0.0, %v8039
        %v8041 = vpop.f32.mrb[0].mxu0
        %v8042 = vadd.f32 0.0, %v8041
        %8043 = vmatprep.mubr.bf16.mxu0 0
        %8044 = vmatmul.mubr.bf16.gmra.mrb[0].mxu0 %v7825
        %v8045 = vpop.f32.mrb[0].mxu0
        %v8046 = vadd.f32 0.0, %v8045
        %v8047 = vpop.f32.mrb[0].mxu0
        %v8048 = vadd.f32 0.0, %v8047
        %v8049 = vpop.f32.mrb[0].mxu0
        %v8050 = vadd.f32 0.0, %v8049
        %v8051 = vpop.f32.mrb[0].mxu0
        %v8052 = vadd.f32 0.0, %v8051
        %8053 = vmatprep.mubr.bf16.mxu0 0
        %8054 = vmatmul.mubr.bf16.gmra.mrb[0].mxu0 %v7828
        %v8055 = vpop.f32.mrb[0].mxu0
        %v8056 = vadd.f32 0.0, %v8055
        %v8057 = vpop.f32.mrb[0].mxu0
        %v8058 = vadd.f32 0.0, %v8057
        %v8059 = vpop.f32.mrb[0].mxu0
        %v8060 = vadd.f32 0.0, %v8059
        %v8061 = vpop.f32.mrb[0].mxu0
        %v8062 = vadd.f32 0.0, %v8061
        %8063 = vmatprep.mubr.bf16.mxu0 0
        %8064 = vmatmul.mubr.bf16.gmra.mrb[0].mxu0 %v7831
        %v8065 = vpop.f32.mrb[0].mxu0
        %v8066 = vadd.f32 0.0, %v8065
        %v8067 = vpop.f32.mrb[0].mxu0
        %v8068 = vadd.f32 0.0, %v8067
        %v8069 = vpop.f32.mrb[0].mxu0
        %v8070 = vadd.f32 0.0, %v8069
        %v8071 = vpop.f32.mrb[0].mxu0
        %v8072 = vadd.f32 0.0, %v8071
        %8073 = vmatprep.mubr.bf16.mxu0 0
        %8074 = vmatmul.mubr.bf16.gmra.mrb[0].mxu0 %v7834
        %v8075 = vpop.f32.mrb[0].mxu0
        %v8076 = vadd.f32 0.0, %v8075
        %v8077 = vpop.f32.mrb[0].mxu0
        %v8078 = vadd.f32 0.0, %v8077
        %v8079 = vpop.f32.mrb[0].mxu0
        %v8080 = vadd.f32 0.0, %v8079
        %v8081 = vpop.f32.mrb[0].mxu0
        %v8082 = vadd.f32 0.0, %v8081
        %8083 = vmatprep.mubr.bf16.mxu0 0
        %8084 = vmatmul.mubr.bf16.gmra.mrb[0].mxu0 %v7837
        %v8085 = vpop.f32.mrb[0].mxu0
        %v8086 = vadd.f32 0.0, %v8085
        %v8087 = vpop.f32.mrb[0].mxu0
        %v8088 = vadd.f32 0.0, %v8087
        %v8089 = vpop.f32.mrb[0].mxu0
        %v8090 = vadd.f32 0.0, %v8089
        %v8091 = vpop.f32.mrb[0].mxu0
        %v8092 = vadd.f32 0.0, %v8091
        %8093 = vmatprep.mubr.bf16.mxu0 0
        %8094 = vmatmul.mubr.bf16.gmra.mrb[0].mxu0 %v7840
        %v8095 = vpop.f32.mrb[0].mxu0
        %v8096 = vadd.f32 0.0, %v8095
        %v8097 = vpop.f32.mrb[0].mxu0
        %v8098 = vadd.f32 0.0, %v8097
        %v8099 = vpop.f32.mrb[0].mxu0
        %v8100 = vadd.f32 0.0, %v8099
        %v8101 = vpop.f32.mrb[0].mxu0
        %v8102 = vadd.f32 0.0, %v8101
        %8103 = vmatprep.mubr.bf16.mxu0 0
        %8104 = vmatmul.mubr.bf16.gmra.mrb[0].mxu0 %v7843
        %v8105 = vpop.f32.mrb[0].mxu0
        %v8106 = vadd.f32 0.0, %v8105
        %v8107 = vpop.f32.mrb[0].mxu0
        %v8108 = vadd.f32 0.0, %v8107
        %v8109 = vpop.f32.mrb[0].mxu0
        %v8110 = vadd.f32 0.0, %v8109
        %v8111 = vpop.f32.mrb[0].mxu0
        %v8112 = vadd.f32 0.0, %v8111
        %8113 = vmatprep.mubr.bf16.mxu0 0
        %8114 = vmatmul.mubr.bf16.gmra.mrb[0].mxu0 %v7846
        %v8115 = vpop.f32.mrb[0].mxu0
        %v8116 = vadd.f32 0.0, %v8115
        %v8117 = vpop.f32.mrb[0].mxu0
        %v8118 = vadd.f32 0.0, %v8117
        %v8119 = vpop.f32.mrb[0].mxu0
        %v8120 = vadd.f32 0.0, %v8119
        %v8121 = vpop.f32.mrb[0].mxu0
        %v8122 = vadd.f32 0.0, %v8121
        %8123 = vmatprep.mubr.bf16.mxu0 0
        %8124 = vmatmul.mubr.bf16.gmra.mrb[0].mxu0 %v7849
        %v8125 = vpop.f32.mrb[0].mxu0
        %v8126 = vadd.f32 0.0, %v8125
        %v8127 = vpop.f32.mrb[0].mxu0
        %v8128 = vadd.f32 0.0, %v8127
        %v8129 = vpop.f32.mrb[0].mxu0
        %v8130 = vadd.f32 0.0, %v8129
        %v8131 = vpop.f32.mrb[0].mxu0
        %v8132 = vadd.f32 0.0, %v8131
        %8133 = vmatprep.mubr.bf16.mxu0 0
        %8134 = vmatmul.mubr.bf16.gmra.mrb[0].mxu0 %v7852
        %v8135 = vpop.f32.mrb[0].mxu0
        %v8136 = vadd.f32 0.0, %v8135
        %v8137 = vpop.f32.mrb[0].mxu0
        %v8138 = vadd.f32 0.0, %v8137
        %v8139 = vpop.f32.mrb[0].mxu0
        %v8140 = vadd.f32 0.0, %v8139
        %v8141 = vpop.f32.mrb[0].mxu0
        %v8142 = vadd.f32 0.0, %v8141
        %8143 = vmatprep.mubr.bf16.mxu0 0
        %8144 = vmatmul.mubr.bf16.gmra.mrb[0].mxu0 %v7855
        %v8145 = vpop.f32.mrb[0].mxu0
        %v8146 = vadd.f32 0.0, %v8145
        %v8147 = vpop.f32.mrb[0].mxu0
        %v8148 = vadd.f32 0.0, %v8147
        %v8149 = vpop.f32.mrb[0].mxu0
        %v8150 = vadd.f32 0.0, %v8149
        %v8151 = vpop.f32.mrb[0].mxu0
        %v8152 = vadd.f32 0.0, %v8151
        %8153 = vmatprep.mubr.bf16.mxu0 0
        %8154 = vmatmul.mubr.bf16.gmra.mrb[0].mxu0 %v7858
        %v8155 = vpop.f32.mrb[0].mxu0
        %v8156 = vadd.f32 0.0, %v8155
        %v8157 = vpop.f32.mrb[0].mxu0
        %v8158 = vadd.f32 0.0, %v8157
        %v8159 = vpop.f32.mrb[0].mxu0
        %v8160 = vadd.f32 0.0, %v8159
        %v8161 = vpop.f32.mrb[0].mxu0
        %v8162 = vadd.f32 0.0, %v8161
        %8163 = vmatprep.mubr.bf16.mxu0 0
        %8164 = vmatmul.mubr.bf16.gmra.mrb[0].mxu0 %v7861
        %v8165 = vpop.f32.mrb[0].mxu0
        %v8166 = vadd.f32 0.0, %v8165
        %v8167 = vpop.f32.mrb[0].mxu0
        %v8168 = vadd.f32 0.0, %v8167
        %v8169 = vpop.f32.mrb[0].mxu0
        %v8170 = vadd.f32 0.0, %v8169
        %v8171 = vpop.f32.mrb[0].mxu0
        %v8172 = vadd.f32 0.0, %v8171
        %8173 = vmatprep.mubr.bf16.mxu0 0
        %8174 = vmatmul.mubr.bf16.gmra.mrb[0].mxu0 %v7864
        %v8175 = vpop.f32.mrb[0].mxu0
        %v8176 = vadd.f32 0.0, %v8175
        %v8177 = vpop.f32.mrb[0].mxu0
        %v8178 = vadd.f32 0.0, %v8177
        %v8179 = vpop.f32.mrb[0].mxu0
        %v8180 = vadd.f32 0.0, %v8179
        %v8181 = vpop.f32.mrb[0].mxu0
        %v8182 = vadd.f32 0.0, %v8181
        %8183 = vmatprep.mubr.bf16.mxu0 0
        %8184 = vmatmul.mubr.bf16.gmra.mrb[0].mxu0 %v7867
        %v8185 = vpop.f32.mrb[0].mxu0
        %v8186 = vadd.f32 0.0, %v8185
        %v8187 = vpop.f32.mrb[0].mxu0
        %v8188 = vadd.f32 0.0, %v8187
        %v8189 = vpop.f32.mrb[0].mxu0
        %v8190 = vadd.f32 0.0, %v8189
        %v8191 = vpop.f32.mrb[0].mxu0
        %v8192 = vadd.f32 0.0, %v8191
        %8193 = vmatprep.mubr.bf16.mxu0 0
        %8194 = vmatmul.mubr.bf16.gmra.mrb[0].mxu0 %v7870
        %v8195 = vpop.f32.mrb[0].mxu0
        %v8196 = vadd.f32 0.0, %v8195
        %v8197 = vpop.f32.mrb[0].mxu0
        %v8198 = vadd.f32 0.0, %v8197
        %v8199 = vpop.f32.mrb[0].mxu0
        %v8200 = vadd.f32 0.0, %v8199
        %v8201 = vpop.f32.mrb[0].mxu0
        %v8202 = vadd.f32 0.0, %v8201
        %8203 = vmatprep.mubr.bf16.mxu0 0
        %8204 = vmatmul.mubr.bf16.gmra.mrb[0].mxu0 %v7873
        %v8205 = vpop.f32.mrb[0].mxu0
        %v8206 = vadd.f32 0.0, %v8205
        %v8207 = vpop.f32.mrb[0].mxu0
        %v8208 = vadd.f32 0.0, %v8207
        %v8209 = vpop.f32.mrb[0].mxu0
        %v8210 = vadd.f32 0.0, %v8209
        %v8211 = vpop.f32.mrb[0].mxu0
        %v8212 = vadd.f32 0.0, %v8211
        %8213 = vmatprep.mubr.bf16.mxu0 0
        %8214 = vmatmul.mubr.bf16.gmra.mrb[0].mxu0 %v7876
        %v8215 = vpop.f32.mrb[0].mxu0
        %v8216 = vadd.f32 0.0, %v8215
        %v8217 = vpop.f32.mrb[0].mxu0
        %v8218 = vadd.f32 0.0, %v8217
        %v8219 = vpop.f32.mrb[0].mxu0
        %v8220 = vadd.f32 0.0, %v8219
        %v8221 = vpop.f32.mrb[0].mxu0
        %v8222 = vadd.f32 0.0, %v8221
        %8223 = vmatprep.mubr.bf16.mxu0 0
        %8224 = vmatmul.mubr.bf16.gmra.mrb[0].mxu0 %v7879
        %v8225 = vpop.f32.mrb[0].mxu0
        %v8226 = vadd.f32 0.0, %v8225
        %v8227 = vpop.f32.mrb[0].mxu0
        %v8228 = vadd.f32 0.0, %v8227
        %v8229 = vpop.f32.mrb[0].mxu0
        %v8230 = vadd.f32 0.0, %v8229
        %v8231 = vpop.f32.mrb[0].mxu0
        %v8232 = vadd.f32 0.0, %v8231
        %8233 = vdwg.mxu0
        %v8234 = vrot.slane %v7916, 7
        %v8235 = vrot.slane %v7920, 7
        %v8236 = vrot.slane %v7926, 7
        %v8237 = vrot.slane %v7930, 7
        %v8238 = vrot.slane %v7936, 7
        %v8239 = vrot.slane %v7940, 7
        %v8240 = vrot.slane %v7946, 7
        %v8241 = vrot.slane %v7950, 7
        %v8242 = vrot.slane %v7956, 7
        %v8243 = vrot.slane %v7960, 7
        %v8244 = vrot.slane %v7966, 7
        %v8245 = vrot.slane %v7970, 7
        %v8246 = vrot.slane %v7976, 7
        %v8247 = vrot.slane %v7980, 7
        %v8248 = vrot.slane %v7986, 7
        %v8249 = vrot.slane %v7990, 7
        %v8250 = vrot.slane %v7996, 7
        %v8251 = vrot.slane %v8000, 7
        %v8252 = vrot.slane %v8006, 7
        %v8253 = vrot.slane %v8010, 7
        %v8254 = vrot.slane %v8016, 7
        %v8255 = vrot.slane %v8020, 7
        %v8256 = vrot.slane %v8026, 7
        %v8257 = vrot.slane %v8030, 7
        %v8258 = vrot.slane %v8036, 7
        %v8259 = vrot.slane %v8040, 7
        %v8260 = vrot.slane %v8046, 7
        %v8261 = vrot.slane %v8050, 7
        %v8262 = vrot.slane %v8056, 7
        %v8263 = vrot.slane %v8060, 7
        %v8264 = vrot.slane %v8066, 7
        %v8265 = vrot.slane %v8070, 7
        %v8266 = vrot.slane %v8076, 7
        %v8267 = vrot.slane %v8080, 7
        %v8268 = vrot.slane %v8086, 7
        %v8269 = vrot.slane %v8090, 7
        %v8270 = vrot.slane %v8096, 7
        %v8271 = vrot.slane %v8100, 7
        %v8272 = vrot.slane %v8106, 7
        %v8273 = vrot.slane %v8110, 7
        %v8274 = vrot.slane %v8116, 7
        %v8275 = vrot.slane %v8120, 7
        %v8276 = vrot.slane %v8126, 7
        %v8277 = vrot.slane %v8130, 7
        %v8278 = vrot.slane %v8136, 7
        %v8279 = vrot.slane %v8140, 7
        %v8280 = vrot.slane %v8146, 7
        %v8281 = vrot.slane %v8150, 7
        %v8282 = vrot.slane %v8156, 7
        %v8283 = vrot.slane %v8160, 7
        %v8284 = vrot.slane %v8166, 7
        %v8285 = vrot.slane %v8170, 7
        %v8286 = vrot.slane %v8176, 7
        %v8287 = vrot.slane %v8180, 7
        %v8288 = vrot.slane %v8186, 7
        %v8289 = vrot.slane %v8190, 7
        %v8290 = vrot.slane %v8196, 7
        %v8291 = vrot.slane %v8200, 7
        %v8292 = vrot.slane %v8206, 7
        %v8293 = vrot.slane %v8210, 7
        %v8294 = vrot.slane %v8216, 7
        %v8295 = vrot.slane %v8220, 7
        %v8296 = vrot.slane %v8226, 7
        %v8297 = vrot.slane %v8230, 7
        %v8298 = vsel %vm1724, %v8296, %v8297
        %v8299 = vsel %vm1724, %v8295, %v8296
        %v8300 = vsel %vm1724, %v8294, %v8295
        %v8301 = vsel %vm1724, %v8293, %v8294
        %v8302 = vsel %vm1724, %v8292, %v8293
        %v8303 = vsel %vm1724, %v8291, %v8292
        %v8304 = vsel %vm1724, %v8290, %v8291
        %v8305 = vsel %vm1724, %v8289, %v8290
        %v8306 = vsel %vm1724, %v8288, %v8289
        %v8307 = vsel %vm1724, %v8287, %v8288
        %v8308 = vsel %vm1724, %v8286, %v8287
        %v8309 = vsel %vm1724, %v8285, %v8286
        %v8310 = vsel %vm1724, %v8284, %v8285
        %v8311 = vsel %vm1724, %v8283, %v8284
        %v8312 = vsel %vm1724, %v8282, %v8283
        %v8313 = vsel %vm1724, %v8281, %v8282
        %v8314 = vsel %vm1724, %v8280, %v8281
        %v8315 = vsel %vm1724, %v8279, %v8280
        %v8316 = vsel %vm1724, %v8278, %v8279
        %v8317 = vsel %vm1724, %v8277, %v8278
        %v8318 = vsel %vm1724, %v8276, %v8277
        %v8319 = vsel %vm1724, %v8275, %v8276
        %v8320 = vsel %vm1724, %v8274, %v8275
        %v8321 = vsel %vm1724, %v8273, %v8274
        %v8322 = vsel %vm1724, %v8272, %v8273
        %v8323 = vsel %vm1724, %v8271, %v8272
        %v8324 = vsel %vm1724, %v8270, %v8271
        %v8325 = vsel %vm1724, %v8269, %v8270
        %v8326 = vsel %vm1724, %v8268, %v8269
        %v8327 = vsel %vm1724, %v8267, %v8268
        %v8328 = vsel %vm1724, %v8266, %v8267
        %v8329 = vsel %vm1724, %v8265, %v8266
        %v8330 = vsel %vm1724, %v8264, %v8265
        %v8331 = vsel %vm1724, %v8263, %v8264
        %v8332 = vsel %vm1724, %v8262, %v8263
        %v8333 = vsel %vm1724, %v8261, %v8262
        %v8334 = vsel %vm1724, %v8260, %v8261
        %v8335 = vsel %vm1724, %v8259, %v8260
        %v8336 = vsel %vm1724, %v8258, %v8259
        %v8337 = vsel %vm1724, %v8257, %v8258
        %v8338 = vsel %vm1724, %v8256, %v8257
        %v8339 = vsel %vm1724, %v8255, %v8256
        %v8340 = vsel %vm1724, %v8254, %v8255
        %v8341 = vsel %vm1724, %v8253, %v8254
        %v8342 = vsel %vm1724, %v8252, %v8253
        %v8343 = vsel %vm1724, %v8251, %v8252
        %v8344 = vsel %vm1724, %v8250, %v8251
        %v8345 = vsel %vm1724, %v8249, %v8250
        %v8346 = vsel %vm1724, %v8248, %v8249
        %v8347 = vsel %vm1724, %v8247, %v8248
        %v8348 = vsel %vm1724, %v8246, %v8247
        %v8349 = vsel %vm1724, %v8245, %v8246
        %v8350 = vsel %vm1724, %v8244, %v8245
        %v8351 = vsel %vm1724, %v8243, %v8244
        %v8352 = vsel %vm1724, %v8242, %v8243
        %v8353 = vsel %vm1724, %v8241, %v8242
        %v8354 = vsel %vm1724, %v8240, %v8241
        %v8355 = vsel %vm1724, %v8239, %v8240
        %v8356 = vsel %vm1724, %v8238, %v8239
        %v8357 = vsel %vm1724, %v8237, %v8238
        %v8358 = vsel %vm1724, %v8236, %v8237
        %v8359 = vsel %vm1724, %v8235, %v8236
        %v8360 = vsel %vm1724, %v8234, %v8235
        %v8361 = vsel %vm1724, %v8297, %v8234
        %8363 = vset.pattern.permute.xlu0 0
        %8364 = vperm.xlu0 %8363, %v6104
        %v8365 = vpop.permute.xlu0 %8364
        %8368 = vset.pattern.permute.xlu0 0
        %8369 = vperm.xlu0 %8368, %v6105
        %v8370 = vpop.permute.xlu0 %8369
        %8373 = vset.pattern.permute.xlu0 0
        %8374 = vperm.xlu0 %8373, %v6106
        %v8375 = vpop.permute.xlu0 %8374
        %8378 = vset.pattern.permute.xlu0 0
        %8379 = vperm.xlu0 %8378, %v6107
        %v8380 = vpop.permute.xlu0 %8379
        %8383 = vset.pattern.permute.xlu0 0
        %8384 = vperm.xlu0 %8383, %v6108
        %v8385 = vpop.permute.xlu0 %8384
        %8388 = vset.pattern.permute.xlu0 0
        %8389 = vperm.xlu0 %8388, %v6109
        %v8390 = vpop.permute.xlu0 %8389
        %8393 = vset.pattern.permute.xlu0 0
        %8394 = vperm.xlu0 %8393, %v6110
        %v8395 = vpop.permute.xlu0 %8394
        %8398 = vset.pattern.permute.xlu0 0
        %8399 = vperm.xlu0 %8398, %v6111
        %v8400 = vpop.permute.xlu0 %8399
        %8403 = vset.pattern.permute.xlu0 0
        %8404 = vperm.xlu0 %8403, %v6112
        %v8405 = vpop.permute.xlu0 %8404
        %8408 = vset.pattern.permute.xlu0 0
        %8409 = vperm.xlu0 %8408, %v6113
        %v8410 = vpop.permute.xlu0 %8409
        %8413 = vset.pattern.permute.xlu0 0
        %8414 = vperm.xlu0 %8413, %v6114
        %v8415 = vpop.permute.xlu0 %8414
        %8418 = vset.pattern.permute.xlu0 0
        %8419 = vperm.xlu0 %8418, %v6115
        %v8420 = vpop.permute.xlu0 %8419
        %8423 = vset.pattern.permute.xlu0 0
        %8424 = vperm.xlu0 %8423, %v6116
        %v8425 = vpop.permute.xlu0 %8424
        %8428 = vset.pattern.permute.xlu0 0
        %8429 = vperm.xlu0 %8428, %v6117
        %v8430 = vpop.permute.xlu0 %8429
        %8433 = vset.pattern.permute.xlu0 0
        %8434 = vperm.xlu0 %8433, %v6118
        %v8435 = vpop.permute.xlu0 %8434
        %8438 = vset.pattern.permute.xlu0 0
        %8439 = vperm.xlu0 %8438, %v6119
        %v8440 = vpop.permute.xlu0 %8439
        %8443 = vset.pattern.permute.xlu0 0
        %8444 = vperm.xlu0 %8443, %v6120
        %v8445 = vpop.permute.xlu0 %8444
        %8448 = vset.pattern.permute.xlu0 0
        %8449 = vperm.xlu0 %8448, %v6121
        %v8450 = vpop.permute.xlu0 %8449
        %8453 = vset.pattern.permute.xlu0 0
        %8454 = vperm.xlu0 %8453, %v6122
        %v8455 = vpop.permute.xlu0 %8454
        %8458 = vset.pattern.permute.xlu0 0
        %8459 = vperm.xlu0 %8458, %v6123
        %v8460 = vpop.permute.xlu0 %8459
        %8463 = vset.pattern.permute.xlu0 0
        %8464 = vperm.xlu0 %8463, %v6124
        %v8465 = vpop.permute.xlu0 %8464
        %8468 = vset.pattern.permute.xlu0 0
        %8469 = vperm.xlu0 %8468, %v6125
        %v8470 = vpop.permute.xlu0 %8469
        %8473 = vset.pattern.permute.xlu0 0
        %8474 = vperm.xlu0 %8473, %v6126
        %v8475 = vpop.permute.xlu0 %8474
        %8478 = vset.pattern.permute.xlu0 0
        %8479 = vperm.xlu0 %8478, %v6127
        %v8480 = vpop.permute.xlu0 %8479
        %8483 = vset.pattern.permute.xlu0 0
        %8484 = vperm.xlu0 %8483, %v6128
        %v8485 = vpop.permute.xlu0 %8484
        %8488 = vset.pattern.permute.xlu0 0
        %8489 = vperm.xlu0 %8488, %v6129
        %v8490 = vpop.permute.xlu0 %8489
        %8493 = vset.pattern.permute.xlu0 0
        %8494 = vperm.xlu0 %8493, %v6130
        %v8495 = vpop.permute.xlu0 %8494
        %8498 = vset.pattern.permute.xlu0 0
        %8499 = vperm.xlu0 %8498, %v6131
        %v8500 = vpop.permute.xlu0 %8499
        %8503 = vset.pattern.permute.xlu0 0
        %8504 = vperm.xlu0 %8503, %v6132
        %v8505 = vpop.permute.xlu0 %8504
        %8508 = vset.pattern.permute.xlu0 0
        %8509 = vperm.xlu0 %8508, %v6133
        %v8510 = vpop.permute.xlu0 %8509
        %8513 = vset.pattern.permute.xlu0 0
        %8514 = vperm.xlu0 %8513, %v6134
        %v8515 = vpop.permute.xlu0 %8514
        %8518 = vset.pattern.permute.xlu0 0
        %8519 = vperm.xlu0 %8518, %v6135
        %v8520 = vpop.permute.xlu0 %8519
        %8523 = vset.pattern.permute.xlu0 0
        %8524 = vperm.xlu0 %8523, %v6136
        %v8525 = vpop.permute.xlu0 %8524
        %8528 = vset.pattern.permute.xlu0 0
        %8529 = vperm.xlu0 %8528, %v6137
        %v8530 = vpop.permute.xlu0 %8529
        %8533 = vset.pattern.permute.xlu0 0
        %8534 = vperm.xlu0 %8533, %v6138
        %v8535 = vpop.permute.xlu0 %8534
        %8538 = vset.pattern.permute.xlu0 0
        %8539 = vperm.xlu0 %8538, %v6139
        %v8540 = vpop.permute.xlu0 %8539
        %8543 = vset.pattern.permute.xlu0 0
        %8544 = vperm.xlu0 %8543, %v6140
        %v8545 = vpop.permute.xlu0 %8544
        %8548 = vset.pattern.permute.xlu0 0
        %8549 = vperm.xlu0 %8548, %v6141
        %v8550 = vpop.permute.xlu0 %8549
        %8553 = vset.pattern.permute.xlu0 0
        %8554 = vperm.xlu0 %8553, %v6142
        %v8555 = vpop.permute.xlu0 %8554
        %8558 = vset.pattern.permute.xlu0 0
        %8559 = vperm.xlu0 %8558, %v6143
        %v8560 = vpop.permute.xlu0 %8559
        %8563 = vset.pattern.permute.xlu0 0
        %8564 = vperm.xlu0 %8563, %v6144
        %v8565 = vpop.permute.xlu0 %8564
        %8568 = vset.pattern.permute.xlu0 0
        %8569 = vperm.xlu0 %8568, %v6145
        %v8570 = vpop.permute.xlu0 %8569
        %8573 = vset.pattern.permute.xlu0 0
        %8574 = vperm.xlu0 %8573, %v6146
        %v8575 = vpop.permute.xlu0 %8574
        %8578 = vset.pattern.permute.xlu0 0
        %8579 = vperm.xlu0 %8578, %v6147
        %v8580 = vpop.permute.xlu0 %8579
        %8583 = vset.pattern.permute.xlu0 0
        %8584 = vperm.xlu0 %8583, %v6148
        %v8585 = vpop.permute.xlu0 %8584
        %8588 = vset.pattern.permute.xlu0 0
        %8589 = vperm.xlu0 %8588, %v6149
        %v8590 = vpop.permute.xlu0 %8589
        %8593 = vset.pattern.permute.xlu0 0
        %8594 = vperm.xlu0 %8593, %v6150
        %v8595 = vpop.permute.xlu0 %8594
        %8598 = vset.pattern.permute.xlu0 0
        %8599 = vperm.xlu0 %8598, %v6151
        %v8600 = vpop.permute.xlu0 %8599
        %8603 = vset.pattern.permute.xlu0 0
        %8604 = vperm.xlu0 %8603, %v6152
        %v8605 = vpop.permute.xlu0 %8604
        %8608 = vset.pattern.permute.xlu0 0
        %8609 = vperm.xlu0 %8608, %v6153
        %v8610 = vpop.permute.xlu0 %8609
        %8613 = vset.pattern.permute.xlu0 0
        %8614 = vperm.xlu0 %8613, %v6154
        %v8615 = vpop.permute.xlu0 %8614
        %8618 = vset.pattern.permute.xlu0 0
        %8619 = vperm.xlu0 %8618, %v6155
        %v8620 = vpop.permute.xlu0 %8619
        %8623 = vset.pattern.permute.xlu0 0
        %8624 = vperm.xlu0 %8623, %v6156
        %v8625 = vpop.permute.xlu0 %8624
        %8628 = vset.pattern.permute.xlu0 0
        %8629 = vperm.xlu0 %8628, %v6157
        %v8630 = vpop.permute.xlu0 %8629
        %8633 = vset.pattern.permute.xlu0 0
        %8634 = vperm.xlu0 %8633, %v6158
        %v8635 = vpop.permute.xlu0 %8634
        %8638 = vset.pattern.permute.xlu0 0
        %8639 = vperm.xlu0 %8638, %v6159
        %v8640 = vpop.permute.xlu0 %8639
        %8643 = vset.pattern.permute.xlu0 0
        %8644 = vperm.xlu0 %8643, %v6160
        %v8645 = vpop.permute.xlu0 %8644
        %8648 = vset.pattern.permute.xlu0 0
        %8649 = vperm.xlu0 %8648, %v6161
        %v8650 = vpop.permute.xlu0 %8649
        %8653 = vset.pattern.permute.xlu0 0
        %8654 = vperm.xlu0 %8653, %v6162
        %v8655 = vpop.permute.xlu0 %8654
        %8658 = vset.pattern.permute.xlu0 0
        %8659 = vperm.xlu0 %8658, %v6163
        %v8660 = vpop.permute.xlu0 %8659
        %8663 = vset.pattern.permute.xlu0 0
        %8664 = vperm.xlu0 %8663, %v6164
        %v8665 = vpop.permute.xlu0 %8664
        %8668 = vset.pattern.permute.xlu0 0
        %8669 = vperm.xlu0 %8668, %v6165
        %v8670 = vpop.permute.xlu0 %8669
        %8673 = vset.pattern.permute.xlu0 0
        %8674 = vperm.xlu0 %8673, %v6166
        %v8675 = vpop.permute.xlu0 %8674
        %8678 = vset.pattern.permute.xlu0 0
        %8679 = vperm.xlu0 %8678, %v6167
        %v8680 = vpop.permute.xlu0 %8679
        %v8682 = vmul.f32 %v8361, %v8365
        %v8683 = vmul.f32 %v8360, %v8370
        %v8684 = vmul.f32 %v8359, %v8375
        %v8685 = vmul.f32 %v8358, %v8380
        %v8686 = vmul.f32 %v8357, %v8385
        %v8687 = vmul.f32 %v8356, %v8390
        %v8688 = vmul.f32 %v8355, %v8395
        %v8689 = vmul.f32 %v8354, %v8400
        %v8690 = vmul.f32 %v8353, %v8405
        %v8691 = vmul.f32 %v8352, %v8410
        %v8692 = vmul.f32 %v8351, %v8415
        %v8693 = vmul.f32 %v8350, %v8420
        %v8694 = vmul.f32 %v8349, %v8425
        %v8695 = vmul.f32 %v8348, %v8430
        %v8696 = vmul.f32 %v8347, %v8435
        %v8697 = vmul.f32 %v8346, %v8440
        %v8698 = vmul.f32 %v8345, %v8445
        %v8699 = vmul.f32 %v8344, %v8450
        %v8700 = vmul.f32 %v8343, %v8455
        %v8701 = vmul.f32 %v8342, %v8460
        %v8702 = vmul.f32 %v8341, %v8465
        %v8703 = vmul.f32 %v8340, %v8470
        %v8704 = vmul.f32 %v8339, %v8475
        %v8705 = vmul.f32 %v8338, %v8480
        %v8706 = vmul.f32 %v8337, %v8485
        %v8707 = vmul.f32 %v8336, %v8490
        %v8708 = vmul.f32 %v8335, %v8495
        %v8709 = vmul.f32 %v8334, %v8500
        %v8710 = vmul.f32 %v8333, %v8505
        %v8711 = vmul.f32 %v8332, %v8510
        %v8712 = vmul.f32 %v8331, %v8515
        %v8713 = vmul.f32 %v8330, %v8520
        %v8714 = vmul.f32 %v8329, %v8525
        %v8715 = vmul.f32 %v8328, %v8530
        %v8716 = vmul.f32 %v8327, %v8535
        %v8717 = vmul.f32 %v8326, %v8540
        %v8718 = vmul.f32 %v8325, %v8545
        %v8719 = vmul.f32 %v8324, %v8550
        %v8720 = vmul.f32 %v8323, %v8555
        %v8721 = vmul.f32 %v8322, %v8560
        %v8722 = vmul.f32 %v8321, %v8565
        %v8723 = vmul.f32 %v8320, %v8570
        %v8724 = vmul.f32 %v8319, %v8575
        %v8725 = vmul.f32 %v8318, %v8580
        %v8726 = vmul.f32 %v8317, %v8585
        %v8727 = vmul.f32 %v8316, %v8590
        %v8728 = vmul.f32 %v8315, %v8595
        %v8729 = vmul.f32 %v8314, %v8600
        %v8730 = vmul.f32 %v8313, %v8605
        %v8731 = vmul.f32 %v8312, %v8610
        %v8732 = vmul.f32 %v8311, %v8615
        %v8733 = vmul.f32 %v8310, %v8620
        %v8734 = vmul.f32 %v8309, %v8625
        %v8735 = vmul.f32 %v8308, %v8630
        %v8736 = vmul.f32 %v8307, %v8635
        %v8737 = vmul.f32 %v8306, %v8640
        %v8738 = vmul.f32 %v8305, %v8645
        %v8739 = vmul.f32 %v8304, %v8650
        %v8740 = vmul.f32 %v8303, %v8655
        %v8741 = vmul.f32 %v8302, %v8660
        %v8742 = vmul.f32 %v8301, %v8665
        %v8743 = vmul.f32 %v8300, %v8670
        %v8744 = vmul.f32 %v8299, %v8675
        %v8745 = vmul.f32 %v8298, %v8680
        %v8746 = vrot.slane %v7918, 1
        %v8747 = vrot.slane %v7922, 1
        %v8748 = vrot.slane %v7928, 1
        %v8749 = vrot.slane %v7932, 1
        %v8750 = vrot.slane %v7938, 1
        %v8751 = vrot.slane %v7942, 1
        %v8752 = vrot.slane %v7948, 1
        %v8753 = vrot.slane %v7952, 1
        %v8754 = vrot.slane %v7958, 1
        %v8755 = vrot.slane %v7962, 1
        %v8756 = vrot.slane %v7968, 1
        %v8757 = vrot.slane %v7972, 1
        %v8758 = vrot.slane %v7978, 1
        %v8759 = vrot.slane %v7982, 1
        %v8760 = vrot.slane %v7988, 1
        %v8761 = vrot.slane %v7992, 1
        %v8762 = vrot.slane %v7998, 1
        %v8763 = vrot.slane %v8002, 1
        %v8764 = vrot.slane %v8008, 1
        %v8765 = vrot.slane %v8012, 1
        %v8766 = vrot.slane %v8018, 1
        %v8767 = vrot.slane %v8022, 1
        %v8768 = vrot.slane %v8028, 1
        %v8769 = vrot.slane %v8032, 1
        %v8770 = vrot.slane %v8038, 1
        %v8771 = vrot.slane %v8042, 1
        %v8772 = vrot.slane %v8048, 1
        %v8773 = vrot.slane %v8052, 1
        %v8774 = vrot.slane %v8058, 1
        %v8775 = vrot.slane %v8062, 1
        %v8776 = vrot.slane %v8068, 1
        %v8777 = vrot.slane %v8072, 1
        %v8778 = vrot.slane %v8078, 1
        %v8779 = vrot.slane %v8082, 1
        %v8780 = vrot.slane %v8088, 1
        %v8781 = vrot.slane %v8092, 1
        %v8782 = vrot.slane %v8098, 1
        %v8783 = vrot.slane %v8102, 1
        %v8784 = vrot.slane %v8108, 1
        %v8785 = vrot.slane %v8112, 1
        %v8786 = vrot.slane %v8118, 1
        %v8787 = vrot.slane %v8122, 1
        %v8788 = vrot.slane %v8128, 1
        %v8789 = vrot.slane %v8132, 1
        %v8790 = vrot.slane %v8138, 1
        %v8791 = vrot.slane %v8142, 1
        %v8792 = vrot.slane %v8148, 1
        %v8793 = vrot.slane %v8152, 1
        %v8794 = vrot.slane %v8158, 1
        %v8795 = vrot.slane %v8162, 1
        %v8796 = vrot.slane %v8168, 1
        %v8797 = vrot.slane %v8172, 1
        %v8798 = vrot.slane %v8178, 1
        %v8799 = vrot.slane %v8182, 1
        %v8800 = vrot.slane %v8188, 1
        %v8801 = vrot.slane %v8192, 1
        %v8802 = vrot.slane %v8198, 1
        %v8803 = vrot.slane %v8202, 1
        %v8804 = vrot.slane %v8208, 1
        %v8805 = vrot.slane %v8212, 1
        %v8806 = vrot.slane %v8218, 1
        %v8807 = vrot.slane %v8222, 1
        %v8808 = vrot.slane %v8228, 1
        %v8809 = vrot.slane %v8232, 1
        %v8810 = vsel %vm1757, %v8808, %v8809
        %v8811 = vsel %vm1757, %v8807, %v8808
        %v8812 = vsel %vm1757, %v8806, %v8807
        %v8813 = vsel %vm1757, %v8805, %v8806
        %v8814 = vsel %vm1757, %v8804, %v8805
        %v8815 = vsel %vm1757, %v8803, %v8804
        %v8816 = vsel %vm1757, %v8802, %v8803
        %v8817 = vsel %vm1757, %v8801, %v8802
        %v8818 = vsel %vm1757, %v8800, %v8801
        %v8819 = vsel %vm1757, %v8799, %v8800
        %v8820 = vsel %vm1757, %v8798, %v8799
        %v8821 = vsel %vm1757, %v8797, %v8798
        %v8822 = vsel %vm1757, %v8796, %v8797
        %v8823 = vsel %vm1757, %v8795, %v8796
        %v8824 = vsel %vm1757, %v8794, %v8795
        %v8825 = vsel %vm1757, %v8793, %v8794
        %v8826 = vsel %vm1757, %v8792, %v8793
        %v8827 = vsel %vm1757, %v8791, %v8792
        %v8828 = vsel %vm1757, %v8790, %v8791
        %v8829 = vsel %vm1757, %v8789, %v8790
        %v8830 = vsel %vm1757, %v8788, %v8789
        %v8831 = vsel %vm1757, %v8787, %v8788
        %v8832 = vsel %vm1757, %v8786, %v8787
        %v8833 = vsel %vm1757, %v8785, %v8786
        %v8834 = vsel %vm1757, %v8784, %v8785
        %v8835 = vsel %vm1757, %v8783, %v8784
        %v8836 = vsel %vm1757, %v8782, %v8783
        %v8837 = vsel %vm1757, %v8781, %v8782
        %v8838 = vsel %vm1757, %v8780, %v8781
        %v8839 = vsel %vm1757, %v8779, %v8780
        %v8840 = vsel %vm1757, %v8778, %v8779
        %v8841 = vsel %vm1757, %v8777, %v8778
        %v8842 = vsel %vm1757, %v8776, %v8777
        %v8843 = vsel %vm1757, %v8775, %v8776
        %v8844 = vsel %vm1757, %v8774, %v8775
        %v8845 = vsel %vm1757, %v8773, %v8774
        %v8846 = vsel %vm1757, %v8772, %v8773
        %v8847 = vsel %vm1757, %v8771, %v8772
        %v8848 = vsel %vm1757, %v8770, %v8771
        %v8849 = vsel %vm1757, %v8769, %v8770
        %v8850 = vsel %vm1757, %v8768, %v8769
        %v8851 = vsel %vm1757, %v8767, %v8768
        %v8852 = vsel %vm1757, %v8766, %v8767
        %v8853 = vsel %vm1757, %v8765, %v8766
        %v8854 = vsel %vm1757, %v8764, %v8765
        %v8855 = vsel %vm1757, %v8763, %v8764
        %v8856 = vsel %vm1757, %v8762, %v8763
        %v8857 = vsel %vm1757, %v8761, %v8762
        %v8858 = vsel %vm1757, %v8760, %v8761
        %v8859 = vsel %vm1757, %v8759, %v8760
        %v8860 = vsel %vm1757, %v8758, %v8759
        %v8861 = vsel %vm1757, %v8757, %v8758
        %v8862 = vsel %vm1757, %v8756, %v8757
        %v8863 = vsel %vm1757, %v8755, %v8756
        %v8864 = vsel %vm1757, %v8754, %v8755
        %v8865 = vsel %vm1757, %v8753, %v8754
        %v8866 = vsel %vm1757, %v8752, %v8753
        %v8867 = vsel %vm1757, %v8751, %v8752
        %v8868 = vsel %vm1757, %v8750, %v8751
        %v8869 = vsel %vm1757, %v8749, %v8750
        %v8870 = vsel %vm1757, %v8748, %v8749
        %v8871 = vsel %vm1757, %v8747, %v8748
        %v8872 = vsel %vm1757, %v8746, %v8747
        %v8873 = vsel %vm1757, %v8809, %v8746
        %8874 = vset.pattern.permute.xlu0 1
        %8875 = vperm.xlu0 %8874, %v6104
        %v8876 = vpop.permute.xlu0 %8875
        %8878 = vset.pattern.permute.xlu0 1
        %8879 = vperm.xlu0 %8878, %v6105
        %v8880 = vpop.permute.xlu0 %8879
        %8882 = vset.pattern.permute.xlu0 1
        %8883 = vperm.xlu0 %8882, %v6106
        %v8884 = vpop.permute.xlu0 %8883
        %8886 = vset.pattern.permute.xlu0 1
        %8887 = vperm.xlu0 %8886, %v6107
        %v8888 = vpop.permute.xlu0 %8887
        %8890 = vset.pattern.permute.xlu0 1
        %8891 = vperm.xlu0 %8890, %v6108
        %v8892 = vpop.permute.xlu0 %8891
        %8894 = vset.pattern.permute.xlu0 1
        %8895 = vperm.xlu0 %8894, %v6109
        %v8896 = vpop.permute.xlu0 %8895
        %8898 = vset.pattern.permute.xlu0 1
        %8899 = vperm.xlu0 %8898, %v6110
        %v8900 = vpop.permute.xlu0 %8899
        %8902 = vset.pattern.permute.xlu0 1
        %8903 = vperm.xlu0 %8902, %v6111
        %v8904 = vpop.permute.xlu0 %8903
        %8906 = vset.pattern.permute.xlu0 1
        %8907 = vperm.xlu0 %8906, %v6112
        %v8908 = vpop.permute.xlu0 %8907
        %8910 = vset.pattern.permute.xlu0 1
        %8911 = vperm.xlu0 %8910, %v6113
        %v8912 = vpop.permute.xlu0 %8911
        %8914 = vset.pattern.permute.xlu0 1
        %8915 = vperm.xlu0 %8914, %v6114
        %v8916 = vpop.permute.xlu0 %8915
        %8918 = vset.pattern.permute.xlu0 1
        %8919 = vperm.xlu0 %8918, %v6115
        %v8920 = vpop.permute.xlu0 %8919
        %8922 = vset.pattern.permute.xlu0 1
        %8923 = vperm.xlu0 %8922, %v6116
        %v8924 = vpop.permute.xlu0 %8923
        %8926 = vset.pattern.permute.xlu0 1
        %8927 = vperm.xlu0 %8926, %v6117
        %v8928 = vpop.permute.xlu0 %8927
        %8930 = vset.pattern.permute.xlu0 1
        %8931 = vperm.xlu0 %8930, %v6118
        %v8932 = vpop.permute.xlu0 %8931
        %8934 = vset.pattern.permute.xlu0 1
        %8935 = vperm.xlu0 %8934, %v6119
        %v8936 = vpop.permute.xlu0 %8935
        %8938 = vset.pattern.permute.xlu0 1
        %8939 = vperm.xlu0 %8938, %v6120
        %v8940 = vpop.permute.xlu0 %8939
        %8942 = vset.pattern.permute.xlu0 1
        %8943 = vperm.xlu0 %8942, %v6121
        %v8944 = vpop.permute.xlu0 %8943
        %8946 = vset.pattern.permute.xlu0 1
        %8947 = vperm.xlu0 %8946, %v6122
        %v8948 = vpop.permute.xlu0 %8947
        %8950 = vset.pattern.permute.xlu0 1
        %8951 = vperm.xlu0 %8950, %v6123
        %v8952 = vpop.permute.xlu0 %8951
        %8954 = vset.pattern.permute.xlu0 1
        %8955 = vperm.xlu0 %8954, %v6124
        %v8956 = vpop.permute.xlu0 %8955
        %8958 = vset.pattern.permute.xlu0 1
        %8959 = vperm.xlu0 %8958, %v6125
        %v8960 = vpop.permute.xlu0 %8959
        %8962 = vset.pattern.permute.xlu0 1
        %8963 = vperm.xlu0 %8962, %v6126
        %v8964 = vpop.permute.xlu0 %8963
        %8966 = vset.pattern.permute.xlu0 1
        %8967 = vperm.xlu0 %8966, %v6127
        %v8968 = vpop.permute.xlu0 %8967
        %8970 = vset.pattern.permute.xlu0 1
        %8971 = vperm.xlu0 %8970, %v6128
        %v8972 = vpop.permute.xlu0 %8971
        %8974 = vset.pattern.permute.xlu0 1
        %8975 = vperm.xlu0 %8974, %v6129
        %v8976 = vpop.permute.xlu0 %8975
        %8978 = vset.pattern.permute.xlu0 1
        %8979 = vperm.xlu0 %8978, %v6130
        %v8980 = vpop.permute.xlu0 %8979
        %8982 = vset.pattern.permute.xlu0 1
        %8983 = vperm.xlu0 %8982, %v6131
        %v8984 = vpop.permute.xlu0 %8983
        %8986 = vset.pattern.permute.xlu0 1
        %8987 = vperm.xlu0 %8986, %v6132
        %v8988 = vpop.permute.xlu0 %8987
        %8990 = vset.pattern.permute.xlu0 1
        %8991 = vperm.xlu0 %8990, %v6133
        %v8992 = vpop.permute.xlu0 %8991
        %8994 = vset.pattern.permute.xlu0 1
        %8995 = vperm.xlu0 %8994, %v6134
        %v8996 = vpop.permute.xlu0 %8995
        %8998 = vset.pattern.permute.xlu0 1
        %8999 = vperm.xlu0 %8998, %v6135
        %v9000 = vpop.permute.xlu0 %8999
        %9002 = vset.pattern.permute.xlu0 1
        %9003 = vperm.xlu0 %9002, %v6136
        %v9004 = vpop.permute.xlu0 %9003
        %9006 = vset.pattern.permute.xlu0 1
        %9007 = vperm.xlu0 %9006, %v6137
        %v9008 = vpop.permute.xlu0 %9007
        %9010 = vset.pattern.permute.xlu0 1
        %9011 = vperm.xlu0 %9010, %v6138
        %v9012 = vpop.permute.xlu0 %9011
        %9014 = vset.pattern.permute.xlu0 1
        %9015 = vperm.xlu0 %9014, %v6139
        %v9016 = vpop.permute.xlu0 %9015
        %9018 = vset.pattern.permute.xlu0 1
        %9019 = vperm.xlu0 %9018, %v6140
        %v9020 = vpop.permute.xlu0 %9019
        %9022 = vset.pattern.permute.xlu0 1
        %9023 = vperm.xlu0 %9022, %v6141
        %v9024 = vpop.permute.xlu0 %9023
        %9026 = vset.pattern.permute.xlu0 1
        %9027 = vperm.xlu0 %9026, %v6142
        %v9028 = vpop.permute.xlu0 %9027
        %9030 = vset.pattern.permute.xlu0 1
        %9031 = vperm.xlu0 %9030, %v6143
        %v9032 = vpop.permute.xlu0 %9031
        %9034 = vset.pattern.permute.xlu0 1
        %9035 = vperm.xlu0 %9034, %v6144
        %v9036 = vpop.permute.xlu0 %9035
        %9038 = vset.pattern.permute.xlu0 1
        %9039 = vperm.xlu0 %9038, %v6145
        %v9040 = vpop.permute.xlu0 %9039
        %9042 = vset.pattern.permute.xlu0 1
        %9043 = vperm.xlu0 %9042, %v6146
        %v9044 = vpop.permute.xlu0 %9043
        %9046 = vset.pattern.permute.xlu0 1
        %9047 = vperm.xlu0 %9046, %v6147
        %v9048 = vpop.permute.xlu0 %9047
        %9050 = vset.pattern.permute.xlu0 1
        %9051 = vperm.xlu0 %9050, %v6148
        %v9052 = vpop.permute.xlu0 %9051
        %9054 = vset.pattern.permute.xlu0 1
        %9055 = vperm.xlu0 %9054, %v6149
        %v9056 = vpop.permute.xlu0 %9055
        %9058 = vset.pattern.permute.xlu0 1
        %9059 = vperm.xlu0 %9058, %v6150
        %v9060 = vpop.permute.xlu0 %9059
        %9062 = vset.pattern.permute.xlu0 1
        %9063 = vperm.xlu0 %9062, %v6151
        %v9064 = vpop.permute.xlu0 %9063
        %9066 = vset.pattern.permute.xlu0 1
        %9067 = vperm.xlu0 %9066, %v6152
        %v9068 = vpop.permute.xlu0 %9067
        %9070 = vset.pattern.permute.xlu0 1
        %9071 = vperm.xlu0 %9070, %v6153
        %v9072 = vpop.permute.xlu0 %9071
        %9074 = vset.pattern.permute.xlu0 1
        %9075 = vperm.xlu0 %9074, %v6154
        %v9076 = vpop.permute.xlu0 %9075
        %9078 = vset.pattern.permute.xlu0 1
        %9079 = vperm.xlu0 %9078, %v6155
        %v9080 = vpop.permute.xlu0 %9079
        %9082 = vset.pattern.permute.xlu0 1
        %9083 = vperm.xlu0 %9082, %v6156
        %v9084 = vpop.permute.xlu0 %9083
        %9086 = vset.pattern.permute.xlu0 1
        %9087 = vperm.xlu0 %9086, %v6157
        %v9088 = vpop.permute.xlu0 %9087
        %9090 = vset.pattern.permute.xlu0 1
        %9091 = vperm.xlu0 %9090, %v6158
        %v9092 = vpop.permute.xlu0 %9091
        %9094 = vset.pattern.permute.xlu0 1
        %9095 = vperm.xlu0 %9094, %v6159
        %v9096 = vpop.permute.xlu0 %9095
        %9098 = vset.pattern.permute.xlu0 1
        %9099 = vperm.xlu0 %9098, %v6160
        %v9100 = vpop.permute.xlu0 %9099
        %9102 = vset.pattern.permute.xlu0 1
        %9103 = vperm.xlu0 %9102, %v6161
        %v9104 = vpop.permute.xlu0 %9103
        %9106 = vset.pattern.permute.xlu0 1
        %9107 = vperm.xlu0 %9106, %v6162
        %v9108 = vpop.permute.xlu0 %9107
        %9110 = vset.pattern.permute.xlu0 1
        %9111 = vperm.xlu0 %9110, %v6163
        %v9112 = vpop.permute.xlu0 %9111
        %9114 = vset.pattern.permute.xlu0 1
        %9115 = vperm.xlu0 %9114, %v6164
        %v9116 = vpop.permute.xlu0 %9115
        %9118 = vset.pattern.permute.xlu0 1
        %9119 = vperm.xlu0 %9118, %v6165
        %v9120 = vpop.permute.xlu0 %9119
        %9122 = vset.pattern.permute.xlu0 1
        %9123 = vperm.xlu0 %9122, %v6166
        %v9124 = vpop.permute.xlu0 %9123
        %9126 = vset.pattern.permute.xlu0 1
        %9127 = vperm.xlu0 %9126, %v6167
        %v9128 = vpop.permute.xlu0 %9127
        %v9130 = vmul.f32 %v8872, %v8876
        %v9131 = vmul.f32 %v8871, %v8880
        %v9132 = vmul.f32 %v8870, %v8884
        %v9133 = vmul.f32 %v8869, %v8888
        %v9134 = vmul.f32 %v8868, %v8892
        %v9135 = vmul.f32 %v8867, %v8896
        %v9136 = vmul.f32 %v8866, %v8900
        %v9137 = vmul.f32 %v8865, %v8904
        %v9138 = vmul.f32 %v8864, %v8908
        %v9139 = vmul.f32 %v8863, %v8912
        %v9140 = vmul.f32 %v8862, %v8916
        %v9141 = vmul.f32 %v8861, %v8920
        %v9142 = vmul.f32 %v8860, %v8924
        %v9143 = vmul.f32 %v8859, %v8928
        %v9144 = vmul.f32 %v8858, %v8932
        %v9145 = vmul.f32 %v8857, %v8936
        %v9146 = vmul.f32 %v8856, %v8940
        %v9147 = vmul.f32 %v8855, %v8944
        %v9148 = vmul.f32 %v8854, %v8948
        %v9149 = vmul.f32 %v8853, %v8952
        %v9150 = vmul.f32 %v8852, %v8956
        %v9151 = vmul.f32 %v8851, %v8960
        %v9152 = vmul.f32 %v8850, %v8964
        %v9153 = vmul.f32 %v8849, %v8968
        %v9154 = vmul.f32 %v8848, %v8972
        %v9155 = vmul.f32 %v8847, %v8976
        %v9156 = vmul.f32 %v8846, %v8980
        %v9157 = vmul.f32 %v8845, %v8984
        %v9158 = vmul.f32 %v8844, %v8988
        %v9159 = vmul.f32 %v8843, %v8992
        %v9160 = vmul.f32 %v8842, %v8996
        %v9161 = vmul.f32 %v8841, %v9000
        %v9162 = vmul.f32 %v8840, %v9004
        %v9163 = vmul.f32 %v8839, %v9008
        %v9164 = vmul.f32 %v8838, %v9012
        %v9165 = vmul.f32 %v8837, %v9016
        %v9166 = vmul.f32 %v8836, %v9020
        %v9167 = vmul.f32 %v8835, %v9024
        %v9168 = vmul.f32 %v8834, %v9028
        %v9169 = vmul.f32 %v8833, %v9032
        %v9170 = vmul.f32 %v8832, %v9036
        %v9171 = vmul.f32 %v8831, %v9040
        %v9172 = vmul.f32 %v8830, %v9044
        %v9173 = vmul.f32 %v8829, %v9048
        %v9174 = vmul.f32 %v8828, %v9052
        %v9175 = vmul.f32 %v8827, %v9056
        %v9176 = vmul.f32 %v8826, %v9060
        %v9177 = vmul.f32 %v8825, %v9064
        %v9178 = vmul.f32 %v8824, %v9068
        %v9179 = vmul.f32 %v8823, %v9072
        %v9180 = vmul.f32 %v8822, %v9076
        %v9181 = vmul.f32 %v8821, %v9080
        %v9182 = vmul.f32 %v8820, %v9084
        %v9183 = vmul.f32 %v8819, %v9088
        %v9184 = vmul.f32 %v8818, %v9092
        %v9185 = vmul.f32 %v8817, %v9096
        %v9186 = vmul.f32 %v8816, %v9100
        %v9187 = vmul.f32 %v8815, %v9104
        %v9188 = vmul.f32 %v8814, %v9108
        %v9189 = vmul.f32 %v8813, %v9112
        %v9190 = vmul.f32 %v8812, %v9116
        %v9191 = vmul.f32 %v8811, %v9120
        %v9192 = vmul.f32 %v8810, %v9124
        %v9193 = vmul.f32 %v8873, %v9128
        %9258 = vrot.lane.b32.xlu0 %v7916, 64
        %v9259 = vpop.permute.xlu0 %9258
        %9260 = vrot.lane.b32.xlu0 %v7920, 64
        %v9261 = vpop.permute.xlu0 %9260
        %9262 = vrot.lane.b32.xlu0 %v7926, 64
        %v9263 = vpop.permute.xlu0 %9262
        %9264 = vrot.lane.b32.xlu0 %v7930, 64
        %v9265 = vpop.permute.xlu0 %9264
        %9266 = vrot.lane.b32.xlu0 %v7936, 64
        %v9267 = vpop.permute.xlu0 %9266
        %9268 = vrot.lane.b32.xlu0 %v7940, 64
        %v9269 = vpop.permute.xlu0 %9268
        %9270 = vrot.lane.b32.xlu0 %v7946, 64
        %v9271 = vpop.permute.xlu0 %9270
        %9272 = vrot.lane.b32.xlu0 %v7950, 64
        %v9273 = vpop.permute.xlu0 %9272
        %9274 = vrot.lane.b32.xlu0 %v7956, 64
        %v9275 = vpop.permute.xlu0 %9274
        %9276 = vrot.lane.b32.xlu0 %v7960, 64
        %v9277 = vpop.permute.xlu0 %9276
        %9278 = vrot.lane.b32.xlu0 %v7966, 64
        %v9279 = vpop.permute.xlu0 %9278
        %9280 = vrot.lane.b32.xlu0 %v7970, 64
        %v9281 = vpop.permute.xlu0 %9280
        %9282 = vrot.lane.b32.xlu0 %v7976, 64
        %v9283 = vpop.permute.xlu0 %9282
        %9284 = vrot.lane.b32.xlu0 %v7980, 64
        %v9285 = vpop.permute.xlu0 %9284
        %9286 = vrot.lane.b32.xlu0 %v7986, 64
        %v9287 = vpop.permute.xlu0 %9286
        %9288 = vrot.lane.b32.xlu0 %v7990, 64
        %v9289 = vpop.permute.xlu0 %9288
        %9290 = vrot.lane.b32.xlu0 %v7996, 64
        %v9291 = vpop.permute.xlu0 %9290
        %9292 = vrot.lane.b32.xlu0 %v8000, 64
        %v9293 = vpop.permute.xlu0 %9292
        %9294 = vrot.lane.b32.xlu0 %v8006, 64
        %v9295 = vpop.permute.xlu0 %9294
        %9296 = vrot.lane.b32.xlu0 %v8010, 64
        %v9297 = vpop.permute.xlu0 %9296
        %9298 = vrot.lane.b32.xlu0 %v8016, 64
        %v9299 = vpop.permute.xlu0 %9298
        %9300 = vrot.lane.b32.xlu0 %v8020, 64
        %v9301 = vpop.permute.xlu0 %9300
        %9302 = vrot.lane.b32.xlu0 %v8026, 64
        %v9303 = vpop.permute.xlu0 %9302
        %9304 = vrot.lane.b32.xlu0 %v8030, 64
        %v9305 = vpop.permute.xlu0 %9304
        %9306 = vrot.lane.b32.xlu0 %v8036, 64
        %v9307 = vpop.permute.xlu0 %9306
        %9308 = vrot.lane.b32.xlu0 %v8040, 64
        %v9309 = vpop.permute.xlu0 %9308
        %9310 = vrot.lane.b32.xlu0 %v8046, 64
        %v9311 = vpop.permute.xlu0 %9310
        %9312 = vrot.lane.b32.xlu0 %v8050, 64
        %v9313 = vpop.permute.xlu0 %9312
        %9314 = vrot.lane.b32.xlu0 %v8056, 64
        %v9315 = vpop.permute.xlu0 %9314
        %9316 = vrot.lane.b32.xlu0 %v8060, 64
        %v9317 = vpop.permute.xlu0 %9316
        %9318 = vrot.lane.b32.xlu0 %v8066, 64
        %v9319 = vpop.permute.xlu0 %9318
        %9320 = vrot.lane.b32.xlu0 %v8070, 64
        %v9321 = vpop.permute.xlu0 %9320
        %9322 = vrot.lane.b32.xlu0 %v8076, 64
        %v9323 = vpop.permute.xlu0 %9322
        %9324 = vrot.lane.b32.xlu0 %v8080, 64
        %v9325 = vpop.permute.xlu0 %9324
        %9326 = vrot.lane.b32.xlu0 %v8086, 64
        %v9327 = vpop.permute.xlu0 %9326
        %9328 = vrot.lane.b32.xlu0 %v8090, 64
        %v9329 = vpop.permute.xlu0 %9328
        %9330 = vrot.lane.b32.xlu0 %v8096, 64
        %v9331 = vpop.permute.xlu0 %9330
        %9332 = vrot.lane.b32.xlu0 %v8100, 64
        %v9333 = vpop.permute.xlu0 %9332
        %9334 = vrot.lane.b32.xlu0 %v8106, 64
        %v9335 = vpop.permute.xlu0 %9334
        %9336 = vrot.lane.b32.xlu0 %v8110, 64
        %v9337 = vpop.permute.xlu0 %9336
        %9338 = vrot.lane.b32.xlu0 %v8116, 64
        %v9339 = vpop.permute.xlu0 %9338
        %9340 = vrot.lane.b32.xlu0 %v8120, 64
        %v9341 = vpop.permute.xlu0 %9340
        %9342 = vrot.lane.b32.xlu0 %v8126, 64
        %v9343 = vpop.permute.xlu0 %9342
        %9344 = vrot.lane.b32.xlu0 %v8130, 64
        %v9345 = vpop.permute.xlu0 %9344
        %9346 = vrot.lane.b32.xlu0 %v8136, 64
        %v9347 = vpop.permute.xlu0 %9346
        %9348 = vrot.lane.b32.xlu0 %v8140, 64
        %v9349 = vpop.permute.xlu0 %9348
        %9350 = vrot.lane.b32.xlu0 %v8146, 64
        %v9351 = vpop.permute.xlu0 %9350
        %9352 = vrot.lane.b32.xlu0 %v8150, 64
        %v9353 = vpop.permute.xlu0 %9352
        %9354 = vrot.lane.b32.xlu0 %v8156, 64
        %v9355 = vpop.permute.xlu0 %9354
        %9356 = vrot.lane.b32.xlu0 %v8160, 64
        %v9357 = vpop.permute.xlu0 %9356
        %9358 = vrot.lane.b32.xlu0 %v8166, 64
        %v9359 = vpop.permute.xlu0 %9358
        %9360 = vrot.lane.b32.xlu0 %v8170, 64
        %v9361 = vpop.permute.xlu0 %9360
        %9362 = vrot.lane.b32.xlu0 %v8176, 64
        %v9363 = vpop.permute.xlu0 %9362
        %9364 = vrot.lane.b32.xlu0 %v8180, 64
        %v9365 = vpop.permute.xlu0 %9364
        %9366 = vrot.lane.b32.xlu0 %v8186, 64
        %v9367 = vpop.permute.xlu0 %9366
        %9368 = vrot.lane.b32.xlu0 %v8190, 64
        %v9369 = vpop.permute.xlu0 %9368
        %9370 = vrot.lane.b32.xlu0 %v8196, 64
        %v9371 = vpop.permute.xlu0 %9370
        %9372 = vrot.lane.b32.xlu0 %v8200, 64
        %v9373 = vpop.permute.xlu0 %9372
        %9374 = vrot.lane.b32.xlu0 %v8206, 64
        %v9375 = vpop.permute.xlu0 %9374
        %9376 = vrot.lane.b32.xlu0 %v8210, 64
        %v9377 = vpop.permute.xlu0 %9376
        %9378 = vrot.lane.b32.xlu0 %v8216, 64
        %v9379 = vpop.permute.xlu0 %9378
        %9380 = vrot.lane.b32.xlu0 %v8220, 64
        %v9381 = vpop.permute.xlu0 %9380
        %9382 = vrot.lane.b32.xlu0 %v8226, 64
        %v9383 = vpop.permute.xlu0 %9382
        %9384 = vrot.lane.b32.xlu0 %v8230, 64
        %v9385 = vpop.permute.xlu0 %9384
        %v9450 = vadd.f32 %v8682, %v9259
        %v9451 = vadd.f32 %v8683, %v9261
        %v9452 = vadd.f32 %v8684, %v9263
        %v9453 = vadd.f32 %v8685, %v9265
        %v9454 = vadd.f32 %v8686, %v9267
        %v9455 = vadd.f32 %v8687, %v9269
        %v9456 = vadd.f32 %v8688, %v9271
        %v9457 = vadd.f32 %v8689, %v9273
        %v9458 = vadd.f32 %v8690, %v9275
        %v9459 = vadd.f32 %v8691, %v9277
        %v9460 = vadd.f32 %v8692, %v9279
        %v9461 = vadd.f32 %v8693, %v9281
        %v9462 = vadd.f32 %v8694, %v9283
        %v9463 = vadd.f32 %v8695, %v9285
        %v9464 = vadd.f32 %v8696, %v9287
        %v9465 = vadd.f32 %v8697, %v9289
        %v9466 = vadd.f32 %v8698, %v9291
        %v9467 = vadd.f32 %v8699, %v9293
        %v9468 = vadd.f32 %v8700, %v9295
        %v9469 = vadd.f32 %v8701, %v9297
        %v9470 = vadd.f32 %v8702, %v9299
        %v9471 = vadd.f32 %v8703, %v9301
        %v9472 = vadd.f32 %v8704, %v9303
        %v9473 = vadd.f32 %v8705, %v9305
        %v9474 = vadd.f32 %v8706, %v9307
        %v9475 = vadd.f32 %v8707, %v9309
        %v9476 = vadd.f32 %v8708, %v9311
        %v9477 = vadd.f32 %v8709, %v9313
        %v9478 = vadd.f32 %v8710, %v9315
        %v9479 = vadd.f32 %v8711, %v9317
        %v9480 = vadd.f32 %v8712, %v9319
        %v9481 = vadd.f32 %v8713, %v9321
        %v9482 = vadd.f32 %v8714, %v9323
        %v9483 = vadd.f32 %v8715, %v9325
        %v9484 = vadd.f32 %v8716, %v9327
        %v9485 = vadd.f32 %v8717, %v9329
        %v9486 = vadd.f32 %v8718, %v9331
        %v9487 = vadd.f32 %v8719, %v9333
        %v9488 = vadd.f32 %v8720, %v9335
        %v9489 = vadd.f32 %v8721, %v9337
        %v9490 = vadd.f32 %v8722, %v9339
        %v9491 = vadd.f32 %v8723, %v9341
        %v9492 = vadd.f32 %v8724, %v9343
        %v9493 = vadd.f32 %v8725, %v9345
        %v9494 = vadd.f32 %v8726, %v9347
        %v9495 = vadd.f32 %v8727, %v9349
        %v9496 = vadd.f32 %v8728, %v9351
        %v9497 = vadd.f32 %v8729, %v9353
        %v9498 = vadd.f32 %v8730, %v9355
        %v9499 = vadd.f32 %v8731, %v9357
        %v9500 = vadd.f32 %v8732, %v9359
        %v9501 = vadd.f32 %v8733, %v9361
        %v9502 = vadd.f32 %v8734, %v9363
        %v9503 = vadd.f32 %v8735, %v9365
        %v9504 = vadd.f32 %v8736, %v9367
        %v9505 = vadd.f32 %v8737, %v9369
        %v9506 = vadd.f32 %v8738, %v9371
        %v9507 = vadd.f32 %v8739, %v9373
        %v9508 = vadd.f32 %v8740, %v9375
        %v9509 = vadd.f32 %v8741, %v9377
        %v9510 = vadd.f32 %v8742, %v9379
        %v9511 = vadd.f32 %v8743, %v9381
        %v9512 = vadd.f32 %v8744, %v9383
        %v9513 = vadd.f32 %v8745, %v9385
        %v9514 = vadd.f32 %v9450, %v9130
        %v9515 = vadd.f32 %v9451, %v9131
        %v9516 = vadd.f32 %v9452, %v9132
        %v9517 = vadd.f32 %v9453, %v9133
        %v9518 = vadd.f32 %v9454, %v9134
        %v9519 = vadd.f32 %v9455, %v9135
        %v9520 = vadd.f32 %v9456, %v9136
        %v9521 = vadd.f32 %v9457, %v9137
        %v9522 = vadd.f32 %v9458, %v9138
        %v9523 = vadd.f32 %v9459, %v9139
        %v9524 = vadd.f32 %v9460, %v9140
        %v9525 = vadd.f32 %v9461, %v9141
        %v9526 = vadd.f32 %v9462, %v9142
        %v9527 = vadd.f32 %v9463, %v9143
        %v9528 = vadd.f32 %v9464, %v9144
        %v9529 = vadd.f32 %v9465, %v9145
        %v9530 = vadd.f32 %v9466, %v9146
        %v9531 = vadd.f32 %v9467, %v9147
        %v9532 = vadd.f32 %v9468, %v9148
        %v9533 = vadd.f32 %v9469, %v9149
        %v9534 = vadd.f32 %v9470, %v9150
        %v9535 = vadd.f32 %v9471, %v9151
        %v9536 = vadd.f32 %v9472, %v9152
        %v9537 = vadd.f32 %v9473, %v9153
        %v9538 = vadd.f32 %v9474, %v9154
        %v9539 = vadd.f32 %v9475, %v9155
        %v9540 = vadd.f32 %v9476, %v9156
        %v9541 = vadd.f32 %v9477, %v9157
        %v9542 = vadd.f32 %v9478, %v9158
        %v9543 = vadd.f32 %v9479, %v9159
        %v9544 = vadd.f32 %v9480, %v9160
        %v9545 = vadd.f32 %v9481, %v9161
        %v9546 = vadd.f32 %v9482, %v9162
        %v9547 = vadd.f32 %v9483, %v9163
        %v9548 = vadd.f32 %v9484, %v9164
        %v9549 = vadd.f32 %v9485, %v9165
        %v9550 = vadd.f32 %v9486, %v9166
        %v9551 = vadd.f32 %v9487, %v9167
        %v9552 = vadd.f32 %v9488, %v9168
        %v9553 = vadd.f32 %v9489, %v9169
        %v9554 = vadd.f32 %v9490, %v9170
        %v9555 = vadd.f32 %v9491, %v9171
        %v9556 = vadd.f32 %v9492, %v9172
        %v9557 = vadd.f32 %v9493, %v9173
        %v9558 = vadd.f32 %v9494, %v9174
        %v9559 = vadd.f32 %v9495, %v9175
        %v9560 = vadd.f32 %v9496, %v9176
        %v9561 = vadd.f32 %v9497, %v9177
        %v9562 = vadd.f32 %v9498, %v9178
        %v9563 = vadd.f32 %v9499, %v9179
        %v9564 = vadd.f32 %v9500, %v9180
        %v9565 = vadd.f32 %v9501, %v9181
        %v9566 = vadd.f32 %v9502, %v9182
        %v9567 = vadd.f32 %v9503, %v9183
        %v9568 = vadd.f32 %v9504, %v9184
        %v9569 = vadd.f32 %v9505, %v9185
        %v9570 = vadd.f32 %v9506, %v9186
        %v9571 = vadd.f32 %v9507, %v9187
        %v9572 = vadd.f32 %v9508, %v9188
        %v9573 = vadd.f32 %v9509, %v9189
        %v9574 = vadd.f32 %v9510, %v9190
        %v9575 = vadd.f32 %v9511, %v9191
        %v9576 = vadd.f32 %v9512, %v9192
        %v9577 = vadd.f32 %v9513, %v9193
        %v9578 = vlaneseq
        %v9579 = vshrl.u32 %v9578, 7
        %v9580 = vsub.s32 0, %v9579
        %v9581 = vrot.slane %v7480, %v9580
        %v9582 = vadd.f32 %v9514, %v9581
        %v9583 = vadd.f32 %v9515, %v9581
        %v9584 = vadd.f32 %v9516, %v9581
        %v9585 = vadd.f32 %v9517, %v9581
        %v9586 = vadd.f32 %v9518, %v9581
        %v9587 = vadd.f32 %v9519, %v9581
        %v9588 = vadd.f32 %v9520, %v9581
        %v9589 = vadd.f32 %v9521, %v9581
        %v9590 = vadd.f32 %v9522, %v9581
        %v9591 = vadd.f32 %v9523, %v9581
        %v9592 = vadd.f32 %v9524, %v9581
        %v9593 = vadd.f32 %v9525, %v9581
        %v9594 = vadd.f32 %v9526, %v9581
        %v9595 = vadd.f32 %v9527, %v9581
        %v9596 = vadd.f32 %v9528, %v9581
        %v9597 = vadd.f32 %v9529, %v9581
        %v9598 = vadd.f32 %v9530, %v9581
        %v9599 = vadd.f32 %v9531, %v9581
        %v9600 = vadd.f32 %v9532, %v9581
        %v9601 = vadd.f32 %v9533, %v9581
        %v9602 = vadd.f32 %v9534, %v9581
        %v9603 = vadd.f32 %v9535, %v9581
        %v9604 = vadd.f32 %v9536, %v9581
        %v9605 = vadd.f32 %v9537, %v9581
        %v9606 = vadd.f32 %v9538, %v9581
        %v9607 = vadd.f32 %v9539, %v9581
        %v9608 = vadd.f32 %v9540, %v9581
        %v9609 = vadd.f32 %v9541, %v9581
        %v9610 = vadd.f32 %v9542, %v9581
        %v9611 = vadd.f32 %v9543, %v9581
        %v9612 = vadd.f32 %v9544, %v9581
        %v9613 = vadd.f32 %v9545, %v9581
        %v9614 = vadd.f32 %v9546, %v9581
        %v9615 = vadd.f32 %v9547, %v9581
        %v9616 = vadd.f32 %v9548, %v9581
        %v9617 = vadd.f32 %v9549, %v9581
        %v9618 = vadd.f32 %v9550, %v9581
        %v9619 = vadd.f32 %v9551, %v9581
        %v9620 = vadd.f32 %v9552, %v9581
        %v9621 = vadd.f32 %v9553, %v9581
        %v9622 = vadd.f32 %v9554, %v9581
        %v9623 = vadd.f32 %v9555, %v9581
        %v9624 = vadd.f32 %v9556, %v9581
        %v9625 = vadd.f32 %v9557, %v9581
        %v9626 = vadd.f32 %v9558, %v9581
        %v9627 = vadd.f32 %v9559, %v9581
        %v9628 = vadd.f32 %v9560, %v9581
        %v9629 = vadd.f32 %v9561, %v9581
        %v9630 = vadd.f32 %v9562, %v9581
        %v9631 = vadd.f32 %v9563, %v9581
        %v9632 = vadd.f32 %v9564, %v9581
        %v9633 = vadd.f32 %v9565, %v9581
        %v9634 = vadd.f32 %v9566, %v9581
        %v9635 = vadd.f32 %v9567, %v9581
        %v9636 = vadd.f32 %v9568, %v9581
        %v9637 = vadd.f32 %v9569, %v9581
        %v9638 = vadd.f32 %v9570, %v9581
        %v9639 = vadd.f32 %v9571, %v9581
        %v9640 = vadd.f32 %v9572, %v9581
        %v9641 = vadd.f32 %v9573, %v9581
        %v9642 = vadd.f32 %v9574, %v9581
        %v9643 = vadd.f32 %v9575, %v9581
        %v9644 = vadd.f32 %v9576, %v9581
        %v9645 = vadd.f32 %v9577, %v9581
        %v9646 = vmul.f32 %v9582, 0.5
        %v9647 = vmul.f32 %v9583, 0.5
        %v9648 = vmul.f32 %v9584, 0.5
        %v9649 = vmul.f32 %v9585, 0.5
        %v9650 = vmul.f32 %v9586, 0.5
        %v9651 = vmul.f32 %v9587, 0.5
        %v9652 = vmul.f32 %v9588, 0.5
        %v9653 = vmul.f32 %v9589, 0.5
        %v9654 = vmul.f32 %v9590, 0.5
        %v9655 = vmul.f32 %v9591, 0.5
        %v9656 = vmul.f32 %v9592, 0.5
        %v9657 = vmul.f32 %v9593, 0.5
        %v9658 = vmul.f32 %v9594, 0.5
        %v9659 = vmul.f32 %v9595, 0.5
        %v9660 = vmul.f32 %v9596, 0.5
        %v9661 = vmul.f32 %v9597, 0.5
        %v9662 = vmul.f32 %v9598, 0.5
        %v9663 = vmul.f32 %v9599, 0.5
        %v9664 = vmul.f32 %v9600, 0.5
        %v9665 = vmul.f32 %v9601, 0.5
        %v9666 = vmul.f32 %v9602, 0.5
        %v9667 = vmul.f32 %v9603, 0.5
        %v9668 = vmul.f32 %v9604, 0.5
        %v9669 = vmul.f32 %v9605, 0.5
        %v9670 = vmul.f32 %v9606, 0.5
        %v9671 = vmul.f32 %v9607, 0.5
        %v9672 = vmul.f32 %v9608, 0.5
        %v9673 = vmul.f32 %v9609, 0.5
        %v9674 = vmul.f32 %v9610, 0.5
        %v9675 = vmul.f32 %v9611, 0.5
        %v9676 = vmul.f32 %v9612, 0.5
        %v9677 = vmul.f32 %v9613, 0.5
        %v9678 = vmul.f32 %v9614, 0.5
        %v9679 = vmul.f32 %v9615, 0.5
        %v9680 = vmul.f32 %v9616, 0.5
        %v9681 = vmul.f32 %v9617, 0.5
        %v9682 = vmul.f32 %v9618, 0.5
        %v9683 = vmul.f32 %v9619, 0.5
        %v9684 = vmul.f32 %v9620, 0.5
        %v9685 = vmul.f32 %v9621, 0.5
        %v9686 = vmul.f32 %v9622, 0.5
        %v9687 = vmul.f32 %v9623, 0.5
        %v9688 = vmul.f32 %v9624, 0.5
        %v9689 = vmul.f32 %v9625, 0.5
        %v9690 = vmul.f32 %v9626, 0.5
        %v9691 = vmul.f32 %v9627, 0.5
        %v9692 = vmul.f32 %v9628, 0.5
        %v9693 = vmul.f32 %v9629, 0.5
        %v9694 = vmul.f32 %v9630, 0.5
        %v9695 = vmul.f32 %v9631, 0.5
        %v9696 = vmul.f32 %v9632, 0.5
        %v9697 = vmul.f32 %v9633, 0.5
        %v9698 = vmul.f32 %v9634, 0.5
        %v9699 = vmul.f32 %v9635, 0.5
        %v9700 = vmul.f32 %v9636, 0.5
        %v9701 = vmul.f32 %v9637, 0.5
        %v9702 = vmul.f32 %v9638, 0.5
        %v9703 = vmul.f32 %v9639, 0.5
        %v9704 = vmul.f32 %v9640, 0.5
        %v9705 = vmul.f32 %v9641, 0.5
        %v9706 = vmul.f32 %v9642, 0.5
        %v9707 = vmul.f32 %v9643, 0.5
        %v9708 = vmul.f32 %v9644, 0.5
        %v9709 = vmul.f32 %v9645, 0.5
        %v9710 = vmul.f32 %v9582, 0.70710677
        %v9711 = vmul.f32 %v9583, 0.70710677
        %v9712 = vmul.f32 %v9584, 0.70710677
        %v9713 = vmul.f32 %v9585, 0.70710677
        %v9714 = vmul.f32 %v9586, 0.70710677
        %v9715 = vmul.f32 %v9587, 0.70710677
        %v9716 = vmul.f32 %v9588, 0.70710677
        %v9717 = vmul.f32 %v9589, 0.70710677
        %v9718 = vmul.f32 %v9590, 0.70710677
        %v9719 = vmul.f32 %v9591, 0.70710677
        %v9720 = vmul.f32 %v9592, 0.70710677
        %v9721 = vmul.f32 %v9593, 0.70710677
        %v9722 = vmul.f32 %v9594, 0.70710677
        %v9723 = vmul.f32 %v9595, 0.70710677
        %v9724 = vmul.f32 %v9596, 0.70710677
        %v9725 = vmul.f32 %v9597, 0.70710677
        %v9726 = vmul.f32 %v9598, 0.70710677
        %v9727 = vmul.f32 %v9599, 0.70710677
        %v9728 = vmul.f32 %v9600, 0.70710677
        %v9729 = vmul.f32 %v9601, 0.70710677
        %v9730 = vmul.f32 %v9602, 0.70710677
        %v9731 = vmul.f32 %v9603, 0.70710677
        %v9732 = vmul.f32 %v9604, 0.70710677
        %v9733 = vmul.f32 %v9605, 0.70710677
        %v9734 = vmul.f32 %v9606, 0.70710677
        %v9735 = vmul.f32 %v9607, 0.70710677
        %v9736 = vmul.f32 %v9608, 0.70710677
        %v9737 = vmul.f32 %v9609, 0.70710677
        %v9738 = vmul.f32 %v9610, 0.70710677
        %v9739 = vmul.f32 %v9611, 0.70710677
        %v9740 = vmul.f32 %v9612, 0.70710677
        %v9741 = vmul.f32 %v9613, 0.70710677
        %v9742 = vmul.f32 %v9614, 0.70710677
        %v9743 = vmul.f32 %v9615, 0.70710677
        %v9744 = vmul.f32 %v9616, 0.70710677
        %v9745 = vmul.f32 %v9617, 0.70710677
        %v9746 = vmul.f32 %v9618, 0.70710677
        %v9747 = vmul.f32 %v9619, 0.70710677
        %v9748 = vmul.f32 %v9620, 0.70710677
        %v9749 = vmul.f32 %v9621, 0.70710677
        %v9750 = vmul.f32 %v9622, 0.70710677
        %v9751 = vmul.f32 %v9623, 0.70710677
        %v9752 = vmul.f32 %v9624, 0.70710677
        %v9753 = vmul.f32 %v9625, 0.70710677
        %v9754 = vmul.f32 %v9626, 0.70710677
        %v9755 = vmul.f32 %v9627, 0.70710677
        %v9756 = vmul.f32 %v9628, 0.70710677
        %v9757 = vmul.f32 %v9629, 0.70710677
        %v9758 = vmul.f32 %v9630, 0.70710677
        %v9759 = vmul.f32 %v9631, 0.70710677
        %v9760 = vmul.f32 %v9632, 0.70710677
        %v9761 = vmul.f32 %v9633, 0.70710677
        %v9762 = vmul.f32 %v9634, 0.70710677
        %v9763 = vmul.f32 %v9635, 0.70710677
        %v9764 = vmul.f32 %v9636, 0.70710677
        %v9765 = vmul.f32 %v9637, 0.70710677
        %v9766 = vmul.f32 %v9638, 0.70710677
        %v9767 = vmul.f32 %v9639, 0.70710677
        %v9768 = vmul.f32 %v9640, 0.70710677
        %v9769 = vmul.f32 %v9641, 0.70710677
        %v9770 = vmul.f32 %v9642, 0.70710677
        %v9771 = vmul.f32 %v9643, 0.70710677
        %v9772 = vmul.f32 %v9644, 0.70710677
        %v9773 = vmul.f32 %v9645, 0.70710677
        %v9774 = verf.f32.pop %v9710
        %v9775 = verf.f32.pop %v9711
        %v9776 = verf.f32.pop %v9712
        %v9777 = verf.f32.pop %v9713
        %v9778 = verf.f32.pop %v9714
        %v9779 = verf.f32.pop %v9715
        %v9780 = verf.f32.pop %v9716
        %v9781 = verf.f32.pop %v9717
        %v9782 = verf.f32.pop %v9718
        %v9783 = verf.f32.pop %v9719
        %v9784 = verf.f32.pop %v9720
        %v9785 = verf.f32.pop %v9721
        %v9786 = verf.f32.pop %v9722
        %v9787 = verf.f32.pop %v9723
        %v9788 = verf.f32.pop %v9724
        %v9789 = verf.f32.pop %v9725
        %v9790 = verf.f32.pop %v9726
        %v9791 = verf.f32.pop %v9727
        %v9792 = verf.f32.pop %v9728
        %v9793 = verf.f32.pop %v9729
        %v9794 = verf.f32.pop %v9730
        %v9795 = verf.f32.pop %v9731
        %v9796 = verf.f32.pop %v9732
        %v9797 = verf.f32.pop %v9733
        %v9798 = verf.f32.pop %v9734
        %v9799 = verf.f32.pop %v9735
        %v9800 = verf.f32.pop %v9736
        %v9801 = verf.f32.pop %v9737
        %v9802 = verf.f32.pop %v9738
        %v9803 = verf.f32.pop %v9739
        %v9804 = verf.f32.pop %v9740
        %v9805 = verf.f32.pop %v9741
        %v9806 = verf.f32.pop %v9742
        %v9807 = verf.f32.pop %v9743
        %v9808 = verf.f32.pop %v9744
        %v9809 = verf.f32.pop %v9745
        %v9810 = verf.f32.pop %v9746
        %v9811 = verf.f32.pop %v9747
        %v9812 = verf.f32.pop %v9748
        %v9813 = verf.f32.pop %v9749
        %v9814 = verf.f32.pop %v9750
        %v9815 = verf.f32.pop %v9751
        %v9816 = verf.f32.pop %v9752
        %v9817 = verf.f32.pop %v9753
        %v9818 = verf.f32.pop %v9754
        %v9819 = verf.f32.pop %v9755
        %v9820 = verf.f32.pop %v9756
        %v9821 = verf.f32.pop %v9757
        %v9822 = verf.f32.pop %v9758
        %v9823 = verf.f32.pop %v9759
        %v9824 = verf.f32.pop %v9760
        %v9825 = verf.f32.pop %v9761
        %v9826 = verf.f32.pop %v9762
        %v9827 = verf.f32.pop %v9763
        %v9828 = verf.f32.pop %v9764
        %v9829 = verf.f32.pop %v9765
        %v9830 = verf.f32.pop %v9766
        %v9831 = verf.f32.pop %v9767
        %v9832 = verf.f32.pop %v9768
        %v9833 = verf.f32.pop %v9769
        %v9834 = verf.f32.pop %v9770
        %v9835 = verf.f32.pop %v9771
        %v9836 = verf.f32.pop %v9772
        %v9837 = verf.f32.pop %v9773
        %v9838 = vadd.f32 %v9774, 1.0
        %v9839 = vadd.f32 %v9775, 1.0
        %v9840 = vadd.f32 %v9776, 1.0
        %v9841 = vadd.f32 %v9777, 1.0
        %v9842 = vadd.f32 %v9778, 1.0
        %v9843 = vadd.f32 %v9779, 1.0
        %v9844 = vadd.f32 %v9780, 1.0
        %v9845 = vadd.f32 %v9781, 1.0
        %v9846 = vadd.f32 %v9782, 1.0
        %v9847 = vadd.f32 %v9783, 1.0
        %v9848 = vadd.f32 %v9784, 1.0
        %v9849 = vadd.f32 %v9785, 1.0
        %v9850 = vadd.f32 %v9786, 1.0
        %v9851 = vadd.f32 %v9787, 1.0
        %v9852 = vadd.f32 %v9788, 1.0
        %v9853 = vadd.f32 %v9789, 1.0
        %v9854 = vadd.f32 %v9790, 1.0
        %v9855 = vadd.f32 %v9791, 1.0
        %v9856 = vadd.f32 %v9792, 1.0
        %v9857 = vadd.f32 %v9793, 1.0
        %v9858 = vadd.f32 %v9794, 1.0
        %v9859 = vadd.f32 %v9795, 1.0
        %v9860 = vadd.f32 %v9796, 1.0
        %v9861 = vadd.f32 %v9797, 1.0
        %v9862 = vadd.f32 %v9798, 1.0
        %v9863 = vadd.f32 %v9799, 1.0
        %v9864 = vadd.f32 %v9800, 1.0
        %v9865 = vadd.f32 %v9801, 1.0
        %v9866 = vadd.f32 %v9802, 1.0
        %v9867 = vadd.f32 %v9803, 1.0
        %v9868 = vadd.f32 %v9804, 1.0
        %v9869 = vadd.f32 %v9805, 1.0
        %v9870 = vadd.f32 %v9806, 1.0
        %v9871 = vadd.f32 %v9807, 1.0
        %v9872 = vadd.f32 %v9808, 1.0
        %v9873 = vadd.f32 %v9809, 1.0
        %v9874 = vadd.f32 %v9810, 1.0
        %v9875 = vadd.f32 %v9811, 1.0
        %v9876 = vadd.f32 %v9812, 1.0
        %v9877 = vadd.f32 %v9813, 1.0
        %v9878 = vadd.f32 %v9814, 1.0
        %v9879 = vadd.f32 %v9815, 1.0
        %v9880 = vadd.f32 %v9816, 1.0
        %v9881 = vadd.f32 %v9817, 1.0
        %v9882 = vadd.f32 %v9818, 1.0
        %v9883 = vadd.f32 %v9819, 1.0
        %v9884 = vadd.f32 %v9820, 1.0
        %v9885 = vadd.f32 %v9821, 1.0
        %v9886 = vadd.f32 %v9822, 1.0
        %v9887 = vadd.f32 %v9823, 1.0
        %v9888 = vadd.f32 %v9824, 1.0
        %v9889 = vadd.f32 %v9825, 1.0
        %v9890 = vadd.f32 %v9826, 1.0
        %v9891 = vadd.f32 %v9827, 1.0
        %v9892 = vadd.f32 %v9828, 1.0
        %v9893 = vadd.f32 %v9829, 1.0
        %v9894 = vadd.f32 %v9830, 1.0
        %v9895 = vadd.f32 %v9831, 1.0
        %v9896 = vadd.f32 %v9832, 1.0
        %v9897 = vadd.f32 %v9833, 1.0
        %v9898 = vadd.f32 %v9834, 1.0
        %v9899 = vadd.f32 %v9835, 1.0
        %v9900 = vadd.f32 %v9836, 1.0
        %v9901 = vadd.f32 %v9837, 1.0
        %v9902 = vmul.f32 %v9646, %v9838
        %v9903 = vmul.f32 %v9647, %v9839
        %v9904 = vmul.f32 %v9648, %v9840
        %v9905 = vmul.f32 %v9649, %v9841
        %v9906 = vmul.f32 %v9650, %v9842
        %v9907 = vmul.f32 %v9651, %v9843
        %v9908 = vmul.f32 %v9652, %v9844
        %v9909 = vmul.f32 %v9653, %v9845
        %v9910 = vmul.f32 %v9654, %v9846
        %v9911 = vmul.f32 %v9655, %v9847
        %v9912 = vmul.f32 %v9656, %v9848
        %v9913 = vmul.f32 %v9657, %v9849
        %v9914 = vmul.f32 %v9658, %v9850
        %v9915 = vmul.f32 %v9659, %v9851
        %v9916 = vmul.f32 %v9660, %v9852
        %v9917 = vmul.f32 %v9661, %v9853
        %v9918 = vmul.f32 %v9662, %v9854
        %v9919 = vmul.f32 %v9663, %v9855
        %v9920 = vmul.f32 %v9664, %v9856
        %v9921 = vmul.f32 %v9665, %v9857
        %v9922 = vmul.f32 %v9666, %v9858
        %v9923 = vmul.f32 %v9667, %v9859
        %v9924 = vmul.f32 %v9668, %v9860
        %v9925 = vmul.f32 %v9669, %v9861
        %v9926 = vmul.f32 %v9670, %v9862
        %v9927 = vmul.f32 %v9671, %v9863
        %v9928 = vmul.f32 %v9672, %v9864
        %v9929 = vmul.f32 %v9673, %v9865
        %v9930 = vmul.f32 %v9674, %v9866
        %v9931 = vmul.f32 %v9675, %v9867
        %v9932 = vmul.f32 %v9676, %v9868
        %v9933 = vmul.f32 %v9677, %v9869
        %v9934 = vmul.f32 %v9678, %v9870
        %v9935 = vmul.f32 %v9679, %v9871
        %v9936 = vmul.f32 %v9680, %v9872
        %v9937 = vmul.f32 %v9681, %v9873
        %v9938 = vmul.f32 %v9682, %v9874
        %v9939 = vmul.f32 %v9683, %v9875
        %v9940 = vmul.f32 %v9684, %v9876
        %v9941 = vmul.f32 %v9685, %v9877
        %v9942 = vmul.f32 %v9686, %v9878
        %v9943 = vmul.f32 %v9687, %v9879
        %v9944 = vmul.f32 %v9688, %v9880
        %v9945 = vmul.f32 %v9689, %v9881
        %v9946 = vmul.f32 %v9690, %v9882
        %v9947 = vmul.f32 %v9691, %v9883
        %v9948 = vmul.f32 %v9692, %v9884
        %v9949 = vmul.f32 %v9693, %v9885
        %v9950 = vmul.f32 %v9694, %v9886
        %v9951 = vmul.f32 %v9695, %v9887
        %v9952 = vmul.f32 %v9696, %v9888
        %v9953 = vmul.f32 %v9697, %v9889
        %v9954 = vmul.f32 %v9698, %v9890
        %v9955 = vmul.f32 %v9699, %v9891
        %v9956 = vmul.f32 %v9700, %v9892
        %v9957 = vmul.f32 %v9701, %v9893
        %v9958 = vmul.f32 %v9702, %v9894
        %v9959 = vmul.f32 %v9703, %v9895
        %v9960 = vmul.f32 %v9704, %v9896
        %v9961 = vmul.f32 %v9705, %v9897
        %v9962 = vmul.f32 %v9706, %v9898
        %v9963 = vmul.f32 %v9707, %v9899
        %v9964 = vmul.f32 %v9708, %v9900
        %v9965 = vmul.f32 %v9709, %v9901
        %v9966 = vrot.slane %v9902, 7
        %v9967 = vrot.slane %v9903, 7
        %v9968 = vrot.slane %v9904, 7
        %v9969 = vrot.slane %v9905, 7
        %v9970 = vrot.slane %v9906, 7
        %v9971 = vrot.slane %v9907, 7
        %v9972 = vrot.slane %v9908, 7
        %v9973 = vrot.slane %v9909, 7
        %v9974 = vrot.slane %v9910, 7
        %v9975 = vrot.slane %v9911, 7
        %v9976 = vrot.slane %v9912, 7
        %v9977 = vrot.slane %v9913, 7
        %v9978 = vrot.slane %v9914, 7
        %v9979 = vrot.slane %v9915, 7
        %v9980 = vrot.slane %v9916, 7
        %v9981 = vrot.slane %v9917, 7
        %v9982 = vrot.slane %v9918, 7
        %v9983 = vrot.slane %v9919, 7
        %v9984 = vrot.slane %v9920, 7
        %v9985 = vrot.slane %v9921, 7
        %v9986 = vrot.slane %v9922, 7
        %v9987 = vrot.slane %v9923, 7
        %v9988 = vrot.slane %v9924, 7
        %v9989 = vrot.slane %v9925, 7
        %v9990 = vrot.slane %v9926, 7
        %v9991 = vrot.slane %v9927, 7
        %v9992 = vrot.slane %v9928, 7
        %v9993 = vrot.slane %v9929, 7
        %v9994 = vrot.slane %v9930, 7
        %v9995 = vrot.slane %v9931, 7
        %v9996 = vrot.slane %v9932, 7
        %v9997 = vrot.slane %v9933, 7
        %v9998 = vrot.slane %v9934, 7
        %v9999 = vrot.slane %v9935, 7
        %v10000 = vrot.slane %v9936, 7
        %v10001 = vrot.slane %v9937, 7
        %v10002 = vrot.slane %v9938, 7
        %v10003 = vrot.slane %v9939, 7
        %v10004 = vrot.slane %v9940, 7
        %v10005 = vrot.slane %v9941, 7
        %v10006 = vrot.slane %v9942, 7
        %v10007 = vrot.slane %v9943, 7
        %v10008 = vrot.slane %v9944, 7
        %v10009 = vrot.slane %v9945, 7
        %v10010 = vrot.slane %v9946, 7
        %v10011 = vrot.slane %v9947, 7
        %v10012 = vrot.slane %v9948, 7
        %v10013 = vrot.slane %v9949, 7
        %v10014 = vrot.slane %v9950, 7
        %v10015 = vrot.slane %v9951, 7
        %v10016 = vrot.slane %v9952, 7
        %v10017 = vrot.slane %v9953, 7
        %v10018 = vrot.slane %v9954, 7
        %v10019 = vrot.slane %v9955, 7
        %v10020 = vrot.slane %v9956, 7
        %v10021 = vrot.slane %v9957, 7
        %v10022 = vrot.slane %v9958, 7
        %v10023 = vrot.slane %v9959, 7
        %v10024 = vrot.slane %v9960, 7
        %v10025 = vrot.slane %v9961, 7
        %v10026 = vrot.slane %v9962, 7
        %v10027 = vrot.slane %v9963, 7
        %v10028 = vrot.slane %v9964, 7
        %v10029 = vrot.slane %v9965, 7
        %v10030 = vsel %vm1724, %v10028, %v10029
        %v10031 = vsel %vm1724, %v10027, %v10028
        %v10032 = vsel %vm1724, %v10026, %v10027
        %v10033 = vsel %vm1724, %v10025, %v10026
        %v10034 = vsel %vm1724, %v10024, %v10025
        %v10035 = vsel %vm1724, %v10023, %v10024
        %v10036 = vsel %vm1724, %v10022, %v10023
        %v10037 = vsel %vm1724, %v10021, %v10022
        %v10038 = vsel %vm1724, %v10020, %v10021
        %v10039 = vsel %vm1724, %v10019, %v10020
        %v10040 = vsel %vm1724, %v10018, %v10019
        %v10041 = vsel %vm1724, %v10017, %v10018
        %v10042 = vsel %vm1724, %v10016, %v10017
        %v10043 = vsel %vm1724, %v10015, %v10016
        %v10044 = vsel %vm1724, %v10014, %v10015
        %v10045 = vsel %vm1724, %v10013, %v10014
        %v10046 = vsel %vm1724, %v10012, %v10013
        %v10047 = vsel %vm1724, %v10011, %v10012
        %v10048 = vsel %vm1724, %v10010, %v10011
        %v10049 = vsel %vm1724, %v10009, %v10010
        %v10050 = vsel %vm1724, %v10008, %v10009
        %v10051 = vsel %vm1724, %v10007, %v10008
        %v10052 = vsel %vm1724, %v10006, %v10007
        %v10053 = vsel %vm1724, %v10005, %v10006
        %v10054 = vsel %vm1724, %v10004, %v10005
        %v10055 = vsel %vm1724, %v10003, %v10004
        %v10056 = vsel %vm1724, %v10002, %v10003
        %v10057 = vsel %vm1724, %v10001, %v10002
        %v10058 = vsel %vm1724, %v10000, %v10001
        %v10059 = vsel %vm1724, %v9999, %v10000
        %v10060 = vsel %vm1724, %v9998, %v9999
        %v10061 = vsel %vm1724, %v9997, %v9998
        %v10062 = vsel %vm1724, %v9996, %v9997
        %v10063 = vsel %vm1724, %v9995, %v9996
        %v10064 = vsel %vm1724, %v9994, %v9995
        %v10065 = vsel %vm1724, %v9993, %v9994
        %v10066 = vsel %vm1724, %v9992, %v9993
        %v10067 = vsel %vm1724, %v9991, %v9992
        %v10068 = vsel %vm1724, %v9990, %v9991
        %v10069 = vsel %vm1724, %v9989, %v9990
        %v10070 = vsel %vm1724, %v9988, %v9989
        %v10071 = vsel %vm1724, %v9987, %v9988
        %v10072 = vsel %vm1724, %v9986, %v9987
        %v10073 = vsel %vm1724, %v9985, %v9986
        %v10074 = vsel %vm1724, %v9984, %v9985
        %v10075 = vsel %vm1724, %v9983, %v9984
        %v10076 = vsel %vm1724, %v9982, %v9983
        %v10077 = vsel %vm1724, %v9981, %v9982
        %v10078 = vsel %vm1724, %v9980, %v9981
        %v10079 = vsel %vm1724, %v9979, %v9980
        %v10080 = vsel %vm1724, %v9978, %v9979
        %v10081 = vsel %vm1724, %v9977, %v9978
        %v10082 = vsel %vm1724, %v9976, %v9977
        %v10083 = vsel %vm1724, %v9975, %v9976
        %v10084 = vsel %vm1724, %v9974, %v9975
        %v10085 = vsel %vm1724, %v9973, %v9974
        %v10086 = vsel %vm1724, %v9972, %v9973
        %v10087 = vsel %vm1724, %v9971, %v9972
        %v10088 = vsel %vm1724, %v9970, %v9971
        %v10089 = vsel %vm1724, %v9969, %v9970
        %v10090 = vsel %vm1724, %v9968, %v9969
        %v10091 = vsel %vm1724, %v9967, %v9968
        %v10092 = vsel %vm1724, %v9966, %v9967
        %v10093 = vsel %vm1724, %v10029, %v9966
        %v10094 = vmul.f32 %v10093, %v8365
        %v10095 = vmul.f32 %v10092, %v8370
        %v10096 = vmul.f32 %v10091, %v8375
        %v10097 = vmul.f32 %v10090, %v8380
        %v10098 = vmul.f32 %v10089, %v8385
        %v10099 = vmul.f32 %v10088, %v8390
        %v10100 = vmul.f32 %v10087, %v8395
        %v10101 = vmul.f32 %v10086, %v8400
        %v10102 = vmul.f32 %v10085, %v8405
        %v10103 = vmul.f32 %v10084, %v8410
        %v10104 = vmul.f32 %v10083, %v8415
        %v10105 = vmul.f32 %v10082, %v8420
        %v10106 = vmul.f32 %v10081, %v8425
        %v10107 = vmul.f32 %v10080, %v8430
        %v10108 = vmul.f32 %v10079, %v8435
        %v10109 = vmul.f32 %v10078, %v8440
        %v10110 = vmul.f32 %v10077, %v8445
        %v10111 = vmul.f32 %v10076, %v8450
        %v10112 = vmul.f32 %v10075, %v8455
        %v10113 = vmul.f32 %v10074, %v8460
        %v10114 = vmul.f32 %v10073, %v8465
        %v10115 = vmul.f32 %v10072, %v8470
        %v10116 = vmul.f32 %v10071, %v8475
        %v10117 = vmul.f32 %v10070, %v8480
        %v10118 = vmul.f32 %v10069, %v8485
        %v10119 = vmul.f32 %v10068, %v8490
        %v10120 = vmul.f32 %v10067, %v8495
        %v10121 = vmul.f32 %v10066, %v8500
        %v10122 = vmul.f32 %v10065, %v8505
        %v10123 = vmul.f32 %v10064, %v8510
        %v10124 = vmul.f32 %v10063, %v8515
        %v10125 = vmul.f32 %v10062, %v8520
        %v10126 = vmul.f32 %v10061, %v8525
        %v10127 = vmul.f32 %v10060, %v8530
        %v10128 = vmul.f32 %v10059, %v8535
        %v10129 = vmul.f32 %v10058, %v8540
        %v10130 = vmul.f32 %v10057, %v8545
        %v10131 = vmul.f32 %v10056, %v8550
        %v10132 = vmul.f32 %v10055, %v8555
        %v10133 = vmul.f32 %v10054, %v8560
        %v10134 = vmul.f32 %v10053, %v8565
        %v10135 = vmul.f32 %v10052, %v8570
        %v10136 = vmul.f32 %v10051, %v8575
        %v10137 = vmul.f32 %v10050, %v8580
        %v10138 = vmul.f32 %v10049, %v8585
        %v10139 = vmul.f32 %v10048, %v8590
        %v10140 = vmul.f32 %v10047, %v8595
        %v10141 = vmul.f32 %v10046, %v8600
        %v10142 = vmul.f32 %v10045, %v8605
        %v10143 = vmul.f32 %v10044, %v8610
        %v10144 = vmul.f32 %v10043, %v8615
        %v10145 = vmul.f32 %v10042, %v8620
        %v10146 = vmul.f32 %v10041, %v8625
        %v10147 = vmul.f32 %v10040, %v8630
        %v10148 = vmul.f32 %v10039, %v8635
        %v10149 = vmul.f32 %v10038, %v8640
        %v10150 = vmul.f32 %v10037, %v8645
        %v10151 = vmul.f32 %v10036, %v8650
        %v10152 = vmul.f32 %v10035, %v8655
        %v10153 = vmul.f32 %v10034, %v8660
        %v10154 = vmul.f32 %v10033, %v8665
        %v10155 = vmul.f32 %v10032, %v8670
        %v10156 = vmul.f32 %v10031, %v8675
        %v10157 = vmul.f32 %v10030, %v8680
        %v10158 = vrot.slane %v9902, 1
        %v10159 = vrot.slane %v9903, 1
        %v10160 = vrot.slane %v9904, 1
        %v10161 = vrot.slane %v9905, 1
        %v10162 = vrot.slane %v9906, 1
        %v10163 = vrot.slane %v9907, 1
        %v10164 = vrot.slane %v9908, 1
        %v10165 = vrot.slane %v9909, 1
        %v10166 = vrot.slane %v9910, 1
        %v10167 = vrot.slane %v9911, 1
        %v10168 = vrot.slane %v9912, 1
        %v10169 = vrot.slane %v9913, 1
        %v10170 = vrot.slane %v9914, 1
        %v10171 = vrot.slane %v9915, 1
        %v10172 = vrot.slane %v9916, 1
        %v10173 = vrot.slane %v9917, 1
        %v10174 = vrot.slane %v9918, 1
        %v10175 = vrot.slane %v9919, 1
        %v10176 = vrot.slane %v9920, 1
        %v10177 = vrot.slane %v9921, 1
        %v10178 = vrot.slane %v9922, 1
        %v10179 = vrot.slane %v9923, 1
        %v10180 = vrot.slane %v9924, 1
        %v10181 = vrot.slane %v9925, 1
        %v10182 = vrot.slane %v9926, 1
        %v10183 = vrot.slane %v9927, 1
        %v10184 = vrot.slane %v9928, 1
        %v10185 = vrot.slane %v9929, 1
        %v10186 = vrot.slane %v9930, 1
        %v10187 = vrot.slane %v9931, 1
        %v10188 = vrot.slane %v9932, 1
        %v10189 = vrot.slane %v9933, 1
        %v10190 = vrot.slane %v9934, 1
        %v10191 = vrot.slane %v9935, 1
        %v10192 = vrot.slane %v9936, 1
        %v10193 = vrot.slane %v9937, 1
        %v10194 = vrot.slane %v9938, 1
        %v10195 = vrot.slane %v9939, 1
        %v10196 = vrot.slane %v9940, 1
        %v10197 = vrot.slane %v9941, 1
        %v10198 = vrot.slane %v9942, 1
        %v10199 = vrot.slane %v9943, 1
        %v10200 = vrot.slane %v9944, 1
        %v10201 = vrot.slane %v9945, 1
        %v10202 = vrot.slane %v9946, 1
        %v10203 = vrot.slane %v9947, 1
        %v10204 = vrot.slane %v9948, 1
        %v10205 = vrot.slane %v9949, 1
        %v10206 = vrot.slane %v9950, 1
        %v10207 = vrot.slane %v9951, 1
        %v10208 = vrot.slane %v9952, 1
        %v10209 = vrot.slane %v9953, 1
        %v10210 = vrot.slane %v9954, 1
        %v10211 = vrot.slane %v9955, 1
        %v10212 = vrot.slane %v9956, 1
        %v10213 = vrot.slane %v9957, 1
        %v10214 = vrot.slane %v9958, 1
        %v10215 = vrot.slane %v9959, 1
        %v10216 = vrot.slane %v9960, 1
        %v10217 = vrot.slane %v9961, 1
        %v10218 = vrot.slane %v9962, 1
        %v10219 = vrot.slane %v9963, 1
        %v10220 = vrot.slane %v9964, 1
        %v10221 = vrot.slane %v9965, 1
        %v10222 = vsel %vm1757, %v10220, %v10221
        %v10223 = vsel %vm1757, %v10219, %v10220
        %v10224 = vsel %vm1757, %v10218, %v10219
        %v10225 = vsel %vm1757, %v10217, %v10218
        %v10226 = vsel %vm1757, %v10216, %v10217
        %v10227 = vsel %vm1757, %v10215, %v10216
        %v10228 = vsel %vm1757, %v10214, %v10215
        %v10229 = vsel %vm1757, %v10213, %v10214
        %v10230 = vsel %vm1757, %v10212, %v10213
        %v10231 = vsel %vm1757, %v10211, %v10212
        %v10232 = vsel %vm1757, %v10210, %v10211
        %v10233 = vsel %vm1757, %v10209, %v10210
        %v10234 = vsel %vm1757, %v10208, %v10209
        %v10235 = vsel %vm1757, %v10207, %v10208
        %v10236 = vsel %vm1757, %v10206, %v10207
        %v10237 = vsel %vm1757, %v10205, %v10206
        %v10238 = vsel %vm1757, %v10204, %v10205
        %v10239 = vsel %vm1757, %v10203, %v10204
        %v10240 = vsel %vm1757, %v10202, %v10203
        %v10241 = vsel %vm1757, %v10201, %v10202
        %v10242 = vsel %vm1757, %v10200, %v10201
        %v10243 = vsel %vm1757, %v10199, %v10200
        %v10244 = vsel %vm1757, %v10198, %v10199
        %v10245 = vsel %vm1757, %v10197, %v10198
        %v10246 = vsel %vm1757, %v10196, %v10197
        %v10247 = vsel %vm1757, %v10195, %v10196
        %v10248 = vsel %vm1757, %v10194, %v10195
        %v10249 = vsel %vm1757, %v10193, %v10194
        %v10250 = vsel %vm1757, %v10192, %v10193
        %v10251 = vsel %vm1757, %v10191, %v10192
        %v10252 = vsel %vm1757, %v10190, %v10191
        %v10253 = vsel %vm1757, %v10189, %v10190
        %v10254 = vsel %vm1757, %v10188, %v10189
        %v10255 = vsel %vm1757, %v10187, %v10188
        %v10256 = vsel %vm1757, %v10186, %v10187
        %v10257 = vsel %vm1757, %v10185, %v10186
        %v10258 = vsel %vm1757, %v10184, %v10185
        %v10259 = vsel %vm1757, %v10183, %v10184
        %v10260 = vsel %vm1757, %v10182, %v10183
        %v10261 = vsel %vm1757, %v10181, %v10182
        %v10262 = vsel %vm1757, %v10180, %v10181
        %v10263 = vsel %vm1757, %v10179, %v10180
        %v10264 = vsel %vm1757, %v10178, %v10179
        %v10265 = vsel %vm1757, %v10177, %v10178
        %v10266 = vsel %vm1757, %v10176, %v10177
        %v10267 = vsel %vm1757, %v10175, %v10176
        %v10268 = vsel %vm1757, %v10174, %v10175
        %v10269 = vsel %vm1757, %v10173, %v10174
        %v10270 = vsel %vm1757, %v10172, %v10173
        %v10271 = vsel %vm1757, %v10171, %v10172
        %v10272 = vsel %vm1757, %v10170, %v10171
        %v10273 = vsel %vm1757, %v10169, %v10170
        %v10274 = vsel %vm1757, %v10168, %v10169
        %v10275 = vsel %vm1757, %v10167, %v10168
        %v10276 = vsel %vm1757, %v10166, %v10167
        %v10277 = vsel %vm1757, %v10165, %v10166
        %v10278 = vsel %vm1757, %v10164, %v10165
        %v10279 = vsel %vm1757, %v10163, %v10164
        %v10280 = vsel %vm1757, %v10162, %v10163
        %v10281 = vsel %vm1757, %v10161, %v10162
        %v10282 = vsel %vm1757, %v10160, %v10161
        %v10283 = vsel %vm1757, %v10159, %v10160
        %v10284 = vsel %vm1757, %v10158, %v10159
        %v10285 = vsel %vm1757, %v10221, %v10158
        %v10286 = vmul.f32 %v10284, %v8876
        %v10287 = vmul.f32 %v10283, %v8880
        %v10288 = vmul.f32 %v10282, %v8884
        %v10289 = vmul.f32 %v10281, %v8888
        %v10290 = vmul.f32 %v10280, %v8892
        %v10291 = vmul.f32 %v10279, %v8896
        %v10292 = vmul.f32 %v10278, %v8900
        %v10293 = vmul.f32 %v10277, %v8904
        %v10294 = vmul.f32 %v10276, %v8908
        %v10295 = vmul.f32 %v10275, %v8912
        %v10296 = vmul.f32 %v10274, %v8916
        %v10297 = vmul.f32 %v10273, %v8920
        %v10298 = vmul.f32 %v10272, %v8924
        %v10299 = vmul.f32 %v10271, %v8928
        %v10300 = vmul.f32 %v10270, %v8932
        %v10301 = vmul.f32 %v10269, %v8936
        %v10302 = vmul.f32 %v10268, %v8940
        %v10303 = vmul.f32 %v10267, %v8944
        %v10304 = vmul.f32 %v10266, %v8948
        %v10305 = vmul.f32 %v10265, %v8952
        %v10306 = vmul.f32 %v10264, %v8956
        %v10307 = vmul.f32 %v10263, %v8960
        %v10308 = vmul.f32 %v10262, %v8964
        %v10309 = vmul.f32 %v10261, %v8968
        %v10310 = vmul.f32 %v10260, %v8972
        %v10311 = vmul.f32 %v10259, %v8976
        %v10312 = vmul.f32 %v10258, %v8980
        %v10313 = vmul.f32 %v10257, %v8984
        %v10314 = vmul.f32 %v10256, %v8988
        %v10315 = vmul.f32 %v10255, %v8992
        %v10316 = vmul.f32 %v10254, %v8996
        %v10317 = vmul.f32 %v10253, %v9000
        %v10318 = vmul.f32 %v10252, %v9004
        %v10319 = vmul.f32 %v10251, %v9008
        %v10320 = vmul.f32 %v10250, %v9012
        %v10321 = vmul.f32 %v10249, %v9016
        %v10322 = vmul.f32 %v10248, %v9020
        %v10323 = vmul.f32 %v10247, %v9024
        %v10324 = vmul.f32 %v10246, %v9028
        %v10325 = vmul.f32 %v10245, %v9032
        %v10326 = vmul.f32 %v10244, %v9036
        %v10327 = vmul.f32 %v10243, %v9040
        %v10328 = vmul.f32 %v10242, %v9044
        %v10329 = vmul.f32 %v10241, %v9048
        %v10330 = vmul.f32 %v10240, %v9052
        %v10331 = vmul.f32 %v10239, %v9056
        %v10332 = vmul.f32 %v10238, %v9060
        %v10333 = vmul.f32 %v10237, %v9064
        %v10334 = vmul.f32 %v10236, %v9068
        %v10335 = vmul.f32 %v10235, %v9072
        %v10336 = vmul.f32 %v10234, %v9076
        %v10337 = vmul.f32 %v10233, %v9080
        %v10338 = vmul.f32 %v10232, %v9084
        %v10339 = vmul.f32 %v10231, %v9088
        %v10340 = vmul.f32 %v10230, %v9092
        %v10341 = vmul.f32 %v10229, %v9096
        %v10342 = vmul.f32 %v10228, %v9100
        %v10343 = vmul.f32 %v10227, %v9104
        %v10344 = vmul.f32 %v10226, %v9108
        %v10345 = vmul.f32 %v10225, %v9112
        %v10346 = vmul.f32 %v10224, %v9116
        %v10347 = vmul.f32 %v10223, %v9120
        %v10348 = vmul.f32 %v10222, %v9124
        %v10349 = vmul.f32 %v10285, %v9128
        %v10350 = vld [vmem:[#allocation5 + $0x13] sm:$0x1]
        %v10351 = vlaneseq
        %v10352 = vshrl.u32 %v10351, 7
        %v10353 = vsub.s32 0, %v10352
        %v10354 = vrot.slane %v10350, %v10353
        %v10355 = vmul.f32 %v10094, %v10354
        %v10356 = vmul.f32 %v10095, %v10354
        %v10357 = vmul.f32 %v10096, %v10354
        %v10358 = vmul.f32 %v10097, %v10354
        %v10359 = vmul.f32 %v10098, %v10354
        %v10360 = vmul.f32 %v10099, %v10354
        %v10361 = vmul.f32 %v10100, %v10354
        %v10362 = vmul.f32 %v10101, %v10354
        %v10363 = vmul.f32 %v10102, %v10354
        %v10364 = vmul.f32 %v10103, %v10354
        %v10365 = vmul.f32 %v10104, %v10354
        %v10366 = vmul.f32 %v10105, %v10354
        %v10367 = vmul.f32 %v10106, %v10354
        %v10368 = vmul.f32 %v10107, %v10354
        %v10369 = vmul.f32 %v10108, %v10354
        %v10370 = vmul.f32 %v10109, %v10354
        %v10371 = vmul.f32 %v10110, %v10354
        %v10372 = vmul.f32 %v10111, %v10354
        %v10373 = vmul.f32 %v10112, %v10354
        %v10374 = vmul.f32 %v10113, %v10354
        %v10375 = vmul.f32 %v10114, %v10354
        %v10376 = vmul.f32 %v10115, %v10354
        %v10377 = vmul.f32 %v10116, %v10354
        %v10378 = vmul.f32 %v10117, %v10354
        %v10379 = vmul.f32 %v10118, %v10354
        %v10380 = vmul.f32 %v10119, %v10354
        %v10381 = vmul.f32 %v10120, %v10354
        %v10382 = vmul.f32 %v10121, %v10354
        %v10383 = vmul.f32 %v10122, %v10354
        %v10384 = vmul.f32 %v10123, %v10354
        %v10385 = vmul.f32 %v10124, %v10354
        %v10386 = vmul.f32 %v10125, %v10354
        %v10387 = vmul.f32 %v10126, %v10354
        %v10388 = vmul.f32 %v10127, %v10354
        %v10389 = vmul.f32 %v10128, %v10354
        %v10390 = vmul.f32 %v10129, %v10354
        %v10391 = vmul.f32 %v10130, %v10354
        %v10392 = vmul.f32 %v10131, %v10354
        %v10393 = vmul.f32 %v10132, %v10354
        %v10394 = vmul.f32 %v10133, %v10354
        %v10395 = vmul.f32 %v10134, %v10354
        %v10396 = vmul.f32 %v10135, %v10354
        %v10397 = vmul.f32 %v10136, %v10354
        %v10398 = vmul.f32 %v10137, %v10354
        %v10399 = vmul.f32 %v10138, %v10354
        %v10400 = vmul.f32 %v10139, %v10354
        %v10401 = vmul.f32 %v10140, %v10354
        %v10402 = vmul.f32 %v10141, %v10354
        %v10403 = vmul.f32 %v10142, %v10354
        %v10404 = vmul.f32 %v10143, %v10354
        %v10405 = vmul.f32 %v10144, %v10354
        %v10406 = vmul.f32 %v10145, %v10354
        %v10407 = vmul.f32 %v10146, %v10354
        %v10408 = vmul.f32 %v10147, %v10354
        %v10409 = vmul.f32 %v10148, %v10354
        %v10410 = vmul.f32 %v10149, %v10354
        %v10411 = vmul.f32 %v10150, %v10354
        %v10412 = vmul.f32 %v10151, %v10354
        %v10413 = vmul.f32 %v10152, %v10354
        %v10414 = vmul.f32 %v10153, %v10354
        %v10415 = vmul.f32 %v10154, %v10354
        %v10416 = vmul.f32 %v10155, %v10354
        %v10417 = vmul.f32 %v10156, %v10354
        %v10418 = vmul.f32 %v10157, %v10354
        %v10419 = vld [vmem:[#allocation5 + $0x14] sm:$0x1]
        %v10420 = vlaneseq
        %v10421 = vshrl.u32 %v10420, 7
        %v10422 = vsub.s32 0, %v10421
        %v10423 = vrot.slane %v10419, %v10422
        %v10424 = vmul.f32 %v9902, %v10423
        %v10425 = vmul.f32 %v9903, %v10423
        %v10426 = vmul.f32 %v9904, %v10423
        %v10427 = vmul.f32 %v9905, %v10423
        %v10428 = vmul.f32 %v9906, %v10423
        %v10429 = vmul.f32 %v9907, %v10423
        %v10430 = vmul.f32 %v9908, %v10423
        %v10431 = vmul.f32 %v9909, %v10423
        %v10432 = vmul.f32 %v9910, %v10423
        %v10433 = vmul.f32 %v9911, %v10423
        %v10434 = vmul.f32 %v9912, %v10423
        %v10435 = vmul.f32 %v9913, %v10423
        %v10436 = vmul.f32 %v9914, %v10423
        %v10437 = vmul.f32 %v9915, %v10423
        %v10438 = vmul.f32 %v9916, %v10423
        %v10439 = vmul.f32 %v9917, %v10423
        %v10440 = vmul.f32 %v9918, %v10423
        %v10441 = vmul.f32 %v9919, %v10423
        %v10442 = vmul.f32 %v9920, %v10423
        %v10443 = vmul.f32 %v9921, %v10423
        %v10444 = vmul.f32 %v9922, %v10423
        %v10445 = vmul.f32 %v9923, %v10423
        %v10446 = vmul.f32 %v9924, %v10423
        %v10447 = vmul.f32 %v9925, %v10423
        %v10448 = vmul.f32 %v9926, %v10423
        %v10449 = vmul.f32 %v9927, %v10423
        %v10450 = vmul.f32 %v9928, %v10423
        %v10451 = vmul.f32 %v9929, %v10423
        %v10452 = vmul.f32 %v9930, %v10423
        %v10453 = vmul.f32 %v9931, %v10423
        %v10454 = vmul.f32 %v9932, %v10423
        %v10455 = vmul.f32 %v9933, %v10423
        %v10456 = vmul.f32 %v9934, %v10423
        %v10457 = vmul.f32 %v9935, %v10423
        %v10458 = vmul.f32 %v9936, %v10423
        %v10459 = vmul.f32 %v9937, %v10423
        %v10460 = vmul.f32 %v9938, %v10423
        %v10461 = vmul.f32 %v9939, %v10423
        %v10462 = vmul.f32 %v9940, %v10423
        %v10463 = vmul.f32 %v9941, %v10423
        %v10464 = vmul.f32 %v9942, %v10423
        %v10465 = vmul.f32 %v9943, %v10423
        %v10466 = vmul.f32 %v9944, %v10423
        %v10467 = vmul.f32 %v9945, %v10423
        %v10468 = vmul.f32 %v9946, %v10423
        %v10469 = vmul.f32 %v9947, %v10423
        %v10470 = vmul.f32 %v9948, %v10423
        %v10471 = vmul.f32 %v9949, %v10423
        %v10472 = vmul.f32 %v9950, %v10423
        %v10473 = vmul.f32 %v9951, %v10423
        %v10474 = vmul.f32 %v9952, %v10423
        %v10475 = vmul.f32 %v9953, %v10423
        %v10476 = vmul.f32 %v9954, %v10423
        %v10477 = vmul.f32 %v9955, %v10423
        %v10478 = vmul.f32 %v9956, %v10423
        %v10479 = vmul.f32 %v9957, %v10423
        %v10480 = vmul.f32 %v9958, %v10423
        %v10481 = vmul.f32 %v9959, %v10423
        %v10482 = vmul.f32 %v9960, %v10423
        %v10483 = vmul.f32 %v9961, %v10423
        %v10484 = vmul.f32 %v9962, %v10423
        %v10485 = vmul.f32 %v9963, %v10423
        %v10486 = vmul.f32 %v9964, %v10423
        %v10487 = vmul.f32 %v9965, %v10423
        %v10488 = vadd.f32 %v10355, %v10424
        %v10489 = vadd.f32 %v10356, %v10425
        %v10490 = vadd.f32 %v10357, %v10426
        %v10491 = vadd.f32 %v10358, %v10427
        %v10492 = vadd.f32 %v10359, %v10428
        %v10493 = vadd.f32 %v10360, %v10429
        %v10494 = vadd.f32 %v10361, %v10430
        %v10495 = vadd.f32 %v10362, %v10431
        %v10496 = vadd.f32 %v10363, %v10432
        %v10497 = vadd.f32 %v10364, %v10433
        %v10498 = vadd.f32 %v10365, %v10434
        %v10499 = vadd.f32 %v10366, %v10435
        %v10500 = vadd.f32 %v10367, %v10436
        %v10501 = vadd.f32 %v10368, %v10437
        %v10502 = vadd.f32 %v10369, %v10438
        %v10503 = vadd.f32 %v10370, %v10439
        %v10504 = vadd.f32 %v10371, %v10440
        %v10505 = vadd.f32 %v10372, %v10441
        %v10506 = vadd.f32 %v10373, %v10442
        %v10507 = vadd.f32 %v10374, %v10443
        %v10508 = vadd.f32 %v10375, %v10444
        %v10509 = vadd.f32 %v10376, %v10445
        %v10510 = vadd.f32 %v10377, %v10446
        %v10511 = vadd.f32 %v10378, %v10447
        %v10512 = vadd.f32 %v10379, %v10448
        %v10513 = vadd.f32 %v10380, %v10449
        %v10514 = vadd.f32 %v10381, %v10450
        %v10515 = vadd.f32 %v10382, %v10451
        %v10516 = vadd.f32 %v10383, %v10452
        %v10517 = vadd.f32 %v10384, %v10453
        %v10518 = vadd.f32 %v10385, %v10454
        %v10519 = vadd.f32 %v10386, %v10455
        %v10520 = vadd.f32 %v10387, %v10456
        %v10521 = vadd.f32 %v10388, %v10457
        %v10522 = vadd.f32 %v10389, %v10458
        %v10523 = vadd.f32 %v10390, %v10459
        %v10524 = vadd.f32 %v10391, %v10460
        %v10525 = vadd.f32 %v10392, %v10461
        %v10526 = vadd.f32 %v10393, %v10462
        %v10527 = vadd.f32 %v10394, %v10463
        %v10528 = vadd.f32 %v10395, %v10464
        %v10529 = vadd.f32 %v10396, %v10465
        %v10530 = vadd.f32 %v10397, %v10466
        %v10531 = vadd.f32 %v10398, %v10467
        %v10532 = vadd.f32 %v10399, %v10468
        %v10533 = vadd.f32 %v10400, %v10469
        %v10534 = vadd.f32 %v10401, %v10470
        %v10535 = vadd.f32 %v10402, %v10471
        %v10536 = vadd.f32 %v10403, %v10472
        %v10537 = vadd.f32 %v10404, %v10473
        %v10538 = vadd.f32 %v10405, %v10474
        %v10539 = vadd.f32 %v10406, %v10475
        %v10540 = vadd.f32 %v10407, %v10476
        %v10541 = vadd.f32 %v10408, %v10477
        %v10542 = vadd.f32 %v10409, %v10478
        %v10543 = vadd.f32 %v10410, %v10479
        %v10544 = vadd.f32 %v10411, %v10480
        %v10545 = vadd.f32 %v10412, %v10481
        %v10546 = vadd.f32 %v10413, %v10482
        %v10547 = vadd.f32 %v10414, %v10483
        %v10548 = vadd.f32 %v10415, %v10484
        %v10549 = vadd.f32 %v10416, %v10485
        %v10550 = vadd.f32 %v10417, %v10486
        %v10551 = vadd.f32 %v10418, %v10487
        %v10552 = vld [vmem:[#allocation5 + $0x15] sm:$0x1]
        %v10553 = vlaneseq
        %v10554 = vshrl.u32 %v10553, 7
        %v10555 = vsub.s32 0, %v10554
        %v10556 = vrot.slane %v10552, %v10555
        %v10557 = vmul.f32 %v10286, %v10556
        %v10558 = vmul.f32 %v10287, %v10556
        %v10559 = vmul.f32 %v10288, %v10556
        %v10560 = vmul.f32 %v10289, %v10556
        %v10561 = vmul.f32 %v10290, %v10556
        %v10562 = vmul.f32 %v10291, %v10556
        %v10563 = vmul.f32 %v10292, %v10556
        %v10564 = vmul.f32 %v10293, %v10556
        %v10565 = vmul.f32 %v10294, %v10556
        %v10566 = vmul.f32 %v10295, %v10556
        %v10567 = vmul.f32 %v10296, %v10556
        %v10568 = vmul.f32 %v10297, %v10556
        %v10569 = vmul.f32 %v10298, %v10556
        %v10570 = vmul.f32 %v10299, %v10556
        %v10571 = vmul.f32 %v10300, %v10556
        %v10572 = vmul.f32 %v10301, %v10556
        %v10573 = vmul.f32 %v10302, %v10556
        %v10574 = vmul.f32 %v10303, %v10556
        %v10575 = vmul.f32 %v10304, %v10556
        %v10576 = vmul.f32 %v10305, %v10556
        %v10577 = vmul.f32 %v10306, %v10556
        %v10578 = vmul.f32 %v10307, %v10556
        %v10579 = vmul.f32 %v10308, %v10556
        %v10580 = vmul.f32 %v10309, %v10556
        %v10581 = vmul.f32 %v10310, %v10556
        %v10582 = vmul.f32 %v10311, %v10556
        %v10583 = vmul.f32 %v10312, %v10556
        %v10584 = vmul.f32 %v10313, %v10556
        %v10585 = vmul.f32 %v10314, %v10556
        %v10586 = vmul.f32 %v10315, %v10556
        %v10587 = vmul.f32 %v10316, %v10556
        %v10588 = vmul.f32 %v10317, %v10556
        %v10589 = vmul.f32 %v10318, %v10556
        %v10590 = vmul.f32 %v10319, %v10556
        %v10591 = vmul.f32 %v10320, %v10556
        %v10592 = vmul.f32 %v10321, %v10556
        %v10593 = vmul.f32 %v10322, %v10556
        %v10594 = vmul.f32 %v10323, %v10556
        %v10595 = vmul.f32 %v10324, %v10556
        %v10596 = vmul.f32 %v10325, %v10556
        %v10597 = vmul.f32 %v10326, %v10556
        %v10598 = vmul.f32 %v10327, %v10556
        %v10599 = vmul.f32 %v10328, %v10556
        %v10600 = vmul.f32 %v10329, %v10556
        %v10601 = vmul.f32 %v10330, %v10556
        %v10602 = vmul.f32 %v10331, %v10556
        %v10603 = vmul.f32 %v10332, %v10556
        %v10604 = vmul.f32 %v10333, %v10556
        %v10605 = vmul.f32 %v10334, %v10556
        %v10606 = vmul.f32 %v10335, %v10556
        %v10607 = vmul.f32 %v10336, %v10556
        %v10608 = vmul.f32 %v10337, %v10556
        %v10609 = vmul.f32 %v10338, %v10556
        %v10610 = vmul.f32 %v10339, %v10556
        %v10611 = vmul.f32 %v10340, %v10556
        %v10612 = vmul.f32 %v10341, %v10556
        %v10613 = vmul.f32 %v10342, %v10556
        %v10614 = vmul.f32 %v10343, %v10556
        %v10615 = vmul.f32 %v10344, %v10556
        %v10616 = vmul.f32 %v10345, %v10556
        %v10617 = vmul.f32 %v10346, %v10556
        %v10618 = vmul.f32 %v10347, %v10556
        %v10619 = vmul.f32 %v10348, %v10556
        %v10620 = vmul.f32 %v10349, %v10556
        %v10621 = vadd.f32 %v10488, %v10557
        %v10622 = vadd.f32 %v10489, %v10558
        %v10623 = vadd.f32 %v10490, %v10559
        %v10624 = vadd.f32 %v10491, %v10560
        %v10625 = vadd.f32 %v10492, %v10561
        %v10626 = vadd.f32 %v10493, %v10562
        %v10627 = vadd.f32 %v10494, %v10563
        %v10628 = vadd.f32 %v10495, %v10564
        %v10629 = vadd.f32 %v10496, %v10565
        %v10630 = vadd.f32 %v10497, %v10566
        %v10631 = vadd.f32 %v10498, %v10567
        %v10632 = vadd.f32 %v10499, %v10568
        %v10633 = vadd.f32 %v10500, %v10569
        %v10634 = vadd.f32 %v10501, %v10570
        %v10635 = vadd.f32 %v10502, %v10571
        %v10636 = vadd.f32 %v10503, %v10572
        %v10637 = vadd.f32 %v10504, %v10573
        %v10638 = vadd.f32 %v10505, %v10574
        %v10639 = vadd.f32 %v10506, %v10575
        %v10640 = vadd.f32 %v10507, %v10576
        %v10641 = vadd.f32 %v10508, %v10577
        %v10642 = vadd.f32 %v10509, %v10578
        %v10643 = vadd.f32 %v10510, %v10579
        %v10644 = vadd.f32 %v10511, %v10580
        %v10645 = vadd.f32 %v10512, %v10581
        %v10646 = vadd.f32 %v10513, %v10582
        %v10647 = vadd.f32 %v10514, %v10583
        %v10648 = vadd.f32 %v10515, %v10584
        %v10649 = vadd.f32 %v10516, %v10585
        %v10650 = vadd.f32 %v10517, %v10586
        %v10651 = vadd.f32 %v10518, %v10587
        %v10652 = vadd.f32 %v10519, %v10588
        %v10653 = vadd.f32 %v10520, %v10589
        %v10654 = vadd.f32 %v10521, %v10590
        %v10655 = vadd.f32 %v10522, %v10591
        %v10656 = vadd.f32 %v10523, %v10592
        %v10657 = vadd.f32 %v10524, %v10593
        %v10658 = vadd.f32 %v10525, %v10594
        %v10659 = vadd.f32 %v10526, %v10595
        %v10660 = vadd.f32 %v10527, %v10596
        %v10661 = vadd.f32 %v10528, %v10597
        %v10662 = vadd.f32 %v10529, %v10598
        %v10663 = vadd.f32 %v10530, %v10599
        %v10664 = vadd.f32 %v10531, %v10600
        %v10665 = vadd.f32 %v10532, %v10601
        %v10666 = vadd.f32 %v10533, %v10602
        %v10667 = vadd.f32 %v10534, %v10603
        %v10668 = vadd.f32 %v10535, %v10604
        %v10669 = vadd.f32 %v10536, %v10605
        %v10670 = vadd.f32 %v10537, %v10606
        %v10671 = vadd.f32 %v10538, %v10607
        %v10672 = vadd.f32 %v10539, %v10608
        %v10673 = vadd.f32 %v10540, %v10609
        %v10674 = vadd.f32 %v10541, %v10610
        %v10675 = vadd.f32 %v10542, %v10611
        %v10676 = vadd.f32 %v10543, %v10612
        %v10677 = vadd.f32 %v10544, %v10613
        %v10678 = vadd.f32 %v10545, %v10614
        %v10679 = vadd.f32 %v10546, %v10615
        %v10680 = vadd.f32 %v10547, %v10616
        %v10681 = vadd.f32 %v10548, %v10617
        %v10682 = vadd.f32 %v10549, %v10618
        %v10683 = vadd.f32 %v10550, %v10619
        %v10684 = vadd.f32 %v10551, %v10620
        %v10685 = vadd.s32 %v1723, 8
        %v10686 = vadd.s32 %v1723, 16
        %v10687 = vadd.s32 %v1723, 24
        %v10688 = vadd.s32 %v1723, 32
        %v10689 = vadd.s32 %v1723, 40
        %v10690 = vadd.s32 %v1723, 48
        %v10691 = vadd.s32 %v1723, 56
        %v10692 = vlaneseq
        %v10693 = vand.u32 %v10692, 127
        %vm10694 = vcmp.eq.s32.totalorder %v1723, %v10693
        %vm10695 = vcmp.eq.s32.totalorder %v10685, %v10693
        %vm10696 = vcmp.eq.s32.totalorder %v10686, %v10693
        %vm10697 = vcmp.eq.s32.totalorder %v10687, %v10693
        %vm10698 = vcmp.eq.s32.totalorder %v10688, %v10693
        %vm10699 = vcmp.eq.s32.totalorder %v10689, %v10693
        %vm10700 = vcmp.eq.s32.totalorder %v10690, %v10693
        %vm10701 = vcmp.eq.s32.totalorder %v10691, %v10693
        %v10702 = vsel %vm10694, 1, 0
        %v10703 = vsel %vm10695, 1, 0
        %v10704 = vsel %vm10696, 1, 0
        %v10705 = vsel %vm10697, 1, 0
        %v10706 = vsel %vm10698, 1, 0
        %v10707 = vsel %vm10699, 1, 0
        %v10708 = vsel %vm10700, 1, 0
        %v10709 = vsel %vm10701, 1, 0
        %v10710 = vcvt.s32.f32 %v10702
        %v10711 = vcvt.s32.f32 %v10703
        %v10712 = vcvt.s32.f32 %v10704
        %v10713 = vcvt.s32.f32 %v10705
        %v10714 = vcvt.s32.f32 %v10706
        %v10715 = vcvt.s32.f32 %v10707
        %v10716 = vcvt.s32.f32 %v10708
        %v10717 = vcvt.s32.f32 %v10709
        %v10718 = vsel %vm4936, %v10621, 0.0
        %10719 = vadd.xlane.f32.xlu0 %v10718
        %v10720 = vpop.xlane.xlu0 %10719
        %v10721 = vsel %vm4936, %v10622, 0.0
        %10722 = vadd.xlane.f32.xlu0 %v10721
        %v10723 = vpop.xlane.xlu0 %10722
        %v10724 = vsel %vm4936, %v10623, 0.0
        %10725 = vadd.xlane.f32.xlu0 %v10724
        %v10726 = vpop.xlane.xlu0 %10725
        %v10727 = vsel %vm4936, %v10624, 0.0
        %10728 = vadd.xlane.f32.xlu0 %v10727
        %v10729 = vpop.xlane.xlu0 %10728
        %v10730 = vsel %vm4936, %v10625, 0.0
        %10731 = vadd.xlane.f32.xlu0 %v10730
        %v10732 = vpop.xlane.xlu0 %10731
        %v10733 = vsel %vm4936, %v10626, 0.0
        %10734 = vadd.xlane.f32.xlu0 %v10733
        %v10735 = vpop.xlane.xlu0 %10734
        %v10736 = vsel %vm4936, %v10627, 0.0
        %10737 = vadd.xlane.f32.xlu0 %v10736
        %v10738 = vpop.xlane.xlu0 %10737
        %v10739 = vsel %vm4936, %v10628, 0.0
        %10740 = vadd.xlane.f32.xlu0 %v10739
        %v10741 = vpop.xlane.xlu0 %10740
        %v10742 = vsel %vm4936, %v10629, 0.0
        %10743 = vadd.xlane.f32.xlu0 %v10742
        %v10744 = vpop.xlane.xlu0 %10743
        %v10745 = vsel %vm4936, %v10630, 0.0
        %10746 = vadd.xlane.f32.xlu0 %v10745
        %v10747 = vpop.xlane.xlu0 %10746
        %v10748 = vsel %vm4936, %v10631, 0.0
        %10749 = vadd.xlane.f32.xlu0 %v10748
        %v10750 = vpop.xlane.xlu0 %10749
        %v10751 = vsel %vm4936, %v10632, 0.0
        %10752 = vadd.xlane.f32.xlu0 %v10751
        %v10753 = vpop.xlane.xlu0 %10752
        %v10754 = vsel %vm4936, %v10633, 0.0
        %10755 = vadd.xlane.f32.xlu0 %v10754
        %v10756 = vpop.xlane.xlu0 %10755
        %v10757 = vsel %vm4936, %v10634, 0.0
        %10758 = vadd.xlane.f32.xlu0 %v10757
        %v10759 = vpop.xlane.xlu0 %10758
        %v10760 = vsel %vm4936, %v10635, 0.0
        %10761 = vadd.xlane.f32.xlu0 %v10760
        %v10762 = vpop.xlane.xlu0 %10761
        %v10763 = vsel %vm4936, %v10636, 0.0
        %10764 = vadd.xlane.f32.xlu0 %v10763
        %v10765 = vpop.xlane.xlu0 %10764
        %v10766 = vsel %vm4936, %v10637, 0.0
        %10767 = vadd.xlane.f32.xlu0 %v10766
        %v10768 = vpop.xlane.xlu0 %10767
        %v10769 = vsel %vm4936, %v10638, 0.0
        %10770 = vadd.xlane.f32.xlu0 %v10769
        %v10771 = vpop.xlane.xlu0 %10770
        %v10772 = vsel %vm4936, %v10639, 0.0
        %10773 = vadd.xlane.f32.xlu0 %v10772
        %v10774 = vpop.xlane.xlu0 %10773
        %v10775 = vsel %vm4936, %v10640, 0.0
        %10776 = vadd.xlane.f32.xlu0 %v10775
        %v10777 = vpop.xlane.xlu0 %10776
        %v10778 = vsel %vm4936, %v10641, 0.0
        %10779 = vadd.xlane.f32.xlu0 %v10778
        %v10780 = vpop.xlane.xlu0 %10779
        %v10781 = vsel %vm4936, %v10642, 0.0
        %10782 = vadd.xlane.f32.xlu0 %v10781
        %v10783 = vpop.xlane.xlu0 %10782
        %v10784 = vsel %vm4936, %v10643, 0.0
        %10785 = vadd.xlane.f32.xlu0 %v10784
        %v10786 = vpop.xlane.xlu0 %10785
        %v10787 = vsel %vm4936, %v10644, 0.0
        %10788 = vadd.xlane.f32.xlu0 %v10787
        %v10789 = vpop.xlane.xlu0 %10788
        %v10790 = vsel %vm4936, %v10645, 0.0
        %10791 = vadd.xlane.f32.xlu0 %v10790
        %v10792 = vpop.xlane.xlu0 %10791
        %v10793 = vsel %vm4936, %v10646, 0.0
        %10794 = vadd.xlane.f32.xlu0 %v10793
        %v10795 = vpop.xlane.xlu0 %10794
        %v10796 = vsel %vm4936, %v10647, 0.0
        %10797 = vadd.xlane.f32.xlu0 %v10796
        %v10798 = vpop.xlane.xlu0 %10797
        %v10799 = vsel %vm4936, %v10648, 0.0
        %10800 = vadd.xlane.f32.xlu0 %v10799
        %v10801 = vpop.xlane.xlu0 %10800
        %v10802 = vsel %vm4936, %v10649, 0.0
        %10803 = vadd.xlane.f32.xlu0 %v10802
        %v10804 = vpop.xlane.xlu0 %10803
        %v10805 = vsel %vm4936, %v10650, 0.0
        %10806 = vadd.xlane.f32.xlu0 %v10805
        %v10807 = vpop.xlane.xlu0 %10806
        %v10808 = vsel %vm4936, %v10651, 0.0
        %10809 = vadd.xlane.f32.xlu0 %v10808
        %v10810 = vpop.xlane.xlu0 %10809
        %v10811 = vsel %vm4936, %v10652, 0.0
        %10812 = vadd.xlane.f32.xlu0 %v10811
        %v10813 = vpop.xlane.xlu0 %10812
        %v10814 = vsel %vm4936, %v10653, 0.0
        %10815 = vadd.xlane.f32.xlu0 %v10814
        %v10816 = vpop.xlane.xlu0 %10815
        %v10817 = vsel %vm4936, %v10654, 0.0
        %10818 = vadd.xlane.f32.xlu0 %v10817
        %v10819 = vpop.xlane.xlu0 %10818
        %v10820 = vsel %vm4936, %v10655, 0.0
        %10821 = vadd.xlane.f32.xlu0 %v10820
        %v10822 = vpop.xlane.xlu0 %10821
        %v10823 = vsel %vm4936, %v10656, 0.0
        %10824 = vadd.xlane.f32.xlu0 %v10823
        %v10825 = vpop.xlane.xlu0 %10824
        %v10826 = vsel %vm4936, %v10657, 0.0
        %10827 = vadd.xlane.f32.xlu0 %v10826
        %v10828 = vpop.xlane.xlu0 %10827
        %v10829 = vsel %vm4936, %v10658, 0.0
        %10830 = vadd.xlane.f32.xlu0 %v10829
        %v10831 = vpop.xlane.xlu0 %10830
        %v10832 = vsel %vm4936, %v10659, 0.0
        %10833 = vadd.xlane.f32.xlu0 %v10832
        %v10834 = vpop.xlane.xlu0 %10833
        %v10835 = vsel %vm4936, %v10660, 0.0
        %10836 = vadd.xlane.f32.xlu0 %v10835
        %v10837 = vpop.xlane.xlu0 %10836
        %v10838 = vsel %vm4936, %v10661, 0.0
        %10839 = vadd.xlane.f32.xlu0 %v10838
        %v10840 = vpop.xlane.xlu0 %10839
        %v10841 = vsel %vm4936, %v10662, 0.0
        %10842 = vadd.xlane.f32.xlu0 %v10841
        %v10843 = vpop.xlane.xlu0 %10842
        %v10844 = vsel %vm4936, %v10663, 0.0
        %10845 = vadd.xlane.f32.xlu0 %v10844
        %v10846 = vpop.xlane.xlu0 %10845
        %v10847 = vsel %vm4936, %v10664, 0.0
        %10848 = vadd.xlane.f32.xlu0 %v10847
        %v10849 = vpop.xlane.xlu0 %10848
        %v10850 = vsel %vm4936, %v10665, 0.0
        %10851 = vadd.xlane.f32.xlu0 %v10850
        %v10852 = vpop.xlane.xlu0 %10851
        %v10853 = vsel %vm4936, %v10666, 0.0
        %10854 = vadd.xlane.f32.xlu0 %v10853
        %v10855 = vpop.xlane.xlu0 %10854
        %v10856 = vsel %vm4936, %v10667, 0.0
        %10857 = vadd.xlane.f32.xlu0 %v10856
        %v10858 = vpop.xlane.xlu0 %10857
        %v10859 = vsel %vm4936, %v10668, 0.0
        %10860 = vadd.xlane.f32.xlu0 %v10859
        %v10861 = vpop.xlane.xlu0 %10860
        %v10862 = vsel %vm4936, %v10669, 0.0
        %10863 = vadd.xlane.f32.xlu0 %v10862
        %v10864 = vpop.xlane.xlu0 %10863
        %v10865 = vsel %vm4936, %v10670, 0.0
        %10866 = vadd.xlane.f32.xlu0 %v10865
        %v10867 = vpop.xlane.xlu0 %10866
        %v10868 = vsel %vm4936, %v10671, 0.0
        %10869 = vadd.xlane.f32.xlu0 %v10868
        %v10870 = vpop.xlane.xlu0 %10869
        %v10871 = vsel %vm4936, %v10672, 0.0
        %10872 = vadd.xlane.f32.xlu0 %v10871
        %v10873 = vpop.xlane.xlu0 %10872
        %v10874 = vsel %vm4936, %v10673, 0.0
        %10875 = vadd.xlane.f32.xlu0 %v10874
        %v10876 = vpop.xlane.xlu0 %10875
        %v10877 = vsel %vm4936, %v10674, 0.0
        %10878 = vadd.xlane.f32.xlu0 %v10877
        %v10879 = vpop.xlane.xlu0 %10878
        %v10880 = vsel %vm4936, %v10675, 0.0
        %10881 = vadd.xlane.f32.xlu0 %v10880
        %v10882 = vpop.xlane.xlu0 %10881
        %v10883 = vsel %vm4936, %v10676, 0.0
        %10884 = vadd.xlane.f32.xlu0 %v10883
        %v10885 = vpop.xlane.xlu0 %10884
        %v10886 = vsel %vm4936, %v10677, 0.0
        %10887 = vadd.xlane.f32.xlu0 %v10886
        %v10888 = vpop.xlane.xlu0 %10887
        %v10889 = vsel %vm4936, %v10678, 0.0
        %10890 = vadd.xlane.f32.xlu0 %v10889
        %v10891 = vpop.xlane.xlu0 %10890
        %v10892 = vsel %vm4936, %v10679, 0.0
        %10893 = vadd.xlane.f32.xlu0 %v10892
        %v10894 = vpop.xlane.xlu0 %10893
        %v10895 = vsel %vm4936, %v10680, 0.0
        %10896 = vadd.xlane.f32.xlu0 %v10895
        %v10897 = vpop.xlane.xlu0 %10896
        %v10898 = vsel %vm4936, %v10681, 0.0
        %10899 = vadd.xlane.f32.xlu0 %v10898
        %v10900 = vpop.xlane.xlu0 %10899
        %v10901 = vsel %vm4936, %v10682, 0.0
        %10902 = vadd.xlane.f32.xlu0 %v10901
        %v10903 = vpop.xlane.xlu0 %10902
        %v10904 = vsel %vm4936, %v10683, 0.0
        %10905 = vadd.xlane.f32.xlu0 %v10904
        %v10906 = vpop.xlane.xlu0 %10905
        %v10907 = vsel %vm4936, %v10684, 0.0
        %10908 = vadd.xlane.f32.xlu0 %v10907
        %v10909 = vpop.xlane.xlu0 %10908
        %v10910 = vmul.f32 %v10720, %v10710
        %v10911 = vmul.f32 %v10723, %v10711
        %v10912 = vmul.f32 %v10726, %v10712
        %v10913 = vmul.f32 %v10729, %v10713
        %v10914 = vmul.f32 %v10732, %v10714
        %v10915 = vmul.f32 %v10735, %v10715
        %v10916 = vmul.f32 %v10738, %v10716
        %v10917 = vmul.f32 %v10741, %v10717
        %v10918 = vmul.f32 %v10744, %v10710
        %v10919 = vmul.f32 %v10747, %v10711
        %v10920 = vmul.f32 %v10750, %v10712
        %v10921 = vmul.f32 %v10753, %v10713
        %v10922 = vmul.f32 %v10756, %v10714
        %v10923 = vmul.f32 %v10759, %v10715
        %v10924 = vmul.f32 %v10762, %v10716
        %v10925 = vmul.f32 %v10765, %v10717
        %v10926 = vmul.f32 %v10768, %v10710
        %v10927 = vmul.f32 %v10771, %v10711
        %v10928 = vmul.f32 %v10774, %v10712
        %v10929 = vmul.f32 %v10777, %v10713
        %v10930 = vmul.f32 %v10780, %v10714
        %v10931 = vmul.f32 %v10783, %v10715
        %v10932 = vmul.f32 %v10786, %v10716
        %v10933 = vmul.f32 %v10789, %v10717
        %v10934 = vmul.f32 %v10792, %v10710
        %v10935 = vmul.f32 %v10795, %v10711
        %v10936 = vmul.f32 %v10798, %v10712
        %v10937 = vmul.f32 %v10801, %v10713
        %v10938 = vmul.f32 %v10804, %v10714
        %v10939 = vmul.f32 %v10807, %v10715
        %v10940 = vmul.f32 %v10810, %v10716
        %v10941 = vmul.f32 %v10813, %v10717
        %v10942 = vmul.f32 %v10816, %v10710
        %v10943 = vmul.f32 %v10819, %v10711
        %v10944 = vmul.f32 %v10822, %v10712
        %v10945 = vmul.f32 %v10825, %v10713
        %v10946 = vmul.f32 %v10828, %v10714
        %v10947 = vmul.f32 %v10831, %v10715
        %v10948 = vmul.f32 %v10834, %v10716
        %v10949 = vmul.f32 %v10837, %v10717
        %v10950 = vmul.f32 %v10840, %v10710
        %v10951 = vmul.f32 %v10843, %v10711
        %v10952 = vmul.f32 %v10846, %v10712
        %v10953 = vmul.f32 %v10849, %v10713
        %v10954 = vmul.f32 %v10852, %v10714
        %v10955 = vmul.f32 %v10855, %v10715
        %v10956 = vmul.f32 %v10858, %v10716
        %v10957 = vmul.f32 %v10861, %v10717
        %v10958 = vmul.f32 %v10864, %v10710
        %v10959 = vmul.f32 %v10867, %v10711
        %v10960 = vmul.f32 %v10870, %v10712
        %v10961 = vmul.f32 %v10873, %v10713
        %v10962 = vmul.f32 %v10876, %v10714
        %v10963 = vmul.f32 %v10879, %v10715
        %v10964 = vmul.f32 %v10882, %v10716
        %v10965 = vmul.f32 %v10885, %v10717
        %v10966 = vmul.f32 %v10888, %v10710
        %v10967 = vmul.f32 %v10891, %v10711
        %v10968 = vmul.f32 %v10894, %v10712
        %v10969 = vmul.f32 %v10897, %v10713
        %v10970 = vmul.f32 %v10900, %v10714
        %v10971 = vmul.f32 %v10903, %v10715
        %v10972 = vmul.f32 %v10906, %v10716
        %v10973 = vmul.f32 %v10909, %v10717
        %v10974 = vsel %vm4936, %v10910, 0.0
        %v10975 = vsel %vm4936, %v10911, 0.0
        %v10976 = vadd.f32 %v10974, %v10975
        %v10977 = vsel %vm4936, %v10912, 0.0
        %v10978 = vadd.f32 %v10976, %v10977
        %v10979 = vsel %vm4936, %v10913, 0.0
        %v10980 = vadd.f32 %v10978, %v10979
        %v10981 = vsel %vm4936, %v10914, 0.0
        %v10982 = vadd.f32 %v10980, %v10981
        %v10983 = vsel %vm4936, %v10915, 0.0
        %v10984 = vadd.f32 %v10982, %v10983
        %v10985 = vsel %vm4936, %v10916, 0.0
        %v10986 = vadd.f32 %v10984, %v10985
        %v10987 = vsel %vm4936, %v10917, 0.0
        %v10988 = vadd.f32 %v10986, %v10987
        %v10989 = vrot.slane %v10988, 4
        %v10990 = vadd.f32 %v10988, %v10989
        %v10991 = vrot.slane %v10990, 2
        %v10992 = vadd.f32 %v10990, %v10991
        %v10993 = vrot.slane %v10992, 1
        %v10994 = vadd.f32 %v10992, %v10993
        %v10995 = vsel %vm4936, %v10918, 0.0
        %v10996 = vsel %vm4936, %v10919, 0.0
        %v10997 = vadd.f32 %v10995, %v10996
        %v10998 = vsel %vm4936, %v10920, 0.0
        %v10999 = vadd.f32 %v10997, %v10998
        %v11000 = vsel %vm4936, %v10921, 0.0
        %v11001 = vadd.f32 %v10999, %v11000
        %v11002 = vsel %vm4936, %v10922, 0.0
        %v11003 = vadd.f32 %v11001, %v11002
        %v11004 = vsel %vm4936, %v10923, 0.0
        %v11005 = vadd.f32 %v11003, %v11004
        %v11006 = vsel %vm4936, %v10924, 0.0
        %v11007 = vadd.f32 %v11005, %v11006
        %v11008 = vsel %vm4936, %v10925, 0.0
        %v11009 = vadd.f32 %v11007, %v11008
        %v11010 = vrot.slane %v11009, 4
        %v11011 = vadd.f32 %v11009, %v11010
        %v11012 = vrot.slane %v11011, 2
        %v11013 = vadd.f32 %v11011, %v11012
        %v11014 = vrot.slane %v11013, 1
        %v11015 = vadd.f32 %v11013, %v11014
        %v11016 = vsel %vm4936, %v10926, 0.0
        %v11017 = vsel %vm4936, %v10927, 0.0
        %v11018 = vadd.f32 %v11016, %v11017
        %v11019 = vsel %vm4936, %v10928, 0.0
        %v11020 = vadd.f32 %v11018, %v11019
        %v11021 = vsel %vm4936, %v10929, 0.0
        %v11022 = vadd.f32 %v11020, %v11021
        %v11023 = vsel %vm4936, %v10930, 0.0
        %v11024 = vadd.f32 %v11022, %v11023
        %v11025 = vsel %vm4936, %v10931, 0.0
        %v11026 = vadd.f32 %v11024, %v11025
        %v11027 = vsel %vm4936, %v10932, 0.0
        %v11028 = vadd.f32 %v11026, %v11027
        %v11029 = vsel %vm4936, %v10933, 0.0
        %v11030 = vadd.f32 %v11028, %v11029
        %v11031 = vrot.slane %v11030, 4
        %v11032 = vadd.f32 %v11030, %v11031
        %v11033 = vrot.slane %v11032, 2
        %v11034 = vadd.f32 %v11032, %v11033
        %v11035 = vrot.slane %v11034, 1
        %v11036 = vadd.f32 %v11034, %v11035
        %v11037 = vsel %vm4936, %v10934, 0.0
        %v11038 = vsel %vm4936, %v10935, 0.0
        %v11039 = vadd.f32 %v11037, %v11038
        %v11040 = vsel %vm4936, %v10936, 0.0
        %v11041 = vadd.f32 %v11039, %v11040
        %v11042 = vsel %vm4936, %v10937, 0.0
        %v11043 = vadd.f32 %v11041, %v11042
        %v11044 = vsel %vm4936, %v10938, 0.0
        %v11045 = vadd.f32 %v11043, %v11044
        %v11046 = vsel %vm4936, %v10939, 0.0
        %v11047 = vadd.f32 %v11045, %v11046
        %v11048 = vsel %vm4936, %v10940, 0.0
        %v11049 = vadd.f32 %v11047, %v11048
        %v11050 = vsel %vm4936, %v10941, 0.0
        %v11051 = vadd.f32 %v11049, %v11050
        %v11052 = vrot.slane %v11051, 4
        %v11053 = vadd.f32 %v11051, %v11052
        %v11054 = vrot.slane %v11053, 2
        %v11055 = vadd.f32 %v11053, %v11054
        %v11056 = vrot.slane %v11055, 1
        %v11057 = vadd.f32 %v11055, %v11056
        %v11058 = vsel %vm4936, %v10942, 0.0
        %v11059 = vsel %vm4936, %v10943, 0.0
        %v11060 = vadd.f32 %v11058, %v11059
        %v11061 = vsel %vm4936, %v10944, 0.0
        %v11062 = vadd.f32 %v11060, %v11061
        %v11063 = vsel %vm4936, %v10945, 0.0
        %v11064 = vadd.f32 %v11062, %v11063
        %v11065 = vsel %vm4936, %v10946, 0.0
        %v11066 = vadd.f32 %v11064, %v11065
        %v11067 = vsel %vm4936, %v10947, 0.0
        %v11068 = vadd.f32 %v11066, %v11067
        %v11069 = vsel %vm4936, %v10948, 0.0
        %v11070 = vadd.f32 %v11068, %v11069
        %v11071 = vsel %vm4936, %v10949, 0.0
        %v11072 = vadd.f32 %v11070, %v11071
        %v11073 = vrot.slane %v11072, 4
        %v11074 = vadd.f32 %v11072, %v11073
        %v11075 = vrot.slane %v11074, 2
        %v11076 = vadd.f32 %v11074, %v11075
        %v11077 = vrot.slane %v11076, 1
        %v11078 = vadd.f32 %v11076, %v11077
        %v11079 = vsel %vm4936, %v10950, 0.0
        %v11080 = vsel %vm4936, %v10951, 0.0
        %v11081 = vadd.f32 %v11079, %v11080
        %v11082 = vsel %vm4936, %v10952, 0.0
        %v11083 = vadd.f32 %v11081, %v11082
        %v11084 = vsel %vm4936, %v10953, 0.0
        %v11085 = vadd.f32 %v11083, %v11084
        %v11086 = vsel %vm4936, %v10954, 0.0
        %v11087 = vadd.f32 %v11085, %v11086
        %v11088 = vsel %vm4936, %v10955, 0.0
        %v11089 = vadd.f32 %v11087, %v11088
        %v11090 = vsel %vm4936, %v10956, 0.0
        %v11091 = vadd.f32 %v11089, %v11090
        %v11092 = vsel %vm4936, %v10957, 0.0
        %v11093 = vadd.f32 %v11091, %v11092
        %v11094 = vrot.slane %v11093, 4
        %v11095 = vadd.f32 %v11093, %v11094
        %v11096 = vrot.slane %v11095, 2
        %v11097 = vadd.f32 %v11095, %v11096
        %v11098 = vrot.slane %v11097, 1
        %v11099 = vadd.f32 %v11097, %v11098
        %v11100 = vsel %vm4936, %v10958, 0.0
        %v11101 = vsel %vm4936, %v10959, 0.0
        %v11102 = vadd.f32 %v11100, %v11101
        %v11103 = vsel %vm4936, %v10960, 0.0
        %v11104 = vadd.f32 %v11102, %v11103
        %v11105 = vsel %vm4936, %v10961, 0.0
        %v11106 = vadd.f32 %v11104, %v11105
        %v11107 = vsel %vm4936, %v10962, 0.0
        %v11108 = vadd.f32 %v11106, %v11107
        %v11109 = vsel %vm4936, %v10963, 0.0
        %v11110 = vadd.f32 %v11108, %v11109
        %v11111 = vsel %vm4936, %v10964, 0.0
        %v11112 = vadd.f32 %v11110, %v11111
        %v11113 = vsel %vm4936, %v10965, 0.0
        %v11114 = vadd.f32 %v11112, %v11113
        %v11115 = vrot.slane %v11114, 4
        %v11116 = vadd.f32 %v11114, %v11115
        %v11117 = vrot.slane %v11116, 2
        %v11118 = vadd.f32 %v11116, %v11117
        %v11119 = vrot.slane %v11118, 1
        %v11120 = vadd.f32 %v11118, %v11119
        %v11121 = vsel %vm4936, %v10966, 0.0
        %v11122 = vsel %vm4936, %v10967, 0.0
        %v11123 = vadd.f32 %v11121, %v11122
        %v11124 = vsel %vm4936, %v10968, 0.0
        %v11125 = vadd.f32 %v11123, %v11124
        %v11126 = vsel %vm4936, %v10969, 0.0
        %v11127 = vadd.f32 %v11125, %v11126
        %v11128 = vsel %vm4936, %v10970, 0.0
        %v11129 = vadd.f32 %v11127, %v11128
        %v11130 = vsel %vm4936, %v10971, 0.0
        %v11131 = vadd.f32 %v11129, %v11130
        %v11132 = vsel %vm4936, %v10972, 0.0
        %v11133 = vadd.f32 %v11131, %v11132
        %v11134 = vsel %vm4936, %v10973, 0.0
        %v11135 = vadd.f32 %v11133, %v11134
        %v11136 = vrot.slane %v11135, 4
        %v11137 = vadd.f32 %v11135, %v11136
        %v11138 = vrot.slane %v11137, 2
        %v11139 = vadd.f32 %v11137, %v11138
        %v11140 = vrot.slane %v11139, 1
        %v11141 = vadd.f32 %v11139, %v11140
        %v11142 = vld [vmem:[#allocation5 + $0x16] sm:$0x1]
        %s11144 = vtos %v11142
        %v11145 = vstv %s11144
        %v11147 = vadd.f32 %v10994, %v11145
        %v11148 = vadd.f32 %v11015, %v11145
        %v11149 = vadd.f32 %v11036, %v11145
        %v11150 = vadd.f32 %v11057, %v11145
        %v11151 = vadd.f32 %v11078, %v11145
        %v11152 = vadd.f32 %v11099, %v11145
        %v11153 = vadd.f32 %v11120, %v11145
        %v11154 = vadd.f32 %v11141, %v11145
        %vm11163 = vcmask 1041409
        %v11164 = vsel %vm11163, %v11148, %v11147
        %vm11165 = vcmask 1042434
        %v11166 = vsel %vm11165, %v11149, %v11164
        %vm11167 = vcmask 1043459
        %v11168 = vsel %vm11167, %v11150, %v11166
        %vm11169 = vcmask 1044484
        %v11170 = vsel %vm11169, %v11151, %v11168
        %vm11171 = vcmask 1045509
        %v11172 = vsel %vm11171, %v11152, %v11170
        %vm11173 = vcmask 1046534
        %v11174 = vsel %vm11173, %v11153, %v11172
        %vm11175 = vcmask 1047559
        %v11176 = vsel %vm11175, %v11154, %v11174
        %v11178 = vsel %vm4936, %v11176, 0.0
        %11179 = vadd.xlane.f32.xlu0 %v11178
        %v11180 = vpop.xlane.xlu0 %11179
        %v11181 = vmul.f32 %v11180, 0.015625
        %v11183 = vrot.slane %v11181, 1
        %v11184 = vrot.slane %v11181, 2
        %v11185 = vrot.slane %v11181, 3
        %v11186 = vrot.slane %v11181, 4
        %v11187 = vrot.slane %v11181, 5
        %v11188 = vrot.slane %v11181, 6
        %v11189 = vrot.slane %v11181, 7
        %v11198 = vsub.f32 %v11147, %v11181
        %v11199 = vsub.f32 %v11148, %v11183
        %v11200 = vsub.f32 %v11149, %v11184
        %v11201 = vsub.f32 %v11150, %v11185
        %v11202 = vsub.f32 %v11151, %v11186
        %v11203 = vsub.f32 %v11152, %v11187
        %v11204 = vsub.f32 %v11153, %v11188
        %v11205 = vsub.f32 %v11154, %v11189
        %v11206 = vmul.f32 %v11198, %v11198
        %v11207 = vmul.f32 %v11199, %v11199
        %v11208 = vmul.f32 %v11200, %v11200
        %v11209 = vmul.f32 %v11201, %v11201
        %v11210 = vmul.f32 %v11202, %v11202
        %v11211 = vmul.f32 %v11203, %v11203
        %v11212 = vmul.f32 %v11204, %v11204
        %v11213 = vmul.f32 %v11205, %v11205
        %v11222 = vrot.slane %v11207, 7
        %v11223 = vsel %vm11163, %v11222, %v11206
        %v11224 = vrot.slane %v11208, 6
        %v11225 = vsel %vm11165, %v11224, %v11223
        %v11226 = vrot.slane %v11209, 5
        %v11227 = vsel %vm11167, %v11226, %v11225
        %v11228 = vrot.slane %v11210, 4
        %v11229 = vsel %vm11169, %v11228, %v11227
        %v11230 = vrot.slane %v11211, 3
        %v11231 = vsel %vm11171, %v11230, %v11229
        %v11232 = vrot.slane %v11212, 2
        %v11233 = vsel %vm11173, %v11232, %v11231
        %v11234 = vrot.slane %v11213, 1
        %v11235 = vsel %vm11175, %v11234, %v11233
        %v11237 = vsel %vm4936, %v11235, 0.0
        %11238 = vadd.xlane.f32.xlu0 %v11237
        %v11239 = vpop.xlane.xlu0 %11238
        %v11240 = vmul.f32 %v11239, 0.015873017
        %v11241 = vrsqrt.pop %v11240
        %v11242 = vmul.f32 %v11240, %v11241
        %vm11243 = vcmp.eq.f32.partialorder %v11240, inf
        %v11244 = vsel %vm11243, %v11240, %v11242
        %vm11245 = vcmp.eq.f32.partialorder %v11240, 0.0
        %v11246 = vand.u32 %v11240, 2147483648
        %v11247 = vsel %vm11245, %v11246, %v11244
        %v11248 = vadd.f32 %v11247, 1e-08
        %v11250 = vrot.slane %v11248, 1
        %v11251 = vrot.slane %v11248, 2
        %v11252 = vrot.slane %v11248, 3
        %v11253 = vrot.slane %v11248, 4
        %v11254 = vrot.slane %v11248, 5
        %v11255 = vrot.slane %v11248, 6
        %v11256 = vrot.slane %v11248, 7
        %v11265 = vrcp.pop %v11248
        %v11266 = vmul.f32 %v11198, %v11265
        %v11267 = vrcp.pop %v11250
        %v11268 = vmul.f32 %v11199, %v11267
        %v11269 = vrcp.pop %v11251
        %v11270 = vmul.f32 %v11200, %v11269
        %v11271 = vrcp.pop %v11252
        %v11272 = vmul.f32 %v11201, %v11271
        %v11273 = vrcp.pop %v11253
        %v11274 = vmul.f32 %v11202, %v11273
        %v11275 = vrcp.pop %v11254
        %v11276 = vmul.f32 %v11203, %v11275
        %v11277 = vrcp.pop %v11255
        %v11278 = vmul.f32 %v11204, %v11277
        %v11279 = vrcp.pop %v11256
        %v11280 = vmul.f32 %v11205, %v11279
        %v11289 = vrot.slane %v11268, 7
        %v11290 = vsel %vm11163, %v11289, %v11266
        %v11291 = vrot.slane %v11270, 6
        %v11292 = vsel %vm11165, %v11291, %v11290
        %v11293 = vrot.slane %v11272, 5
        %v11294 = vsel %vm11167, %v11293, %v11292
        %v11295 = vrot.slane %v11274, 4
        %v11296 = vsel %vm11169, %v11295, %v11294
        %v11297 = vrot.slane %v11276, 3
        %v11298 = vsel %vm11171, %v11297, %v11296
        %v11299 = vrot.slane %v11278, 2
        %v11300 = vsel %vm11173, %v11299, %v11298
        %v11301 = vrot.slane %v11280, 1
        %v11302 = vsel %vm11175, %v11301, %v11300
        %v11304 = vsel %vm4936, %v11302, %v11181
        %vm11305 = vcmask 531456
        %v11306 = vsel %vm11305, %v11304, %v11247
        %vm11307 = vcmask 539648
        %v11308 = vsel %vm11307, %v11306, 0.0
        %11309 = vst [vmem:[%s671] sm:$0xff] %v11308
        %s11310 = sand.u32 %s450, 1
        %s11311 = scalar_lea.sflag [#allocation4], %s11310
        %s11312 = sand.u32 %s450, 1
        %s11313 = smul.addr %s11312, 8
        %s11314 = scalar_lea.vmem [#allocation11], %s11313
        // Predicated region
        $region117: #{tpu_custom_call.1} parent=95 // pred_check
          %p11315 = pneg %p460
        $region118: #{tpu_custom_call.1} parent=95 // pred_check_branch
          %11317 = sbr.rel (%p11315) target = $region120
        $region119: #{tpu_custom_call.1} parent=95 // pred_region
          %s11319 = ssub.s32 128, 128
          %11320 = vsyncadd %s11311, %s11319
          %s11321 = smul.addr %s38, 128
          %s11322 = scalar_lea.hbm %s19, %s11321
          %s11324 = sshll.u32 %s11314, 4
          %s11325 = int_to_ptr.vmem [resolvable:$true] %s11324
          %11327 = dma.vmem_to_hbm [thread:$0]  %s11325, 128, %s11322, %s11311
        $region120: #{tpu_custom_call.1} parent=95 // pred_fallthru
          _
      $region96: #{tpu_custom_call.1} parent=5 // pred_fallthru
        _
      %p11328 = scmp.le.s32.totalorder 2, %s33
      // Predicated region
      $region121: #{tpu_custom_call.1} parent=5 // pred_check
        %p11329 = pneg %p11328
      $region122: #{tpu_custom_call.1} parent=5 // pred_check_branch
        %11331 = sbr.rel (%p11329) target = $region124
      $region123: #{tpu_custom_call.1} parent=5 // pred_region
        %s11332 = ssub.s32 %s33, 2
        // Predicated region
        $region125: #{tpu_custom_call.1} parent=123 // pred_check
          %p11333 = pneg %p466
        $region126: #{tpu_custom_call.1} parent=123 // pred_check_branch
          %11335 = sbr.rel (%p11333) target = $region128
        $region127: #{tpu_custom_call.1} parent=123 // pred_region
          %s11336 = sand.u32 %s451, 1
          %s11337 = scalar_lea.sflag [#allocation4], %s11336
          %s11338 = sand.u32 %s451, 1
          %s11339 = smul.addr %s11338, 8
          %s11340 = scalar_lea.vmem [#allocation11], %s11339
          %11341 = dma.done %s11337, 128
        $region128: #{tpu_custom_call.1} parent=123 // pred_fallthru
          _
      $region124: #{tpu_custom_call.1} parent=5 // pred_fallthru
        _
    $region6: #{tpu_custom_call.1} parent=1 // loop_footer
      %s37 = sadd.s32 1, %s33
    $region7: #{tpu_custom_call.1} parent=1 // loop_footer_branch
      %32 = sbr.rel target = $region3
    $region8: #{tpu_custom_call.1} parent=1 // loop_exit
      _
    %11342 = vsyncpa [#allocation3], 1
    %s11343 = scalar_lea.sflag [#allocation3], 1
    %11344 = vsyncpa %s11343, 1
    %11345 = vsyncpa [#allocation6], 1
    %11346 = vsyncpa [#allocation9], 1
    %11347 = vsyncpa [#allocation4], 1
    %s11348 = scalar_lea.sflag [#allocation4], 1
    %11349 = vsyncpa %s11348, 1

</llo_original>
